<compile_context>
chip_gen: v7x
topology: tpu7x:2x2x1
jax: 0.10.0
libtpu: 0.0.40
codegen_flags: <defaults>
</compile_context>

<pallas_src>
import functools
import math

import jax
import jax.numpy as jnp
from jax.experimental import pallas as pl
from jax.experimental.pallas import tpu as pltpu

# ----------------------------------------------------------------------------
# synthetic config (config.MARGIN / config.MARGIN_NEG in the reference)
# ----------------------------------------------------------------------------
MARGIN = 6.0
MARGIN_NEG = 3.0
INIT_SIZE = 0.001

# Rows gathered per grid step (48 DMAs in flight per step: 8 rows x 6 lookups).
ROWS_PER_STEP = 8


# ----------------------------------------------------------------------------
# Fused embedding + bias gather kernel (manual DMA, pl.ANY tables)
# ----------------------------------------------------------------------------
def _fused_gather_kernel(head_ref, rel_ref, tail_ref,              # SMEM (prefetch)
                         ent_hbm, relt_hbm, ebias_hbm, rbias_hbm,  # HBM (pl.ANY)
                         he_ref, re_ref, te_ref,                   # VMEM out blocks
                         hb_ref, rb_ref, tb_ref,
                         sems, *, rows_per_step):
    base = pl.program_id(0) * rows_per_step
    copies = []
    for r in range(rows_per_step):          # static unroll
        h = head_ref[base + r]
        rel = rel_ref[base + r]
        t = tail_ref[base + r]
        dst = pl.ds(r, 1)
        copies.append(pltpu.make_async_copy(
            ent_hbm.at[pl.ds(h, 1), :], he_ref.at[dst, :], sems.at[r, 0]))
        copies.append(pltpu.make_async_copy(
            relt_hbm.at[pl.ds(rel, 1), :], re_ref.at[dst, :], sems.at[r, 1]))
        copies.append(pltpu.make_async_copy(
            ent_hbm.at[pl.ds(t, 1), :], te_ref.at[dst, :], sems.at[r, 2]))
        copies.append(pltpu.make_async_copy(
            ebias_hbm.at[pl.ds(h, 1), :], hb_ref.at[dst, :], sems.at[r, 3]))
        copies.append(pltpu.make_async_copy(
            rbias_hbm.at[pl.ds(rel, 1), :], rb_ref.at[dst, :], sems.at[r, 4]))
        copies.append(pltpu.make_async_copy(
            ebias_hbm.at[pl.ds(t, 1), :], tb_ref.at[dst, :], sems.at[r, 5]))
    # Issue everything, then wait — keeps all 6*rows_per_step DMAs in flight.
    for c in copies:
        c.start()
    for c in copies:
        c.wait()


def fused_forward_gather(entity_table, relation_table, e_bias, r_bias,
                         head, relation, tail, rows_per_step=ROWS_PER_STEP):
    """One pallas_call doing all six gathers for a batch of (h, r, t) ids."""
    b = head.shape[0]
    d = entity_table.shape[1]
    r = rows_per_step
    b_pad = pl.cdiv(b, r) * r
    pad = b_pad - b
    head_p = jnp.pad(head.astype(jnp.int32), (0, pad))
    rel_p = jnp.pad(relation.astype(jnp.int32), (0, pad))
    tail_p = jnp.pad(tail.astype(jnp.int32), (0, pad))

    emb_spec = pl.BlockSpec((r, d), lambda i, *_: (i, 0))
    bias_spec = pl.BlockSpec((r, 1), lambda i, *_: (i, 0))

    outs = pl.pallas_call(
        functools.partial(_fused_gather_kernel, rows_per_step=r),
        out_shape=(
            jax.ShapeDtypeStruct((b_pad, d), entity_table.dtype),
            jax.ShapeDtypeStruct((b_pad, d), relation_table.dtype),
            jax.ShapeDtypeStruct((b_pad, d), entity_table.dtype),
            jax.ShapeDtypeStruct((b_pad, 1), e_bias.dtype),
            jax.ShapeDtypeStruct((b_pad, 1), r_bias.dtype),
            jax.ShapeDtypeStruct((b_pad, 1), e_bias.dtype),
        ),
        grid_spec=pltpu.PrefetchScalarGridSpec(
            num_scalar_prefetch=3,
            grid=(b_pad // r,),
            in_specs=[pl.BlockSpec(memory_space=pl.ANY)] * 4,
            out_specs=[emb_spec, emb_spec, emb_spec,
                       bias_spec, bias_spec, bias_spec],
            scratch_shapes=[pltpu.SemaphoreType.DMA((r, 6))],
        ),
        compiler_params=pltpu.CompilerParams(
            dimension_semantics=("parallel",)),
    )(head_p, rel_p, tail_p, entity_table, relation_table, e_bias, r_bias)

    h_e, r_e, t_e, h_b, r_b, t_b = outs
    return h_e[:b], r_e[:b], t_e[:b], h_b[:b], r_b[:b], t_b[:b]


# ----------------------------------------------------------------------------
# Fused loss kernel (one pass over sublane-dense padded scores, 3 scalars out)
# ----------------------------------------------------------------------------
def _log_sigmoid(x):
    # numerically stable log(sigmoid(x)); exp lands on the EUP slot.
    return jnp.minimum(x, 0.0) - jnp.log1p(jnp.exp(-jnp.abs(x)))


def _fused_loss_kernel(pos_ref, neg_ref, out_ref, *,
                       batch, margin_rank, margin, margin_neg):
    pos = pos_ref[...]
    neg = neg_ref[...]
    rows, cols = pos.shape
    flat_idx = (jax.lax.broadcasted_iota(jnp.int32, (rows, cols), 0) * cols
                + jax.lax.broadcasted_iota(jnp.int32, (rows, cols), 1))
    mask = flat_idx < batch
    zero = jnp.zeros_like(pos)

    # marginrankingloss: sum(relu(neg - pos + margin_rank))
    mrl = jnp.sum(jnp.where(mask, jnp.maximum(neg - pos + margin_rank, 0.0), zero))

    # hardmarginloss: (sum(relu(-pos - margin)) + sum(relu(neg + margin_neg))) / 2
    p_h = jnp.sum(jnp.where(mask, jnp.maximum(-pos - margin, 0.0), zero))
    n_h = jnp.sum(jnp.where(mask, jnp.maximum(neg + margin_neg, 0.0), zero))
    hml = (p_h + n_h) * 0.5

    # loglikelihoodloss: (-mean(logsig(m + pos)) - mean(logsig(-neg - m))) / 2
    inv_b = 1.0 / float(batch)
    pos_ll = jnp.sum(jnp.where(mask, _log_sigmoid(margin + pos), zero)) * inv_b
    neg_ll = jnp.sum(jnp.where(mask, _log_sigmoid(-neg - margin), zero)) * inv_b
    lll = -(pos_ll + neg_ll) * 0.5

    # Lane-dense single vector store: losses live in lanes 0..2.
    lane = jax.lax.broadcasted_iota(jnp.int32, (1, 128), 1)
    out_ref[...] = (jnp.where(lane == 0, mrl, 0.0)
                    + jnp.where(lane == 1, hml, 0.0)
                    + jnp.where(lane == 2, lll, 0.0)).astype(jnp.float32)


def _pad_scores_2d(x):
    """Reshape/pad scores to a sublane-dense (8k, 128) f32 slab."""
    flat = x.reshape(-1).astype(jnp.float32)
    n = flat.shape[0]
    rows = pl.cdiv(pl.cdiv(n, 128), 8) * 8
    padded = jnp.pad(flat, (0, rows * 128 - n))
    return padded.reshape(rows, 128)


def fused_losses(positive_score, negative_score, margin_rank, margin, margin_neg):
    """Returns (marginrankingloss, hardmarginloss, loglikelihoodloss)."""
    b = int(math.prod(positive_score.shape))
    pos2 = _pad_scores_2d(positive_score)
    neg2 = _pad_scores_2d(negative_score)
    out = pl.pallas_call(
        functools.partial(_fused_loss_kernel, batch=b,
                          margin_rank=float(margin_rank),
                          margin=float(margin), margin_neg=float(margin_neg)),
        out_shape=jax.ShapeDtypeStruct((1, 128), jnp.float32),
        in_specs=[pl.BlockSpec(pos2.shape, lambda: (0, 0)),
                  pl.BlockSpec(neg2.shape, lambda: (0, 0))],
        out_specs=pl.BlockSpec((1, 128), lambda: (0, 0)),
    )(pos2, neg2)
    return out[0, :3]


# ----------------------------------------------------------------------------
# KGE module in JAX (glue around the Pallas hot paths)
# ----------------------------------------------------------------------------
class KGE:
    def __init__(self, model_name, nentity, nrelation, nword, dimension, key):
        self.model_name = model_name
        self.nentity = nentity
        self.nrelation = nrelation
        self.nword = nword
        self.dimension = dimension
        self.margin = MARGIN
        self.margin_neg = MARGIN_NEG
        self.init_size = INIT_SIZE

        ks = jax.random.split(key, 6)
        self.entity_embedding = self.init_size * jax.random.normal(
            ks[0], (nentity, dimension), jnp.float32)
        self.relation_embedding = self.init_size * jax.random.normal(
            ks[1], (nrelation, dimension), jnp.float32)
        self.word_embedding = self.init_size * jax.random.normal(
            ks[2], (nword, dimension), jnp.float32)
        self.e_bias = self.init_size * jax.random.normal(
            ks[3], (nentity, 1), jnp.float32)
        self.r_bias = self.init_size * jax.random.normal(
            ks[4], (nrelation, 1), jnp.float32)
        self.w_bias = self.init_size * jax.random.normal(
            ks[5], (nword, 1), jnp.float32)

    def forward(self, head, relation, tail):
        """All six embedding/bias lookups fused into one Pallas call."""
        return fused_forward_gather(
            self.entity_embedding, self.relation_embedding,
            self.e_bias, self.r_bias, head, relation, tail)

    # One fused pass computing all three losses on the same scores.
    def losses(self, positive_score, negative_score, margin):
        return fused_losses(positive_score, negative_score,
                            margin, self.margin, self.margin_neg)

    def marginrankingloss(self, positive_score, negative_score, margin):
        return self.losses(positive_score, negative_score, margin)[0]

    def hardmarginloss(self, positive_score, negative_score):
        return self.losses(positive_score, negative_score, self.margin)[1]

    def loglikelihoodloss(self, positive_score, negative_score):
        return self.losses(positive_score, negative_score, self.margin)[2]


# ----------------------------------------------------------------------------
# main
# ----------------------------------------------------------------------------
if __name__ == "__main__":
    key = jax.random.PRNGKey(0)
    k_model, k_h, k_r, k_t, k_ps, k_ns = jax.random.split(key, 6)

    NENTITY, NRELATION, NWORD, DIM, BATCH = 64, 16, 32, 128, 8

    model = KGE("TransE", NENTITY, NRELATION, NWORD, DIM, k_model)

    head = jax.random.randint(k_h, (BATCH,), 0, NENTITY, dtype=jnp.int32)
    relation = jax.random.randint(k_r, (BATCH,), 0, NRELATION, dtype=jnp.int32)
    tail = jax.random.randint(k_t, (BATCH,), 0, NENTITY, dtype=jnp.int32)

    # Forward: single fused Pallas gather kernel.
    h_e, r_e, t_e, h_b, r_b, t_b = model.forward(head, relation, tail)
    jax.block_until_ready((h_e, r_e, t_e, h_b, r_b, t_b))

    # Reference checks for the fused gather.
    assert jnp.allclose(h_e, model.entity_embedding[head]), "head emb mismatch"
    assert jnp.allclose(r_e, model.relation_embedding[relation]), "rel emb mismatch"
    assert jnp.allclose(t_e, model.entity_embedding[tail]), "tail emb mismatch"
    assert jnp.allclose(h_b, model.e_bias[head]), "head bias mismatch"
    assert jnp.allclose(r_b, model.r_bias[relation]), "rel bias mismatch"
    assert jnp.allclose(t_b, model.e_bias[tail]), "tail bias mismatch"

    # Losses: one fused Pallas kernel for all three.
    positive_score = jax.random.normal(k_ps, (BATCH,), jnp.float32)
    negative_score = jax.random.normal(k_ns, (BATCH,), jnp.float32)

    all_losses = model.losses(positive_score, negative_score, 1.0)
    jax.block_until_ready(all_losses)
    mrl, hml, lll = all_losses[0], all_losses[1], all_losses[2]

    # Reference checks for the losses.
    mrl_ref = jnp.sum(jnp.maximum(negative_score - positive_score + 1.0, 0.0))
    hml_ref = 0.5 * (jnp.sum(jnp.maximum(-positive_score - MARGIN, 0.0)) +
                     jnp.sum(jnp.maximum(negative_score + MARGIN_NEG, 0.0)))
    lll_ref = 0.5 * (-jnp.mean(jax.nn.log_sigmoid(MARGIN + positive_score))
                     - jnp.mean(jax.nn.log_sigmoid(-negative_score - MARGIN)))
    assert jnp.allclose(mrl, mrl_ref, atol=1e-5), "marginrankingloss mismatch"
    assert jnp.allclose(hml, hml_ref, atol=1e-5), "hardmarginloss mismatch"
    assert jnp.allclose(lll, lll_ref, atol=1e-5), "loglikelihoodloss mismatch"

    print("KERNEL_OK")
</pallas_src>

<mosaic_0001>
module attributes {stable_mosaic.version = 11 : i64} {
  func.func @_fused_gather_kernel(%arg0: i32, %arg1: memref<8xi32, #tpu.memory_space<smem>>, %arg2: memref<8xi32, #tpu.memory_space<smem>>, %arg3: memref<8xi32, #tpu.memory_space<smem>>, %arg4: memref<64x128xf32, #tpu.memory_space<any>>, %arg5: memref<16x128xf32, #tpu.memory_space<any>>, %arg6: memref<64x1xf32, #tpu.memory_space<any>>, %arg7: memref<16x1xf32, #tpu.memory_space<any>>, %arg8: memref<8x128xf32, #tpu.memory_space<vmem>>, %arg9: memref<8x128xf32, #tpu.memory_space<vmem>>, %arg10: memref<8x128xf32, #tpu.memory_space<vmem>>, %arg11: memref<8x1xf32, #tpu.memory_space<vmem>>, %arg12: memref<8x1xf32, #tpu.memory_space<vmem>>, %arg13: memref<8x1xf32, #tpu.memory_space<vmem>>, %arg14: memref<8x6x!tpu.dma_semaphore, #tpu.memory_space<semaphore_mem>>) attributes {dimension_semantics = [#tpu.dimension_semantics<parallel>], iteration_bounds = array<i64: 1>, scalar_prefetch = 3 : i64, scratch_operands = 1 : i64, tpu.core_type = #tpu.core_type<tc>, window_params = [{}, {}, {}, {}, {transform_indices = @transform_4, window_bounds = array<i64: 8, 128>}, {transform_indices = @transform_5, window_bounds = array<i64: 8, 128>}, {transform_indices = @transform_6, window_bounds = array<i64: 8, 128>}, {transform_indices = @transform_7, window_bounds = array<i64: 8, 1>}, {transform_indices = @transform_8, window_bounds = array<i64: 8, 1>}, {transform_indices = @transform_9, window_bounds = array<i64: 8, 1>}]} {
    %c8_i32 = arith.constant 8 : i32
    %0 = arith.muli %arg0, %c8_i32 : i32
    %c0_i32 = arith.constant 0 : i32
    %1 = arith.addi %0, %c0_i32 : i32
    %2 = arith.index_cast %1 : i32 to index
    %3 = memref.load %arg1[%2] : memref<8xi32, #tpu.memory_space<smem>>
    %c0_i32_0 = arith.constant 0 : i32
    %4 = arith.addi %0, %c0_i32_0 : i32
    %5 = arith.index_cast %4 : i32 to index
    %6 = memref.load %arg2[%5] : memref<8xi32, #tpu.memory_space<smem>>
    %c0_i32_1 = arith.constant 0 : i32
    %7 = arith.addi %0, %c0_i32_1 : i32
    %8 = arith.index_cast %7 : i32 to index
    %9 = memref.load %arg3[%8] : memref<8xi32, #tpu.memory_space<smem>>
    %c1_i32 = arith.constant 1 : i32
    %10 = arith.addi %0, %c1_i32 : i32
    %11 = arith.index_cast %10 : i32 to index
    %12 = memref.load %arg1[%11] : memref<8xi32, #tpu.memory_space<smem>>
    %c1_i32_2 = arith.constant 1 : i32
    %13 = arith.addi %0, %c1_i32_2 : i32
    %14 = arith.index_cast %13 : i32 to index
    %15 = memref.load %arg2[%14] : memref<8xi32, #tpu.memory_space<smem>>
    %c1_i32_3 = arith.constant 1 : i32
    %16 = arith.addi %0, %c1_i32_3 : i32
    %17 = arith.index_cast %16 : i32 to index
    %18 = memref.load %arg3[%17] : memref<8xi32, #tpu.memory_space<smem>>
    %c2_i32 = arith.constant 2 : i32
    %19 = arith.addi %0, %c2_i32 : i32
    %20 = arith.index_cast %19 : i32 to index
    %21 = memref.load %arg1[%20] : memref<8xi32, #tpu.memory_space<smem>>
    %c2_i32_4 = arith.constant 2 : i32
    %22 = arith.addi %0, %c2_i32_4 : i32
    %23 = arith.index_cast %22 : i32 to index
    %24 = memref.load %arg2[%23] : memref<8xi32, #tpu.memory_space<smem>>
    %c2_i32_5 = arith.constant 2 : i32
    %25 = arith.addi %0, %c2_i32_5 : i32
    %26 = arith.index_cast %25 : i32 to index
    %27 = memref.load %arg3[%26] : memref<8xi32, #tpu.memory_space<smem>>
    %c3_i32 = arith.constant 3 : i32
    %28 = arith.addi %0, %c3_i32 : i32
    %29 = arith.index_cast %28 : i32 to index
    %30 = memref.load %arg1[%29] : memref<8xi32, #tpu.memory_space<smem>>
    %c3_i32_6 = arith.constant 3 : i32
    %31 = arith.addi %0, %c3_i32_6 : i32
    %32 = arith.index_cast %31 : i32 to index
    %33 = memref.load %arg2[%32] : memref<8xi32, #tpu.memory_space<smem>>
    %c3_i32_7 = arith.constant 3 : i32
    %34 = arith.addi %0, %c3_i32_7 : i32
    %35 = arith.index_cast %34 : i32 to index
    %36 = memref.load %arg3[%35] : memref<8xi32, #tpu.memory_space<smem>>
    %c4_i32 = arith.constant 4 : i32
    %37 = arith.addi %0, %c4_i32 : i32
    %38 = arith.index_cast %37 : i32 to index
    %39 = memref.load %arg1[%38] : memref<8xi32, #tpu.memory_space<smem>>
    %c4_i32_8 = arith.constant 4 : i32
    %40 = arith.addi %0, %c4_i32_8 : i32
    %41 = arith.index_cast %40 : i32 to index
    %42 = memref.load %arg2[%41] : memref<8xi32, #tpu.memory_space<smem>>
    %c4_i32_9 = arith.constant 4 : i32
    %43 = arith.addi %0, %c4_i32_9 : i32
    %44 = arith.index_cast %43 : i32 to index
    %45 = memref.load %arg3[%44] : memref<8xi32, #tpu.memory_space<smem>>
    %c5_i32 = arith.constant 5 : i32
    %46 = arith.addi %0, %c5_i32 : i32
    %47 = arith.index_cast %46 : i32 to index
    %48 = memref.load %arg1[%47] : memref<8xi32, #tpu.memory_space<smem>>
    %c5_i32_10 = arith.constant 5 : i32
    %49 = arith.addi %0, %c5_i32_10 : i32
    %50 = arith.index_cast %49 : i32 to index
    %51 = memref.load %arg2[%50] : memref<8xi32, #tpu.memory_space<smem>>
    %c5_i32_11 = arith.constant 5 : i32
    %52 = arith.addi %0, %c5_i32_11 : i32
    %53 = arith.index_cast %52 : i32 to index
    %54 = memref.load %arg3[%53] : memref<8xi32, #tpu.memory_space<smem>>
    %c6_i32 = arith.constant 6 : i32
    %55 = arith.addi %0, %c6_i32 : i32
    %56 = arith.index_cast %55 : i32 to index
    %57 = memref.load %arg1[%56] : memref<8xi32, #tpu.memory_space<smem>>
    %c6_i32_12 = arith.constant 6 : i32
    %58 = arith.addi %0, %c6_i32_12 : i32
    %59 = arith.index_cast %58 : i32 to index
    %60 = memref.load %arg2[%59] : memref<8xi32, #tpu.memory_space<smem>>
    %c6_i32_13 = arith.constant 6 : i32
    %61 = arith.addi %0, %c6_i32_13 : i32
    %62 = arith.index_cast %61 : i32 to index
    %63 = memref.load %arg3[%62] : memref<8xi32, #tpu.memory_space<smem>>
    %c7_i32 = arith.constant 7 : i32
    %64 = arith.addi %0, %c7_i32 : i32
    %65 = arith.index_cast %64 : i32 to index
    %66 = memref.load %arg1[%65] : memref<8xi32, #tpu.memory_space<smem>>
    %c7_i32_14 = arith.constant 7 : i32
    %67 = arith.addi %0, %c7_i32_14 : i32
    %68 = arith.index_cast %67 : i32 to index
    %69 = memref.load %arg2[%68] : memref<8xi32, #tpu.memory_space<smem>>
    %c7_i32_15 = arith.constant 7 : i32
    %70 = arith.addi %0, %c7_i32_15 : i32
    %71 = arith.index_cast %70 : i32 to index
    %72 = memref.load %arg3[%71] : memref<8xi32, #tpu.memory_space<smem>>
    %c0_i32_16 = arith.constant 0 : i32
    %c0_i32_17 = arith.constant 0 : i32
    %c0_i32_18 = arith.constant 0 : i32
    %73 = tpu.memref_slice %arg4[%3, %c0_i32_18] : memref<64x128xf32, #tpu.memory_space<any>> -> memref<1x128xf32, #tpu.memory_space<any>>
    %c0_i32_19 = arith.constant 0 : i32
    %c0_i32_20 = arith.constant 0 : i32
    %74 = tpu.memref_slice %arg8[%c0_i32_19, %c0_i32_20] : memref<8x128xf32, #tpu.memory_space<vmem>> -> memref<1x128xf32, #tpu.memory_space<vmem>>
    %75 = tpu.memref_slice %arg14[%c0_i32_16, %c0_i32_17] : memref<8x6x!tpu.dma_semaphore, #tpu.memory_space<semaphore_mem>> -> memref<1x1x!tpu.dma_semaphore, #tpu.memory_space<semaphore_mem>>
    %76 = tpu.memref_squeeze %75 : memref<1x1x!tpu.dma_semaphore, #tpu.memory_space<semaphore_mem>> -> memref<!tpu.dma_semaphore, #tpu.memory_space<semaphore_mem>>
    tpu.enqueue_dma source(%73 : memref<1x128xf32, #tpu.memory_space<any>>) target(%74 : memref<1x128xf32, #tpu.memory_space<vmem>>) target_semaphore(%76 : memref<!tpu.dma_semaphore, #tpu.memory_space<semaphore_mem>>)
    %c0_i32_21 = arith.constant 0 : i32
    %c1_i32_22 = arith.constant 1 : i32
    %c0_i32_23 = arith.constant 0 : i32
    %77 = tpu.memref_slice %arg5[%6, %c0_i32_23] : memref<16x128xf32, #tpu.memory_space<any>> -> memref<1x128xf32, #tpu.memory_space<any>>
    %c0_i32_24 = arith.constant 0 : i32
    %c0_i32_25 = arith.constant 0 : i32
    %78 = tpu.memref_slice %arg9[%c0_i32_24, %c0_i32_25] : memref<8x128xf32, #tpu.memory_space<vmem>> -> memref<1x128xf32, #tpu.memory_space<vmem>>
    %79 = tpu.memref_slice %arg14[%c0_i32_21, %c1_i32_22] : memref<8x6x!tpu.dma_semaphore, #tpu.memory_space<semaphore_mem>> -> memref<1x1x!tpu.dma_semaphore, #tpu.memory_space<semaphore_mem>>
    %80 = tpu.memref_squeeze %79 : memref<1x1x!tpu.dma_semaphore, #tpu.memory_space<semaphore_mem>> -> memref<!tpu.dma_semaphore, #tpu.memory_space<semaphore_mem>>
    tpu.enqueue_dma source(%77 : memref<1x128xf32, #tpu.memory_space<any>>) target(%78 : memref<1x128xf32, #tpu.memory_space<vmem>>) target_semaphore(%80 : memref<!tpu.dma_semaphore, #tpu.memory_space<semaphore_mem>>)
    %c0_i32_26 = arith.constant 0 : i32
    %c2_i32_27 = arith.constant 2 : i32
    %c0_i32_28 = arith.constant 0 : i32
    %81 = tpu.memref_slice %arg4[%9, %c0_i32_28] : memref<64x128xf32, #tpu.memory_space<any>> -> memref<1x128xf32, #tpu.memory_space<any>>
    %c0_i32_29 = arith.constant 0 : i32
    %c0_i32_30 = arith.constant 0 : i32
    %82 = tpu.memref_slice %arg10[%c0_i32_29, %c0_i32_30] : memref<8x128xf32, #tpu.memory_space<vmem>> -> memref<1x128xf32, #tpu.memory_space<vmem>>
    %83 = tpu.memref_slice %arg14[%c0_i32_26, %c2_i32_27] : memref<8x6x!tpu.dma_semaphore, #tpu.memory_space<semaphore_mem>> -> memref<1x1x!tpu.dma_semaphore, #tpu.memory_space<semaphore_mem>>
    %84 = tpu.memref_squeeze %83 : memref<1x1x!tpu.dma_semaphore, #tpu.memory_space<semaphore_mem>> -> memref<!tpu.dma_semaphore, #tpu.memory_space<semaphore_mem>>
    tpu.enqueue_dma source(%81 : memref<1x128xf32, #tpu.memory_space<any>>) target(%82 : memref<1x128xf32, #tpu.memory_space<vmem>>) target_semaphore(%84 : memref<!tpu.dma_semaphore, #tpu.memory_space<semaphore_mem>>)
    %c0_i32_31 = arith.constant 0 : i32
    %c3_i32_32 = arith.constant 3 : i32
    %c0_i32_33 = arith.constant 0 : i32
    %85 = tpu.memref_slice %arg6[%3, %c0_i32_33] : memref<64x1xf32, #tpu.memory_space<any>> -> memref<1x1xf32, #tpu.memory_space<any>>
    %c0_i32_34 = arith.constant 0 : i32
    %c0_i32_35 = arith.constant 0 : i32
    %86 = tpu.memref_slice %arg11[%c0_i32_34, %c0_i32_35] : memref<8x1xf32, #tpu.memory_space<vmem>> -> memref<1x1xf32, #tpu.memory_space<vmem>>
    %87 = tpu.memref_slice %arg14[%c0_i32_31, %c3_i32_32] : memref<8x6x!tpu.dma_semaphore, #tpu.memory_space<semaphore_mem>> -> memref<1x1x!tpu.dma_semaphore, #tpu.memory_space<semaphore_mem>>
    %88 = tpu.memref_squeeze %87 : memref<1x1x!tpu.dma_semaphore, #tpu.memory_space<semaphore_mem>> -> memref<!tpu.dma_semaphore, #tpu.memory_space<semaphore_mem>>
    tpu.enqueue_dma source(%85 : memref<1x1xf32, #tpu.memory_space<any>>) target(%86 : memref<1x1xf32, #tpu.memory_space<vmem>>) target_semaphore(%88 : memref<!tpu.dma_semaphore, #tpu.memory_space<semaphore_mem>>)
    %c0_i32_36 = arith.constant 0 : i32
    %c4_i32_37 = arith.constant 4 : i32
    %c0_i32_38 = arith.constant 0 : i32
    %89 = tpu.memref_slice %arg7[%6, %c0_i32_38] : memref<16x1xf32, #tpu.memory_space<any>> -> memref<1x1xf32, #tpu.memory_space<any>>
    %c0_i32_39 = arith.constant 0 : i32
    %c0_i32_40 = arith.constant 0 : i32
    %90 = tpu.memref_slice %arg12[%c0_i32_39, %c0_i32_40] : memref<8x1xf32, #tpu.memory_space<vmem>> -> memref<1x1xf32, #tpu.memory_space<vmem>>
    %91 = tpu.memref_slice %arg14[%c0_i32_36, %c4_i32_37] : memref<8x6x!tpu.dma_semaphore, #tpu.memory_space<semaphore_mem>> -> memref<1x1x!tpu.dma_semaphore, #tpu.memory_space<semaphore_mem>>
    %92 = tpu.memref_squeeze %91 : memref<1x1x!tpu.dma_semaphore, #tpu.memory_space<semaphore_mem>> -> memref<!tpu.dma_semaphore, #tpu.memory_space<semaphore_mem>>
    tpu.enqueue_dma source(%89 : memref<1x1xf32, #tpu.memory_space<any>>) target(%90 : memref<1x1xf32, #tpu.memory_space<vmem>>) target_semaphore(%92 : memref<!tpu.dma_semaphore, #tpu.memory_space<semaphore_mem>>)
    %c0_i32_41 = arith.constant 0 : i32
    %c5_i32_42 = arith.constant 5 : i32
    %c0_i32_43 = arith.constant 0 : i32
    %93 = tpu.memref_slice %arg6[%9, %c0_i32_43] : memref<64x1xf32, #tpu.memory_space<any>> -> memref<1x1xf32, #tpu.memory_space<any>>
    %c0_i32_44 = arith.constant 0 : i32
    %c0_i32_45 = arith.constant 0 : i32
    %94 = tpu.memref_slice %arg13[%c0_i32_44, %c0_i32_45] : memref<8x1xf32, #tpu.memory_space<vmem>> -> memref<1x1xf32, #tpu.memory_space<vmem>>
    %95 = tpu.memref_slice %arg14[%c0_i32_41, %c5_i32_42] : memref<8x6x!tpu.dma_semaphore, #tpu.memory_space<semaphore_mem>> -> memref<1x1x!tpu.dma_semaphore, #tpu.memory_space<semaphore_mem>>
    %96 = tpu.memref_squeeze %95 : memref<1x1x!tpu.dma_semaphore, #tpu.memory_space<semaphore_mem>> -> memref<!tpu.dma_semaphore, #tpu.memory_space<semaphore_mem>>
    tpu.enqueue_dma source(%93 : memref<1x1xf32, #tpu.memory_space<any>>) target(%94 : memref<1x1xf32, #tpu.memory_space<vmem>>) target_semaphore(%96 : memref<!tpu.dma_semaphore, #tpu.memory_space<semaphore_mem>>)
    %c1_i32_46 = arith.constant 1 : i32
    %c0_i32_47 = arith.constant 0 : i32
    %c0_i32_48 = arith.constant 0 : i32
    %97 = tpu.memref_slice %arg4[%12, %c0_i32_48] : memref<64x128xf32, #tpu.memory_space<any>> -> memref<1x128xf32, #tpu.memory_space<any>>
    %c1_i32_49 = arith.constant 1 : i32
    %c0_i32_50 = arith.constant 0 : i32
    %98 = tpu.memref_slice %arg8[%c1_i32_49, %c0_i32_50] : memref<8x128xf32, #tpu.memory_space<vmem>> -> memref<1x128xf32, #tpu.memory_space<vmem>>
    %99 = tpu.memref_slice %arg14[%c1_i32_46, %c0_i32_47] : memref<8x6x!tpu.dma_semaphore, #tpu.memory_space<semaphore_mem>> -> memref<1x1x!tpu.dma_semaphore, #tpu.memory_space<semaphore_mem>>
    %100 = tpu.memref_squeeze %99 : memref<1x1x!tpu.dma_semaphore, #tpu.memory_space<semaphore_mem>> -> memref<!tpu.dma_semaphore, #tpu.memory_space<semaphore_mem>>
    tpu.enqueue_dma source(%97 : memref<1x128xf32, #tpu.memory_space<any>>) target(%98 : memref<1x128xf32, #tpu.memory_space<vmem>>) target_semaphore(%100 : memref<!tpu.dma_semaphore, #tpu.memory_space<semaphore_mem>>)
    %c1_i32_51 = arith.constant 1 : i32
    %c1_i32_52 = arith.constant 1 : i32
    %c0_i32_53 = arith.constant 0 : i32
    %101 = tpu.memref_slice %arg5[%15, %c0_i32_53] : memref<16x128xf32, #tpu.memory_space<any>> -> memref<1x128xf32, #tpu.memory_space<any>>
    %c1_i32_54 = arith.constant 1 : i32
    %c0_i32_55 = arith.constant 0 : i32
    %102 = tpu.memref_slice %arg9[%c1_i32_54, %c0_i32_55] : memref<8x128xf32, #tpu.memory_space<vmem>> -> memref<1x128xf32, #tpu.memory_space<vmem>>
    %103 = tpu.memref_slice %arg14[%c1_i32_51, %c1_i32_52] : memref<8x6x!tpu.dma_semaphore, #tpu.memory_space<semaphore_mem>> -> memref<1x1x!tpu.dma_semaphore, #tpu.memory_space<semaphore_mem>>
    %104 = tpu.memref_squeeze %103 : memref<1x1x!tpu.dma_semaphore, #tpu.memory_space<semaphore_mem>> -> memref<!tpu.dma_semaphore, #tpu.memory_space<semaphore_mem>>
    tpu.enqueue_dma source(%101 : memref<1x128xf32, #tpu.memory_space<any>>) target(%102 : memref<1x128xf32, #tpu.memory_space<vmem>>) target_semaphore(%104 : memref<!tpu.dma_semaphore, #tpu.memory_space<semaphore_mem>>)
    %c1_i32_56 = arith.constant 1 : i32
    %c2_i32_57 = arith.constant 2 : i32
    %c0_i32_58 = arith.constant 0 : i32
    %105 = tpu.memref_slice %arg4[%18, %c0_i32_58] : memref<64x128xf32, #tpu.memory_space<any>> -> memref<1x128xf32, #tpu.memory_space<any>>
    %c1_i32_59 = arith.constant 1 : i32
    %c0_i32_60 = arith.constant 0 : i32
    %106 = tpu.memref_slice %arg10[%c1_i32_59, %c0_i32_60] : memref<8x128xf32, #tpu.memory_space<vmem>> -> memref<1x128xf32, #tpu.memory_space<vmem>>
    %107 = tpu.memref_slice %arg14[%c1_i32_56, %c2_i32_57] : memref<8x6x!tpu.dma_semaphore, #tpu.memory_space<semaphore_mem>> -> memref<1x1x!tpu.dma_semaphore, #tpu.memory_space<semaphore_mem>>
    %108 = tpu.memref_squeeze %107 : memref<1x1x!tpu.dma_semaphore, #tpu.memory_space<semaphore_mem>> -> memref<!tpu.dma_semaphore, #tpu.memory_space<semaphore_mem>>
    tpu.enqueue_dma source(%105 : memref<1x128xf32, #tpu.memory_space<any>>) target(%106 : memref<1x128xf32, #tpu.memory_space<vmem>>) target_semaphore(%108 : memref<!tpu.dma_semaphore, #tpu.memory_space<semaphore_mem>>)
    %c1_i32_61 = arith.constant 1 : i32
    %c3_i32_62 = arith.constant 3 : i32
    %c0_i32_63 = arith.constant 0 : i32
    %109 = tpu.memref_slice %arg6[%12, %c0_i32_63] : memref<64x1xf32, #tpu.memory_space<any>> -> memref<1x1xf32, #tpu.memory_space<any>>
    %c1_i32_64 = arith.constant 1 : i32
    %c0_i32_65 = arith.constant 0 : i32
    %110 = tpu.memref_slice %arg11[%c1_i32_64, %c0_i32_65] : memref<8x1xf32, #tpu.memory_space<vmem>> -> memref<1x1xf32, #tpu.memory_space<vmem>>
    %111 = tpu.memref_slice %arg14[%c1_i32_61, %c3_i32_62] : memref<8x6x!tpu.dma_semaphore, #tpu.memory_space<semaphore_mem>> -> memref<1x1x!tpu.dma_semaphore, #tpu.memory_space<semaphore_mem>>
    %112 = tpu.memref_squeeze %111 : memref<1x1x!tpu.dma_semaphore, #tpu.memory_space<semaphore_mem>> -> memref<!tpu.dma_semaphore, #tpu.memory_space<semaphore_mem>>
    tpu.enqueue_dma source(%109 : memref<1x1xf32, #tpu.memory_space<any>>) target(%110 : memref<1x1xf32, #tpu.memory_space<vmem>>) target_semaphore(%112 : memref<!tpu.dma_semaphore, #tpu.memory_space<semaphore_mem>>)
    %c1_i32_66 = arith.constant 1 : i32
    %c4_i32_67 = arith.constant 4 : i32
    %c0_i32_68 = arith.constant 0 : i32
    %113 = tpu.memref_slice %arg7[%15, %c0_i32_68] : memref<16x1xf32, #tpu.memory_space<any>> -> memref<1x1xf32, #tpu.memory_space<any>>
    %c1_i32_69 = arith.constant 1 : i32
    %c0_i32_70 = arith.constant 0 : i32
    %114 = tpu.memref_slice %arg12[%c1_i32_69, %c0_i32_70] : memref<8x1xf32, #tpu.memory_space<vmem>> -> memref<1x1xf32, #tpu.memory_space<vmem>>
    %115 = tpu.memref_slice %arg14[%c1_i32_66, %c4_i32_67] : memref<8x6x!tpu.dma_semaphore, #tpu.memory_space<semaphore_mem>> -> memref<1x1x!tpu.dma_semaphore, #tpu.memory_space<semaphore_mem>>
    %116 = tpu.memref_squeeze %115 : memref<1x1x!tpu.dma_semaphore, #tpu.memory_space<semaphore_mem>> -> memref<!tpu.dma_semaphore, #tpu.memory_space<semaphore_mem>>
    tpu.enqueue_dma source(%113 : memref<1x1xf32, #tpu.memory_space<any>>) target(%114 : memref<1x1xf32, #tpu.memory_space<vmem>>) target_semaphore(%116 : memref<!tpu.dma_semaphore, #tpu.memory_space<semaphore_mem>>)
    %c1_i32_71 = arith.constant 1 : i32
    %c5_i32_72 = arith.constant 5 : i32
    %c0_i32_73 = arith.constant 0 : i32
    %117 = tpu.memref_slice %arg6[%18, %c0_i32_73] : memref<64x1xf32, #tpu.memory_space<any>> -> memref<1x1xf32, #tpu.memory_space<any>>
    %c1_i32_74 = arith.constant 1 : i32
    %c0_i32_75 = arith.constant 0 : i32
    %118 = tpu.memref_slice %arg13[%c1_i32_74, %c0_i32_75] : memref<8x1xf32, #tpu.memory_space<vmem>> -> memref<1x1xf32, #tpu.memory_space<vmem>>
    %119 = tpu.memref_slice %arg14[%c1_i32_71, %c5_i32_72] : memref<8x6x!tpu.dma_semaphore, #tpu.memory_space<semaphore_mem>> -> memref<1x1x!tpu.dma_semaphore, #tpu.memory_space<semaphore_mem>>
    %120 = tpu.memref_squeeze %119 : memref<1x1x!tpu.dma_semaphore, #tpu.memory_space<semaphore_mem>> -> memref<!tpu.dma_semaphore, #tpu.memory_space<semaphore_mem>>
    tpu.enqueue_dma source(%117 : memref<1x1xf32, #tpu.memory_space<any>>) target(%118 : memref<1x1xf32, #tpu.memory_space<vmem>>) target_semaphore(%120 : memref<!tpu.dma_semaphore, #tpu.memory_space<semaphore_mem>>)
    %c2_i32_76 = arith.constant 2 : i32
    %c0_i32_77 = arith.constant 0 : i32
    %c0_i32_78 = arith.constant 0 : i32
    %121 = tpu.memref_slice %arg4[%21, %c0_i32_78] : memref<64x128xf32, #tpu.memory_space<any>> -> memref<1x128xf32, #tpu.memory_space<any>>
    %c2_i32_79 = arith.constant 2 : i32
    %c0_i32_80 = arith.constant 0 : i32
    %122 = tpu.memref_slice %arg8[%c2_i32_79, %c0_i32_80] : memref<8x128xf32, #tpu.memory_space<vmem>> -> memref<1x128xf32, #tpu.memory_space<vmem>>
    %123 = tpu.memref_slice %arg14[%c2_i32_76, %c0_i32_77] : memref<8x6x!tpu.dma_semaphore, #tpu.memory_space<semaphore_mem>> -> memref<1x1x!tpu.dma_semaphore, #tpu.memory_space<semaphore_mem>>
    %124 = tpu.memref_squeeze %123 : memref<1x1x!tpu.dma_semaphore, #tpu.memory_space<semaphore_mem>> -> memref<!tpu.dma_semaphore, #tpu.memory_space<semaphore_mem>>
    tpu.enqueue_dma source(%121 : memref<1x128xf32, #tpu.memory_space<any>>) target(%122 : memref<1x128xf32, #tpu.memory_space<vmem>>) target_semaphore(%124 : memref<!tpu.dma_semaphore, #tpu.memory_space<semaphore_mem>>)
    %c2_i32_81 = arith.constant 2 : i32
    %c1_i32_82 = arith.constant 1 : i32
    %c0_i32_83 = arith.constant 0 : i32
    %125 = tpu.memref_slice %arg5[%24, %c0_i32_83] : memref<16x128xf32, #tpu.memory_space<any>> -> memref<1x128xf32, #tpu.memory_space<any>>
    %c2_i32_84 = arith.constant 2 : i32
    %c0_i32_85 = arith.constant 0 : i32
    %126 = tpu.memref_slice %arg9[%c2_i32_84, %c0_i32_85] : memref<8x128xf32, #tpu.memory_space<vmem>> -> memref<1x128xf32, #tpu.memory_space<vmem>>
    %127 = tpu.memref_slice %arg14[%c2_i32_81, %c1_i32_82] : memref<8x6x!tpu.dma_semaphore, #tpu.memory_space<semaphore_mem>> -> memref<1x1x!tpu.dma_semaphore, #tpu.memory_space<semaphore_mem>>
    %128 = tpu.memref_squeeze %127 : memref<1x1x!tpu.dma_semaphore, #tpu.memory_space<semaphore_mem>> -> memref<!tpu.dma_semaphore, #tpu.memory_space<semaphore_mem>>
    tpu.enqueue_dma source(%125 : memref<1x128xf32, #tpu.memory_space<any>>) target(%126 : memref<1x128xf32, #tpu.memory_space<vmem>>) target_semaphore(%128 : memref<!tpu.dma_semaphore, #tpu.memory_space<semaphore_mem>>)
    %c2_i32_86 = arith.constant 2 : i32
    %c2_i32_87 = arith.constant 2 : i32
    %c0_i32_88 = arith.constant 0 : i32
    %129 = tpu.memref_slice %arg4[%27, %c0_i32_88] : memref<64x128xf32, #tpu.memory_space<any>> -> memref<1x128xf32, #tpu.memory_space<any>>
    %c2_i32_89 = arith.constant 2 : i32
    %c0_i32_90 = arith.constant 0 : i32
    %130 = tpu.memref_slice %arg10[%c2_i32_89, %c0_i32_90] : memref<8x128xf32, #tpu.memory_space<vmem>> -> memref<1x128xf32, #tpu.memory_space<vmem>>
    %131 = tpu.memref_slice %arg14[%c2_i32_86, %c2_i32_87] : memref<8x6x!tpu.dma_semaphore, #tpu.memory_space<semaphore_mem>> -> memref<1x1x!tpu.dma_semaphore, #tpu.memory_space<semaphore_mem>>
    %132 = tpu.memref_squeeze %131 : memref<1x1x!tpu.dma_semaphore, #tpu.memory_space<semaphore_mem>> -> memref<!tpu.dma_semaphore, #tpu.memory_space<semaphore_mem>>
    tpu.enqueue_dma source(%129 : memref<1x128xf32, #tpu.memory_space<any>>) target(%130 : memref<1x128xf32, #tpu.memory_space<vmem>>) target_semaphore(%132 : memref<!tpu.dma_semaphore, #tpu.memory_space<semaphore_mem>>)
    %c2_i32_91 = arith.constant 2 : i32
    %c3_i32_92 = arith.constant 3 : i32
    %c0_i32_93 = arith.constant 0 : i32
    %133 = tpu.memref_slice %arg6[%21, %c0_i32_93] : memref<64x1xf32, #tpu.memory_space<any>> -> memref<1x1xf32, #tpu.memory_space<any>>
    %c2_i32_94 = arith.constant 2 : i32
    %c0_i32_95 = arith.constant 0 : i32
    %134 = tpu.memref_slice %arg11[%c2_i32_94, %c0_i32_95] : memref<8x1xf32, #tpu.memory_space<vmem>> -> memref<1x1xf32, #tpu.memory_space<vmem>>
    %135 = tpu.memref_slice %arg14[%c2_i32_91, %c3_i32_92] : memref<8x6x!tpu.dma_semaphore, #tpu.memory_space<semaphore_mem>> -> memref<1x1x!tpu.dma_semaphore, #tpu.memory_space<semaphore_mem>>
    %136 = tpu.memref_squeeze %135 : memref<1x1x!tpu.dma_semaphore, #tpu.memory_space<semaphore_mem>> -> memref<!tpu.dma_semaphore, #tpu.memory_space<semaphore_mem>>
    tpu.enqueue_dma source(%133 : memref<1x1xf32, #tpu.memory_space<any>>) target(%134 : memref<1x1xf32, #tpu.memory_space<vmem>>) target_semaphore(%136 : memref<!tpu.dma_semaphore, #tpu.memory_space<semaphore_mem>>)
    %c2_i32_96 = arith.constant 2 : i32
    %c4_i32_97 = arith.constant 4 : i32
    %c0_i32_98 = arith.constant 0 : i32
    %137 = tpu.memref_slice %arg7[%24, %c0_i32_98] : memref<16x1xf32, #tpu.memory_space<any>> -> memref<1x1xf32, #tpu.memory_space<any>>
    %c2_i32_99 = arith.constant 2 : i32
    %c0_i32_100 = arith.constant 0 : i32
    %138 = tpu.memref_slice %arg12[%c2_i32_99, %c0_i32_100] : memref<8x1xf32, #tpu.memory_space<vmem>> -> memref<1x1xf32, #tpu.memory_space<vmem>>
    %139 = tpu.memref_slice %arg14[%c2_i32_96, %c4_i32_97] : memref<8x6x!tpu.dma_semaphore, #tpu.memory_space<semaphore_mem>> -> memref<1x1x!tpu.dma_semaphore, #tpu.memory_space<semaphore_mem>>
    %140 = tpu.memref_squeeze %139 : memref<1x1x!tpu.dma_semaphore, #tpu.memory_space<semaphore_mem>> -> memref<!tpu.dma_semaphore, #tpu.memory_space<semaphore_mem>>
    tpu.enqueue_dma source(%137 : memref<1x1xf32, #tpu.memory_space<any>>) target(%138 : memref<1x1xf32, #tpu.memory_space<vmem>>) target_semaphore(%140 : memref<!tpu.dma_semaphore, #tpu.memory_space<semaphore_mem>>)
    %c2_i32_101 = arith.constant 2 : i32
    %c5_i32_102 = arith.constant 5 : i32
    %c0_i32_103 = arith.constant 0 : i32
    %141 = tpu.memref_slice %arg6[%27, %c0_i32_103] : memref<64x1xf32, #tpu.memory_space<any>> -> memref<1x1xf32, #tpu.memory_space<any>>
    %c2_i32_104 = arith.constant 2 : i32
    %c0_i32_105 = arith.constant 0 : i32
    %142 = tpu.memref_slice %arg13[%c2_i32_104, %c0_i32_105] : memref<8x1xf32, #tpu.memory_space<vmem>> -> memref<1x1xf32, #tpu.memory_space<vmem>>
    %143 = tpu.memref_slice %arg14[%c2_i32_101, %c5_i32_102] : memref<8x6x!tpu.dma_semaphore, #tpu.memory_space<semaphore_mem>> -> memref<1x1x!tpu.dma_semaphore, #tpu.memory_space<semaphore_mem>>
    %144 = tpu.memref_squeeze %143 : memref<1x1x!tpu.dma_semaphore, #tpu.memory_space<semaphore_mem>> -> memref<!tpu.dma_semaphore, #tpu.memory_space<semaphore_mem>>
    tpu.enqueue_dma source(%141 : memref<1x1xf32, #tpu.memory_space<any>>) target(%142 : memref<1x1xf32, #tpu.memory_space<vmem>>) target_semaphore(%144 : memref<!tpu.dma_semaphore, #tpu.memory_space<semaphore_mem>>)
    %c3_i32_106 = arith.constant 3 : i32
    %c0_i32_107 = arith.constant 0 : i32
    %c0_i32_108 = arith.constant 0 : i32
    %145 = tpu.memref_slice %arg4[%30, %c0_i32_108] : memref<64x128xf32, #tpu.memory_space<any>> -> memref<1x128xf32, #tpu.memory_space<any>>
    %c3_i32_109 = arith.constant 3 : i32
    %c0_i32_110 = arith.constant 0 : i32
    %146 = tpu.memref_slice %arg8[%c3_i32_109, %c0_i32_110] : memref<8x128xf32, #tpu.memory_space<vmem>> -> memref<1x128xf32, #tpu.memory_space<vmem>>
    %147 = tpu.memref_slice %arg14[%c3_i32_106, %c0_i32_107] : memref<8x6x!tpu.dma_semaphore, #tpu.memory_space<semaphore_mem>> -> memref<1x1x!tpu.dma_semaphore, #tpu.memory_space<semaphore_mem>>
    %148 = tpu.memref_squeeze %147 : memref<1x1x!tpu.dma_semaphore, #tpu.memory_space<semaphore_mem>> -> memref<!tpu.dma_semaphore, #tpu.memory_space<semaphore_mem>>
    tpu.enqueue_dma source(%145 : memref<1x128xf32, #tpu.memory_space<any>>) target(%146 : memref<1x128xf32, #tpu.memory_space<vmem>>) target_semaphore(%148 : memref<!tpu.dma_semaphore, #tpu.memory_space<semaphore_mem>>)
    %c3_i32_111 = arith.constant 3 : i32
    %c1_i32_112 = arith.constant 1 : i32
    %c0_i32_113 = arith.constant 0 : i32
    %149 = tpu.memref_slice %arg5[%33, %c0_i32_113] : memref<16x128xf32, #tpu.memory_space<any>> -> memref<1x128xf32, #tpu.memory_space<any>>
    %c3_i32_114 = arith.constant 3 : i32
    %c0_i32_115 = arith.constant 0 : i32
    %150 = tpu.memref_slice %arg9[%c3_i32_114, %c0_i32_115] : memref<8x128xf32, #tpu.memory_space<vmem>> -> memref<1x128xf32, #tpu.memory_space<vmem>>
    %151 = tpu.memref_slice %arg14[%c3_i32_111, %c1_i32_112] : memref<8x6x!tpu.dma_semaphore, #tpu.memory_space<semaphore_mem>> -> memref<1x1x!tpu.dma_semaphore, #tpu.memory_space<semaphore_mem>>
    %152 = tpu.memref_squeeze %151 : memref<1x1x!tpu.dma_semaphore, #tpu.memory_space<semaphore_mem>> -> memref<!tpu.dma_semaphore, #tpu.memory_space<semaphore_mem>>
    tpu.enqueue_dma source(%149 : memref<1x128xf32, #tpu.memory_space<any>>) target(%150 : memref<1x128xf32, #tpu.memory_space<vmem>>) target_semaphore(%152 : memref<!tpu.dma_semaphore, #tpu.memory_space<semaphore_mem>>)
    %c3_i32_116 = arith.constant 3 : i32
    %c2_i32_117 = arith.constant 2 : i32
    %c0_i32_118 = arith.constant 0 : i32
    %153 = tpu.memref_slice %arg4[%36, %c0_i32_118] : memref<64x128xf32, #tpu.memory_space<any>> -> memref<1x128xf32, #tpu.memory_space<any>>
    %c3_i32_119 = arith.constant 3 : i32
    %c0_i32_120 = arith.constant 0 : i32
    %154 = tpu.memref_slice %arg10[%c3_i32_119, %c0_i32_120] : memref<8x128xf32, #tpu.memory_space<vmem>> -> memref<1x128xf32, #tpu.memory_space<vmem>>
    %155 = tpu.memref_slice %arg14[%c3_i32_116, %c2_i32_117] : memref<8x6x!tpu.dma_semaphore, #tpu.memory_space<semaphore_mem>> -> memref<1x1x!tpu.dma_semaphore, #tpu.memory_space<semaphore_mem>>
    %156 = tpu.memref_squeeze %155 : memref<1x1x!tpu.dma_semaphore, #tpu.memory_space<semaphore_mem>> -> memref<!tpu.dma_semaphore, #tpu.memory_space<semaphore_mem>>
    tpu.enqueue_dma source(%153 : memref<1x128xf32, #tpu.memory_space<any>>) target(%154 : memref<1x128xf32, #tpu.memory_space<vmem>>) target_semaphore(%156 : memref<!tpu.dma_semaphore, #tpu.memory_space<semaphore_mem>>)
    %c3_i32_121 = arith.constant 3 : i32
    %c3_i32_122 = arith.constant 3 : i32
    %c0_i32_123 = arith.constant 0 : i32
    %157 = tpu.memref_slice %arg6[%30, %c0_i32_123] : memref<64x1xf32, #tpu.memory_space<any>> -> memref<1x1xf32, #tpu.memory_space<any>>
    %c3_i32_124 = arith.constant 3 : i32
    %c0_i32_125 = arith.constant 0 : i32
    %158 = tpu.memref_slice %arg11[%c3_i32_124, %c0_i32_125] : memref<8x1xf32, #tpu.memory_space<vmem>> -> memref<1x1xf32, #tpu.memory_space<vmem>>
    %159 = tpu.memref_slice %arg14[%c3_i32_121, %c3_i32_122] : memref<8x6x!tpu.dma_semaphore, #tpu.memory_space<semaphore_mem>> -> memref<1x1x!tpu.dma_semaphore, #tpu.memory_space<semaphore_mem>>
    %160 = tpu.memref_squeeze %159 : memref<1x1x!tpu.dma_semaphore, #tpu.memory_space<semaphore_mem>> -> memref<!tpu.dma_semaphore, #tpu.memory_space<semaphore_mem>>
    tpu.enqueue_dma source(%157 : memref<1x1xf32, #tpu.memory_space<any>>) target(%158 : memref<1x1xf32, #tpu.memory_space<vmem>>) target_semaphore(%160 : memref<!tpu.dma_semaphore, #tpu.memory_space<semaphore_mem>>)
    %c3_i32_126 = arith.constant 3 : i32
    %c4_i32_127 = arith.constant 4 : i32
    %c0_i32_128 = arith.constant 0 : i32
    %161 = tpu.memref_slice %arg7[%33, %c0_i32_128] : memref<16x1xf32, #tpu.memory_space<any>> -> memref<1x1xf32, #tpu.memory_space<any>>
    %c3_i32_129 = arith.constant 3 : i32
    %c0_i32_130 = arith.constant 0 : i32
    %162 = tpu.memref_slice %arg12[%c3_i32_129, %c0_i32_130] : memref<8x1xf32, #tpu.memory_space<vmem>> -> memref<1x1xf32, #tpu.memory_space<vmem>>
    %163 = tpu.memref_slice %arg14[%c3_i32_126, %c4_i32_127] : memref<8x6x!tpu.dma_semaphore, #tpu.memory_space<semaphore_mem>> -> memref<1x1x!tpu.dma_semaphore, #tpu.memory_space<semaphore_mem>>
    %164 = tpu.memref_squeeze %163 : memref<1x1x!tpu.dma_semaphore, #tpu.memory_space<semaphore_mem>> -> memref<!tpu.dma_semaphore, #tpu.memory_space<semaphore_mem>>
    tpu.enqueue_dma source(%161 : memref<1x1xf32, #tpu.memory_space<any>>) target(%162 : memref<1x1xf32, #tpu.memory_space<vmem>>) target_semaphore(%164 : memref<!tpu.dma_semaphore, #tpu.memory_space<semaphore_mem>>)
    %c3_i32_131 = arith.constant 3 : i32
    %c5_i32_132 = arith.constant 5 : i32
    %c0_i32_133 = arith.constant 0 : i32
    %165 = tpu.memref_slice %arg6[%36, %c0_i32_133] : memref<64x1xf32, #tpu.memory_space<any>> -> memref<1x1xf32, #tpu.memory_space<any>>
    %c3_i32_134 = arith.constant 3 : i32
    %c0_i32_135 = arith.constant 0 : i32
    %166 = tpu.memref_slice %arg13[%c3_i32_134, %c0_i32_135] : memref<8x1xf32, #tpu.memory_space<vmem>> -> memref<1x1xf32, #tpu.memory_space<vmem>>
    %167 = tpu.memref_slice %arg14[%c3_i32_131, %c5_i32_132] : memref<8x6x!tpu.dma_semaphore, #tpu.memory_space<semaphore_mem>> -> memref<1x1x!tpu.dma_semaphore, #tpu.memory_space<semaphore_mem>>
    %168 = tpu.memref_squeeze %167 : memref<1x1x!tpu.dma_semaphore, #tpu.memory_space<semaphore_mem>> -> memref<!tpu.dma_semaphore, #tpu.memory_space<semaphore_mem>>
    tpu.enqueue_dma source(%165 : memref<1x1xf32, #tpu.memory_space<any>>) target(%166 : memref<1x1xf32, #tpu.memory_space<vmem>>) target_semaphore(%168 : memref<!tpu.dma_semaphore, #tpu.memory_space<semaphore_mem>>)
    %c4_i32_136 = arith.constant 4 : i32
    %c0_i32_137 = arith.constant 0 : i32
    %c0_i32_138 = arith.constant 0 : i32
    %169 = tpu.memref_slice %arg4[%39, %c0_i32_138] : memref<64x128xf32, #tpu.memory_space<any>> -> memref<1x128xf32, #tpu.memory_space<any>>
    %c4_i32_139 = arith.constant 4 : i32
    %c0_i32_140 = arith.constant 0 : i32
    %170 = tpu.memref_slice %arg8[%c4_i32_139, %c0_i32_140] : memref<8x128xf32, #tpu.memory_space<vmem>> -> memref<1x128xf32, #tpu.memory_space<vmem>>
    %171 = tpu.memref_slice %arg14[%c4_i32_136, %c0_i32_137] : memref<8x6x!tpu.dma_semaphore, #tpu.memory_space<semaphore_mem>> -> memref<1x1x!tpu.dma_semaphore, #tpu.memory_space<semaphore_mem>>
    %172 = tpu.memref_squeeze %171 : memref<1x1x!tpu.dma_semaphore, #tpu.memory_space<semaphore_mem>> -> memref<!tpu.dma_semaphore, #tpu.memory_space<semaphore_mem>>
    tpu.enqueue_dma source(%169 : memref<1x128xf32, #tpu.memory_space<any>>) target(%170 : memref<1x128xf32, #tpu.memory_space<vmem>>) target_semaphore(%172 : memref<!tpu.dma_semaphore, #tpu.memory_space<semaphore_mem>>)
    %c4_i32_141 = arith.constant 4 : i32
    %c1_i32_142 = arith.constant 1 : i32
    %c0_i32_143 = arith.constant 0 : i32
    %173 = tpu.memref_slice %arg5[%42, %c0_i32_143] : memref<16x128xf32, #tpu.memory_space<any>> -> memref<1x128xf32, #tpu.memory_space<any>>
    %c4_i32_144 = arith.constant 4 : i32
    %c0_i32_145 = arith.constant 0 : i32
    %174 = tpu.memref_slice %arg9[%c4_i32_144, %c0_i32_145] : memref<8x128xf32, #tpu.memory_space<vmem>> -> memref<1x128xf32, #tpu.memory_space<vmem>>
    %175 = tpu.memref_slice %arg14[%c4_i32_141, %c1_i32_142] : memref<8x6x!tpu.dma_semaphore, #tpu.memory_space<semaphore_mem>> -> memref<1x1x!tpu.dma_semaphore, #tpu.memory_space<semaphore_mem>>
    %176 = tpu.memref_squeeze %175 : memref<1x1x!tpu.dma_semaphore, #tpu.memory_space<semaphore_mem>> -> memref<!tpu.dma_semaphore, #tpu.memory_space<semaphore_mem>>
    tpu.enqueue_dma source(%173 : memref<1x128xf32, #tpu.memory_space<any>>) target(%174 : memref<1x128xf32, #tpu.memory_space<vmem>>) target_semaphore(%176 : memref<!tpu.dma_semaphore, #tpu.memory_space<semaphore_mem>>)
    %c4_i32_146 = arith.constant 4 : i32
    %c2_i32_147 = arith.constant 2 : i32
    %c0_i32_148 = arith.constant 0 : i32
    %177 = tpu.memref_slice %arg4[%45, %c0_i32_148] : memref<64x128xf32, #tpu.memory_space<any>> -> memref<1x128xf32, #tpu.memory_space<any>>
    %c4_i32_149 = arith.constant 4 : i32
    %c0_i32_150 = arith.constant 0 : i32
    %178 = tpu.memref_slice %arg10[%c4_i32_149, %c0_i32_150] : memref<8x128xf32, #tpu.memory_space<vmem>> -> memref<1x128xf32, #tpu.memory_space<vmem>>
    %179 = tpu.memref_slice %arg14[%c4_i32_146, %c2_i32_147] : memref<8x6x!tpu.dma_semaphore, #tpu.memory_space<semaphore_mem>> -> memref<1x1x!tpu.dma_semaphore, #tpu.memory_space<semaphore_mem>>
    %180 = tpu.memref_squeeze %179 : memref<1x1x!tpu.dma_semaphore, #tpu.memory_space<semaphore_mem>> -> memref<!tpu.dma_semaphore, #tpu.memory_space<semaphore_mem>>
    tpu.enqueue_dma source(%177 : memref<1x128xf32, #tpu.memory_space<any>>) target(%178 : memref<1x128xf32, #tpu.memory_space<vmem>>) target_semaphore(%180 : memref<!tpu.dma_semaphore, #tpu.memory_space<semaphore_mem>>)
    %c4_i32_151 = arith.constant 4 : i32
    %c3_i32_152 = arith.constant 3 : i32
    %c0_i32_153 = arith.constant 0 : i32
    %181 = tpu.memref_slice %arg6[%39, %c0_i32_153] : memref<64x1xf32, #tpu.memory_space<any>> -> memref<1x1xf32, #tpu.memory_space<any>>
    %c4_i32_154 = arith.constant 4 : i32
    %c0_i32_155 = arith.constant 0 : i32
    %182 = tpu.memref_slice %arg11[%c4_i32_154, %c0_i32_155] : memref<8x1xf32, #tpu.memory_space<vmem>> -> memref<1x1xf32, #tpu.memory_space<vmem>>
    %183 = tpu.memref_slice %arg14[%c4_i32_151, %c3_i32_152] : memref<8x6x!tpu.dma_semaphore, #tpu.memory_space<semaphore_mem>> -> memref<1x1x!tpu.dma_semaphore, #tpu.memory_space<semaphore_mem>>
    %184 = tpu.memref_squeeze %183 : memref<1x1x!tpu.dma_semaphore, #tpu.memory_space<semaphore_mem>> -> memref<!tpu.dma_semaphore, #tpu.memory_space<semaphore_mem>>
    tpu.enqueue_dma source(%181 : memref<1x1xf32, #tpu.memory_space<any>>) target(%182 : memref<1x1xf32, #tpu.memory_space<vmem>>) target_semaphore(%184 : memref<!tpu.dma_semaphore, #tpu.memory_space<semaphore_mem>>)
    %c4_i32_156 = arith.constant 4 : i32
    %c4_i32_157 = arith.constant 4 : i32
    %c0_i32_158 = arith.constant 0 : i32
    %185 = tpu.memref_slice %arg7[%42, %c0_i32_158] : memref<16x1xf32, #tpu.memory_space<any>> -> memref<1x1xf32, #tpu.memory_space<any>>
    %c4_i32_159 = arith.constant 4 : i32
    %c0_i32_160 = arith.constant 0 : i32
    %186 = tpu.memref_slice %arg12[%c4_i32_159, %c0_i32_160] : memref<8x1xf32, #tpu.memory_space<vmem>> -> memref<1x1xf32, #tpu.memory_space<vmem>>
    %187 = tpu.memref_slice %arg14[%c4_i32_156, %c4_i32_157] : memref<8x6x!tpu.dma_semaphore, #tpu.memory_space<semaphore_mem>> -> memref<1x1x!tpu.dma_semaphore, #tpu.memory_space<semaphore_mem>>
    %188 = tpu.memref_squeeze %187 : memref<1x1x!tpu.dma_semaphore, #tpu.memory_space<semaphore_mem>> -> memref<!tpu.dma_semaphore, #tpu.memory_space<semaphore_mem>>
    tpu.enqueue_dma source(%185 : memref<1x1xf32, #tpu.memory_space<any>>) target(%186 : memref<1x1xf32, #tpu.memory_space<vmem>>) target_semaphore(%188 : memref<!tpu.dma_semaphore, #tpu.memory_space<semaphore_mem>>)
    %c4_i32_161 = arith.constant 4 : i32
    %c5_i32_162 = arith.constant 5 : i32
    %c0_i32_163 = arith.constant 0 : i32
    %189 = tpu.memref_slice %arg6[%45, %c0_i32_163] : memref<64x1xf32, #tpu.memory_space<any>> -> memref<1x1xf32, #tpu.memory_space<any>>
    %c4_i32_164 = arith.constant 4 : i32
    %c0_i32_165 = arith.constant 0 : i32
    %190 = tpu.memref_slice %arg13[%c4_i32_164, %c0_i32_165] : memref<8x1xf32, #tpu.memory_space<vmem>> -> memref<1x1xf32, #tpu.memory_space<vmem>>
    %191 = tpu.memref_slice %arg14[%c4_i32_161, %c5_i32_162] : memref<8x6x!tpu.dma_semaphore, #tpu.memory_space<semaphore_mem>> -> memref<1x1x!tpu.dma_semaphore, #tpu.memory_space<semaphore_mem>>
    %192 = tpu.memref_squeeze %191 : memref<1x1x!tpu.dma_semaphore, #tpu.memory_space<semaphore_mem>> -> memref<!tpu.dma_semaphore, #tpu.memory_space<semaphore_mem>>
    tpu.enqueue_dma source(%189 : memref<1x1xf32, #tpu.memory_space<any>>) target(%190 : memref<1x1xf32, #tpu.memory_space<vmem>>) target_semaphore(%192 : memref<!tpu.dma_semaphore, #tpu.memory_space<semaphore_mem>>)
    %c5_i32_166 = arith.constant 5 : i32
    %c0_i32_167 = arith.constant 0 : i32
    %c0_i32_168 = arith.constant 0 : i32
    %193 = tpu.memref_slice %arg4[%48, %c0_i32_168] : memref<64x128xf32, #tpu.memory_space<any>> -> memref<1x128xf32, #tpu.memory_space<any>>
    %c5_i32_169 = arith.constant 5 : i32
    %c0_i32_170 = arith.constant 0 : i32
    %194 = tpu.memref_slice %arg8[%c5_i32_169, %c0_i32_170] : memref<8x128xf32, #tpu.memory_space<vmem>> -> memref<1x128xf32, #tpu.memory_space<vmem>>
    %195 = tpu.memref_slice %arg14[%c5_i32_166, %c0_i32_167] : memref<8x6x!tpu.dma_semaphore, #tpu.memory_space<semaphore_mem>> -> memref<1x1x!tpu.dma_semaphore, #tpu.memory_space<semaphore_mem>>
    %196 = tpu.memref_squeeze %195 : memref<1x1x!tpu.dma_semaphore, #tpu.memory_space<semaphore_mem>> -> memref<!tpu.dma_semaphore, #tpu.memory_space<semaphore_mem>>
    tpu.enqueue_dma source(%193 : memref<1x128xf32, #tpu.memory_space<any>>) target(%194 : memref<1x128xf32, #tpu.memory_space<vmem>>) target_semaphore(%196 : memref<!tpu.dma_semaphore, #tpu.memory_space<semaphore_mem>>)
    %c5_i32_171 = arith.constant 5 : i32
    %c1_i32_172 = arith.constant 1 : i32
    %c0_i32_173 = arith.constant 0 : i32
    %197 = tpu.memref_slice %arg5[%51, %c0_i32_173] : memref<16x128xf32, #tpu.memory_space<any>> -> memref<1x128xf32, #tpu.memory_space<any>>
    %c5_i32_174 = arith.constant 5 : i32
    %c0_i32_175 = arith.constant 0 : i32
    %198 = tpu.memref_slice %arg9[%c5_i32_174, %c0_i32_175] : memref<8x128xf32, #tpu.memory_space<vmem>> -> memref<1x128xf32, #tpu.memory_space<vmem>>
    %199 = tpu.memref_slice %arg14[%c5_i32_171, %c1_i32_172] : memref<8x6x!tpu.dma_semaphore, #tpu.memory_space<semaphore_mem>> -> memref<1x1x!tpu.dma_semaphore, #tpu.memory_space<semaphore_mem>>
    %200 = tpu.memref_squeeze %199 : memref<1x1x!tpu.dma_semaphore, #tpu.memory_space<semaphore_mem>> -> memref<!tpu.dma_semaphore, #tpu.memory_space<semaphore_mem>>
    tpu.enqueue_dma source(%197 : memref<1x128xf32, #tpu.memory_space<any>>) target(%198 : memref<1x128xf32, #tpu.memory_space<vmem>>) target_semaphore(%200 : memref<!tpu.dma_semaphore, #tpu.memory_space<semaphore_mem>>)
    %c5_i32_176 = arith.constant 5 : i32
    %c2_i32_177 = arith.constant 2 : i32
    %c0_i32_178 = arith.constant 0 : i32
    %201 = tpu.memref_slice %arg4[%54, %c0_i32_178] : memref<64x128xf32, #tpu.memory_space<any>> -> memref<1x128xf32, #tpu.memory_space<any>>
    %c5_i32_179 = arith.constant 5 : i32
    %c0_i32_180 = arith.constant 0 : i32
    %202 = tpu.memref_slice %arg10[%c5_i32_179, %c0_i32_180] : memref<8x128xf32, #tpu.memory_space<vmem>> -> memref<1x128xf32, #tpu.memory_space<vmem>>
    %203 = tpu.memref_slice %arg14[%c5_i32_176, %c2_i32_177] : memref<8x6x!tpu.dma_semaphore, #tpu.memory_space<semaphore_mem>> -> memref<1x1x!tpu.dma_semaphore, #tpu.memory_space<semaphore_mem>>
    %204 = tpu.memref_squeeze %203 : memref<1x1x!tpu.dma_semaphore, #tpu.memory_space<semaphore_mem>> -> memref<!tpu.dma_semaphore, #tpu.memory_space<semaphore_mem>>
    tpu.enqueue_dma source(%201 : memref<1x128xf32, #tpu.memory_space<any>>) target(%202 : memref<1x128xf32, #tpu.memory_space<vmem>>) target_semaphore(%204 : memref<!tpu.dma_semaphore, #tpu.memory_space<semaphore_mem>>)
    %c5_i32_181 = arith.constant 5 : i32
    %c3_i32_182 = arith.constant 3 : i32
    %c0_i32_183 = arith.constant 0 : i32
    %205 = tpu.memref_slice %arg6[%48, %c0_i32_183] : memref<64x1xf32, #tpu.memory_space<any>> -> memref<1x1xf32, #tpu.memory_space<any>>
    %c5_i32_184 = arith.constant 5 : i32
    %c0_i32_185 = arith.constant 0 : i32
    %206 = tpu.memref_slice %arg11[%c5_i32_184, %c0_i32_185] : memref<8x1xf32, #tpu.memory_space<vmem>> -> memref<1x1xf32, #tpu.memory_space<vmem>>
    %207 = tpu.memref_slice %arg14[%c5_i32_181, %c3_i32_182] : memref<8x6x!tpu.dma_semaphore, #tpu.memory_space<semaphore_mem>> -> memref<1x1x!tpu.dma_semaphore, #tpu.memory_space<semaphore_mem>>
    %208 = tpu.memref_squeeze %207 : memref<1x1x!tpu.dma_semaphore, #tpu.memory_space<semaphore_mem>> -> memref<!tpu.dma_semaphore, #tpu.memory_space<semaphore_mem>>
    tpu.enqueue_dma source(%205 : memref<1x1xf32, #tpu.memory_space<any>>) target(%206 : memref<1x1xf32, #tpu.memory_space<vmem>>) target_semaphore(%208 : memref<!tpu.dma_semaphore, #tpu.memory_space<semaphore_mem>>)
    %c5_i32_186 = arith.constant 5 : i32
    %c4_i32_187 = arith.constant 4 : i32
    %c0_i32_188 = arith.constant 0 : i32
    %209 = tpu.memref_slice %arg7[%51, %c0_i32_188] : memref<16x1xf32, #tpu.memory_space<any>> -> memref<1x1xf32, #tpu.memory_space<any>>
    %c5_i32_189 = arith.constant 5 : i32
    %c0_i32_190 = arith.constant 0 : i32
    %210 = tpu.memref_slice %arg12[%c5_i32_189, %c0_i32_190] : memref<8x1xf32, #tpu.memory_space<vmem>> -> memref<1x1xf32, #tpu.memory_space<vmem>>
    %211 = tpu.memref_slice %arg14[%c5_i32_186, %c4_i32_187] : memref<8x6x!tpu.dma_semaphore, #tpu.memory_space<semaphore_mem>> -> memref<1x1x!tpu.dma_semaphore, #tpu.memory_space<semaphore_mem>>
    %212 = tpu.memref_squeeze %211 : memref<1x1x!tpu.dma_semaphore, #tpu.memory_space<semaphore_mem>> -> memref<!tpu.dma_semaphore, #tpu.memory_space<semaphore_mem>>
    tpu.enqueue_dma source(%209 : memref<1x1xf32, #tpu.memory_space<any>>) target(%210 : memref<1x1xf32, #tpu.memory_space<vmem>>) target_semaphore(%212 : memref<!tpu.dma_semaphore, #tpu.memory_space<semaphore_mem>>)
    %c5_i32_191 = arith.constant 5 : i32
    %c5_i32_192 = arith.constant 5 : i32
    %c0_i32_193 = arith.constant 0 : i32
    %213 = tpu.memref_slice %arg6[%54, %c0_i32_193] : memref<64x1xf32, #tpu.memory_space<any>> -> memref<1x1xf32, #tpu.memory_space<any>>
    %c5_i32_194 = arith.constant 5 : i32
    %c0_i32_195 = arith.constant 0 : i32
    %214 = tpu.memref_slice %arg13[%c5_i32_194, %c0_i32_195] : memref<8x1xf32, #tpu.memory_space<vmem>> -> memref<1x1xf32, #tpu.memory_space<vmem>>
    %215 = tpu.memref_slice %arg14[%c5_i32_191, %c5_i32_192] : memref<8x6x!tpu.dma_semaphore, #tpu.memory_space<semaphore_mem>> -> memref<1x1x!tpu.dma_semaphore, #tpu.memory_space<semaphore_mem>>
    %216 = tpu.memref_squeeze %215 : memref<1x1x!tpu.dma_semaphore, #tpu.memory_space<semaphore_mem>> -> memref<!tpu.dma_semaphore, #tpu.memory_space<semaphore_mem>>
    tpu.enqueue_dma source(%213 : memref<1x1xf32, #tpu.memory_space<any>>) target(%214 : memref<1x1xf32, #tpu.memory_space<vmem>>) target_semaphore(%216 : memref<!tpu.dma_semaphore, #tpu.memory_space<semaphore_mem>>)
    %c6_i32_196 = arith.constant 6 : i32
    %c0_i32_197 = arith.constant 0 : i32
    %c0_i32_198 = arith.constant 0 : i32
    %217 = tpu.memref_slice %arg4[%57, %c0_i32_198] : memref<64x128xf32, #tpu.memory_space<any>> -> memref<1x128xf32, #tpu.memory_space<any>>
    %c6_i32_199 = arith.constant 6 : i32
    %c0_i32_200 = arith.constant 0 : i32
    %218 = tpu.memref_slice %arg8[%c6_i32_199, %c0_i32_200] : memref<8x128xf32, #tpu.memory_space<vmem>> -> memref<1x128xf32, #tpu.memory_space<vmem>>
    %219 = tpu.memref_slice %arg14[%c6_i32_196, %c0_i32_197] : memref<8x6x!tpu.dma_semaphore, #tpu.memory_space<semaphore_mem>> -> memref<1x1x!tpu.dma_semaphore, #tpu.memory_space<semaphore_mem>>
    %220 = tpu.memref_squeeze %219 : memref<1x1x!tpu.dma_semaphore, #tpu.memory_space<semaphore_mem>> -> memref<!tpu.dma_semaphore, #tpu.memory_space<semaphore_mem>>
    tpu.enqueue_dma source(%217 : memref<1x128xf32, #tpu.memory_space<any>>) target(%218 : memref<1x128xf32, #tpu.memory_space<vmem>>) target_semaphore(%220 : memref<!tpu.dma_semaphore, #tpu.memory_space<semaphore_mem>>)
    %c6_i32_201 = arith.constant 6 : i32
    %c1_i32_202 = arith.constant 1 : i32
    %c0_i32_203 = arith.constant 0 : i32
    %221 = tpu.memref_slice %arg5[%60, %c0_i32_203] : memref<16x128xf32, #tpu.memory_space<any>> -> memref<1x128xf32, #tpu.memory_space<any>>
    %c6_i32_204 = arith.constant 6 : i32
    %c0_i32_205 = arith.constant 0 : i32
    %222 = tpu.memref_slice %arg9[%c6_i32_204, %c0_i32_205] : memref<8x128xf32, #tpu.memory_space<vmem>> -> memref<1x128xf32, #tpu.memory_space<vmem>>
    %223 = tpu.memref_slice %arg14[%c6_i32_201, %c1_i32_202] : memref<8x6x!tpu.dma_semaphore, #tpu.memory_space<semaphore_mem>> -> memref<1x1x!tpu.dma_semaphore, #tpu.memory_space<semaphore_mem>>
    %224 = tpu.memref_squeeze %223 : memref<1x1x!tpu.dma_semaphore, #tpu.memory_space<semaphore_mem>> -> memref<!tpu.dma_semaphore, #tpu.memory_space<semaphore_mem>>
    tpu.enqueue_dma source(%221 : memref<1x128xf32, #tpu.memory_space<any>>) target(%222 : memref<1x128xf32, #tpu.memory_space<vmem>>) target_semaphore(%224 : memref<!tpu.dma_semaphore, #tpu.memory_space<semaphore_mem>>)
    %c6_i32_206 = arith.constant 6 : i32
    %c2_i32_207 = arith.constant 2 : i32
    %c0_i32_208 = arith.constant 0 : i32
    %225 = tpu.memref_slice %arg4[%63, %c0_i32_208] : memref<64x128xf32, #tpu.memory_space<any>> -> memref<1x128xf32, #tpu.memory_space<any>>
    %c6_i32_209 = arith.constant 6 : i32
    %c0_i32_210 = arith.constant 0 : i32
    %226 = tpu.memref_slice %arg10[%c6_i32_209, %c0_i32_210] : memref<8x128xf32, #tpu.memory_space<vmem>> -> memref<1x128xf32, #tpu.memory_space<vmem>>
    %227 = tpu.memref_slice %arg14[%c6_i32_206, %c2_i32_207] : memref<8x6x!tpu.dma_semaphore, #tpu.memory_space<semaphore_mem>> -> memref<1x1x!tpu.dma_semaphore, #tpu.memory_space<semaphore_mem>>
    %228 = tpu.memref_squeeze %227 : memref<1x1x!tpu.dma_semaphore, #tpu.memory_space<semaphore_mem>> -> memref<!tpu.dma_semaphore, #tpu.memory_space<semaphore_mem>>
    tpu.enqueue_dma source(%225 : memref<1x128xf32, #tpu.memory_space<any>>) target(%226 : memref<1x128xf32, #tpu.memory_space<vmem>>) target_semaphore(%228 : memref<!tpu.dma_semaphore, #tpu.memory_space<semaphore_mem>>)
    %c6_i32_211 = arith.constant 6 : i32
    %c3_i32_212 = arith.constant 3 : i32
    %c0_i32_213 = arith.constant 0 : i32
    %229 = tpu.memref_slice %arg6[%57, %c0_i32_213] : memref<64x1xf32, #tpu.memory_space<any>> -> memref<1x1xf32, #tpu.memory_space<any>>
    %c6_i32_214 = arith.constant 6 : i32
    %c0_i32_215 = arith.constant 0 : i32
    %230 = tpu.memref_slice %arg11[%c6_i32_214, %c0_i32_215] : memref<8x1xf32, #tpu.memory_space<vmem>> -> memref<1x1xf32, #tpu.memory_space<vmem>>
    %231 = tpu.memref_slice %arg14[%c6_i32_211, %c3_i32_212] : memref<8x6x!tpu.dma_semaphore, #tpu.memory_space<semaphore_mem>> -> memref<1x1x!tpu.dma_semaphore, #tpu.memory_space<semaphore_mem>>
    %232 = tpu.memref_squeeze %231 : memref<1x1x!tpu.dma_semaphore, #tpu.memory_space<semaphore_mem>> -> memref<!tpu.dma_semaphore, #tpu.memory_space<semaphore_mem>>
    tpu.enqueue_dma source(%229 : memref<1x1xf32, #tpu.memory_space<any>>) target(%230 : memref<1x1xf32, #tpu.memory_space<vmem>>) target_semaphore(%232 : memref<!tpu.dma_semaphore, #tpu.memory_space<semaphore_mem>>)
    %c6_i32_216 = arith.constant 6 : i32
    %c4_i32_217 = arith.constant 4 : i32
    %c0_i32_218 = arith.constant 0 : i32
    %233 = tpu.memref_slice %arg7[%60, %c0_i32_218] : memref<16x1xf32, #tpu.memory_space<any>> -> memref<1x1xf32, #tpu.memory_space<any>>
    %c6_i32_219 = arith.constant 6 : i32
    %c0_i32_220 = arith.constant 0 : i32
    %234 = tpu.memref_slice %arg12[%c6_i32_219, %c0_i32_220] : memref<8x1xf32, #tpu.memory_space<vmem>> -> memref<1x1xf32, #tpu.memory_space<vmem>>
    %235 = tpu.memref_slice %arg14[%c6_i32_216, %c4_i32_217] : memref<8x6x!tpu.dma_semaphore, #tpu.memory_space<semaphore_mem>> -> memref<1x1x!tpu.dma_semaphore, #tpu.memory_space<semaphore_mem>>
    %236 = tpu.memref_squeeze %235 : memref<1x1x!tpu.dma_semaphore, #tpu.memory_space<semaphore_mem>> -> memref<!tpu.dma_semaphore, #tpu.memory_space<semaphore_mem>>
    tpu.enqueue_dma source(%233 : memref<1x1xf32, #tpu.memory_space<any>>) target(%234 : memref<1x1xf32, #tpu.memory_space<vmem>>) target_semaphore(%236 : memref<!tpu.dma_semaphore, #tpu.memory_space<semaphore_mem>>)
    %c6_i32_221 = arith.constant 6 : i32
    %c5_i32_222 = arith.constant 5 : i32
    %c0_i32_223 = arith.constant 0 : i32
    %237 = tpu.memref_slice %arg6[%63, %c0_i32_223] : memref<64x1xf32, #tpu.memory_space<any>> -> memref<1x1xf32, #tpu.memory_space<any>>
    %c6_i32_224 = arith.constant 6 : i32
    %c0_i32_225 = arith.constant 0 : i32
    %238 = tpu.memref_slice %arg13[%c6_i32_224, %c0_i32_225] : memref<8x1xf32, #tpu.memory_space<vmem>> -> memref<1x1xf32, #tpu.memory_space<vmem>>
    %239 = tpu.memref_slice %arg14[%c6_i32_221, %c5_i32_222] : memref<8x6x!tpu.dma_semaphore, #tpu.memory_space<semaphore_mem>> -> memref<1x1x!tpu.dma_semaphore, #tpu.memory_space<semaphore_mem>>
    %240 = tpu.memref_squeeze %239 : memref<1x1x!tpu.dma_semaphore, #tpu.memory_space<semaphore_mem>> -> memref<!tpu.dma_semaphore, #tpu.memory_space<semaphore_mem>>
    tpu.enqueue_dma source(%237 : memref<1x1xf32, #tpu.memory_space<any>>) target(%238 : memref<1x1xf32, #tpu.memory_space<vmem>>) target_semaphore(%240 : memref<!tpu.dma_semaphore, #tpu.memory_space<semaphore_mem>>)
    %c7_i32_226 = arith.constant 7 : i32
    %c0_i32_227 = arith.constant 0 : i32
    %c0_i32_228 = arith.constant 0 : i32
    %241 = tpu.memref_slice %arg4[%66, %c0_i32_228] : memref<64x128xf32, #tpu.memory_space<any>> -> memref<1x128xf32, #tpu.memory_space<any>>
    %c7_i32_229 = arith.constant 7 : i32
    %c0_i32_230 = arith.constant 0 : i32
    %242 = tpu.memref_slice %arg8[%c7_i32_229, %c0_i32_230] : memref<8x128xf32, #tpu.memory_space<vmem>> -> memref<1x128xf32, #tpu.memory_space<vmem>>
    %243 = tpu.memref_slice %arg14[%c7_i32_226, %c0_i32_227] : memref<8x6x!tpu.dma_semaphore, #tpu.memory_space<semaphore_mem>> -> memref<1x1x!tpu.dma_semaphore, #tpu.memory_space<semaphore_mem>>
    %244 = tpu.memref_squeeze %243 : memref<1x1x!tpu.dma_semaphore, #tpu.memory_space<semaphore_mem>> -> memref<!tpu.dma_semaphore, #tpu.memory_space<semaphore_mem>>
    tpu.enqueue_dma source(%241 : memref<1x128xf32, #tpu.memory_space<any>>) target(%242 : memref<1x128xf32, #tpu.memory_space<vmem>>) target_semaphore(%244 : memref<!tpu.dma_semaphore, #tpu.memory_space<semaphore_mem>>)
    %c7_i32_231 = arith.constant 7 : i32
    %c1_i32_232 = arith.constant 1 : i32
    %c0_i32_233 = arith.constant 0 : i32
    %245 = tpu.memref_slice %arg5[%69, %c0_i32_233] : memref<16x128xf32, #tpu.memory_space<any>> -> memref<1x128xf32, #tpu.memory_space<any>>
    %c7_i32_234 = arith.constant 7 : i32
    %c0_i32_235 = arith.constant 0 : i32
    %246 = tpu.memref_slice %arg9[%c7_i32_234, %c0_i32_235] : memref<8x128xf32, #tpu.memory_space<vmem>> -> memref<1x128xf32, #tpu.memory_space<vmem>>
    %247 = tpu.memref_slice %arg14[%c7_i32_231, %c1_i32_232] : memref<8x6x!tpu.dma_semaphore, #tpu.memory_space<semaphore_mem>> -> memref<1x1x!tpu.dma_semaphore, #tpu.memory_space<semaphore_mem>>
    %248 = tpu.memref_squeeze %247 : memref<1x1x!tpu.dma_semaphore, #tpu.memory_space<semaphore_mem>> -> memref<!tpu.dma_semaphore, #tpu.memory_space<semaphore_mem>>
    tpu.enqueue_dma source(%245 : memref<1x128xf32, #tpu.memory_space<any>>) target(%246 : memref<1x128xf32, #tpu.memory_space<vmem>>) target_semaphore(%248 : memref<!tpu.dma_semaphore, #tpu.memory_space<semaphore_mem>>)
    %c7_i32_236 = arith.constant 7 : i32
    %c2_i32_237 = arith.constant 2 : i32
    %c0_i32_238 = arith.constant 0 : i32
    %249 = tpu.memref_slice %arg4[%72, %c0_i32_238] : memref<64x128xf32, #tpu.memory_space<any>> -> memref<1x128xf32, #tpu.memory_space<any>>
    %c7_i32_239 = arith.constant 7 : i32
    %c0_i32_240 = arith.constant 0 : i32
    %250 = tpu.memref_slice %arg10[%c7_i32_239, %c0_i32_240] : memref<8x128xf32, #tpu.memory_space<vmem>> -> memref<1x128xf32, #tpu.memory_space<vmem>>
    %251 = tpu.memref_slice %arg14[%c7_i32_236, %c2_i32_237] : memref<8x6x!tpu.dma_semaphore, #tpu.memory_space<semaphore_mem>> -> memref<1x1x!tpu.dma_semaphore, #tpu.memory_space<semaphore_mem>>
    %252 = tpu.memref_squeeze %251 : memref<1x1x!tpu.dma_semaphore, #tpu.memory_space<semaphore_mem>> -> memref<!tpu.dma_semaphore, #tpu.memory_space<semaphore_mem>>
    tpu.enqueue_dma source(%249 : memref<1x128xf32, #tpu.memory_space<any>>) target(%250 : memref<1x128xf32, #tpu.memory_space<vmem>>) target_semaphore(%252 : memref<!tpu.dma_semaphore, #tpu.memory_space<semaphore_mem>>)
    %c7_i32_241 = arith.constant 7 : i32
    %c3_i32_242 = arith.constant 3 : i32
    %c0_i32_243 = arith.constant 0 : i32
    %253 = tpu.memref_slice %arg6[%66, %c0_i32_243] : memref<64x1xf32, #tpu.memory_space<any>> -> memref<1x1xf32, #tpu.memory_space<any>>
    %c7_i32_244 = arith.constant 7 : i32
    %c0_i32_245 = arith.constant 0 : i32
    %254 = tpu.memref_slice %arg11[%c7_i32_244, %c0_i32_245] : memref<8x1xf32, #tpu.memory_space<vmem>> -> memref<1x1xf32, #tpu.memory_space<vmem>>
    %255 = tpu.memref_slice %arg14[%c7_i32_241, %c3_i32_242] : memref<8x6x!tpu.dma_semaphore, #tpu.memory_space<semaphore_mem>> -> memref<1x1x!tpu.dma_semaphore, #tpu.memory_space<semaphore_mem>>
    %256 = tpu.memref_squeeze %255 : memref<1x1x!tpu.dma_semaphore, #tpu.memory_space<semaphore_mem>> -> memref<!tpu.dma_semaphore, #tpu.memory_space<semaphore_mem>>
    tpu.enqueue_dma source(%253 : memref<1x1xf32, #tpu.memory_space<any>>) target(%254 : memref<1x1xf32, #tpu.memory_space<vmem>>) target_semaphore(%256 : memref<!tpu.dma_semaphore, #tpu.memory_space<semaphore_mem>>)
    %c7_i32_246 = arith.constant 7 : i32
    %c4_i32_247 = arith.constant 4 : i32
    %c0_i32_248 = arith.constant 0 : i32
    %257 = tpu.memref_slice %arg7[%69, %c0_i32_248] : memref<16x1xf32, #tpu.memory_space<any>> -> memref<1x1xf32, #tpu.memory_space<any>>
    %c7_i32_249 = arith.constant 7 : i32
    %c0_i32_250 = arith.constant 0 : i32
    %258 = tpu.memref_slice %arg12[%c7_i32_249, %c0_i32_250] : memref<8x1xf32, #tpu.memory_space<vmem>> -> memref<1x1xf32, #tpu.memory_space<vmem>>
    %259 = tpu.memref_slice %arg14[%c7_i32_246, %c4_i32_247] : memref<8x6x!tpu.dma_semaphore, #tpu.memory_space<semaphore_mem>> -> memref<1x1x!tpu.dma_semaphore, #tpu.memory_space<semaphore_mem>>
    %260 = tpu.memref_squeeze %259 : memref<1x1x!tpu.dma_semaphore, #tpu.memory_space<semaphore_mem>> -> memref<!tpu.dma_semaphore, #tpu.memory_space<semaphore_mem>>
    tpu.enqueue_dma source(%257 : memref<1x1xf32, #tpu.memory_space<any>>) target(%258 : memref<1x1xf32, #tpu.memory_space<vmem>>) target_semaphore(%260 : memref<!tpu.dma_semaphore, #tpu.memory_space<semaphore_mem>>)
    %c7_i32_251 = arith.constant 7 : i32
    %c5_i32_252 = arith.constant 5 : i32
    %c0_i32_253 = arith.constant 0 : i32
    %261 = tpu.memref_slice %arg6[%72, %c0_i32_253] : memref<64x1xf32, #tpu.memory_space<any>> -> memref<1x1xf32, #tpu.memory_space<any>>
    %c7_i32_254 = arith.constant 7 : i32
    %c0_i32_255 = arith.constant 0 : i32
    %262 = tpu.memref_slice %arg13[%c7_i32_254, %c0_i32_255] : memref<8x1xf32, #tpu.memory_space<vmem>> -> memref<1x1xf32, #tpu.memory_space<vmem>>
    %263 = tpu.memref_slice %arg14[%c7_i32_251, %c5_i32_252] : memref<8x6x!tpu.dma_semaphore, #tpu.memory_space<semaphore_mem>> -> memref<1x1x!tpu.dma_semaphore, #tpu.memory_space<semaphore_mem>>
    %264 = tpu.memref_squeeze %263 : memref<1x1x!tpu.dma_semaphore, #tpu.memory_space<semaphore_mem>> -> memref<!tpu.dma_semaphore, #tpu.memory_space<semaphore_mem>>
    tpu.enqueue_dma source(%261 : memref<1x1xf32, #tpu.memory_space<any>>) target(%262 : memref<1x1xf32, #tpu.memory_space<vmem>>) target_semaphore(%264 : memref<!tpu.dma_semaphore, #tpu.memory_space<semaphore_mem>>)
    %c0_i32_256 = arith.constant 0 : i32
    %c0_i32_257 = arith.constant 0 : i32
    %c0_i32_258 = arith.constant 0 : i32
    %265 = tpu.memref_slice %arg4[%3, %c0_i32_258] : memref<64x128xf32, #tpu.memory_space<any>> -> memref<1x128xf32, #tpu.memory_space<any>>
    %c0_i32_259 = arith.constant 0 : i32
    %c0_i32_260 = arith.constant 0 : i32
    %266 = tpu.memref_slice %arg8[%c0_i32_259, %c0_i32_260] : memref<8x128xf32, #tpu.memory_space<vmem>> -> memref<1x128xf32, #tpu.memory_space<vmem>>
    %267 = tpu.memref_slice %arg14[%c0_i32_256, %c0_i32_257] : memref<8x6x!tpu.dma_semaphore, #tpu.memory_space<semaphore_mem>> -> memref<1x1x!tpu.dma_semaphore, #tpu.memory_space<semaphore_mem>>
    %268 = tpu.memref_squeeze %267 : memref<1x1x!tpu.dma_semaphore, #tpu.memory_space<semaphore_mem>> -> memref<!tpu.dma_semaphore, #tpu.memory_space<semaphore_mem>>
    tpu.wait_dma2 semaphore(%268 : memref<!tpu.dma_semaphore, #tpu.memory_space<semaphore_mem>>) src(%265 : memref<1x128xf32, #tpu.memory_space<any>>) dst(%266 : memref<1x128xf32, #tpu.memory_space<vmem>>)
    %c0_i32_261 = arith.constant 0 : i32
    %c1_i32_262 = arith.constant 1 : i32
    %c0_i32_263 = arith.constant 0 : i32
    %269 = tpu.memref_slice %arg5[%6, %c0_i32_263] : memref<16x128xf32, #tpu.memory_space<any>> -> memref<1x128xf32, #tpu.memory_space<any>>
    %c0_i32_264 = arith.constant 0 : i32
    %c0_i32_265 = arith.constant 0 : i32
    %270 = tpu.memref_slice %arg9[%c0_i32_264, %c0_i32_265] : memref<8x128xf32, #tpu.memory_space<vmem>> -> memref<1x128xf32, #tpu.memory_space<vmem>>
    %271 = tpu.memref_slice %arg14[%c0_i32_261, %c1_i32_262] : memref<8x6x!tpu.dma_semaphore, #tpu.memory_space<semaphore_mem>> -> memref<1x1x!tpu.dma_semaphore, #tpu.memory_space<semaphore_mem>>
    %272 = tpu.memref_squeeze %271 : memref<1x1x!tpu.dma_semaphore, #tpu.memory_space<semaphore_mem>> -> memref<!tpu.dma_semaphore, #tpu.memory_space<semaphore_mem>>
    tpu.wait_dma2 semaphore(%272 : memref<!tpu.dma_semaphore, #tpu.memory_space<semaphore_mem>>) src(%269 : memref<1x128xf32, #tpu.memory_space<any>>) dst(%270 : memref<1x128xf32, #tpu.memory_space<vmem>>)
    %c0_i32_266 = arith.constant 0 : i32
    %c2_i32_267 = arith.constant 2 : i32
    %c0_i32_268 = arith.constant 0 : i32
    %273 = tpu.memref_slice %arg4[%9, %c0_i32_268] : memref<64x128xf32, #tpu.memory_space<any>> -> memref<1x128xf32, #tpu.memory_space<any>>
    %c0_i32_269 = arith.constant 0 : i32
    %c0_i32_270 = arith.constant 0 : i32
    %274 = tpu.memref_slice %arg10[%c0_i32_269, %c0_i32_270] : memref<8x128xf32, #tpu.memory_space<vmem>> -> memref<1x128xf32, #tpu.memory_space<vmem>>
    %275 = tpu.memref_slice %arg14[%c0_i32_266, %c2_i32_267] : memref<8x6x!tpu.dma_semaphore, #tpu.memory_space<semaphore_mem>> -> memref<1x1x!tpu.dma_semaphore, #tpu.memory_space<semaphore_mem>>
    %276 = tpu.memref_squeeze %275 : memref<1x1x!tpu.dma_semaphore, #tpu.memory_space<semaphore_mem>> -> memref<!tpu.dma_semaphore, #tpu.memory_space<semaphore_mem>>
    tpu.wait_dma2 semaphore(%276 : memref<!tpu.dma_semaphore, #tpu.memory_space<semaphore_mem>>) src(%273 : memref<1x128xf32, #tpu.memory_space<any>>) dst(%274 : memref<1x128xf32, #tpu.memory_space<vmem>>)
    %c0_i32_271 = arith.constant 0 : i32
    %c3_i32_272 = arith.constant 3 : i32
    %c0_i32_273 = arith.constant 0 : i32
    %277 = tpu.memref_slice %arg6[%3, %c0_i32_273] : memref<64x1xf32, #tpu.memory_space<any>> -> memref<1x1xf32, #tpu.memory_space<any>>
    %c0_i32_274 = arith.constant 0 : i32
    %c0_i32_275 = arith.constant 0 : i32
    %278 = tpu.memref_slice %arg11[%c0_i32_274, %c0_i32_275] : memref<8x1xf32, #tpu.memory_space<vmem>> -> memref<1x1xf32, #tpu.memory_space<vmem>>
    %279 = tpu.memref_slice %arg14[%c0_i32_271, %c3_i32_272] : memref<8x6x!tpu.dma_semaphore, #tpu.memory_space<semaphore_mem>> -> memref<1x1x!tpu.dma_semaphore, #tpu.memory_space<semaphore_mem>>
    %280 = tpu.memref_squeeze %279 : memref<1x1x!tpu.dma_semaphore, #tpu.memory_space<semaphore_mem>> -> memref<!tpu.dma_semaphore, #tpu.memory_space<semaphore_mem>>
    tpu.wait_dma2 semaphore(%280 : memref<!tpu.dma_semaphore, #tpu.memory_space<semaphore_mem>>) src(%277 : memref<1x1xf32, #tpu.memory_space<any>>) dst(%278 : memref<1x1xf32, #tpu.memory_space<vmem>>)
    %c0_i32_276 = arith.constant 0 : i32
    %c4_i32_277 = arith.constant 4 : i32
    %c0_i32_278 = arith.constant 0 : i32
    %281 = tpu.memref_slice %arg7[%6, %c0_i32_278] : memref<16x1xf32, #tpu.memory_space<any>> -> memref<1x1xf32, #tpu.memory_space<any>>
    %c0_i32_279 = arith.constant 0 : i32
    %c0_i32_280 = arith.constant 0 : i32
    %282 = tpu.memref_slice %arg12[%c0_i32_279, %c0_i32_280] : memref<8x1xf32, #tpu.memory_space<vmem>> -> memref<1x1xf32, #tpu.memory_space<vmem>>
    %283 = tpu.memref_slice %arg14[%c0_i32_276, %c4_i32_277] : memref<8x6x!tpu.dma_semaphore, #tpu.memory_space<semaphore_mem>> -> memref<1x1x!tpu.dma_semaphore, #tpu.memory_space<semaphore_mem>>
    %284 = tpu.memref_squeeze %283 : memref<1x1x!tpu.dma_semaphore, #tpu.memory_space<semaphore_mem>> -> memref<!tpu.dma_semaphore, #tpu.memory_space<semaphore_mem>>
    tpu.wait_dma2 semaphore(%284 : memref<!tpu.dma_semaphore, #tpu.memory_space<semaphore_mem>>) src(%281 : memref<1x1xf32, #tpu.memory_space<any>>) dst(%282 : memref<1x1xf32, #tpu.memory_space<vmem>>)
    %c0_i32_281 = arith.constant 0 : i32
    %c5_i32_282 = arith.constant 5 : i32
    %c0_i32_283 = arith.constant 0 : i32
    %285 = tpu.memref_slice %arg6[%9, %c0_i32_283] : memref<64x1xf32, #tpu.memory_space<any>> -> memref<1x1xf32, #tpu.memory_space<any>>
    %c0_i32_284 = arith.constant 0 : i32
    %c0_i32_285 = arith.constant 0 : i32
    %286 = tpu.memref_slice %arg13[%c0_i32_284, %c0_i32_285] : memref<8x1xf32, #tpu.memory_space<vmem>> -> memref<1x1xf32, #tpu.memory_space<vmem>>
    %287 = tpu.memref_slice %arg14[%c0_i32_281, %c5_i32_282] : memref<8x6x!tpu.dma_semaphore, #tpu.memory_space<semaphore_mem>> -> memref<1x1x!tpu.dma_semaphore, #tpu.memory_space<semaphore_mem>>
    %288 = tpu.memref_squeeze %287 : memref<1x1x!tpu.dma_semaphore, #tpu.memory_space<semaphore_mem>> -> memref<!tpu.dma_semaphore, #tpu.memory_space<semaphore_mem>>
    tpu.wait_dma2 semaphore(%288 : memref<!tpu.dma_semaphore, #tpu.memory_space<semaphore_mem>>) src(%285 : memref<1x1xf32, #tpu.memory_space<any>>) dst(%286 : memref<1x1xf32, #tpu.memory_space<vmem>>)
    %c1_i32_286 = arith.constant 1 : i32
    %c0_i32_287 = arith.constant 0 : i32
    %c0_i32_288 = arith.constant 0 : i32
    %289 = tpu.memref_slice %arg4[%12, %c0_i32_288] : memref<64x128xf32, #tpu.memory_space<any>> -> memref<1x128xf32, #tpu.memory_space<any>>
    %c1_i32_289 = arith.constant 1 : i32
    %c0_i32_290 = arith.constant 0 : i32
    %290 = tpu.memref_slice %arg8[%c1_i32_289, %c0_i32_290] : memref<8x128xf32, #tpu.memory_space<vmem>> -> memref<1x128xf32, #tpu.memory_space<vmem>>
    %291 = tpu.memref_slice %arg14[%c1_i32_286, %c0_i32_287] : memref<8x6x!tpu.dma_semaphore, #tpu.memory_space<semaphore_mem>> -> memref<1x1x!tpu.dma_semaphore, #tpu.memory_space<semaphore_mem>>
    %292 = tpu.memref_squeeze %291 : memref<1x1x!tpu.dma_semaphore, #tpu.memory_space<semaphore_mem>> -> memref<!tpu.dma_semaphore, #tpu.memory_space<semaphore_mem>>
    tpu.wait_dma2 semaphore(%292 : memref<!tpu.dma_semaphore, #tpu.memory_space<semaphore_mem>>) src(%289 : memref<1x128xf32, #tpu.memory_space<any>>) dst(%290 : memref<1x128xf32, #tpu.memory_space<vmem>>)
    %c1_i32_291 = arith.constant 1 : i32
    %c1_i32_292 = arith.constant 1 : i32
    %c0_i32_293 = arith.constant 0 : i32
    %293 = tpu.memref_slice %arg5[%15, %c0_i32_293] : memref<16x128xf32, #tpu.memory_space<any>> -> memref<1x128xf32, #tpu.memory_space<any>>
    %c1_i32_294 = arith.constant 1 : i32
    %c0_i32_295 = arith.constant 0 : i32
    %294 = tpu.memref_slice %arg9[%c1_i32_294, %c0_i32_295] : memref<8x128xf32, #tpu.memory_space<vmem>> -> memref<1x128xf32, #tpu.memory_space<vmem>>
    %295 = tpu.memref_slice %arg14[%c1_i32_291, %c1_i32_292] : memref<8x6x!tpu.dma_semaphore, #tpu.memory_space<semaphore_mem>> -> memref<1x1x!tpu.dma_semaphore, #tpu.memory_space<semaphore_mem>>
    %296 = tpu.memref_squeeze %295 : memref<1x1x!tpu.dma_semaphore, #tpu.memory_space<semaphore_mem>> -> memref<!tpu.dma_semaphore, #tpu.memory_space<semaphore_mem>>
    tpu.wait_dma2 semaphore(%296 : memref<!tpu.dma_semaphore, #tpu.memory_space<semaphore_mem>>) src(%293 : memref<1x128xf32, #tpu.memory_space<any>>) dst(%294 : memref<1x128xf32, #tpu.memory_space<vmem>>)
    %c1_i32_296 = arith.constant 1 : i32
    %c2_i32_297 = arith.constant 2 : i32
    %c0_i32_298 = arith.constant 0 : i32
    %297 = tpu.memref_slice %arg4[%18, %c0_i32_298] : memref<64x128xf32, #tpu.memory_space<any>> -> memref<1x128xf32, #tpu.memory_space<any>>
    %c1_i32_299 = arith.constant 1 : i32
    %c0_i32_300 = arith.constant 0 : i32
    %298 = tpu.memref_slice %arg10[%c1_i32_299, %c0_i32_300] : memref<8x128xf32, #tpu.memory_space<vmem>> -> memref<1x128xf32, #tpu.memory_space<vmem>>
    %299 = tpu.memref_slice %arg14[%c1_i32_296, %c2_i32_297] : memref<8x6x!tpu.dma_semaphore, #tpu.memory_space<semaphore_mem>> -> memref<1x1x!tpu.dma_semaphore, #tpu.memory_space<semaphore_mem>>
    %300 = tpu.memref_squeeze %299 : memref<1x1x!tpu.dma_semaphore, #tpu.memory_space<semaphore_mem>> -> memref<!tpu.dma_semaphore, #tpu.memory_space<semaphore_mem>>
    tpu.wait_dma2 semaphore(%300 : memref<!tpu.dma_semaphore, #tpu.memory_space<semaphore_mem>>) src(%297 : memref<1x128xf32, #tpu.memory_space<any>>) dst(%298 : memref<1x128xf32, #tpu.memory_space<vmem>>)
    %c1_i32_301 = arith.constant 1 : i32
    %c3_i32_302 = arith.constant 3 : i32
    %c0_i32_303 = arith.constant 0 : i32
    %301 = tpu.memref_slice %arg6[%12, %c0_i32_303] : memref<64x1xf32, #tpu.memory_space<any>> -> memref<1x1xf32, #tpu.memory_space<any>>
    %c1_i32_304 = arith.constant 1 : i32
    %c0_i32_305 = arith.constant 0 : i32
    %302 = tpu.memref_slice %arg11[%c1_i32_304, %c0_i32_305] : memref<8x1xf32, #tpu.memory_space<vmem>> -> memref<1x1xf32, #tpu.memory_space<vmem>>
    %303 = tpu.memref_slice %arg14[%c1_i32_301, %c3_i32_302] : memref<8x6x!tpu.dma_semaphore, #tpu.memory_space<semaphore_mem>> -> memref<1x1x!tpu.dma_semaphore, #tpu.memory_space<semaphore_mem>>
    %304 = tpu.memref_squeeze %303 : memref<1x1x!tpu.dma_semaphore, #tpu.memory_space<semaphore_mem>> -> memref<!tpu.dma_semaphore, #tpu.memory_space<semaphore_mem>>
    tpu.wait_dma2 semaphore(%304 : memref<!tpu.dma_semaphore, #tpu.memory_space<semaphore_mem>>) src(%301 : memref<1x1xf32, #tpu.memory_space<any>>) dst(%302 : memref<1x1xf32, #tpu.memory_space<vmem>>)
    %c1_i32_306 = arith.constant 1 : i32
    %c4_i32_307 = arith.constant 4 : i32
    %c0_i32_308 = arith.constant 0 : i32
    %305 = tpu.memref_slice %arg7[%15, %c0_i32_308] : memref<16x1xf32, #tpu.memory_space<any>> -> memref<1x1xf32, #tpu.memory_space<any>>
    %c1_i32_309 = arith.constant 1 : i32
    %c0_i32_310 = arith.constant 0 : i32
    %306 = tpu.memref_slice %arg12[%c1_i32_309, %c0_i32_310] : memref<8x1xf32, #tpu.memory_space<vmem>> -> memref<1x1xf32, #tpu.memory_space<vmem>>
    %307 = tpu.memref_slice %arg14[%c1_i32_306, %c4_i32_307] : memref<8x6x!tpu.dma_semaphore, #tpu.memory_space<semaphore_mem>> -> memref<1x1x!tpu.dma_semaphore, #tpu.memory_space<semaphore_mem>>
    %308 = tpu.memref_squeeze %307 : memref<1x1x!tpu.dma_semaphore, #tpu.memory_space<semaphore_mem>> -> memref<!tpu.dma_semaphore, #tpu.memory_space<semaphore_mem>>
    tpu.wait_dma2 semaphore(%308 : memref<!tpu.dma_semaphore, #tpu.memory_space<semaphore_mem>>) src(%305 : memref<1x1xf32, #tpu.memory_space<any>>) dst(%306 : memref<1x1xf32, #tpu.memory_space<vmem>>)
    %c1_i32_311 = arith.constant 1 : i32
    %c5_i32_312 = arith.constant 5 : i32
    %c0_i32_313 = arith.constant 0 : i32
    %309 = tpu.memref_slice %arg6[%18, %c0_i32_313] : memref<64x1xf32, #tpu.memory_space<any>> -> memref<1x1xf32, #tpu.memory_space<any>>
    %c1_i32_314 = arith.constant 1 : i32
    %c0_i32_315 = arith.constant 0 : i32
    %310 = tpu.memref_slice %arg13[%c1_i32_314, %c0_i32_315] : memref<8x1xf32, #tpu.memory_space<vmem>> -> memref<1x1xf32, #tpu.memory_space<vmem>>
    %311 = tpu.memref_slice %arg14[%c1_i32_311, %c5_i32_312] : memref<8x6x!tpu.dma_semaphore, #tpu.memory_space<semaphore_mem>> -> memref<1x1x!tpu.dma_semaphore, #tpu.memory_space<semaphore_mem>>
    %312 = tpu.memref_squeeze %311 : memref<1x1x!tpu.dma_semaphore, #tpu.memory_space<semaphore_mem>> -> memref<!tpu.dma_semaphore, #tpu.memory_space<semaphore_mem>>
    tpu.wait_dma2 semaphore(%312 : memref<!tpu.dma_semaphore, #tpu.memory_space<semaphore_mem>>) src(%309 : memref<1x1xf32, #tpu.memory_space<any>>) dst(%310 : memref<1x1xf32, #tpu.memory_space<vmem>>)
    %c2_i32_316 = arith.constant 2 : i32
    %c0_i32_317 = arith.constant 0 : i32
    %c0_i32_318 = arith.constant 0 : i32
    %313 = tpu.memref_slice %arg4[%21, %c0_i32_318] : memref<64x128xf32, #tpu.memory_space<any>> -> memref<1x128xf32, #tpu.memory_space<any>>
    %c2_i32_319 = arith.constant 2 : i32
    %c0_i32_320 = arith.constant 0 : i32
    %314 = tpu.memref_slice %arg8[%c2_i32_319, %c0_i32_320] : memref<8x128xf32, #tpu.memory_space<vmem>> -> memref<1x128xf32, #tpu.memory_space<vmem>>
    %315 = tpu.memref_slice %arg14[%c2_i32_316, %c0_i32_317] : memref<8x6x!tpu.dma_semaphore, #tpu.memory_space<semaphore_mem>> -> memref<1x1x!tpu.dma_semaphore, #tpu.memory_space<semaphore_mem>>
    %316 = tpu.memref_squeeze %315 : memref<1x1x!tpu.dma_semaphore, #tpu.memory_space<semaphore_mem>> -> memref<!tpu.dma_semaphore, #tpu.memory_space<semaphore_mem>>
    tpu.wait_dma2 semaphore(%316 : memref<!tpu.dma_semaphore, #tpu.memory_space<semaphore_mem>>) src(%313 : memref<1x128xf32, #tpu.memory_space<any>>) dst(%314 : memref<1x128xf32, #tpu.memory_space<vmem>>)
    %c2_i32_321 = arith.constant 2 : i32
    %c1_i32_322 = arith.constant 1 : i32
    %c0_i32_323 = arith.constant 0 : i32
    %317 = tpu.memref_slice %arg5[%24, %c0_i32_323] : memref<16x128xf32, #tpu.memory_space<any>> -> memref<1x128xf32, #tpu.memory_space<any>>
    %c2_i32_324 = arith.constant 2 : i32
    %c0_i32_325 = arith.constant 0 : i32
    %318 = tpu.memref_slice %arg9[%c2_i32_324, %c0_i32_325] : memref<8x128xf32, #tpu.memory_space<vmem>> -> memref<1x128xf32, #tpu.memory_space<vmem>>
    %319 = tpu.memref_slice %arg14[%c2_i32_321, %c1_i32_322] : memref<8x6x!tpu.dma_semaphore, #tpu.memory_space<semaphore_mem>> -> memref<1x1x!tpu.dma_semaphore, #tpu.memory_space<semaphore_mem>>
    %320 = tpu.memref_squeeze %319 : memref<1x1x!tpu.dma_semaphore, #tpu.memory_space<semaphore_mem>> -> memref<!tpu.dma_semaphore, #tpu.memory_space<semaphore_mem>>
    tpu.wait_dma2 semaphore(%320 : memref<!tpu.dma_semaphore, #tpu.memory_space<semaphore_mem>>) src(%317 : memref<1x128xf32, #tpu.memory_space<any>>) dst(%318 : memref<1x128xf32, #tpu.memory_space<vmem>>)
    %c2_i32_326 = arith.constant 2 : i32
    %c2_i32_327 = arith.constant 2 : i32
    %c0_i32_328 = arith.constant 0 : i32
    %321 = tpu.memref_slice %arg4[%27, %c0_i32_328] : memref<64x128xf32, #tpu.memory_space<any>> -> memref<1x128xf32, #tpu.memory_space<any>>
    %c2_i32_329 = arith.constant 2 : i32
    %c0_i32_330 = arith.constant 0 : i32
    %322 = tpu.memref_slice %arg10[%c2_i32_329, %c0_i32_330] : memref<8x128xf32, #tpu.memory_space<vmem>> -> memref<1x128xf32, #tpu.memory_space<vmem>>
    %323 = tpu.memref_slice %arg14[%c2_i32_326, %c2_i32_327] : memref<8x6x!tpu.dma_semaphore, #tpu.memory_space<semaphore_mem>> -> memref<1x1x!tpu.dma_semaphore, #tpu.memory_space<semaphore_mem>>
    %324 = tpu.memref_squeeze %323 : memref<1x1x!tpu.dma_semaphore, #tpu.memory_space<semaphore_mem>> -> memref<!tpu.dma_semaphore, #tpu.memory_space<semaphore_mem>>
    tpu.wait_dma2 semaphore(%324 : memref<!tpu.dma_semaphore, #tpu.memory_space<semaphore_mem>>) src(%321 : memref<1x128xf32, #tpu.memory_space<any>>) dst(%322 : memref<1x128xf32, #tpu.memory_space<vmem>>)
    %c2_i32_331 = arith.constant 2 : i32
    %c3_i32_332 = arith.constant 3 : i32
    %c0_i32_333 = arith.constant 0 : i32
    %325 = tpu.memref_slice %arg6[%21, %c0_i32_333] : memref<64x1xf32, #tpu.memory_space<any>> -> memref<1x1xf32, #tpu.memory_space<any>>
    %c2_i32_334 = arith.constant 2 : i32
    %c0_i32_335 = arith.constant 0 : i32
    %326 = tpu.memref_slice %arg11[%c2_i32_334, %c0_i32_335] : memref<8x1xf32, #tpu.memory_space<vmem>> -> memref<1x1xf32, #tpu.memory_space<vmem>>
    %327 = tpu.memref_slice %arg14[%c2_i32_331, %c3_i32_332] : memref<8x6x!tpu.dma_semaphore, #tpu.memory_space<semaphore_mem>> -> memref<1x1x!tpu.dma_semaphore, #tpu.memory_space<semaphore_mem>>
    %328 = tpu.memref_squeeze %327 : memref<1x1x!tpu.dma_semaphore, #tpu.memory_space<semaphore_mem>> -> memref<!tpu.dma_semaphore, #tpu.memory_space<semaphore_mem>>
    tpu.wait_dma2 semaphore(%328 : memref<!tpu.dma_semaphore, #tpu.memory_space<semaphore_mem>>) src(%325 : memref<1x1xf32, #tpu.memory_space<any>>) dst(%326 : memref<1x1xf32, #tpu.memory_space<vmem>>)
    %c2_i32_336 = arith.constant 2 : i32
    %c4_i32_337 = arith.constant 4 : i32
    %c0_i32_338 = arith.constant 0 : i32
    %329 = tpu.memref_slice %arg7[%24, %c0_i32_338] : memref<16x1xf32, #tpu.memory_space<any>> -> memref<1x1xf32, #tpu.memory_space<any>>
    %c2_i32_339 = arith.constant 2 : i32
    %c0_i32_340 = arith.constant 0 : i32
    %330 = tpu.memref_slice %arg12[%c2_i32_339, %c0_i32_340] : memref<8x1xf32, #tpu.memory_space<vmem>> -> memref<1x1xf32, #tpu.memory_space<vmem>>
    %331 = tpu.memref_slice %arg14[%c2_i32_336, %c4_i32_337] : memref<8x6x!tpu.dma_semaphore, #tpu.memory_space<semaphore_mem>> -> memref<1x1x!tpu.dma_semaphore, #tpu.memory_space<semaphore_mem>>
    %332 = tpu.memref_squeeze %331 : memref<1x1x!tpu.dma_semaphore, #tpu.memory_space<semaphore_mem>> -> memref<!tpu.dma_semaphore, #tpu.memory_space<semaphore_mem>>
    tpu.wait_dma2 semaphore(%332 : memref<!tpu.dma_semaphore, #tpu.memory_space<semaphore_mem>>) src(%329 : memref<1x1xf32, #tpu.memory_space<any>>) dst(%330 : memref<1x1xf32, #tpu.memory_space<vmem>>)
    %c2_i32_341 = arith.constant 2 : i32
    %c5_i32_342 = arith.constant 5 : i32
    %c0_i32_343 = arith.constant 0 : i32
    %333 = tpu.memref_slice %arg6[%27, %c0_i32_343] : memref<64x1xf32, #tpu.memory_space<any>> -> memref<1x1xf32, #tpu.memory_space<any>>
    %c2_i32_344 = arith.constant 2 : i32
    %c0_i32_345 = arith.constant 0 : i32
    %334 = tpu.memref_slice %arg13[%c2_i32_344, %c0_i32_345] : memref<8x1xf32, #tpu.memory_space<vmem>> -> memref<1x1xf32, #tpu.memory_space<vmem>>
    %335 = tpu.memref_slice %arg14[%c2_i32_341, %c5_i32_342] : memref<8x6x!tpu.dma_semaphore, #tpu.memory_space<semaphore_mem>> -> memref<1x1x!tpu.dma_semaphore, #tpu.memory_space<semaphore_mem>>
    %336 = tpu.memref_squeeze %335 : memref<1x1x!tpu.dma_semaphore, #tpu.memory_space<semaphore_mem>> -> memref<!tpu.dma_semaphore, #tpu.memory_space<semaphore_mem>>
    tpu.wait_dma2 semaphore(%336 : memref<!tpu.dma_semaphore, #tpu.memory_space<semaphore_mem>>) src(%333 : memref<1x1xf32, #tpu.memory_space<any>>) dst(%334 : memref<1x1xf32, #tpu.memory_space<vmem>>)
    %c3_i32_346 = arith.constant 3 : i32
    %c0_i32_347 = arith.constant 0 : i32
    %c0_i32_348 = arith.constant 0 : i32
    %337 = tpu.memref_slice %arg4[%30, %c0_i32_348] : memref<64x128xf32, #tpu.memory_space<any>> -> memref<1x128xf32, #tpu.memory_space<any>>
    %c3_i32_349 = arith.constant 3 : i32
    %c0_i32_350 = arith.constant 0 : i32
    %338 = tpu.memref_slice %arg8[%c3_i32_349, %c0_i32_350] : memref<8x128xf32, #tpu.memory_space<vmem>> -> memref<1x128xf32, #tpu.memory_space<vmem>>
    %339 = tpu.memref_slice %arg14[%c3_i32_346, %c0_i32_347] : memref<8x6x!tpu.dma_semaphore, #tpu.memory_space<semaphore_mem>> -> memref<1x1x!tpu.dma_semaphore, #tpu.memory_space<semaphore_mem>>
    %340 = tpu.memref_squeeze %339 : memref<1x1x!tpu.dma_semaphore, #tpu.memory_space<semaphore_mem>> -> memref<!tpu.dma_semaphore, #tpu.memory_space<semaphore_mem>>
    tpu.wait_dma2 semaphore(%340 : memref<!tpu.dma_semaphore, #tpu.memory_space<semaphore_mem>>) src(%337 : memref<1x128xf32, #tpu.memory_space<any>>) dst(%338 : memref<1x128xf32, #tpu.memory_space<vmem>>)
    %c3_i32_351 = arith.constant 3 : i32
    %c1_i32_352 = arith.constant 1 : i32
    %c0_i32_353 = arith.constant 0 : i32
    %341 = tpu.memref_slice %arg5[%33, %c0_i32_353] : memref<16x128xf32, #tpu.memory_space<any>> -> memref<1x128xf32, #tpu.memory_space<any>>
    %c3_i32_354 = arith.constant 3 : i32
    %c0_i32_355 = arith.constant 0 : i32
    %342 = tpu.memref_slice %arg9[%c3_i32_354, %c0_i32_355] : memref<8x128xf32, #tpu.memory_space<vmem>> -> memref<1x128xf32, #tpu.memory_space<vmem>>
    %343 = tpu.memref_slice %arg14[%c3_i32_351, %c1_i32_352] : memref<8x6x!tpu.dma_semaphore, #tpu.memory_space<semaphore_mem>> -> memref<1x1x!tpu.dma_semaphore, #tpu.memory_space<semaphore_mem>>
    %344 = tpu.memref_squeeze %343 : memref<1x1x!tpu.dma_semaphore, #tpu.memory_space<semaphore_mem>> -> memref<!tpu.dma_semaphore, #tpu.memory_space<semaphore_mem>>
    tpu.wait_dma2 semaphore(%344 : memref<!tpu.dma_semaphore, #tpu.memory_space<semaphore_mem>>) src(%341 : memref<1x128xf32, #tpu.memory_space<any>>) dst(%342 : memref<1x128xf32, #tpu.memory_space<vmem>>)
    %c3_i32_356 = arith.constant 3 : i32
    %c2_i32_357 = arith.constant 2 : i32
    %c0_i32_358 = arith.constant 0 : i32
    %345 = tpu.memref_slice %arg4[%36, %c0_i32_358] : memref<64x128xf32, #tpu.memory_space<any>> -> memref<1x128xf32, #tpu.memory_space<any>>
    %c3_i32_359 = arith.constant 3 : i32
    %c0_i32_360 = arith.constant 0 : i32
    %346 = tpu.memref_slice %arg10[%c3_i32_359, %c0_i32_360] : memref<8x128xf32, #tpu.memory_space<vmem>> -> memref<1x128xf32, #tpu.memory_space<vmem>>
    %347 = tpu.memref_slice %arg14[%c3_i32_356, %c2_i32_357] : memref<8x6x!tpu.dma_semaphore, #tpu.memory_space<semaphore_mem>> -> memref<1x1x!tpu.dma_semaphore, #tpu.memory_space<semaphore_mem>>
    %348 = tpu.memref_squeeze %347 : memref<1x1x!tpu.dma_semaphore, #tpu.memory_space<semaphore_mem>> -> memref<!tpu.dma_semaphore, #tpu.memory_space<semaphore_mem>>
    tpu.wait_dma2 semaphore(%348 : memref<!tpu.dma_semaphore, #tpu.memory_space<semaphore_mem>>) src(%345 : memref<1x128xf32, #tpu.memory_space<any>>) dst(%346 : memref<1x128xf32, #tpu.memory_space<vmem>>)
    %c3_i32_361 = arith.constant 3 : i32
    %c3_i32_362 = arith.constant 3 : i32
    %c0_i32_363 = arith.constant 0 : i32
    %349 = tpu.memref_slice %arg6[%30, %c0_i32_363] : memref<64x1xf32, #tpu.memory_space<any>> -> memref<1x1xf32, #tpu.memory_space<any>>
    %c3_i32_364 = arith.constant 3 : i32
    %c0_i32_365 = arith.constant 0 : i32
    %350 = tpu.memref_slice %arg11[%c3_i32_364, %c0_i32_365] : memref<8x1xf32, #tpu.memory_space<vmem>> -> memref<1x1xf32, #tpu.memory_space<vmem>>
    %351 = tpu.memref_slice %arg14[%c3_i32_361, %c3_i32_362] : memref<8x6x!tpu.dma_semaphore, #tpu.memory_space<semaphore_mem>> -> memref<1x1x!tpu.dma_semaphore, #tpu.memory_space<semaphore_mem>>
    %352 = tpu.memref_squeeze %351 : memref<1x1x!tpu.dma_semaphore, #tpu.memory_space<semaphore_mem>> -> memref<!tpu.dma_semaphore, #tpu.memory_space<semaphore_mem>>
    tpu.wait_dma2 semaphore(%352 : memref<!tpu.dma_semaphore, #tpu.memory_space<semaphore_mem>>) src(%349 : memref<1x1xf32, #tpu.memory_space<any>>) dst(%350 : memref<1x1xf32, #tpu.memory_space<vmem>>)
    %c3_i32_366 = arith.constant 3 : i32
    %c4_i32_367 = arith.constant 4 : i32
    %c0_i32_368 = arith.constant 0 : i32
    %353 = tpu.memref_slice %arg7[%33, %c0_i32_368] : memref<16x1xf32, #tpu.memory_space<any>> -> memref<1x1xf32, #tpu.memory_space<any>>
    %c3_i32_369 = arith.constant 3 : i32
    %c0_i32_370 = arith.constant 0 : i32
    %354 = tpu.memref_slice %arg12[%c3_i32_369, %c0_i32_370] : memref<8x1xf32, #tpu.memory_space<vmem>> -> memref<1x1xf32, #tpu.memory_space<vmem>>
    %355 = tpu.memref_slice %arg14[%c3_i32_366, %c4_i32_367] : memref<8x6x!tpu.dma_semaphore, #tpu.memory_space<semaphore_mem>> -> memref<1x1x!tpu.dma_semaphore, #tpu.memory_space<semaphore_mem>>
    %356 = tpu.memref_squeeze %355 : memref<1x1x!tpu.dma_semaphore, #tpu.memory_space<semaphore_mem>> -> memref<!tpu.dma_semaphore, #tpu.memory_space<semaphore_mem>>
    tpu.wait_dma2 semaphore(%356 : memref<!tpu.dma_semaphore, #tpu.memory_space<semaphore_mem>>) src(%353 : memref<1x1xf32, #tpu.memory_space<any>>) dst(%354 : memref<1x1xf32, #tpu.memory_space<vmem>>)
    %c3_i32_371 = arith.constant 3 : i32
    %c5_i32_372 = arith.constant 5 : i32
    %c0_i32_373 = arith.constant 0 : i32
    %357 = tpu.memref_slice %arg6[%36, %c0_i32_373] : memref<64x1xf32, #tpu.memory_space<any>> -> memref<1x1xf32, #tpu.memory_space<any>>
    %c3_i32_374 = arith.constant 3 : i32
    %c0_i32_375 = arith.constant 0 : i32
    %358 = tpu.memref_slice %arg13[%c3_i32_374, %c0_i32_375] : memref<8x1xf32, #tpu.memory_space<vmem>> -> memref<1x1xf32, #tpu.memory_space<vmem>>
    %359 = tpu.memref_slice %arg14[%c3_i32_371, %c5_i32_372] : memref<8x6x!tpu.dma_semaphore, #tpu.memory_space<semaphore_mem>> -> memref<1x1x!tpu.dma_semaphore, #tpu.memory_space<semaphore_mem>>
    %360 = tpu.memref_squeeze %359 : memref<1x1x!tpu.dma_semaphore, #tpu.memory_space<semaphore_mem>> -> memref<!tpu.dma_semaphore, #tpu.memory_space<semaphore_mem>>
    tpu.wait_dma2 semaphore(%360 : memref<!tpu.dma_semaphore, #tpu.memory_space<semaphore_mem>>) src(%357 : memref<1x1xf32, #tpu.memory_space<any>>) dst(%358 : memref<1x1xf32, #tpu.memory_space<vmem>>)
    %c4_i32_376 = arith.constant 4 : i32
    %c0_i32_377 = arith.constant 0 : i32
    %c0_i32_378 = arith.constant 0 : i32
    %361 = tpu.memref_slice %arg4[%39, %c0_i32_378] : memref<64x128xf32, #tpu.memory_space<any>> -> memref<1x128xf32, #tpu.memory_space<any>>
    %c4_i32_379 = arith.constant 4 : i32
    %c0_i32_380 = arith.constant 0 : i32
    %362 = tpu.memref_slice %arg8[%c4_i32_379, %c0_i32_380] : memref<8x128xf32, #tpu.memory_space<vmem>> -> memref<1x128xf32, #tpu.memory_space<vmem>>
    %363 = tpu.memref_slice %arg14[%c4_i32_376, %c0_i32_377] : memref<8x6x!tpu.dma_semaphore, #tpu.memory_space<semaphore_mem>> -> memref<1x1x!tpu.dma_semaphore, #tpu.memory_space<semaphore_mem>>
    %364 = tpu.memref_squeeze %363 : memref<1x1x!tpu.dma_semaphore, #tpu.memory_space<semaphore_mem>> -> memref<!tpu.dma_semaphore, #tpu.memory_space<semaphore_mem>>
    tpu.wait_dma2 semaphore(%364 : memref<!tpu.dma_semaphore, #tpu.memory_space<semaphore_mem>>) src(%361 : memref<1x128xf32, #tpu.memory_space<any>>) dst(%362 : memref<1x128xf32, #tpu.memory_space<vmem>>)
    %c4_i32_381 = arith.constant 4 : i32
    %c1_i32_382 = arith.constant 1 : i32
    %c0_i32_383 = arith.constant 0 : i32
    %365 = tpu.memref_slice %arg5[%42, %c0_i32_383] : memref<16x128xf32, #tpu.memory_space<any>> -> memref<1x128xf32, #tpu.memory_space<any>>
    %c4_i32_384 = arith.constant 4 : i32
    %c0_i32_385 = arith.constant 0 : i32
    %366 = tpu.memref_slice %arg9[%c4_i32_384, %c0_i32_385] : memref<8x128xf32, #tpu.memory_space<vmem>> -> memref<1x128xf32, #tpu.memory_space<vmem>>
    %367 = tpu.memref_slice %arg14[%c4_i32_381, %c1_i32_382] : memref<8x6x!tpu.dma_semaphore, #tpu.memory_space<semaphore_mem>> -> memref<1x1x!tpu.dma_semaphore, #tpu.memory_space<semaphore_mem>>
    %368 = tpu.memref_squeeze %367 : memref<1x1x!tpu.dma_semaphore, #tpu.memory_space<semaphore_mem>> -> memref<!tpu.dma_semaphore, #tpu.memory_space<semaphore_mem>>
    tpu.wait_dma2 semaphore(%368 : memref<!tpu.dma_semaphore, #tpu.memory_space<semaphore_mem>>) src(%365 : memref<1x128xf32, #tpu.memory_space<any>>) dst(%366 : memref<1x128xf32, #tpu.memory_space<vmem>>)
    %c4_i32_386 = arith.constant 4 : i32
    %c2_i32_387 = arith.constant 2 : i32
    %c0_i32_388 = arith.constant 0 : i32
    %369 = tpu.memref_slice %arg4[%45, %c0_i32_388] : memref<64x128xf32, #tpu.memory_space<any>> -> memref<1x128xf32, #tpu.memory_space<any>>
    %c4_i32_389 = arith.constant 4 : i32
    %c0_i32_390 = arith.constant 0 : i32
    %370 = tpu.memref_slice %arg10[%c4_i32_389, %c0_i32_390] : memref<8x128xf32, #tpu.memory_space<vmem>> -> memref<1x128xf32, #tpu.memory_space<vmem>>
    %371 = tpu.memref_slice %arg14[%c4_i32_386, %c2_i32_387] : memref<8x6x!tpu.dma_semaphore, #tpu.memory_space<semaphore_mem>> -> memref<1x1x!tpu.dma_semaphore, #tpu.memory_space<semaphore_mem>>
    %372 = tpu.memref_squeeze %371 : memref<1x1x!tpu.dma_semaphore, #tpu.memory_space<semaphore_mem>> -> memref<!tpu.dma_semaphore, #tpu.memory_space<semaphore_mem>>
    tpu.wait_dma2 semaphore(%372 : memref<!tpu.dma_semaphore, #tpu.memory_space<semaphore_mem>>) src(%369 : memref<1x128xf32, #tpu.memory_space<any>>) dst(%370 : memref<1x128xf32, #tpu.memory_space<vmem>>)
    %c4_i32_391 = arith.constant 4 : i32
    %c3_i32_392 = arith.constant 3 : i32
    %c0_i32_393 = arith.constant 0 : i32
    %373 = tpu.memref_slice %arg6[%39, %c0_i32_393] : memref<64x1xf32, #tpu.memory_space<any>> -> memref<1x1xf32, #tpu.memory_space<any>>
    %c4_i32_394 = arith.constant 4 : i32
    %c0_i32_395 = arith.constant 0 : i32
    %374 = tpu.memref_slice %arg11[%c4_i32_394, %c0_i32_395] : memref<8x1xf32, #tpu.memory_space<vmem>> -> memref<1x1xf32, #tpu.memory_space<vmem>>
    %375 = tpu.memref_slice %arg14[%c4_i32_391, %c3_i32_392] : memref<8x6x!tpu.dma_semaphore, #tpu.memory_space<semaphore_mem>> -> memref<1x1x!tpu.dma_semaphore, #tpu.memory_space<semaphore_mem>>
    %376 = tpu.memref_squeeze %375 : memref<1x1x!tpu.dma_semaphore, #tpu.memory_space<semaphore_mem>> -> memref<!tpu.dma_semaphore, #tpu.memory_space<semaphore_mem>>
    tpu.wait_dma2 semaphore(%376 : memref<!tpu.dma_semaphore, #tpu.memory_space<semaphore_mem>>) src(%373 : memref<1x1xf32, #tpu.memory_space<any>>) dst(%374 : memref<1x1xf32, #tpu.memory_space<vmem>>)
    %c4_i32_396 = arith.constant 4 : i32
    %c4_i32_397 = arith.constant 4 : i32
    %c0_i32_398 = arith.constant 0 : i32
    %377 = tpu.memref_slice %arg7[%42, %c0_i32_398] : memref<16x1xf32, #tpu.memory_space<any>> -> memref<1x1xf32, #tpu.memory_space<any>>
    %c4_i32_399 = arith.constant 4 : i32
    %c0_i32_400 = arith.constant 0 : i32
    %378 = tpu.memref_slice %arg12[%c4_i32_399, %c0_i32_400] : memref<8x1xf32, #tpu.memory_space<vmem>> -> memref<1x1xf32, #tpu.memory_space<vmem>>
    %379 = tpu.memref_slice %arg14[%c4_i32_396, %c4_i32_397] : memref<8x6x!tpu.dma_semaphore, #tpu.memory_space<semaphore_mem>> -> memref<1x1x!tpu.dma_semaphore, #tpu.memory_space<semaphore_mem>>
    %380 = tpu.memref_squeeze %379 : memref<1x1x!tpu.dma_semaphore, #tpu.memory_space<semaphore_mem>> -> memref<!tpu.dma_semaphore, #tpu.memory_space<semaphore_mem>>
    tpu.wait_dma2 semaphore(%380 : memref<!tpu.dma_semaphore, #tpu.memory_space<semaphore_mem>>) src(%377 : memref<1x1xf32, #tpu.memory_space<any>>) dst(%378 : memref<1x1xf32, #tpu.memory_space<vmem>>)
    %c4_i32_401 = arith.constant 4 : i32
    %c5_i32_402 = arith.constant 5 : i32
    %c0_i32_403 = arith.constant 0 : i32
    %381 = tpu.memref_slice %arg6[%45, %c0_i32_403] : memref<64x1xf32, #tpu.memory_space<any>> -> memref<1x1xf32, #tpu.memory_space<any>>
    %c4_i32_404 = arith.constant 4 : i32
    %c0_i32_405 = arith.constant 0 : i32
    %382 = tpu.memref_slice %arg13[%c4_i32_404, %c0_i32_405] : memref<8x1xf32, #tpu.memory_space<vmem>> -> memref<1x1xf32, #tpu.memory_space<vmem>>
    %383 = tpu.memref_slice %arg14[%c4_i32_401, %c5_i32_402] : memref<8x6x!tpu.dma_semaphore, #tpu.memory_space<semaphore_mem>> -> memref<1x1x!tpu.dma_semaphore, #tpu.memory_space<semaphore_mem>>
    %384 = tpu.memref_squeeze %383 : memref<1x1x!tpu.dma_semaphore, #tpu.memory_space<semaphore_mem>> -> memref<!tpu.dma_semaphore, #tpu.memory_space<semaphore_mem>>
    tpu.wait_dma2 semaphore(%384 : memref<!tpu.dma_semaphore, #tpu.memory_space<semaphore_mem>>) src(%381 : memref<1x1xf32, #tpu.memory_space<any>>) dst(%382 : memref<1x1xf32, #tpu.memory_space<vmem>>)
    %c5_i32_406 = arith.constant 5 : i32
    %c0_i32_407 = arith.constant 0 : i32
    %c0_i32_408 = arith.constant 0 : i32
    %385 = tpu.memref_slice %arg4[%48, %c0_i32_408] : memref<64x128xf32, #tpu.memory_space<any>> -> memref<1x128xf32, #tpu.memory_space<any>>
    %c5_i32_409 = arith.constant 5 : i32
    %c0_i32_410 = arith.constant 0 : i32
    %386 = tpu.memref_slice %arg8[%c5_i32_409, %c0_i32_410] : memref<8x128xf32, #tpu.memory_space<vmem>> -> memref<1x128xf32, #tpu.memory_space<vmem>>
    %387 = tpu.memref_slice %arg14[%c5_i32_406, %c0_i32_407] : memref<8x6x!tpu.dma_semaphore, #tpu.memory_space<semaphore_mem>> -> memref<1x1x!tpu.dma_semaphore, #tpu.memory_space<semaphore_mem>>
    %388 = tpu.memref_squeeze %387 : memref<1x1x!tpu.dma_semaphore, #tpu.memory_space<semaphore_mem>> -> memref<!tpu.dma_semaphore, #tpu.memory_space<semaphore_mem>>
    tpu.wait_dma2 semaphore(%388 : memref<!tpu.dma_semaphore, #tpu.memory_space<semaphore_mem>>) src(%385 : memref<1x128xf32, #tpu.memory_space<any>>) dst(%386 : memref<1x128xf32, #tpu.memory_space<vmem>>)
    %c5_i32_411 = arith.constant 5 : i32
    %c1_i32_412 = arith.constant 1 : i32
    %c0_i32_413 = arith.constant 0 : i32
    %389 = tpu.memref_slice %arg5[%51, %c0_i32_413] : memref<16x128xf32, #tpu.memory_space<any>> -> memref<1x128xf32, #tpu.memory_space<any>>
    %c5_i32_414 = arith.constant 5 : i32
    %c0_i32_415 = arith.constant 0 : i32
    %390 = tpu.memref_slice %arg9[%c5_i32_414, %c0_i32_415] : memref<8x128xf32, #tpu.memory_space<vmem>> -> memref<1x128xf32, #tpu.memory_space<vmem>>
    %391 = tpu.memref_slice %arg14[%c5_i32_411, %c1_i32_412] : memref<8x6x!tpu.dma_semaphore, #tpu.memory_space<semaphore_mem>> -> memref<1x1x!tpu.dma_semaphore, #tpu.memory_space<semaphore_mem>>
    %392 = tpu.memref_squeeze %391 : memref<1x1x!tpu.dma_semaphore, #tpu.memory_space<semaphore_mem>> -> memref<!tpu.dma_semaphore, #tpu.memory_space<semaphore_mem>>
    tpu.wait_dma2 semaphore(%392 : memref<!tpu.dma_semaphore, #tpu.memory_space<semaphore_mem>>) src(%389 : memref<1x128xf32, #tpu.memory_space<any>>) dst(%390 : memref<1x128xf32, #tpu.memory_space<vmem>>)
    %c5_i32_416 = arith.constant 5 : i32
    %c2_i32_417 = arith.constant 2 : i32
    %c0_i32_418 = arith.constant 0 : i32
    %393 = tpu.memref_slice %arg4[%54, %c0_i32_418] : memref<64x128xf32, #tpu.memory_space<any>> -> memref<1x128xf32, #tpu.memory_space<any>>
    %c5_i32_419 = arith.constant 5 : i32
    %c0_i32_420 = arith.constant 0 : i32
    %394 = tpu.memref_slice %arg10[%c5_i32_419, %c0_i32_420] : memref<8x128xf32, #tpu.memory_space<vmem>> -> memref<1x128xf32, #tpu.memory_space<vmem>>
    %395 = tpu.memref_slice %arg14[%c5_i32_416, %c2_i32_417] : memref<8x6x!tpu.dma_semaphore, #tpu.memory_space<semaphore_mem>> -> memref<1x1x!tpu.dma_semaphore, #tpu.memory_space<semaphore_mem>>
    %396 = tpu.memref_squeeze %395 : memref<1x1x!tpu.dma_semaphore, #tpu.memory_space<semaphore_mem>> -> memref<!tpu.dma_semaphore, #tpu.memory_space<semaphore_mem>>
    tpu.wait_dma2 semaphore(%396 : memref<!tpu.dma_semaphore, #tpu.memory_space<semaphore_mem>>) src(%393 : memref<1x128xf32, #tpu.memory_space<any>>) dst(%394 : memref<1x128xf32, #tpu.memory_space<vmem>>)
    %c5_i32_421 = arith.constant 5 : i32
    %c3_i32_422 = arith.constant 3 : i32
    %c0_i32_423 = arith.constant 0 : i32
    %397 = tpu.memref_slice %arg6[%48, %c0_i32_423] : memref<64x1xf32, #tpu.memory_space<any>> -> memref<1x1xf32, #tpu.memory_space<any>>
    %c5_i32_424 = arith.constant 5 : i32
    %c0_i32_425 = arith.constant 0 : i32
    %398 = tpu.memref_slice %arg11[%c5_i32_424, %c0_i32_425] : memref<8x1xf32, #tpu.memory_space<vmem>> -> memref<1x1xf32, #tpu.memory_space<vmem>>
    %399 = tpu.memref_slice %arg14[%c5_i32_421, %c3_i32_422] : memref<8x6x!tpu.dma_semaphore, #tpu.memory_space<semaphore_mem>> -> memref<1x1x!tpu.dma_semaphore, #tpu.memory_space<semaphore_mem>>
    %400 = tpu.memref_squeeze %399 : memref<1x1x!tpu.dma_semaphore, #tpu.memory_space<semaphore_mem>> -> memref<!tpu.dma_semaphore, #tpu.memory_space<semaphore_mem>>
    tpu.wait_dma2 semaphore(%400 : memref<!tpu.dma_semaphore, #tpu.memory_space<semaphore_mem>>) src(%397 : memref<1x1xf32, #tpu.memory_space<any>>) dst(%398 : memref<1x1xf32, #tpu.memory_space<vmem>>)
    %c5_i32_426 = arith.constant 5 : i32
    %c4_i32_427 = arith.constant 4 : i32
    %c0_i32_428 = arith.constant 0 : i32
    %401 = tpu.memref_slice %arg7[%51, %c0_i32_428] : memref<16x1xf32, #tpu.memory_space<any>> -> memref<1x1xf32, #tpu.memory_space<any>>
    %c5_i32_429 = arith.constant 5 : i32
    %c0_i32_430 = arith.constant 0 : i32
    %402 = tpu.memref_slice %arg12[%c5_i32_429, %c0_i32_430] : memref<8x1xf32, #tpu.memory_space<vmem>> -> memref<1x1xf32, #tpu.memory_space<vmem>>
    %403 = tpu.memref_slice %arg14[%c5_i32_426, %c4_i32_427] : memref<8x6x!tpu.dma_semaphore, #tpu.memory_space<semaphore_mem>> -> memref<1x1x!tpu.dma_semaphore, #tpu.memory_space<semaphore_mem>>
    %404 = tpu.memref_squeeze %403 : memref<1x1x!tpu.dma_semaphore, #tpu.memory_space<semaphore_mem>> -> memref<!tpu.dma_semaphore, #tpu.memory_space<semaphore_mem>>
    tpu.wait_dma2 semaphore(%404 : memref<!tpu.dma_semaphore, #tpu.memory_space<semaphore_mem>>) src(%401 : memref<1x1xf32, #tpu.memory_space<any>>) dst(%402 : memref<1x1xf32, #tpu.memory_space<vmem>>)
    %c5_i32_431 = arith.constant 5 : i32
    %c5_i32_432 = arith.constant 5 : i32
    %c0_i32_433 = arith.constant 0 : i32
    %405 = tpu.memref_slice %arg6[%54, %c0_i32_433] : memref<64x1xf32, #tpu.memory_space<any>> -> memref<1x1xf32, #tpu.memory_space<any>>
    %c5_i32_434 = arith.constant 5 : i32
    %c0_i32_435 = arith.constant 0 : i32
    %406 = tpu.memref_slice %arg13[%c5_i32_434, %c0_i32_435] : memref<8x1xf32, #tpu.memory_space<vmem>> -> memref<1x1xf32, #tpu.memory_space<vmem>>
    %407 = tpu.memref_slice %arg14[%c5_i32_431, %c5_i32_432] : memref<8x6x!tpu.dma_semaphore, #tpu.memory_space<semaphore_mem>> -> memref<1x1x!tpu.dma_semaphore, #tpu.memory_space<semaphore_mem>>
    %408 = tpu.memref_squeeze %407 : memref<1x1x!tpu.dma_semaphore, #tpu.memory_space<semaphore_mem>> -> memref<!tpu.dma_semaphore, #tpu.memory_space<semaphore_mem>>
    tpu.wait_dma2 semaphore(%408 : memref<!tpu.dma_semaphore, #tpu.memory_space<semaphore_mem>>) src(%405 : memref<1x1xf32, #tpu.memory_space<any>>) dst(%406 : memref<1x1xf32, #tpu.memory_space<vmem>>)
    %c6_i32_436 = arith.constant 6 : i32
    %c0_i32_437 = arith.constant 0 : i32
    %c0_i32_438 = arith.constant 0 : i32
    %409 = tpu.memref_slice %arg4[%57, %c0_i32_438] : memref<64x128xf32, #tpu.memory_space<any>> -> memref<1x128xf32, #tpu.memory_space<any>>
    %c6_i32_439 = arith.constant 6 : i32
    %c0_i32_440 = arith.constant 0 : i32
    %410 = tpu.memref_slice %arg8[%c6_i32_439, %c0_i32_440] : memref<8x128xf32, #tpu.memory_space<vmem>> -> memref<1x128xf32, #tpu.memory_space<vmem>>
    %411 = tpu.memref_slice %arg14[%c6_i32_436, %c0_i32_437] : memref<8x6x!tpu.dma_semaphore, #tpu.memory_space<semaphore_mem>> -> memref<1x1x!tpu.dma_semaphore, #tpu.memory_space<semaphore_mem>>
    %412 = tpu.memref_squeeze %411 : memref<1x1x!tpu.dma_semaphore, #tpu.memory_space<semaphore_mem>> -> memref<!tpu.dma_semaphore, #tpu.memory_space<semaphore_mem>>
    tpu.wait_dma2 semaphore(%412 : memref<!tpu.dma_semaphore, #tpu.memory_space<semaphore_mem>>) src(%409 : memref<1x128xf32, #tpu.memory_space<any>>) dst(%410 : memref<1x128xf32, #tpu.memory_space<vmem>>)
    %c6_i32_441 = arith.constant 6 : i32
    %c1_i32_442 = arith.constant 1 : i32
    %c0_i32_443 = arith.constant 0 : i32
    %413 = tpu.memref_slice %arg5[%60, %c0_i32_443] : memref<16x128xf32, #tpu.memory_space<any>> -> memref<1x128xf32, #tpu.memory_space<any>>
    %c6_i32_444 = arith.constant 6 : i32
    %c0_i32_445 = arith.constant 0 : i32
    %414 = tpu.memref_slice %arg9[%c6_i32_444, %c0_i32_445] : memref<8x128xf32, #tpu.memory_space<vmem>> -> memref<1x128xf32, #tpu.memory_space<vmem>>
    %415 = tpu.memref_slice %arg14[%c6_i32_441, %c1_i32_442] : memref<8x6x!tpu.dma_semaphore, #tpu.memory_space<semaphore_mem>> -> memref<1x1x!tpu.dma_semaphore, #tpu.memory_space<semaphore_mem>>
    %416 = tpu.memref_squeeze %415 : memref<1x1x!tpu.dma_semaphore, #tpu.memory_space<semaphore_mem>> -> memref<!tpu.dma_semaphore, #tpu.memory_space<semaphore_mem>>
    tpu.wait_dma2 semaphore(%416 : memref<!tpu.dma_semaphore, #tpu.memory_space<semaphore_mem>>) src(%413 : memref<1x128xf32, #tpu.memory_space<any>>) dst(%414 : memref<1x128xf32, #tpu.memory_space<vmem>>)
    %c6_i32_446 = arith.constant 6 : i32
    %c2_i32_447 = arith.constant 2 : i32
    %c0_i32_448 = arith.constant 0 : i32
    %417 = tpu.memref_slice %arg4[%63, %c0_i32_448] : memref<64x128xf32, #tpu.memory_space<any>> -> memref<1x128xf32, #tpu.memory_space<any>>
    %c6_i32_449 = arith.constant 6 : i32
    %c0_i32_450 = arith.constant 0 : i32
    %418 = tpu.memref_slice %arg10[%c6_i32_449, %c0_i32_450] : memref<8x128xf32, #tpu.memory_space<vmem>> -> memref<1x128xf32, #tpu.memory_space<vmem>>
    %419 = tpu.memref_slice %arg14[%c6_i32_446, %c2_i32_447] : memref<8x6x!tpu.dma_semaphore, #tpu.memory_space<semaphore_mem>> -> memref<1x1x!tpu.dma_semaphore, #tpu.memory_space<semaphore_mem>>
    %420 = tpu.memref_squeeze %419 : memref<1x1x!tpu.dma_semaphore, #tpu.memory_space<semaphore_mem>> -> memref<!tpu.dma_semaphore, #tpu.memory_space<semaphore_mem>>
    tpu.wait_dma2 semaphore(%420 : memref<!tpu.dma_semaphore, #tpu.memory_space<semaphore_mem>>) src(%417 : memref<1x128xf32, #tpu.memory_space<any>>) dst(%418 : memref<1x128xf32, #tpu.memory_space<vmem>>)
    %c6_i32_451 = arith.constant 6 : i32
    %c3_i32_452 = arith.constant 3 : i32
    %c0_i32_453 = arith.constant 0 : i32
    %421 = tpu.memref_slice %arg6[%57, %c0_i32_453] : memref<64x1xf32, #tpu.memory_space<any>> -> memref<1x1xf32, #tpu.memory_space<any>>
    %c6_i32_454 = arith.constant 6 : i32
    %c0_i32_455 = arith.constant 0 : i32
    %422 = tpu.memref_slice %arg11[%c6_i32_454, %c0_i32_455] : memref<8x1xf32, #tpu.memory_space<vmem>> -> memref<1x1xf32, #tpu.memory_space<vmem>>
    %423 = tpu.memref_slice %arg14[%c6_i32_451, %c3_i32_452] : memref<8x6x!tpu.dma_semaphore, #tpu.memory_space<semaphore_mem>> -> memref<1x1x!tpu.dma_semaphore, #tpu.memory_space<semaphore_mem>>
    %424 = tpu.memref_squeeze %423 : memref<1x1x!tpu.dma_semaphore, #tpu.memory_space<semaphore_mem>> -> memref<!tpu.dma_semaphore, #tpu.memory_space<semaphore_mem>>
    tpu.wait_dma2 semaphore(%424 : memref<!tpu.dma_semaphore, #tpu.memory_space<semaphore_mem>>) src(%421 : memref<1x1xf32, #tpu.memory_space<any>>) dst(%422 : memref<1x1xf32, #tpu.memory_space<vmem>>)
    %c6_i32_456 = arith.constant 6 : i32
    %c4_i32_457 = arith.constant 4 : i32
    %c0_i32_458 = arith.constant 0 : i32
    %425 = tpu.memref_slice %arg7[%60, %c0_i32_458] : memref<16x1xf32, #tpu.memory_space<any>> -> memref<1x1xf32, #tpu.memory_space<any>>
    %c6_i32_459 = arith.constant 6 : i32
    %c0_i32_460 = arith.constant 0 : i32
    %426 = tpu.memref_slice %arg12[%c6_i32_459, %c0_i32_460] : memref<8x1xf32, #tpu.memory_space<vmem>> -> memref<1x1xf32, #tpu.memory_space<vmem>>
    %427 = tpu.memref_slice %arg14[%c6_i32_456, %c4_i32_457] : memref<8x6x!tpu.dma_semaphore, #tpu.memory_space<semaphore_mem>> -> memref<1x1x!tpu.dma_semaphore, #tpu.memory_space<semaphore_mem>>
    %428 = tpu.memref_squeeze %427 : memref<1x1x!tpu.dma_semaphore, #tpu.memory_space<semaphore_mem>> -> memref<!tpu.dma_semaphore, #tpu.memory_space<semaphore_mem>>
    tpu.wait_dma2 semaphore(%428 : memref<!tpu.dma_semaphore, #tpu.memory_space<semaphore_mem>>) src(%425 : memref<1x1xf32, #tpu.memory_space<any>>) dst(%426 : memref<1x1xf32, #tpu.memory_space<vmem>>)
    %c6_i32_461 = arith.constant 6 : i32
    %c5_i32_462 = arith.constant 5 : i32
    %c0_i32_463 = arith.constant 0 : i32
    %429 = tpu.memref_slice %arg6[%63, %c0_i32_463] : memref<64x1xf32, #tpu.memory_space<any>> -> memref<1x1xf32, #tpu.memory_space<any>>
    %c6_i32_464 = arith.constant 6 : i32
    %c0_i32_465 = arith.constant 0 : i32
    %430 = tpu.memref_slice %arg13[%c6_i32_464, %c0_i32_465] : memref<8x1xf32, #tpu.memory_space<vmem>> -> memref<1x1xf32, #tpu.memory_space<vmem>>
    %431 = tpu.memref_slice %arg14[%c6_i32_461, %c5_i32_462] : memref<8x6x!tpu.dma_semaphore, #tpu.memory_space<semaphore_mem>> -> memref<1x1x!tpu.dma_semaphore, #tpu.memory_space<semaphore_mem>>
    %432 = tpu.memref_squeeze %431 : memref<1x1x!tpu.dma_semaphore, #tpu.memory_space<semaphore_mem>> -> memref<!tpu.dma_semaphore, #tpu.memory_space<semaphore_mem>>
    tpu.wait_dma2 semaphore(%432 : memref<!tpu.dma_semaphore, #tpu.memory_space<semaphore_mem>>) src(%429 : memref<1x1xf32, #tpu.memory_space<any>>) dst(%430 : memref<1x1xf32, #tpu.memory_space<vmem>>)
    %c7_i32_466 = arith.constant 7 : i32
    %c0_i32_467 = arith.constant 0 : i32
    %c0_i32_468 = arith.constant 0 : i32
    %433 = tpu.memref_slice %arg4[%66, %c0_i32_468] : memref<64x128xf32, #tpu.memory_space<any>> -> memref<1x128xf32, #tpu.memory_space<any>>
    %c7_i32_469 = arith.constant 7 : i32
    %c0_i32_470 = arith.constant 0 : i32
    %434 = tpu.memref_slice %arg8[%c7_i32_469, %c0_i32_470] : memref<8x128xf32, #tpu.memory_space<vmem>> -> memref<1x128xf32, #tpu.memory_space<vmem>>
    %435 = tpu.memref_slice %arg14[%c7_i32_466, %c0_i32_467] : memref<8x6x!tpu.dma_semaphore, #tpu.memory_space<semaphore_mem>> -> memref<1x1x!tpu.dma_semaphore, #tpu.memory_space<semaphore_mem>>
    %436 = tpu.memref_squeeze %435 : memref<1x1x!tpu.dma_semaphore, #tpu.memory_space<semaphore_mem>> -> memref<!tpu.dma_semaphore, #tpu.memory_space<semaphore_mem>>
    tpu.wait_dma2 semaphore(%436 : memref<!tpu.dma_semaphore, #tpu.memory_space<semaphore_mem>>) src(%433 : memref<1x128xf32, #tpu.memory_space<any>>) dst(%434 : memref<1x128xf32, #tpu.memory_space<vmem>>)
    %c7_i32_471 = arith.constant 7 : i32
    %c1_i32_472 = arith.constant 1 : i32
    %c0_i32_473 = arith.constant 0 : i32
    %437 = tpu.memref_slice %arg5[%69, %c0_i32_473] : memref<16x128xf32, #tpu.memory_space<any>> -> memref<1x128xf32, #tpu.memory_space<any>>
    %c7_i32_474 = arith.constant 7 : i32
    %c0_i32_475 = arith.constant 0 : i32
    %438 = tpu.memref_slice %arg9[%c7_i32_474, %c0_i32_475] : memref<8x128xf32, #tpu.memory_space<vmem>> -> memref<1x128xf32, #tpu.memory_space<vmem>>
    %439 = tpu.memref_slice %arg14[%c7_i32_471, %c1_i32_472] : memref<8x6x!tpu.dma_semaphore, #tpu.memory_space<semaphore_mem>> -> memref<1x1x!tpu.dma_semaphore, #tpu.memory_space<semaphore_mem>>
    %440 = tpu.memref_squeeze %439 : memref<1x1x!tpu.dma_semaphore, #tpu.memory_space<semaphore_mem>> -> memref<!tpu.dma_semaphore, #tpu.memory_space<semaphore_mem>>
    tpu.wait_dma2 semaphore(%440 : memref<!tpu.dma_semaphore, #tpu.memory_space<semaphore_mem>>) src(%437 : memref<1x128xf32, #tpu.memory_space<any>>) dst(%438 : memref<1x128xf32, #tpu.memory_space<vmem>>)
    %c7_i32_476 = arith.constant 7 : i32
    %c2_i32_477 = arith.constant 2 : i32
    %c0_i32_478 = arith.constant 0 : i32
    %441 = tpu.memref_slice %arg4[%72, %c0_i32_478] : memref<64x128xf32, #tpu.memory_space<any>> -> memref<1x128xf32, #tpu.memory_space<any>>
    %c7_i32_479 = arith.constant 7 : i32
    %c0_i32_480 = arith.constant 0 : i32
    %442 = tpu.memref_slice %arg10[%c7_i32_479, %c0_i32_480] : memref<8x128xf32, #tpu.memory_space<vmem>> -> memref<1x128xf32, #tpu.memory_space<vmem>>
    %443 = tpu.memref_slice %arg14[%c7_i32_476, %c2_i32_477] : memref<8x6x!tpu.dma_semaphore, #tpu.memory_space<semaphore_mem>> -> memref<1x1x!tpu.dma_semaphore, #tpu.memory_space<semaphore_mem>>
    %444 = tpu.memref_squeeze %443 : memref<1x1x!tpu.dma_semaphore, #tpu.memory_space<semaphore_mem>> -> memref<!tpu.dma_semaphore, #tpu.memory_space<semaphore_mem>>
    tpu.wait_dma2 semaphore(%444 : memref<!tpu.dma_semaphore, #tpu.memory_space<semaphore_mem>>) src(%441 : memref<1x128xf32, #tpu.memory_space<any>>) dst(%442 : memref<1x128xf32, #tpu.memory_space<vmem>>)
    %c7_i32_481 = arith.constant 7 : i32
    %c3_i32_482 = arith.constant 3 : i32
    %c0_i32_483 = arith.constant 0 : i32
    %445 = tpu.memref_slice %arg6[%66, %c0_i32_483] : memref<64x1xf32, #tpu.memory_space<any>> -> memref<1x1xf32, #tpu.memory_space<any>>
    %c7_i32_484 = arith.constant 7 : i32
    %c0_i32_485 = arith.constant 0 : i32
    %446 = tpu.memref_slice %arg11[%c7_i32_484, %c0_i32_485] : memref<8x1xf32, #tpu.memory_space<vmem>> -> memref<1x1xf32, #tpu.memory_space<vmem>>
    %447 = tpu.memref_slice %arg14[%c7_i32_481, %c3_i32_482] : memref<8x6x!tpu.dma_semaphore, #tpu.memory_space<semaphore_mem>> -> memref<1x1x!tpu.dma_semaphore, #tpu.memory_space<semaphore_mem>>
    %448 = tpu.memref_squeeze %447 : memref<1x1x!tpu.dma_semaphore, #tpu.memory_space<semaphore_mem>> -> memref<!tpu.dma_semaphore, #tpu.memory_space<semaphore_mem>>
    tpu.wait_dma2 semaphore(%448 : memref<!tpu.dma_semaphore, #tpu.memory_space<semaphore_mem>>) src(%445 : memref<1x1xf32, #tpu.memory_space<any>>) dst(%446 : memref<1x1xf32, #tpu.memory_space<vmem>>)
    %c7_i32_486 = arith.constant 7 : i32
    %c4_i32_487 = arith.constant 4 : i32
    %c0_i32_488 = arith.constant 0 : i32
    %449 = tpu.memref_slice %arg7[%69, %c0_i32_488] : memref<16x1xf32, #tpu.memory_space<any>> -> memref<1x1xf32, #tpu.memory_space<any>>
    %c7_i32_489 = arith.constant 7 : i32
    %c0_i32_490 = arith.constant 0 : i32
    %450 = tpu.memref_slice %arg12[%c7_i32_489, %c0_i32_490] : memref<8x1xf32, #tpu.memory_space<vmem>> -> memref<1x1xf32, #tpu.memory_space<vmem>>
    %451 = tpu.memref_slice %arg14[%c7_i32_486, %c4_i32_487] : memref<8x6x!tpu.dma_semaphore, #tpu.memory_space<semaphore_mem>> -> memref<1x1x!tpu.dma_semaphore, #tpu.memory_space<semaphore_mem>>
    %452 = tpu.memref_squeeze %451 : memref<1x1x!tpu.dma_semaphore, #tpu.memory_space<semaphore_mem>> -> memref<!tpu.dma_semaphore, #tpu.memory_space<semaphore_mem>>
    tpu.wait_dma2 semaphore(%452 : memref<!tpu.dma_semaphore, #tpu.memory_space<semaphore_mem>>) src(%449 : memref<1x1xf32, #tpu.memory_space<any>>) dst(%450 : memref<1x1xf32, #tpu.memory_space<vmem>>)
    %c7_i32_491 = arith.constant 7 : i32
    %c5_i32_492 = arith.constant 5 : i32
    %c0_i32_493 = arith.constant 0 : i32
    %453 = tpu.memref_slice %arg6[%72, %c0_i32_493] : memref<64x1xf32, #tpu.memory_space<any>> -> memref<1x1xf32, #tpu.memory_space<any>>
    %c7_i32_494 = arith.constant 7 : i32
    %c0_i32_495 = arith.constant 0 : i32
    %454 = tpu.memref_slice %arg13[%c7_i32_494, %c0_i32_495] : memref<8x1xf32, #tpu.memory_space<vmem>> -> memref<1x1xf32, #tpu.memory_space<vmem>>
    %455 = tpu.memref_slice %arg14[%c7_i32_491, %c5_i32_492] : memref<8x6x!tpu.dma_semaphore, #tpu.memory_space<semaphore_mem>> -> memref<1x1x!tpu.dma_semaphore, #tpu.memory_space<semaphore_mem>>
    %456 = tpu.memref_squeeze %455 : memref<1x1x!tpu.dma_semaphore, #tpu.memory_space<semaphore_mem>> -> memref<!tpu.dma_semaphore, #tpu.memory_space<semaphore_mem>>
    tpu.wait_dma2 semaphore(%456 : memref<!tpu.dma_semaphore, #tpu.memory_space<semaphore_mem>>) src(%453 : memref<1x1xf32, #tpu.memory_space<any>>) dst(%454 : memref<1x1xf32, #tpu.memory_space<vmem>>)
    return
  }
  func.func @transform_4(%arg0: i32, %arg1: memref<8xi32, #tpu.memory_space<smem>>, %arg2: memref<8xi32, #tpu.memory_space<smem>>, %arg3: memref<8xi32, #tpu.memory_space<smem>>) -> (i32, i32) {
    %c0_i32 = arith.constant 0 : i32
    %c0_i32_0 = arith.constant 0 : i32
    return %arg0, %c0_i32 : i32, i32
  }
  func.func @transform_5(%arg0: i32, %arg1: memref<8xi32, #tpu.memory_space<smem>>, %arg2: memref<8xi32, #tpu.memory_space<smem>>, %arg3: memref<8xi32, #tpu.memory_space<smem>>) -> (i32, i32) {
    %c0_i32 = arith.constant 0 : i32
    %c0_i32_0 = arith.constant 0 : i32
    return %arg0, %c0_i32 : i32, i32
  }
  func.func @transform_6(%arg0: i32, %arg1: memref<8xi32, #tpu.memory_space<smem>>, %arg2: memref<8xi32, #tpu.memory_space<smem>>, %arg3: memref<8xi32, #tpu.memory_space<smem>>) -> (i32, i32) {
    %c0_i32 = arith.constant 0 : i32
    %c0_i32_0 = arith.constant 0 : i32
    return %arg0, %c0_i32 : i32, i32
  }
  func.func @transform_7(%arg0: i32, %arg1: memref<8xi32, #tpu.memory_space<smem>>, %arg2: memref<8xi32, #tpu.memory_space<smem>>, %arg3: memref<8xi32, #tpu.memory_space<smem>>) -> (i32, i32) {
    %c0_i32 = arith.constant 0 : i32
    %c0_i32_0 = arith.constant 0 : i32
    return %arg0, %c0_i32 : i32, i32
  }
  func.func @transform_8(%arg0: i32, %arg1: memref<8xi32, #tpu.memory_space<smem>>, %arg2: memref<8xi32, #tpu.memory_space<smem>>, %arg3: memref<8xi32, #tpu.memory_space<smem>>) -> (i32, i32) {
    %c0_i32 = arith.constant 0 : i32
    %c0_i32_0 = arith.constant 0 : i32
    return %arg0, %c0_i32 : i32, i32
  }
  func.func @transform_9(%arg0: i32, %arg1: memref<8xi32, #tpu.memory_space<smem>>, %arg2: memref<8xi32, #tpu.memory_space<smem>>, %arg3: memref<8xi32, #tpu.memory_space<smem>>) -> (i32, i32) {
    %c0_i32 = arith.constant 0 : i32
    %c0_i32_0 = arith.constant 0 : i32
    return %arg0, %c0_i32 : i32, i32
  }
}

</mosaic_0001>

<llo_original>
// kernel: tpu_custom_call.1
$region0: #{tpu_custom_call.1}
  #allocation0 [shape = 'u32[]', space=smem, size = 0x4, offset = 0x4, fixed_abs, tag = 'smem constant byte address 0x4 - core index']
  #allocation1 [shape = 'u32[144,128]{1,0:T(1,128)}', space=vmem, size = 0x12000, scoped, tag = 'internal scratch']
  #allocation2 [shape = 's32[48]{0}', space=sflag, size = 0xc0, scoped, tag = 'scratch operand']
  #allocation3 [shape = 's32[1]{0}', space=sflag, size = 0x4, scoped, tag = 'scoped memory for tpu_custom_call.1']
  #allocation4 [shape = 'u8[512]{0}', space=smem, size = 0x200, scoped, tag = 'prefetched SMEM operand 0']
  #allocation5 [shape = 'u8[512]{0}', space=smem, size = 0x200, scoped, tag = 'prefetched SMEM operand 1']
  #allocation6 [shape = 'u8[512]{0}', space=smem, size = 0x200, scoped, tag = 'prefetched SMEM operand 2']
  #allocation12 [shape = 's32[]', space=sflag, size = 0x4, offset = 0, fixed_abs, tag = 'sflag constant byte address 0x0 - dummy sync flag']
  #allocation13 [shape = 's32[]', space=sflag, size = 0x4, offset = 0, fixed_abs, tag = 'sflag constant byte address 0x0 - dummy sync flag']
  #allocation14 [shape = 's32[]', space=sflag, size = 0x4, offset = 0, fixed_abs, tag = 'sflag constant byte address 0x0 - dummy sync flag']
  #allocation15 [shape = 's32[]', space=sflag, size = 0x4, offset = 0, fixed_abs, tag = 'sflag constant byte address 0x0 - dummy sync flag']
  #allocation16 [shape = 's32[]', space=sflag, size = 0x4, offset = 0, fixed_abs, tag = 'sflag constant byte address 0x0 - dummy sync flag']
  #allocation17 [shape = 's32[]', space=sflag, size = 0x4, offset = 0, fixed_abs, tag = 'sflag constant byte address 0x0 - dummy sync flag']
  #allocation18 [shape = 's32[]', space=sflag, size = 0x4, offset = 0, fixed_abs, tag = 'sflag constant byte address 0x0 - dummy sync flag']
  #allocation19 [shape = 's32[]', space=sflag, size = 0x4, offset = 0, fixed_abs, tag = 'sflag constant byte address 0x0 - dummy sync flag']
  #allocation20 [shape = 's32[]', space=sflag, size = 0x4, offset = 0, fixed_abs, tag = 'sflag constant byte address 0x0 - dummy sync flag']
  #allocation21 [shape = 's32[]', space=sflag, size = 0x4, offset = 0, fixed_abs, tag = 'sflag constant byte address 0x0 - dummy sync flag']
  #allocation22 [shape = 's32[]', space=sflag, size = 0x4, offset = 0, fixed_abs, tag = 'sflag constant byte address 0x0 - dummy sync flag']
  #allocation23 [shape = 's32[]', space=sflag, size = 0x4, offset = 0, fixed_abs, tag = 'sflag constant byte address 0x0 - dummy sync flag']
  #allocation24 [shape = 's32[]', space=sflag, size = 0x4, offset = 0, fixed_abs, tag = 'sflag constant byte address 0x0 - dummy sync flag']
  #allocation25 [shape = 's32[]', space=sflag, size = 0x4, offset = 0, fixed_abs, tag = 'sflag constant byte address 0x0 - dummy sync flag']
  #allocation26 [shape = 's32[]', space=sflag, size = 0x4, offset = 0, fixed_abs, tag = 'sflag constant byte address 0x0 - dummy sync flag']
  #allocation27 [shape = 's32[]', space=sflag, size = 0x4, offset = 0, fixed_abs, tag = 'sflag constant byte address 0x0 - dummy sync flag']
  #allocation28 [shape = 's32[]', space=sflag, size = 0x4, offset = 0, fixed_abs, tag = 'sflag constant byte address 0x0 - dummy sync flag']
  #allocation29 [shape = 's32[]', space=sflag, size = 0x4, offset = 0, fixed_abs, tag = 'sflag constant byte address 0x0 - dummy sync flag']
  #allocation30 [shape = 's32[]', space=sflag, size = 0x4, offset = 0, fixed_abs, tag = 'sflag constant byte address 0x0 - dummy sync flag']
  #allocation31 [shape = 's32[]', space=sflag, size = 0x4, offset = 0, fixed_abs, tag = 'sflag constant byte address 0x0 - dummy sync flag']
  #allocation32 [shape = 's32[]', space=sflag, size = 0x4, offset = 0, fixed_abs, tag = 'sflag constant byte address 0x0 - dummy sync flag']
  #allocation33 [shape = 's32[]', space=sflag, size = 0x4, offset = 0, fixed_abs, tag = 'sflag constant byte address 0x0 - dummy sync flag']
  #allocation34 [shape = 's32[]', space=sflag, size = 0x4, offset = 0, fixed_abs, tag = 'sflag constant byte address 0x0 - dummy sync flag']
  #allocation35 [shape = 's32[]', space=sflag, size = 0x4, offset = 0, fixed_abs, tag = 'sflag constant byte address 0x0 - dummy sync flag']
  #allocation36 [shape = 's32[]', space=sflag, size = 0x4, offset = 0, fixed_abs, tag = 'sflag constant byte address 0x0 - dummy sync flag']
  #allocation37 [shape = 's32[]', space=sflag, size = 0x4, offset = 0, fixed_abs, tag = 'sflag constant byte address 0x0 - dummy sync flag']
  #allocation38 [shape = 's32[]', space=sflag, size = 0x4, offset = 0, fixed_abs, tag = 'sflag constant byte address 0x0 - dummy sync flag']
  #allocation39 [shape = 's32[]', space=sflag, size = 0x4, offset = 0, fixed_abs, tag = 'sflag constant byte address 0x0 - dummy sync flag']
  #allocation40 [shape = 's32[]', space=sflag, size = 0x4, offset = 0, fixed_abs, tag = 'sflag constant byte address 0x0 - dummy sync flag']
  #allocation41 [shape = 's32[]', space=sflag, size = 0x4, offset = 0, fixed_abs, tag = 'sflag constant byte address 0x0 - dummy sync flag']
  #allocation42 [shape = 's32[]', space=sflag, size = 0x4, offset = 0, fixed_abs, tag = 'sflag constant byte address 0x0 - dummy sync flag']
  #allocation43 [shape = 's32[]', space=sflag, size = 0x4, offset = 0, fixed_abs, tag = 'sflag constant byte address 0x0 - dummy sync flag']
  #allocation44 [shape = 's32[]', space=sflag, size = 0x4, offset = 0, fixed_abs, tag = 'sflag constant byte address 0x0 - dummy sync flag']
  #allocation45 [shape = 's32[]', space=sflag, size = 0x4, offset = 0, fixed_abs, tag = 'sflag constant byte address 0x0 - dummy sync flag']
  #allocation46 [shape = 's32[]', space=sflag, size = 0x4, offset = 0, fixed_abs, tag = 'sflag constant byte address 0x0 - dummy sync flag']
  #allocation47 [shape = 's32[]', space=sflag, size = 0x4, offset = 0, fixed_abs, tag = 'sflag constant byte address 0x0 - dummy sync flag']
  #allocation48 [shape = 's32[]', space=sflag, size = 0x4, offset = 0, fixed_abs, tag = 'sflag constant byte address 0x0 - dummy sync flag']
  #allocation49 [shape = 's32[]', space=sflag, size = 0x4, offset = 0, fixed_abs, tag = 'sflag constant byte address 0x0 - dummy sync flag']
  #allocation50 [shape = 's32[]', space=sflag, size = 0x4, offset = 0, fixed_abs, tag = 'sflag constant byte address 0x0 - dummy sync flag']
  #allocation51 [shape = 's32[]', space=sflag, size = 0x4, offset = 0, fixed_abs, tag = 'sflag constant byte address 0x0 - dummy sync flag']
  #allocation52 [shape = 's32[]', space=sflag, size = 0x4, offset = 0, fixed_abs, tag = 'sflag constant byte address 0x0 - dummy sync flag']
  #allocation53 [shape = 's32[]', space=sflag, size = 0x4, offset = 0, fixed_abs, tag = 'sflag constant byte address 0x0 - dummy sync flag']
  #allocation54 [shape = 's32[]', space=sflag, size = 0x4, offset = 0, fixed_abs, tag = 'sflag constant byte address 0x0 - dummy sync flag']
  #allocation55 [shape = 's32[]', space=sflag, size = 0x4, offset = 0, fixed_abs, tag = 'sflag constant byte address 0x0 - dummy sync flag']
  #allocation56 [shape = 's32[]', space=sflag, size = 0x4, offset = 0, fixed_abs, tag = 'sflag constant byte address 0x0 - dummy sync flag']
  #allocation57 [shape = 's32[]', space=sflag, size = 0x4, offset = 0, fixed_abs, tag = 'sflag constant byte address 0x0 - dummy sync flag']
  #allocation58 [shape = 's32[]', space=sflag, size = 0x4, offset = 0, fixed_abs, tag = 'sflag constant byte address 0x0 - dummy sync flag']
  #allocation59 [shape = 's32[]', space=sflag, size = 0x4, offset = 0, fixed_abs, tag = 'sflag constant byte address 0x0 - dummy sync flag']
  %s0 = inlined_call_operand.vmem [shape: s32[8], index: 0, kind: input, shape index: {}]
  %s1 = inlined_call_operand.vmem [shape: s32[8], index: 1, kind: input, shape index: {}]
  %s2 = inlined_call_operand.vmem [shape: s32[8], index: 2, kind: input, shape index: {}]
  %s3 = inlined_call_operand.vmem [shape: f32[64,128], index: 3, kind: input, shape index: {}]
  %s4 = inlined_call_operand.vmem [shape: f32[16,128], index: 4, kind: input, shape index: {}]
  %s5 = inlined_call_operand.vmem [shape: f32[64,1], index: 5, kind: input, shape index: {}]
  %s6 = inlined_call_operand.vmem [shape: f32[16,1], index: 6, kind: input, shape index: {}]
  %s7 = inlined_call_operand.hbm [shape: f32[8,128], index: 7, kind: output, shape index: {0}]
  %s8 = inlined_call_operand.hbm [shape: f32[8,128], index: 8, kind: output, shape index: {1}]
  %s9 = inlined_call_operand.hbm [shape: f32[8,128], index: 9, kind: output, shape index: {2}]
  %s10 = inlined_call_operand.vmem [shape: f32[8,1], index: 10, kind: output, shape index: {3}]
  %s11 = inlined_call_operand.vmem [shape: f32[8,1], index: 11, kind: output, shape index: {4}]
  %s12 = inlined_call_operand.vmem [shape: f32[8,1], index: 12, kind: output, shape index: {5}]
  %13 = xla_tuple %s7, %s8, %s9, %s10, %s11, %s12
  %s14 = sld [smem:[#allocation0]]
  $region1490: #{tpu_custom_call.1} parent=0
    _
  %s16 = ssub.s32 1, %s14
  %s17 = scalar_select 0, %s16, %s14
  %s18 = sshll.u32 %s0, 4
  %s19 = int_to_ptr.vmem [resolvable:$true] %s18
  %21 = dma.vmem_to_smem %s19, 16, [#allocation4], [#allocation3]
  %s22 = sshll.u32 %s1, 4
  %s23 = int_to_ptr.vmem [resolvable:$true] %s22
  %25 = dma.vmem_to_smem %s23, 16, [#allocation5], [#allocation3]
  %s26 = sshll.u32 %s2, 4
  %s27 = int_to_ptr.vmem [resolvable:$true] %s26
  %29 = dma.vmem_to_smem %s27, 16, [#allocation6], [#allocation3]
  %30 = dma.done [#allocation3], 48
  %31 = sfence
  $region1: #{tpu_custom_call.1} parent=0
    #allocation7 [shape = 'u8[4096]{0}', space=vmem, size = 0x1000, scoped, tag = 'output window, operand 0, single buffered']
    #allocation8 [shape = 's32[1]{0}', space=sflag, size = 0x4, scoped, tag = 'scoped memory for tpu_custom_call.1']
    #allocation9 [shape = 'u8[4096]{0}', space=vmem, size = 0x1000, scoped, tag = 'output window, operand 1, single buffered']
    #allocation10 [shape = 's32[1]{0}', space=sflag, size = 0x4, scoped, tag = 'scoped memory for tpu_custom_call.1']
    #allocation11 [shape = 'u8[4096]{0}', space=vmem, size = 0x1000, scoped, tag = 'output window, operand 2, single buffered']
    %32 = vsyncpa [#allocation8], 0
    %33 = vsyncpa [#allocation10], 0
    %s34 = smul.u32 0, 8
    %s35 = sld [smem:[#allocation4 + %s34]]
    %s36 = sld [smem:[#allocation5 + %s34]]
    %s37 = sld [smem:[#allocation6 + %s34]]
    %s38 = sadd.s32 %s34, 1
    %s39 = sld [smem:[#allocation4 + %s38]]
    %s40 = sld [smem:[#allocation5 + %s38]]
    %s41 = sld [smem:[#allocation6 + %s38]]
    %s42 = sadd.s32 %s34, 2
    %s43 = sld [smem:[#allocation4 + %s42]]
    %s44 = sld [smem:[#allocation5 + %s42]]
    %s45 = sld [smem:[#allocation6 + %s42]]
    %s46 = sadd.s32 %s34, 3
    %s47 = sld [smem:[#allocation4 + %s46]]
    %s48 = sld [smem:[#allocation5 + %s46]]
    %s49 = sld [smem:[#allocation6 + %s46]]
    %s50 = sadd.s32 %s34, 4
    %s51 = sld [smem:[#allocation4 + %s50]]
    %s52 = sld [smem:[#allocation5 + %s50]]
    %s53 = sld [smem:[#allocation6 + %s50]]
    %s54 = sadd.s32 %s34, 5
    %s55 = sld [smem:[#allocation4 + %s54]]
    %s56 = sld [smem:[#allocation5 + %s54]]
    %s57 = sld [smem:[#allocation6 + %s54]]
    %s58 = sadd.s32 %s34, 6
    %s59 = sld [smem:[#allocation4 + %s58]]
    %s60 = sld [smem:[#allocation5 + %s58]]
    %s61 = sld [smem:[#allocation6 + %s58]]
    %s62 = sadd.s32 %s34, 7
    %s63 = sld [smem:[#allocation4 + %s62]]
    %s64 = sld [smem:[#allocation5 + %s62]]
    %s65 = sld [smem:[#allocation6 + %s62]]
    %s66 = scalar_lea.vmem %s3, %s35
    %p68 = scmp.lt.u32.totalorder 1, 8
    %p69 = pneg %p68
    // Predicated region
    $region2: #{tpu_custom_call.1} parent=1 // pred_check
      _
    $region3: #{tpu_custom_call.1} parent=1 // pred_check_branch
      %71 = sbr.rel (%p68) target = $region5
    $region4: #{tpu_custom_call.1} parent=1 // pred_region
      %s86 = sand.u32 1, 7
      %p87 = scmp.eq.s32.totalorder %s86, 0
      %p88 = pneg %p87
      // Predicated region
      $region17: #{tpu_custom_call.1} parent=4 // pred_check
        _
      $region18: #{tpu_custom_call.1} parent=4 // pred_check_branch
        %90 = sbr.rel (%p87) target = $region20
      $region19: #{tpu_custom_call.1} parent=4 // pred_region
        %s91 = sand.u32 1, 7
        %s92 = ssub.s32 1, %s91
        %s93 = scalar_lea.vmem %s66, %s92
        %s94 = ssub.s32 1, %s91
        %s95 = scalar_lea.vmem [#allocation7], %s94
        %s96 = sshllo.u32 0, %s91
        loop: start=0, step=1, limit=1
        $region21: #{tpu_custom_call.1} parent=19 // loop_pre_header
          _
        $region22: #{tpu_custom_call.1} parent=19 // loop_header
          %s98 = sphi 0, %s102
          %p99 = scmp.ge.s32.totalorder %s98, 1
          %s103 = sphi %s93, %s93
          %s104 = sphi %s95, %s95
        $region23: #{tpu_custom_call.1} parent=19 // loop_header_branch
          %101 = sbr.rel (%p99) target = $region27
        $region24: #{tpu_custom_call.1} parent=19 // loop_body
          %v105 = vld [vmem:[%s103] sm:%s96]
          %106 = vst [vmem:[%s104] sm:%s96] %v105
        $region25: #{tpu_custom_call.1} parent=19 // loop_footer
          %s102 = sadd.s32 1, %s98
        $region26: #{tpu_custom_call.1} parent=19 // loop_footer_branch
          %97 = sbr.rel target = $region22
        $region27: #{tpu_custom_call.1} parent=19 // loop_exit
          _
      $region20: #{tpu_custom_call.1} parent=4 // pred_fallthru
        _
    $region5: #{tpu_custom_call.1} parent=1 // pred_fallthru
      _
    // Predicated region
    $region6: #{tpu_custom_call.1} parent=1 // pred_check
      %p72 = pneg %p68
    $region7: #{tpu_custom_call.1} parent=1 // pred_check_branch
      %74 = sbr.rel (%p72) target = $region9
    $region8: #{tpu_custom_call.1} parent=1 // pred_region
      %s75 = sshllo.u32 0, 1
      loop: start=0, step=1, limit=1
      $region10: #{tpu_custom_call.1} parent=8 // loop_pre_header
        _
      $region11: #{tpu_custom_call.1} parent=8 // loop_header
        %s77 = sphi 0, %s81
        %p78 = scmp.ge.s32.totalorder %s77, 1
        %s82 = sphi %s66, %s66
        %s83 = sphi [#allocation7], [#allocation7]
      $region12: #{tpu_custom_call.1} parent=8 // loop_header_branch
        %80 = sbr.rel (%p78) target = $region16
      $region13: #{tpu_custom_call.1} parent=8 // loop_body
        %v84 = vld [vmem:[%s82] sm:%s75]
        %85 = vst [vmem:[%s83] sm:%s75] %v84
      $region14: #{tpu_custom_call.1} parent=8 // loop_footer
        %s81 = sadd.s32 1, %s77
      $region15: #{tpu_custom_call.1} parent=8 // loop_footer_branch
        %76 = sbr.rel target = $region11
      $region16: #{tpu_custom_call.1} parent=8 // loop_exit
        _
    $region9: #{tpu_custom_call.1} parent=1 // pred_fallthru
      _
    // Predicated region
    $region28: #{tpu_custom_call.1} parent=1 // pred_check
      _
    $region29: #{tpu_custom_call.1} parent=1 // pred_check_branch
      %109 = sbr.rel (0) target = $region31
    $region30: #{tpu_custom_call.1} parent=1 // pred_region
      %110 = vsyncadd [#allocation2], 16
    $region31: #{tpu_custom_call.1} parent=1 // pred_fallthru
      _
    %s111 = scalar_lea.vmem %s4, %s36
    %s112 = scalar_lea.sflag [#allocation2], 1
    %p114 = scmp.lt.u32.totalorder 1, 8
    %p115 = pneg %p114
    // Predicated region
    $region32: #{tpu_custom_call.1} parent=1 // pred_check
      _
    $region33: #{tpu_custom_call.1} parent=1 // pred_check_branch
      %117 = sbr.rel (%p114) target = $region35
    $region34: #{tpu_custom_call.1} parent=1 // pred_region
      %s132 = sand.u32 1, 7
      %p133 = scmp.eq.s32.totalorder %s132, 0
      %p134 = pneg %p133
      // Predicated region
      $region47: #{tpu_custom_call.1} parent=34 // pred_check
        _
      $region48: #{tpu_custom_call.1} parent=34 // pred_check_branch
        %136 = sbr.rel (%p133) target = $region50
      $region49: #{tpu_custom_call.1} parent=34 // pred_region
        %s137 = sand.u32 1, 7
        %s138 = ssub.s32 1, %s137
        %s139 = scalar_lea.vmem %s111, %s138
        %s140 = ssub.s32 1, %s137
        %s141 = scalar_lea.vmem [#allocation9], %s140
        %s142 = sshllo.u32 0, %s137
        loop: start=0, step=1, limit=1
        $region51: #{tpu_custom_call.1} parent=49 // loop_pre_header
          _
        $region52: #{tpu_custom_call.1} parent=49 // loop_header
          %s144 = sphi 0, %s148
          %p145 = scmp.ge.s32.totalorder %s144, 1
          %s149 = sphi %s139, %s139
          %s150 = sphi %s141, %s141
        $region53: #{tpu_custom_call.1} parent=49 // loop_header_branch
          %147 = sbr.rel (%p145) target = $region57
        $region54: #{tpu_custom_call.1} parent=49 // loop_body
          %v151 = vld [vmem:[%s149] sm:%s142]
          %152 = vst [vmem:[%s150] sm:%s142] %v151
        $region55: #{tpu_custom_call.1} parent=49 // loop_footer
          %s148 = sadd.s32 1, %s144
        $region56: #{tpu_custom_call.1} parent=49 // loop_footer_branch
          %143 = sbr.rel target = $region52
        $region57: #{tpu_custom_call.1} parent=49 // loop_exit
          _
      $region50: #{tpu_custom_call.1} parent=34 // pred_fallthru
        _
    $region35: #{tpu_custom_call.1} parent=1 // pred_fallthru
      _
    // Predicated region
    $region36: #{tpu_custom_call.1} parent=1 // pred_check
      %p118 = pneg %p114
    $region37: #{tpu_custom_call.1} parent=1 // pred_check_branch
      %120 = sbr.rel (%p118) target = $region39
    $region38: #{tpu_custom_call.1} parent=1 // pred_region
      %s121 = sshllo.u32 0, 1
      loop: start=0, step=1, limit=1
      $region40: #{tpu_custom_call.1} parent=38 // loop_pre_header
        _
      $region41: #{tpu_custom_call.1} parent=38 // loop_header
        %s123 = sphi 0, %s127
        %p124 = scmp.ge.s32.totalorder %s123, 1
        %s128 = sphi %s111, %s111
        %s129 = sphi [#allocation9], [#allocation9]
      $region42: #{tpu_custom_call.1} parent=38 // loop_header_branch
        %126 = sbr.rel (%p124) target = $region46
      $region43: #{tpu_custom_call.1} parent=38 // loop_body
        %v130 = vld [vmem:[%s128] sm:%s121]
        %131 = vst [vmem:[%s129] sm:%s121] %v130
      $region44: #{tpu_custom_call.1} parent=38 // loop_footer
        %s127 = sadd.s32 1, %s123
      $region45: #{tpu_custom_call.1} parent=38 // loop_footer_branch
        %122 = sbr.rel target = $region41
      $region46: #{tpu_custom_call.1} parent=38 // loop_exit
        _
    $region39: #{tpu_custom_call.1} parent=1 // pred_fallthru
      _
    // Predicated region
    $region58: #{tpu_custom_call.1} parent=1 // pred_check
      _
    $region59: #{tpu_custom_call.1} parent=1 // pred_check_branch
      %155 = sbr.rel (0) target = $region61
    $region60: #{tpu_custom_call.1} parent=1 // pred_region
      %156 = vsyncadd %s112, 16
    $region61: #{tpu_custom_call.1} parent=1 // pred_fallthru
      _
    %s157 = scalar_lea.vmem %s3, %s37
    %s158 = scalar_lea.sflag [#allocation2], 2
    %p160 = scmp.lt.u32.totalorder 1, 8
    %p161 = pneg %p160
    // Predicated region
    $region62: #{tpu_custom_call.1} parent=1 // pred_check
      _
    $region63: #{tpu_custom_call.1} parent=1 // pred_check_branch
      %163 = sbr.rel (%p160) target = $region65
    $region64: #{tpu_custom_call.1} parent=1 // pred_region
      %s178 = sand.u32 1, 7
      %p179 = scmp.eq.s32.totalorder %s178, 0
      %p180 = pneg %p179
      // Predicated region
      $region77: #{tpu_custom_call.1} parent=64 // pred_check
        _
      $region78: #{tpu_custom_call.1} parent=64 // pred_check_branch
        %182 = sbr.rel (%p179) target = $region80
      $region79: #{tpu_custom_call.1} parent=64 // pred_region
        %s183 = sand.u32 1, 7
        %s184 = ssub.s32 1, %s183
        %s185 = scalar_lea.vmem %s157, %s184
        %s186 = ssub.s32 1, %s183
        %s187 = scalar_lea.vmem [#allocation11], %s186
        %s188 = sshllo.u32 0, %s183
        loop: start=0, step=1, limit=1
        $region81: #{tpu_custom_call.1} parent=79 // loop_pre_header
          _
        $region82: #{tpu_custom_call.1} parent=79 // loop_header
          %s190 = sphi 0, %s194
          %p191 = scmp.ge.s32.totalorder %s190, 1
          %s195 = sphi %s185, %s185
          %s196 = sphi %s187, %s187
        $region83: #{tpu_custom_call.1} parent=79 // loop_header_branch
          %193 = sbr.rel (%p191) target = $region87
        $region84: #{tpu_custom_call.1} parent=79 // loop_body
          %v197 = vld [vmem:[%s195] sm:%s188]
          %198 = vst [vmem:[%s196] sm:%s188] %v197
        $region85: #{tpu_custom_call.1} parent=79 // loop_footer
          %s194 = sadd.s32 1, %s190
        $region86: #{tpu_custom_call.1} parent=79 // loop_footer_branch
          %189 = sbr.rel target = $region82
        $region87: #{tpu_custom_call.1} parent=79 // loop_exit
          _
      $region80: #{tpu_custom_call.1} parent=64 // pred_fallthru
        _
    $region65: #{tpu_custom_call.1} parent=1 // pred_fallthru
      _
    // Predicated region
    $region66: #{tpu_custom_call.1} parent=1 // pred_check
      %p164 = pneg %p160
    $region67: #{tpu_custom_call.1} parent=1 // pred_check_branch
      %166 = sbr.rel (%p164) target = $region69
    $region68: #{tpu_custom_call.1} parent=1 // pred_region
      %s167 = sshllo.u32 0, 1
      loop: start=0, step=1, limit=1
      $region70: #{tpu_custom_call.1} parent=68 // loop_pre_header
        _
      $region71: #{tpu_custom_call.1} parent=68 // loop_header
        %s169 = sphi 0, %s173
        %p170 = scmp.ge.s32.totalorder %s169, 1
        %s174 = sphi %s157, %s157
        %s175 = sphi [#allocation11], [#allocation11]
      $region72: #{tpu_custom_call.1} parent=68 // loop_header_branch
        %172 = sbr.rel (%p170) target = $region76
      $region73: #{tpu_custom_call.1} parent=68 // loop_body
        %v176 = vld [vmem:[%s174] sm:%s167]
        %177 = vst [vmem:[%s175] sm:%s167] %v176
      $region74: #{tpu_custom_call.1} parent=68 // loop_footer
        %s173 = sadd.s32 1, %s169
      $region75: #{tpu_custom_call.1} parent=68 // loop_footer_branch
        %168 = sbr.rel target = $region71
      $region76: #{tpu_custom_call.1} parent=68 // loop_exit
        _
    $region69: #{tpu_custom_call.1} parent=1 // pred_fallthru
      _
    // Predicated region
    $region88: #{tpu_custom_call.1} parent=1 // pred_check
      _
    $region89: #{tpu_custom_call.1} parent=1 // pred_check_branch
      %201 = sbr.rel (0) target = $region91
    $region90: #{tpu_custom_call.1} parent=1 // pred_region
      %202 = vsyncadd %s158, 16
    $region91: #{tpu_custom_call.1} parent=1 // pred_fallthru
      _
    %s203 = scalar_lea.vmem %s5, %s35
    %s204 = scalar_lea.sflag [#allocation2], 3
    %p206 = scmp.lt.u32.totalorder 1, 8
    %p207 = pneg %p206
    // Predicated region
    $region92: #{tpu_custom_call.1} parent=1 // pred_check
      _
    $region93: #{tpu_custom_call.1} parent=1 // pred_check_branch
      %209 = sbr.rel (%p206) target = $region95
    $region94: #{tpu_custom_call.1} parent=1 // pred_region
      %s224 = sand.u32 1, 7
      %p225 = scmp.eq.s32.totalorder %s224, 0
      %p226 = pneg %p225
      // Predicated region
      $region107: #{tpu_custom_call.1} parent=94 // pred_check
        _
      $region108: #{tpu_custom_call.1} parent=94 // pred_check_branch
        %228 = sbr.rel (%p225) target = $region110
      $region109: #{tpu_custom_call.1} parent=94 // pred_region
        %s229 = sand.u32 1, 7
        %s230 = ssub.s32 1, %s229
        %s231 = scalar_lea.vmem %s203, %s230
        %s232 = ssub.s32 1, %s229
        %s233 = scalar_lea.vmem %s10, %s232
        %s234 = sshllo.u32 0, %s229
        loop: start=0, step=1, limit=1
        $region111: #{tpu_custom_call.1} parent=109 // loop_pre_header
          _
        $region112: #{tpu_custom_call.1} parent=109 // loop_header
          %s236 = sphi 0, %s240
          %p237 = scmp.ge.s32.totalorder %s236, 1
          %s241 = sphi %s231, %s231
          %s242 = sphi %s233, %s233
        $region113: #{tpu_custom_call.1} parent=109 // loop_header_branch
          %239 = sbr.rel (%p237) target = $region117
        $region114: #{tpu_custom_call.1} parent=109 // loop_body
          %v243 = vld [vmem:[%s241] sm:%s234]
          %244 = vst [vmem:[%s242] sm:%s234] %v243
        $region115: #{tpu_custom_call.1} parent=109 // loop_footer
          %s240 = sadd.s32 1, %s236
        $region116: #{tpu_custom_call.1} parent=109 // loop_footer_branch
          %235 = sbr.rel target = $region112
        $region117: #{tpu_custom_call.1} parent=109 // loop_exit
          _
      $region110: #{tpu_custom_call.1} parent=94 // pred_fallthru
        _
    $region95: #{tpu_custom_call.1} parent=1 // pred_fallthru
      _
    // Predicated region
    $region96: #{tpu_custom_call.1} parent=1 // pred_check
      %p210 = pneg %p206
    $region97: #{tpu_custom_call.1} parent=1 // pred_check_branch
      %212 = sbr.rel (%p210) target = $region99
    $region98: #{tpu_custom_call.1} parent=1 // pred_region
      %s213 = sshllo.u32 0, 1
      loop: start=0, step=1, limit=1
      $region100: #{tpu_custom_call.1} parent=98 // loop_pre_header
        _
      $region101: #{tpu_custom_call.1} parent=98 // loop_header
        %s215 = sphi 0, %s219
        %p216 = scmp.ge.s32.totalorder %s215, 1
        %s220 = sphi %s203, %s203
        %s221 = sphi %s10, %s10
      $region102: #{tpu_custom_call.1} parent=98 // loop_header_branch
        %218 = sbr.rel (%p216) target = $region106
      $region103: #{tpu_custom_call.1} parent=98 // loop_body
        %v222 = vld [vmem:[%s220] sm:%s213]
        %223 = vst [vmem:[%s221] sm:%s213] %v222
      $region104: #{tpu_custom_call.1} parent=98 // loop_footer
        %s219 = sadd.s32 1, %s215
      $region105: #{tpu_custom_call.1} parent=98 // loop_footer_branch
        %214 = sbr.rel target = $region101
      $region106: #{tpu_custom_call.1} parent=98 // loop_exit
        _
    $region99: #{tpu_custom_call.1} parent=1 // pred_fallthru
      _
    // Predicated region
    $region118: #{tpu_custom_call.1} parent=1 // pred_check
      _
    $region119: #{tpu_custom_call.1} parent=1 // pred_check_branch
      %247 = sbr.rel (0) target = $region121
    $region120: #{tpu_custom_call.1} parent=1 // pred_region
      %248 = vsyncadd %s204, 16
    $region121: #{tpu_custom_call.1} parent=1 // pred_fallthru
      _
    %s249 = scalar_lea.vmem %s6, %s36
    %s250 = scalar_lea.sflag [#allocation2], 4
    %p252 = scmp.lt.u32.totalorder 1, 8
    %p253 = pneg %p252
    // Predicated region
    $region122: #{tpu_custom_call.1} parent=1 // pred_check
      _
    $region123: #{tpu_custom_call.1} parent=1 // pred_check_branch
      %255 = sbr.rel (%p252) target = $region125
    $region124: #{tpu_custom_call.1} parent=1 // pred_region
      %s270 = sand.u32 1, 7
      %p271 = scmp.eq.s32.totalorder %s270, 0
      %p272 = pneg %p271
      // Predicated region
      $region137: #{tpu_custom_call.1} parent=124 // pred_check
        _
      $region138: #{tpu_custom_call.1} parent=124 // pred_check_branch
        %274 = sbr.rel (%p271) target = $region140
      $region139: #{tpu_custom_call.1} parent=124 // pred_region
        %s275 = sand.u32 1, 7
        %s276 = ssub.s32 1, %s275
        %s277 = scalar_lea.vmem %s249, %s276
        %s278 = ssub.s32 1, %s275
        %s279 = scalar_lea.vmem %s11, %s278
        %s280 = sshllo.u32 0, %s275
        loop: start=0, step=1, limit=1
        $region141: #{tpu_custom_call.1} parent=139 // loop_pre_header
          _
        $region142: #{tpu_custom_call.1} parent=139 // loop_header
          %s282 = sphi 0, %s286
          %p283 = scmp.ge.s32.totalorder %s282, 1
          %s287 = sphi %s277, %s277
          %s288 = sphi %s279, %s279
        $region143: #{tpu_custom_call.1} parent=139 // loop_header_branch
          %285 = sbr.rel (%p283) target = $region147
        $region144: #{tpu_custom_call.1} parent=139 // loop_body
          %v289 = vld [vmem:[%s287] sm:%s280]
          %290 = vst [vmem:[%s288] sm:%s280] %v289
        $region145: #{tpu_custom_call.1} parent=139 // loop_footer
          %s286 = sadd.s32 1, %s282
        $region146: #{tpu_custom_call.1} parent=139 // loop_footer_branch
          %281 = sbr.rel target = $region142
        $region147: #{tpu_custom_call.1} parent=139 // loop_exit
          _
      $region140: #{tpu_custom_call.1} parent=124 // pred_fallthru
        _
    $region125: #{tpu_custom_call.1} parent=1 // pred_fallthru
      _
    // Predicated region
    $region126: #{tpu_custom_call.1} parent=1 // pred_check
      %p256 = pneg %p252
    $region127: #{tpu_custom_call.1} parent=1 // pred_check_branch
      %258 = sbr.rel (%p256) target = $region129
    $region128: #{tpu_custom_call.1} parent=1 // pred_region
      %s259 = sshllo.u32 0, 1
      loop: start=0, step=1, limit=1
      $region130: #{tpu_custom_call.1} parent=128 // loop_pre_header
        _
      $region131: #{tpu_custom_call.1} parent=128 // loop_header
        %s261 = sphi 0, %s265
        %p262 = scmp.ge.s32.totalorder %s261, 1
        %s266 = sphi %s249, %s249
        %s267 = sphi %s11, %s11
      $region132: #{tpu_custom_call.1} parent=128 // loop_header_branch
        %264 = sbr.rel (%p262) target = $region136
      $region133: #{tpu_custom_call.1} parent=128 // loop_body
        %v268 = vld [vmem:[%s266] sm:%s259]
        %269 = vst [vmem:[%s267] sm:%s259] %v268
      $region134: #{tpu_custom_call.1} parent=128 // loop_footer
        %s265 = sadd.s32 1, %s261
      $region135: #{tpu_custom_call.1} parent=128 // loop_footer_branch
        %260 = sbr.rel target = $region131
      $region136: #{tpu_custom_call.1} parent=128 // loop_exit
        _
    $region129: #{tpu_custom_call.1} parent=1 // pred_fallthru
      _
    // Predicated region
    $region148: #{tpu_custom_call.1} parent=1 // pred_check
      _
    $region149: #{tpu_custom_call.1} parent=1 // pred_check_branch
      %293 = sbr.rel (0) target = $region151
    $region150: #{tpu_custom_call.1} parent=1 // pred_region
      %294 = vsyncadd %s250, 16
    $region151: #{tpu_custom_call.1} parent=1 // pred_fallthru
      _
    %s295 = scalar_lea.vmem %s5, %s37
    %s296 = scalar_lea.sflag [#allocation2], 5
    %p298 = scmp.lt.u32.totalorder 1, 8
    %p299 = pneg %p298
    // Predicated region
    $region152: #{tpu_custom_call.1} parent=1 // pred_check
      _
    $region153: #{tpu_custom_call.1} parent=1 // pred_check_branch
      %301 = sbr.rel (%p298) target = $region155
    $region154: #{tpu_custom_call.1} parent=1 // pred_region
      %s316 = sand.u32 1, 7
      %p317 = scmp.eq.s32.totalorder %s316, 0
      %p318 = pneg %p317
      // Predicated region
      $region167: #{tpu_custom_call.1} parent=154 // pred_check
        _
      $region168: #{tpu_custom_call.1} parent=154 // pred_check_branch
        %320 = sbr.rel (%p317) target = $region170
      $region169: #{tpu_custom_call.1} parent=154 // pred_region
        %s321 = sand.u32 1, 7
        %s322 = ssub.s32 1, %s321
        %s323 = scalar_lea.vmem %s295, %s322
        %s324 = ssub.s32 1, %s321
        %s325 = scalar_lea.vmem %s12, %s324
        %s326 = sshllo.u32 0, %s321
        loop: start=0, step=1, limit=1
        $region171: #{tpu_custom_call.1} parent=169 // loop_pre_header
          _
        $region172: #{tpu_custom_call.1} parent=169 // loop_header
          %s328 = sphi 0, %s332
          %p329 = scmp.ge.s32.totalorder %s328, 1
          %s333 = sphi %s323, %s323
          %s334 = sphi %s325, %s325
        $region173: #{tpu_custom_call.1} parent=169 // loop_header_branch
          %331 = sbr.rel (%p329) target = $region177
        $region174: #{tpu_custom_call.1} parent=169 // loop_body
          %v335 = vld [vmem:[%s333] sm:%s326]
          %336 = vst [vmem:[%s334] sm:%s326] %v335
        $region175: #{tpu_custom_call.1} parent=169 // loop_footer
          %s332 = sadd.s32 1, %s328
        $region176: #{tpu_custom_call.1} parent=169 // loop_footer_branch
          %327 = sbr.rel target = $region172
        $region177: #{tpu_custom_call.1} parent=169 // loop_exit
          _
      $region170: #{tpu_custom_call.1} parent=154 // pred_fallthru
        _
    $region155: #{tpu_custom_call.1} parent=1 // pred_fallthru
      _
    // Predicated region
    $region156: #{tpu_custom_call.1} parent=1 // pred_check
      %p302 = pneg %p298
    $region157: #{tpu_custom_call.1} parent=1 // pred_check_branch
      %304 = sbr.rel (%p302) target = $region159
    $region158: #{tpu_custom_call.1} parent=1 // pred_region
      %s305 = sshllo.u32 0, 1
      loop: start=0, step=1, limit=1
      $region160: #{tpu_custom_call.1} parent=158 // loop_pre_header
        _
      $region161: #{tpu_custom_call.1} parent=158 // loop_header
        %s307 = sphi 0, %s311
        %p308 = scmp.ge.s32.totalorder %s307, 1
        %s312 = sphi %s295, %s295
        %s313 = sphi %s12, %s12
      $region162: #{tpu_custom_call.1} parent=158 // loop_header_branch
        %310 = sbr.rel (%p308) target = $region166
      $region163: #{tpu_custom_call.1} parent=158 // loop_body
        %v314 = vld [vmem:[%s312] sm:%s305]
        %315 = vst [vmem:[%s313] sm:%s305] %v314
      $region164: #{tpu_custom_call.1} parent=158 // loop_footer
        %s311 = sadd.s32 1, %s307
      $region165: #{tpu_custom_call.1} parent=158 // loop_footer_branch
        %306 = sbr.rel target = $region161
      $region166: #{tpu_custom_call.1} parent=158 // loop_exit
        _
    $region159: #{tpu_custom_call.1} parent=1 // pred_fallthru
      _
    // Predicated region
    $region178: #{tpu_custom_call.1} parent=1 // pred_check
      _
    $region179: #{tpu_custom_call.1} parent=1 // pred_check_branch
      %339 = sbr.rel (0) target = $region181
    $region180: #{tpu_custom_call.1} parent=1 // pred_region
      %340 = vsyncadd %s296, 16
    $region181: #{tpu_custom_call.1} parent=1 // pred_fallthru
      _
    %s341 = scalar_lea.vmem %s3, %s39
    %s342 = scalar_lea.vmem [#allocation7], 1
    %s343 = scalar_lea.sflag [#allocation2], 6
    %p345 = scmp.lt.u32.totalorder 1, 8
    %p346 = pneg %p345
    // Predicated region
    $region182: #{tpu_custom_call.1} parent=1 // pred_check
      _
    $region183: #{tpu_custom_call.1} parent=1 // pred_check_branch
      %348 = sbr.rel (%p345) target = $region185
    $region184: #{tpu_custom_call.1} parent=1 // pred_region
      %s363 = sand.u32 1, 7
      %p364 = scmp.eq.s32.totalorder %s363, 0
      %p365 = pneg %p364
      // Predicated region
      $region197: #{tpu_custom_call.1} parent=184 // pred_check
        _
      $region198: #{tpu_custom_call.1} parent=184 // pred_check_branch
        %367 = sbr.rel (%p364) target = $region200
      $region199: #{tpu_custom_call.1} parent=184 // pred_region
        %s368 = sand.u32 1, 7
        %s369 = ssub.s32 1, %s368
        %s370 = scalar_lea.vmem %s341, %s369
        %s371 = ssub.s32 1, %s368
        %s372 = scalar_lea.vmem %s342, %s371 [#allocation7]
        %s373 = sshllo.u32 0, %s368
        loop: start=0, step=1, limit=1
        $region201: #{tpu_custom_call.1} parent=199 // loop_pre_header
          _
        $region202: #{tpu_custom_call.1} parent=199 // loop_header
          %s375 = sphi 0, %s379
          %p376 = scmp.ge.s32.totalorder %s375, 1
          %s380 = sphi %s370, %s370
          %s381 = sphi %s372, %s372
        $region203: #{tpu_custom_call.1} parent=199 // loop_header_branch
          %378 = sbr.rel (%p376) target = $region207
        $region204: #{tpu_custom_call.1} parent=199 // loop_body
          %v382 = vld [vmem:[%s380] sm:%s373]
          %383 = vst [vmem:[%s381] sm:%s373] %v382
        $region205: #{tpu_custom_call.1} parent=199 // loop_footer
          %s379 = sadd.s32 1, %s375
        $region206: #{tpu_custom_call.1} parent=199 // loop_footer_branch
          %374 = sbr.rel target = $region202
        $region207: #{tpu_custom_call.1} parent=199 // loop_exit
          _
      $region200: #{tpu_custom_call.1} parent=184 // pred_fallthru
        _
    $region185: #{tpu_custom_call.1} parent=1 // pred_fallthru
      _
    // Predicated region
    $region186: #{tpu_custom_call.1} parent=1 // pred_check
      %p349 = pneg %p345
    $region187: #{tpu_custom_call.1} parent=1 // pred_check_branch
      %351 = sbr.rel (%p349) target = $region189
    $region188: #{tpu_custom_call.1} parent=1 // pred_region
      %s352 = sshllo.u32 0, 1
      loop: start=0, step=1, limit=1
      $region190: #{tpu_custom_call.1} parent=188 // loop_pre_header
        _
      $region191: #{tpu_custom_call.1} parent=188 // loop_header
        %s354 = sphi 0, %s358
        %p355 = scmp.ge.s32.totalorder %s354, 1
        %s359 = sphi %s341, %s341
        %s360 = sphi %s342, %s342
      $region192: #{tpu_custom_call.1} parent=188 // loop_header_branch
        %357 = sbr.rel (%p355) target = $region196
      $region193: #{tpu_custom_call.1} parent=188 // loop_body
        %v361 = vld [vmem:[%s359] sm:%s352]
        %362 = vst [vmem:[%s360] sm:%s352] %v361
      $region194: #{tpu_custom_call.1} parent=188 // loop_footer
        %s358 = sadd.s32 1, %s354
      $region195: #{tpu_custom_call.1} parent=188 // loop_footer_branch
        %353 = sbr.rel target = $region191
      $region196: #{tpu_custom_call.1} parent=188 // loop_exit
        _
    $region189: #{tpu_custom_call.1} parent=1 // pred_fallthru
      _
    // Predicated region
    $region208: #{tpu_custom_call.1} parent=1 // pred_check
      _
    $region209: #{tpu_custom_call.1} parent=1 // pred_check_branch
      %386 = sbr.rel (0) target = $region211
    $region210: #{tpu_custom_call.1} parent=1 // pred_region
      %387 = vsyncadd %s343, 16
    $region211: #{tpu_custom_call.1} parent=1 // pred_fallthru
      _
    %s388 = scalar_lea.vmem %s4, %s40
    %s389 = scalar_lea.vmem [#allocation9], 1
    %s390 = scalar_lea.sflag [#allocation2], 7
    %p392 = scmp.lt.u32.totalorder 1, 8
    %p393 = pneg %p392
    // Predicated region
    $region212: #{tpu_custom_call.1} parent=1 // pred_check
      _
    $region213: #{tpu_custom_call.1} parent=1 // pred_check_branch
      %395 = sbr.rel (%p392) target = $region215
    $region214: #{tpu_custom_call.1} parent=1 // pred_region
      %s410 = sand.u32 1, 7
      %p411 = scmp.eq.s32.totalorder %s410, 0
      %p412 = pneg %p411
      // Predicated region
      $region227: #{tpu_custom_call.1} parent=214 // pred_check
        _
      $region228: #{tpu_custom_call.1} parent=214 // pred_check_branch
        %414 = sbr.rel (%p411) target = $region230
      $region229: #{tpu_custom_call.1} parent=214 // pred_region
        %s415 = sand.u32 1, 7
        %s416 = ssub.s32 1, %s415
        %s417 = scalar_lea.vmem %s388, %s416
        %s418 = ssub.s32 1, %s415
        %s419 = scalar_lea.vmem %s389, %s418 [#allocation9]
        %s420 = sshllo.u32 0, %s415
        loop: start=0, step=1, limit=1
        $region231: #{tpu_custom_call.1} parent=229 // loop_pre_header
          _
        $region232: #{tpu_custom_call.1} parent=229 // loop_header
          %s422 = sphi 0, %s426
          %p423 = scmp.ge.s32.totalorder %s422, 1
          %s427 = sphi %s417, %s417
          %s428 = sphi %s419, %s419
        $region233: #{tpu_custom_call.1} parent=229 // loop_header_branch
          %425 = sbr.rel (%p423) target = $region237
        $region234: #{tpu_custom_call.1} parent=229 // loop_body
          %v429 = vld [vmem:[%s427] sm:%s420]
          %430 = vst [vmem:[%s428] sm:%s420] %v429
        $region235: #{tpu_custom_call.1} parent=229 // loop_footer
          %s426 = sadd.s32 1, %s422
        $region236: #{tpu_custom_call.1} parent=229 // loop_footer_branch
          %421 = sbr.rel target = $region232
        $region237: #{tpu_custom_call.1} parent=229 // loop_exit
          _
      $region230: #{tpu_custom_call.1} parent=214 // pred_fallthru
        _
    $region215: #{tpu_custom_call.1} parent=1 // pred_fallthru
      _
    // Predicated region
    $region216: #{tpu_custom_call.1} parent=1 // pred_check
      %p396 = pneg %p392
    $region217: #{tpu_custom_call.1} parent=1 // pred_check_branch
      %398 = sbr.rel (%p396) target = $region219
    $region218: #{tpu_custom_call.1} parent=1 // pred_region
      %s399 = sshllo.u32 0, 1
      loop: start=0, step=1, limit=1
      $region220: #{tpu_custom_call.1} parent=218 // loop_pre_header
        _
      $region221: #{tpu_custom_call.1} parent=218 // loop_header
        %s401 = sphi 0, %s405
        %p402 = scmp.ge.s32.totalorder %s401, 1
        %s406 = sphi %s388, %s388
        %s407 = sphi %s389, %s389
      $region222: #{tpu_custom_call.1} parent=218 // loop_header_branch
        %404 = sbr.rel (%p402) target = $region226
      $region223: #{tpu_custom_call.1} parent=218 // loop_body
        %v408 = vld [vmem:[%s406] sm:%s399]
        %409 = vst [vmem:[%s407] sm:%s399] %v408
      $region224: #{tpu_custom_call.1} parent=218 // loop_footer
        %s405 = sadd.s32 1, %s401
      $region225: #{tpu_custom_call.1} parent=218 // loop_footer_branch
        %400 = sbr.rel target = $region221
      $region226: #{tpu_custom_call.1} parent=218 // loop_exit
        _
    $region219: #{tpu_custom_call.1} parent=1 // pred_fallthru
      _
    // Predicated region
    $region238: #{tpu_custom_call.1} parent=1 // pred_check
      _
    $region239: #{tpu_custom_call.1} parent=1 // pred_check_branch
      %433 = sbr.rel (0) target = $region241
    $region240: #{tpu_custom_call.1} parent=1 // pred_region
      %434 = vsyncadd %s390, 16
    $region241: #{tpu_custom_call.1} parent=1 // pred_fallthru
      _
    %s435 = scalar_lea.vmem %s3, %s41
    %s436 = scalar_lea.vmem [#allocation11], 1
    %s437 = scalar_lea.sflag [#allocation2], 8
    %p439 = scmp.lt.u32.totalorder 1, 8
    %p440 = pneg %p439
    // Predicated region
    $region242: #{tpu_custom_call.1} parent=1 // pred_check
      _
    $region243: #{tpu_custom_call.1} parent=1 // pred_check_branch
      %442 = sbr.rel (%p439) target = $region245
    $region244: #{tpu_custom_call.1} parent=1 // pred_region
      %s457 = sand.u32 1, 7
      %p458 = scmp.eq.s32.totalorder %s457, 0
      %p459 = pneg %p458
      // Predicated region
      $region257: #{tpu_custom_call.1} parent=244 // pred_check
        _
      $region258: #{tpu_custom_call.1} parent=244 // pred_check_branch
        %461 = sbr.rel (%p458) target = $region260
      $region259: #{tpu_custom_call.1} parent=244 // pred_region
        %s462 = sand.u32 1, 7
        %s463 = ssub.s32 1, %s462
        %s464 = scalar_lea.vmem %s435, %s463
        %s465 = ssub.s32 1, %s462
        %s466 = scalar_lea.vmem %s436, %s465 [#allocation11]
        %s467 = sshllo.u32 0, %s462
        loop: start=0, step=1, limit=1
        $region261: #{tpu_custom_call.1} parent=259 // loop_pre_header
          _
        $region262: #{tpu_custom_call.1} parent=259 // loop_header
          %s469 = sphi 0, %s473
          %p470 = scmp.ge.s32.totalorder %s469, 1
          %s474 = sphi %s464, %s464
          %s475 = sphi %s466, %s466
        $region263: #{tpu_custom_call.1} parent=259 // loop_header_branch
          %472 = sbr.rel (%p470) target = $region267
        $region264: #{tpu_custom_call.1} parent=259 // loop_body
          %v476 = vld [vmem:[%s474] sm:%s467]
          %477 = vst [vmem:[%s475] sm:%s467] %v476
        $region265: #{tpu_custom_call.1} parent=259 // loop_footer
          %s473 = sadd.s32 1, %s469
        $region266: #{tpu_custom_call.1} parent=259 // loop_footer_branch
          %468 = sbr.rel target = $region262
        $region267: #{tpu_custom_call.1} parent=259 // loop_exit
          _
      $region260: #{tpu_custom_call.1} parent=244 // pred_fallthru
        _
    $region245: #{tpu_custom_call.1} parent=1 // pred_fallthru
      _
    // Predicated region
    $region246: #{tpu_custom_call.1} parent=1 // pred_check
      %p443 = pneg %p439
    $region247: #{tpu_custom_call.1} parent=1 // pred_check_branch
      %445 = sbr.rel (%p443) target = $region249
    $region248: #{tpu_custom_call.1} parent=1 // pred_region
      %s446 = sshllo.u32 0, 1
      loop: start=0, step=1, limit=1
      $region250: #{tpu_custom_call.1} parent=248 // loop_pre_header
        _
      $region251: #{tpu_custom_call.1} parent=248 // loop_header
        %s448 = sphi 0, %s452
        %p449 = scmp.ge.s32.totalorder %s448, 1
        %s453 = sphi %s435, %s435
        %s454 = sphi %s436, %s436
      $region252: #{tpu_custom_call.1} parent=248 // loop_header_branch
        %451 = sbr.rel (%p449) target = $region256
      $region253: #{tpu_custom_call.1} parent=248 // loop_body
        %v455 = vld [vmem:[%s453] sm:%s446]
        %456 = vst [vmem:[%s454] sm:%s446] %v455
      $region254: #{tpu_custom_call.1} parent=248 // loop_footer
        %s452 = sadd.s32 1, %s448
      $region255: #{tpu_custom_call.1} parent=248 // loop_footer_branch
        %447 = sbr.rel target = $region251
      $region256: #{tpu_custom_call.1} parent=248 // loop_exit
        _
    $region249: #{tpu_custom_call.1} parent=1 // pred_fallthru
      _
    // Predicated region
    $region268: #{tpu_custom_call.1} parent=1 // pred_check
      _
    $region269: #{tpu_custom_call.1} parent=1 // pred_check_branch
      %480 = sbr.rel (0) target = $region271
    $region270: #{tpu_custom_call.1} parent=1 // pred_region
      %481 = vsyncadd %s437, 16
    $region271: #{tpu_custom_call.1} parent=1 // pred_fallthru
      _
    %s482 = scalar_lea.vmem %s5, %s39
    %s483 = scalar_lea.vmem %s10, 1
    %s484 = scalar_lea.sflag [#allocation2], 9
    %p486 = scmp.lt.u32.totalorder 1, 8
    %p487 = pneg %p486
    // Predicated region
    $region272: #{tpu_custom_call.1} parent=1 // pred_check
      _
    $region273: #{tpu_custom_call.1} parent=1 // pred_check_branch
      %489 = sbr.rel (%p486) target = $region275
    $region274: #{tpu_custom_call.1} parent=1 // pred_region
      %s504 = sand.u32 1, 7
      %p505 = scmp.eq.s32.totalorder %s504, 0
      %p506 = pneg %p505
      // Predicated region
      $region287: #{tpu_custom_call.1} parent=274 // pred_check
        _
      $region288: #{tpu_custom_call.1} parent=274 // pred_check_branch
        %508 = sbr.rel (%p505) target = $region290
      $region289: #{tpu_custom_call.1} parent=274 // pred_region
        %s509 = sand.u32 1, 7
        %s510 = ssub.s32 1, %s509
        %s511 = scalar_lea.vmem %s482, %s510
        %s512 = ssub.s32 1, %s509
        %s513 = scalar_lea.vmem %s483, %s512
        %s514 = sshllo.u32 0, %s509
        loop: start=0, step=1, limit=1
        $region291: #{tpu_custom_call.1} parent=289 // loop_pre_header
          _
        $region292: #{tpu_custom_call.1} parent=289 // loop_header
          %s516 = sphi 0, %s520
          %p517 = scmp.ge.s32.totalorder %s516, 1
          %s521 = sphi %s511, %s511
          %s522 = sphi %s513, %s513
        $region293: #{tpu_custom_call.1} parent=289 // loop_header_branch
          %519 = sbr.rel (%p517) target = $region297
        $region294: #{tpu_custom_call.1} parent=289 // loop_body
          %v523 = vld [vmem:[%s521] sm:%s514]
          %524 = vst [vmem:[%s522] sm:%s514] %v523
        $region295: #{tpu_custom_call.1} parent=289 // loop_footer
          %s520 = sadd.s32 1, %s516
        $region296: #{tpu_custom_call.1} parent=289 // loop_footer_branch
          %515 = sbr.rel target = $region292
        $region297: #{tpu_custom_call.1} parent=289 // loop_exit
          _
      $region290: #{tpu_custom_call.1} parent=274 // pred_fallthru
        _
    $region275: #{tpu_custom_call.1} parent=1 // pred_fallthru
      _
    // Predicated region
    $region276: #{tpu_custom_call.1} parent=1 // pred_check
      %p490 = pneg %p486
    $region277: #{tpu_custom_call.1} parent=1 // pred_check_branch
      %492 = sbr.rel (%p490) target = $region279
    $region278: #{tpu_custom_call.1} parent=1 // pred_region
      %s493 = sshllo.u32 0, 1
      loop: start=0, step=1, limit=1
      $region280: #{tpu_custom_call.1} parent=278 // loop_pre_header
        _
      $region281: #{tpu_custom_call.1} parent=278 // loop_header
        %s495 = sphi 0, %s499
        %p496 = scmp.ge.s32.totalorder %s495, 1
        %s500 = sphi %s482, %s482
        %s501 = sphi %s483, %s483
      $region282: #{tpu_custom_call.1} parent=278 // loop_header_branch
        %498 = sbr.rel (%p496) target = $region286
      $region283: #{tpu_custom_call.1} parent=278 // loop_body
        %v502 = vld [vmem:[%s500] sm:%s493]
        %503 = vst [vmem:[%s501] sm:%s493] %v502
      $region284: #{tpu_custom_call.1} parent=278 // loop_footer
        %s499 = sadd.s32 1, %s495
      $region285: #{tpu_custom_call.1} parent=278 // loop_footer_branch
        %494 = sbr.rel target = $region281
      $region286: #{tpu_custom_call.1} parent=278 // loop_exit
        _
    $region279: #{tpu_custom_call.1} parent=1 // pred_fallthru
      _
    // Predicated region
    $region298: #{tpu_custom_call.1} parent=1 // pred_check
      _
    $region299: #{tpu_custom_call.1} parent=1 // pred_check_branch
      %527 = sbr.rel (0) target = $region301
    $region300: #{tpu_custom_call.1} parent=1 // pred_region
      %528 = vsyncadd %s484, 16
    $region301: #{tpu_custom_call.1} parent=1 // pred_fallthru
      _
    %s529 = scalar_lea.vmem %s6, %s40
    %s530 = scalar_lea.vmem %s11, 1
    %s531 = scalar_lea.sflag [#allocation2], 10
    %p533 = scmp.lt.u32.totalorder 1, 8
    %p534 = pneg %p533
    // Predicated region
    $region302: #{tpu_custom_call.1} parent=1 // pred_check
      _
    $region303: #{tpu_custom_call.1} parent=1 // pred_check_branch
      %536 = sbr.rel (%p533) target = $region305
    $region304: #{tpu_custom_call.1} parent=1 // pred_region
      %s551 = sand.u32 1, 7
      %p552 = scmp.eq.s32.totalorder %s551, 0
      %p553 = pneg %p552
      // Predicated region
      $region317: #{tpu_custom_call.1} parent=304 // pred_check
        _
      $region318: #{tpu_custom_call.1} parent=304 // pred_check_branch
        %555 = sbr.rel (%p552) target = $region320
      $region319: #{tpu_custom_call.1} parent=304 // pred_region
        %s556 = sand.u32 1, 7
        %s557 = ssub.s32 1, %s556
        %s558 = scalar_lea.vmem %s529, %s557
        %s559 = ssub.s32 1, %s556
        %s560 = scalar_lea.vmem %s530, %s559
        %s561 = sshllo.u32 0, %s556
        loop: start=0, step=1, limit=1
        $region321: #{tpu_custom_call.1} parent=319 // loop_pre_header
          _
        $region322: #{tpu_custom_call.1} parent=319 // loop_header
          %s563 = sphi 0, %s567
          %p564 = scmp.ge.s32.totalorder %s563, 1
          %s568 = sphi %s558, %s558
          %s569 = sphi %s560, %s560
        $region323: #{tpu_custom_call.1} parent=319 // loop_header_branch
          %566 = sbr.rel (%p564) target = $region327
        $region324: #{tpu_custom_call.1} parent=319 // loop_body
          %v570 = vld [vmem:[%s568] sm:%s561]
          %571 = vst [vmem:[%s569] sm:%s561] %v570
        $region325: #{tpu_custom_call.1} parent=319 // loop_footer
          %s567 = sadd.s32 1, %s563
        $region326: #{tpu_custom_call.1} parent=319 // loop_footer_branch
          %562 = sbr.rel target = $region322
        $region327: #{tpu_custom_call.1} parent=319 // loop_exit
          _
      $region320: #{tpu_custom_call.1} parent=304 // pred_fallthru
        _
    $region305: #{tpu_custom_call.1} parent=1 // pred_fallthru
      _
    // Predicated region
    $region306: #{tpu_custom_call.1} parent=1 // pred_check
      %p537 = pneg %p533
    $region307: #{tpu_custom_call.1} parent=1 // pred_check_branch
      %539 = sbr.rel (%p537) target = $region309
    $region308: #{tpu_custom_call.1} parent=1 // pred_region
      %s540 = sshllo.u32 0, 1
      loop: start=0, step=1, limit=1
      $region310: #{tpu_custom_call.1} parent=308 // loop_pre_header
        _
      $region311: #{tpu_custom_call.1} parent=308 // loop_header
        %s542 = sphi 0, %s546
        %p543 = scmp.ge.s32.totalorder %s542, 1
        %s547 = sphi %s529, %s529
        %s548 = sphi %s530, %s530
      $region312: #{tpu_custom_call.1} parent=308 // loop_header_branch
        %545 = sbr.rel (%p543) target = $region316
      $region313: #{tpu_custom_call.1} parent=308 // loop_body
        %v549 = vld [vmem:[%s547] sm:%s540]
        %550 = vst [vmem:[%s548] sm:%s540] %v549
      $region314: #{tpu_custom_call.1} parent=308 // loop_footer
        %s546 = sadd.s32 1, %s542
      $region315: #{tpu_custom_call.1} parent=308 // loop_footer_branch
        %541 = sbr.rel target = $region311
      $region316: #{tpu_custom_call.1} parent=308 // loop_exit
        _
    $region309: #{tpu_custom_call.1} parent=1 // pred_fallthru
      _
    // Predicated region
    $region328: #{tpu_custom_call.1} parent=1 // pred_check
      _
    $region329: #{tpu_custom_call.1} parent=1 // pred_check_branch
      %574 = sbr.rel (0) target = $region331
    $region330: #{tpu_custom_call.1} parent=1 // pred_region
      %575 = vsyncadd %s531, 16
    $region331: #{tpu_custom_call.1} parent=1 // pred_fallthru
      _
    %s576 = scalar_lea.vmem %s5, %s41
    %s577 = scalar_lea.vmem %s12, 1
    %s578 = scalar_lea.sflag [#allocation2], 11
    %p580 = scmp.lt.u32.totalorder 1, 8
    %p581 = pneg %p580
    // Predicated region
    $region332: #{tpu_custom_call.1} parent=1 // pred_check
      _
    $region333: #{tpu_custom_call.1} parent=1 // pred_check_branch
      %583 = sbr.rel (%p580) target = $region335
    $region334: #{tpu_custom_call.1} parent=1 // pred_region
      %s598 = sand.u32 1, 7
      %p599 = scmp.eq.s32.totalorder %s598, 0
      %p600 = pneg %p599
      // Predicated region
      $region347: #{tpu_custom_call.1} parent=334 // pred_check
        _
      $region348: #{tpu_custom_call.1} parent=334 // pred_check_branch
        %602 = sbr.rel (%p599) target = $region350
      $region349: #{tpu_custom_call.1} parent=334 // pred_region
        %s603 = sand.u32 1, 7
        %s604 = ssub.s32 1, %s603
        %s605 = scalar_lea.vmem %s576, %s604
        %s606 = ssub.s32 1, %s603
        %s607 = scalar_lea.vmem %s577, %s606
        %s608 = sshllo.u32 0, %s603
        loop: start=0, step=1, limit=1
        $region351: #{tpu_custom_call.1} parent=349 // loop_pre_header
          _
        $region352: #{tpu_custom_call.1} parent=349 // loop_header
          %s610 = sphi 0, %s614
          %p611 = scmp.ge.s32.totalorder %s610, 1
          %s615 = sphi %s605, %s605
          %s616 = sphi %s607, %s607
        $region353: #{tpu_custom_call.1} parent=349 // loop_header_branch
          %613 = sbr.rel (%p611) target = $region357
        $region354: #{tpu_custom_call.1} parent=349 // loop_body
          %v617 = vld [vmem:[%s615] sm:%s608]
          %618 = vst [vmem:[%s616] sm:%s608] %v617
        $region355: #{tpu_custom_call.1} parent=349 // loop_footer
          %s614 = sadd.s32 1, %s610
        $region356: #{tpu_custom_call.1} parent=349 // loop_footer_branch
          %609 = sbr.rel target = $region352
        $region357: #{tpu_custom_call.1} parent=349 // loop_exit
          _
      $region350: #{tpu_custom_call.1} parent=334 // pred_fallthru
        _
    $region335: #{tpu_custom_call.1} parent=1 // pred_fallthru
      _
    // Predicated region
    $region336: #{tpu_custom_call.1} parent=1 // pred_check
      %p584 = pneg %p580
    $region337: #{tpu_custom_call.1} parent=1 // pred_check_branch
      %586 = sbr.rel (%p584) target = $region339
    $region338: #{tpu_custom_call.1} parent=1 // pred_region
      %s587 = sshllo.u32 0, 1
      loop: start=0, step=1, limit=1
      $region340: #{tpu_custom_call.1} parent=338 // loop_pre_header
        _
      $region341: #{tpu_custom_call.1} parent=338 // loop_header
        %s589 = sphi 0, %s593
        %p590 = scmp.ge.s32.totalorder %s589, 1
        %s594 = sphi %s576, %s576
        %s595 = sphi %s577, %s577
      $region342: #{tpu_custom_call.1} parent=338 // loop_header_branch
        %592 = sbr.rel (%p590) target = $region346
      $region343: #{tpu_custom_call.1} parent=338 // loop_body
        %v596 = vld [vmem:[%s594] sm:%s587]
        %597 = vst [vmem:[%s595] sm:%s587] %v596
      $region344: #{tpu_custom_call.1} parent=338 // loop_footer
        %s593 = sadd.s32 1, %s589
      $region345: #{tpu_custom_call.1} parent=338 // loop_footer_branch
        %588 = sbr.rel target = $region341
      $region346: #{tpu_custom_call.1} parent=338 // loop_exit
        _
    $region339: #{tpu_custom_call.1} parent=1 // pred_fallthru
      _
    // Predicated region
    $region358: #{tpu_custom_call.1} parent=1 // pred_check
      _
    $region359: #{tpu_custom_call.1} parent=1 // pred_check_branch
      %621 = sbr.rel (0) target = $region361
    $region360: #{tpu_custom_call.1} parent=1 // pred_region
      %622 = vsyncadd %s578, 16
    $region361: #{tpu_custom_call.1} parent=1 // pred_fallthru
      _
    %s623 = scalar_lea.vmem %s3, %s43
    %s624 = scalar_lea.vmem [#allocation7], 2
    %s625 = scalar_lea.sflag [#allocation2], 12
    %p627 = scmp.lt.u32.totalorder 1, 8
    %p628 = pneg %p627
    // Predicated region
    $region362: #{tpu_custom_call.1} parent=1 // pred_check
      _
    $region363: #{tpu_custom_call.1} parent=1 // pred_check_branch
      %630 = sbr.rel (%p627) target = $region365
    $region364: #{tpu_custom_call.1} parent=1 // pred_region
      %s645 = sand.u32 1, 7
      %p646 = scmp.eq.s32.totalorder %s645, 0
      %p647 = pneg %p646
      // Predicated region
      $region377: #{tpu_custom_call.1} parent=364 // pred_check
        _
      $region378: #{tpu_custom_call.1} parent=364 // pred_check_branch
        %649 = sbr.rel (%p646) target = $region380
      $region379: #{tpu_custom_call.1} parent=364 // pred_region
        %s650 = sand.u32 1, 7
        %s651 = ssub.s32 1, %s650
        %s652 = scalar_lea.vmem %s623, %s651
        %s653 = ssub.s32 1, %s650
        %s654 = scalar_lea.vmem %s624, %s653 [#allocation7]
        %s655 = sshllo.u32 0, %s650
        loop: start=0, step=1, limit=1
        $region381: #{tpu_custom_call.1} parent=379 // loop_pre_header
          _
        $region382: #{tpu_custom_call.1} parent=379 // loop_header
          %s657 = sphi 0, %s661
          %p658 = scmp.ge.s32.totalorder %s657, 1
          %s662 = sphi %s652, %s652
          %s663 = sphi %s654, %s654
        $region383: #{tpu_custom_call.1} parent=379 // loop_header_branch
          %660 = sbr.rel (%p658) target = $region387
        $region384: #{tpu_custom_call.1} parent=379 // loop_body
          %v664 = vld [vmem:[%s662] sm:%s655]
          %665 = vst [vmem:[%s663] sm:%s655] %v664
        $region385: #{tpu_custom_call.1} parent=379 // loop_footer
          %s661 = sadd.s32 1, %s657
        $region386: #{tpu_custom_call.1} parent=379 // loop_footer_branch
          %656 = sbr.rel target = $region382
        $region387: #{tpu_custom_call.1} parent=379 // loop_exit
          _
      $region380: #{tpu_custom_call.1} parent=364 // pred_fallthru
        _
    $region365: #{tpu_custom_call.1} parent=1 // pred_fallthru
      _
    // Predicated region
    $region366: #{tpu_custom_call.1} parent=1 // pred_check
      %p631 = pneg %p627
    $region367: #{tpu_custom_call.1} parent=1 // pred_check_branch
      %633 = sbr.rel (%p631) target = $region369
    $region368: #{tpu_custom_call.1} parent=1 // pred_region
      %s634 = sshllo.u32 0, 1
      loop: start=0, step=1, limit=1
      $region370: #{tpu_custom_call.1} parent=368 // loop_pre_header
        _
      $region371: #{tpu_custom_call.1} parent=368 // loop_header
        %s636 = sphi 0, %s640
        %p637 = scmp.ge.s32.totalorder %s636, 1
        %s641 = sphi %s623, %s623
        %s642 = sphi %s624, %s624
      $region372: #{tpu_custom_call.1} parent=368 // loop_header_branch
        %639 = sbr.rel (%p637) target = $region376
      $region373: #{tpu_custom_call.1} parent=368 // loop_body
        %v643 = vld [vmem:[%s641] sm:%s634]
        %644 = vst [vmem:[%s642] sm:%s634] %v643
      $region374: #{tpu_custom_call.1} parent=368 // loop_footer
        %s640 = sadd.s32 1, %s636
      $region375: #{tpu_custom_call.1} parent=368 // loop_footer_branch
        %635 = sbr.rel target = $region371
      $region376: #{tpu_custom_call.1} parent=368 // loop_exit
        _
    $region369: #{tpu_custom_call.1} parent=1 // pred_fallthru
      _
    // Predicated region
    $region388: #{tpu_custom_call.1} parent=1 // pred_check
      _
    $region389: #{tpu_custom_call.1} parent=1 // pred_check_branch
      %668 = sbr.rel (0) target = $region391
    $region390: #{tpu_custom_call.1} parent=1 // pred_region
      %669 = vsyncadd %s625, 16
    $region391: #{tpu_custom_call.1} parent=1 // pred_fallthru
      _
    %s670 = scalar_lea.vmem %s4, %s44
    %s671 = scalar_lea.vmem [#allocation9], 2
    %s672 = scalar_lea.sflag [#allocation2], 13
    %p674 = scmp.lt.u32.totalorder 1, 8
    %p675 = pneg %p674
    // Predicated region
    $region392: #{tpu_custom_call.1} parent=1 // pred_check
      _
    $region393: #{tpu_custom_call.1} parent=1 // pred_check_branch
      %677 = sbr.rel (%p674) target = $region395
    $region394: #{tpu_custom_call.1} parent=1 // pred_region
      %s692 = sand.u32 1, 7
      %p693 = scmp.eq.s32.totalorder %s692, 0
      %p694 = pneg %p693
      // Predicated region
      $region407: #{tpu_custom_call.1} parent=394 // pred_check
        _
      $region408: #{tpu_custom_call.1} parent=394 // pred_check_branch
        %696 = sbr.rel (%p693) target = $region410
      $region409: #{tpu_custom_call.1} parent=394 // pred_region
        %s697 = sand.u32 1, 7
        %s698 = ssub.s32 1, %s697
        %s699 = scalar_lea.vmem %s670, %s698
        %s700 = ssub.s32 1, %s697
        %s701 = scalar_lea.vmem %s671, %s700 [#allocation9]
        %s702 = sshllo.u32 0, %s697
        loop: start=0, step=1, limit=1
        $region411: #{tpu_custom_call.1} parent=409 // loop_pre_header
          _
        $region412: #{tpu_custom_call.1} parent=409 // loop_header
          %s704 = sphi 0, %s708
          %p705 = scmp.ge.s32.totalorder %s704, 1
          %s709 = sphi %s699, %s699
          %s710 = sphi %s701, %s701
        $region413: #{tpu_custom_call.1} parent=409 // loop_header_branch
          %707 = sbr.rel (%p705) target = $region417
        $region414: #{tpu_custom_call.1} parent=409 // loop_body
          %v711 = vld [vmem:[%s709] sm:%s702]
          %712 = vst [vmem:[%s710] sm:%s702] %v711
        $region415: #{tpu_custom_call.1} parent=409 // loop_footer
          %s708 = sadd.s32 1, %s704
        $region416: #{tpu_custom_call.1} parent=409 // loop_footer_branch
          %703 = sbr.rel target = $region412
        $region417: #{tpu_custom_call.1} parent=409 // loop_exit
          _
      $region410: #{tpu_custom_call.1} parent=394 // pred_fallthru
        _
    $region395: #{tpu_custom_call.1} parent=1 // pred_fallthru
      _
    // Predicated region
    $region396: #{tpu_custom_call.1} parent=1 // pred_check
      %p678 = pneg %p674
    $region397: #{tpu_custom_call.1} parent=1 // pred_check_branch
      %680 = sbr.rel (%p678) target = $region399
    $region398: #{tpu_custom_call.1} parent=1 // pred_region
      %s681 = sshllo.u32 0, 1
      loop: start=0, step=1, limit=1
      $region400: #{tpu_custom_call.1} parent=398 // loop_pre_header
        _
      $region401: #{tpu_custom_call.1} parent=398 // loop_header
        %s683 = sphi 0, %s687
        %p684 = scmp.ge.s32.totalorder %s683, 1
        %s688 = sphi %s670, %s670
        %s689 = sphi %s671, %s671
      $region402: #{tpu_custom_call.1} parent=398 // loop_header_branch
        %686 = sbr.rel (%p684) target = $region406
      $region403: #{tpu_custom_call.1} parent=398 // loop_body
        %v690 = vld [vmem:[%s688] sm:%s681]
        %691 = vst [vmem:[%s689] sm:%s681] %v690
      $region404: #{tpu_custom_call.1} parent=398 // loop_footer
        %s687 = sadd.s32 1, %s683
      $region405: #{tpu_custom_call.1} parent=398 // loop_footer_branch
        %682 = sbr.rel target = $region401
      $region406: #{tpu_custom_call.1} parent=398 // loop_exit
        _
    $region399: #{tpu_custom_call.1} parent=1 // pred_fallthru
      _
    // Predicated region
    $region418: #{tpu_custom_call.1} parent=1 // pred_check
      _
    $region419: #{tpu_custom_call.1} parent=1 // pred_check_branch
      %715 = sbr.rel (0) target = $region421
    $region420: #{tpu_custom_call.1} parent=1 // pred_region
      %716 = vsyncadd %s672, 16
    $region421: #{tpu_custom_call.1} parent=1 // pred_fallthru
      _
    %s717 = scalar_lea.vmem %s3, %s45
    %s718 = scalar_lea.vmem [#allocation11], 2
    %s719 = scalar_lea.sflag [#allocation2], 14
    %p721 = scmp.lt.u32.totalorder 1, 8
    %p722 = pneg %p721
    // Predicated region
    $region422: #{tpu_custom_call.1} parent=1 // pred_check
      _
    $region423: #{tpu_custom_call.1} parent=1 // pred_check_branch
      %724 = sbr.rel (%p721) target = $region425
    $region424: #{tpu_custom_call.1} parent=1 // pred_region
      %s739 = sand.u32 1, 7
      %p740 = scmp.eq.s32.totalorder %s739, 0
      %p741 = pneg %p740
      // Predicated region
      $region437: #{tpu_custom_call.1} parent=424 // pred_check
        _
      $region438: #{tpu_custom_call.1} parent=424 // pred_check_branch
        %743 = sbr.rel (%p740) target = $region440
      $region439: #{tpu_custom_call.1} parent=424 // pred_region
        %s744 = sand.u32 1, 7
        %s745 = ssub.s32 1, %s744
        %s746 = scalar_lea.vmem %s717, %s745
        %s747 = ssub.s32 1, %s744
        %s748 = scalar_lea.vmem %s718, %s747 [#allocation11]
        %s749 = sshllo.u32 0, %s744
        loop: start=0, step=1, limit=1
        $region441: #{tpu_custom_call.1} parent=439 // loop_pre_header
          _
        $region442: #{tpu_custom_call.1} parent=439 // loop_header
          %s751 = sphi 0, %s755
          %p752 = scmp.ge.s32.totalorder %s751, 1
          %s756 = sphi %s746, %s746
          %s757 = sphi %s748, %s748
        $region443: #{tpu_custom_call.1} parent=439 // loop_header_branch
          %754 = sbr.rel (%p752) target = $region447
        $region444: #{tpu_custom_call.1} parent=439 // loop_body
          %v758 = vld [vmem:[%s756] sm:%s749]
          %759 = vst [vmem:[%s757] sm:%s749] %v758
        $region445: #{tpu_custom_call.1} parent=439 // loop_footer
          %s755 = sadd.s32 1, %s751
        $region446: #{tpu_custom_call.1} parent=439 // loop_footer_branch
          %750 = sbr.rel target = $region442
        $region447: #{tpu_custom_call.1} parent=439 // loop_exit
          _
      $region440: #{tpu_custom_call.1} parent=424 // pred_fallthru
        _
    $region425: #{tpu_custom_call.1} parent=1 // pred_fallthru
      _
    // Predicated region
    $region426: #{tpu_custom_call.1} parent=1 // pred_check
      %p725 = pneg %p721
    $region427: #{tpu_custom_call.1} parent=1 // pred_check_branch
      %727 = sbr.rel (%p725) target = $region429
    $region428: #{tpu_custom_call.1} parent=1 // pred_region
      %s728 = sshllo.u32 0, 1
      loop: start=0, step=1, limit=1
      $region430: #{tpu_custom_call.1} parent=428 // loop_pre_header
        _
      $region431: #{tpu_custom_call.1} parent=428 // loop_header
        %s730 = sphi 0, %s734
        %p731 = scmp.ge.s32.totalorder %s730, 1
        %s735 = sphi %s717, %s717
        %s736 = sphi %s718, %s718
      $region432: #{tpu_custom_call.1} parent=428 // loop_header_branch
        %733 = sbr.rel (%p731) target = $region436
      $region433: #{tpu_custom_call.1} parent=428 // loop_body
        %v737 = vld [vmem:[%s735] sm:%s728]
        %738 = vst [vmem:[%s736] sm:%s728] %v737
      $region434: #{tpu_custom_call.1} parent=428 // loop_footer
        %s734 = sadd.s32 1, %s730
      $region435: #{tpu_custom_call.1} parent=428 // loop_footer_branch
        %729 = sbr.rel target = $region431
      $region436: #{tpu_custom_call.1} parent=428 // loop_exit
        _
    $region429: #{tpu_custom_call.1} parent=1 // pred_fallthru
      _
    // Predicated region
    $region448: #{tpu_custom_call.1} parent=1 // pred_check
      _
    $region449: #{tpu_custom_call.1} parent=1 // pred_check_branch
      %762 = sbr.rel (0) target = $region451
    $region450: #{tpu_custom_call.1} parent=1 // pred_region
      %763 = vsyncadd %s719, 16
    $region451: #{tpu_custom_call.1} parent=1 // pred_fallthru
      _
    %s764 = scalar_lea.vmem %s5, %s43
    %s765 = scalar_lea.vmem %s10, 2
    %s766 = scalar_lea.sflag [#allocation2], 15
    %p768 = scmp.lt.u32.totalorder 1, 8
    %p769 = pneg %p768
    // Predicated region
    $region452: #{tpu_custom_call.1} parent=1 // pred_check
      _
    $region453: #{tpu_custom_call.1} parent=1 // pred_check_branch
      %771 = sbr.rel (%p768) target = $region455
    $region454: #{tpu_custom_call.1} parent=1 // pred_region
      %s786 = sand.u32 1, 7
      %p787 = scmp.eq.s32.totalorder %s786, 0
      %p788 = pneg %p787
      // Predicated region
      $region467: #{tpu_custom_call.1} parent=454 // pred_check
        _
      $region468: #{tpu_custom_call.1} parent=454 // pred_check_branch
        %790 = sbr.rel (%p787) target = $region470
      $region469: #{tpu_custom_call.1} parent=454 // pred_region
        %s791 = sand.u32 1, 7
        %s792 = ssub.s32 1, %s791
        %s793 = scalar_lea.vmem %s764, %s792
        %s794 = ssub.s32 1, %s791
        %s795 = scalar_lea.vmem %s765, %s794
        %s796 = sshllo.u32 0, %s791
        loop: start=0, step=1, limit=1
        $region471: #{tpu_custom_call.1} parent=469 // loop_pre_header
          _
        $region472: #{tpu_custom_call.1} parent=469 // loop_header
          %s798 = sphi 0, %s802
          %p799 = scmp.ge.s32.totalorder %s798, 1
          %s803 = sphi %s793, %s793
          %s804 = sphi %s795, %s795
        $region473: #{tpu_custom_call.1} parent=469 // loop_header_branch
          %801 = sbr.rel (%p799) target = $region477
        $region474: #{tpu_custom_call.1} parent=469 // loop_body
          %v805 = vld [vmem:[%s803] sm:%s796]
          %806 = vst [vmem:[%s804] sm:%s796] %v805
        $region475: #{tpu_custom_call.1} parent=469 // loop_footer
          %s802 = sadd.s32 1, %s798
        $region476: #{tpu_custom_call.1} parent=469 // loop_footer_branch
          %797 = sbr.rel target = $region472
        $region477: #{tpu_custom_call.1} parent=469 // loop_exit
          _
      $region470: #{tpu_custom_call.1} parent=454 // pred_fallthru
        _
    $region455: #{tpu_custom_call.1} parent=1 // pred_fallthru
      _
    // Predicated region
    $region456: #{tpu_custom_call.1} parent=1 // pred_check
      %p772 = pneg %p768
    $region457: #{tpu_custom_call.1} parent=1 // pred_check_branch
      %774 = sbr.rel (%p772) target = $region459
    $region458: #{tpu_custom_call.1} parent=1 // pred_region
      %s775 = sshllo.u32 0, 1
      loop: start=0, step=1, limit=1
      $region460: #{tpu_custom_call.1} parent=458 // loop_pre_header
        _
      $region461: #{tpu_custom_call.1} parent=458 // loop_header
        %s777 = sphi 0, %s781
        %p778 = scmp.ge.s32.totalorder %s777, 1
        %s782 = sphi %s764, %s764
        %s783 = sphi %s765, %s765
      $region462: #{tpu_custom_call.1} parent=458 // loop_header_branch
        %780 = sbr.rel (%p778) target = $region466
      $region463: #{tpu_custom_call.1} parent=458 // loop_body
        %v784 = vld [vmem:[%s782] sm:%s775]
        %785 = vst [vmem:[%s783] sm:%s775] %v784
      $region464: #{tpu_custom_call.1} parent=458 // loop_footer
        %s781 = sadd.s32 1, %s777
      $region465: #{tpu_custom_call.1} parent=458 // loop_footer_branch
        %776 = sbr.rel target = $region461
      $region466: #{tpu_custom_call.1} parent=458 // loop_exit
        _
    $region459: #{tpu_custom_call.1} parent=1 // pred_fallthru
      _
    // Predicated region
    $region478: #{tpu_custom_call.1} parent=1 // pred_check
      _
    $region479: #{tpu_custom_call.1} parent=1 // pred_check_branch
      %809 = sbr.rel (0) target = $region481
    $region480: #{tpu_custom_call.1} parent=1 // pred_region
      %810 = vsyncadd %s766, 16
    $region481: #{tpu_custom_call.1} parent=1 // pred_fallthru
      _
    %s811 = scalar_lea.vmem %s6, %s44
    %s812 = scalar_lea.vmem %s11, 2
    %s813 = scalar_lea.sflag [#allocation2], 16
    %p815 = scmp.lt.u32.totalorder 1, 8
    %p816 = pneg %p815
    // Predicated region
    $region482: #{tpu_custom_call.1} parent=1 // pred_check
      _
    $region483: #{tpu_custom_call.1} parent=1 // pred_check_branch
      %818 = sbr.rel (%p815) target = $region485
    $region484: #{tpu_custom_call.1} parent=1 // pred_region
      %s833 = sand.u32 1, 7
      %p834 = scmp.eq.s32.totalorder %s833, 0
      %p835 = pneg %p834
      // Predicated region
      $region497: #{tpu_custom_call.1} parent=484 // pred_check
        _
      $region498: #{tpu_custom_call.1} parent=484 // pred_check_branch
        %837 = sbr.rel (%p834) target = $region500
      $region499: #{tpu_custom_call.1} parent=484 // pred_region
        %s838 = sand.u32 1, 7
        %s839 = ssub.s32 1, %s838
        %s840 = scalar_lea.vmem %s811, %s839
        %s841 = ssub.s32 1, %s838
        %s842 = scalar_lea.vmem %s812, %s841
        %s843 = sshllo.u32 0, %s838
        loop: start=0, step=1, limit=1
        $region501: #{tpu_custom_call.1} parent=499 // loop_pre_header
          _
        $region502: #{tpu_custom_call.1} parent=499 // loop_header
          %s845 = sphi 0, %s849
          %p846 = scmp.ge.s32.totalorder %s845, 1
          %s850 = sphi %s840, %s840
          %s851 = sphi %s842, %s842
        $region503: #{tpu_custom_call.1} parent=499 // loop_header_branch
          %848 = sbr.rel (%p846) target = $region507
        $region504: #{tpu_custom_call.1} parent=499 // loop_body
          %v852 = vld [vmem:[%s850] sm:%s843]
          %853 = vst [vmem:[%s851] sm:%s843] %v852
        $region505: #{tpu_custom_call.1} parent=499 // loop_footer
          %s849 = sadd.s32 1, %s845
        $region506: #{tpu_custom_call.1} parent=499 // loop_footer_branch
          %844 = sbr.rel target = $region502
        $region507: #{tpu_custom_call.1} parent=499 // loop_exit
          _
      $region500: #{tpu_custom_call.1} parent=484 // pred_fallthru
        _
    $region485: #{tpu_custom_call.1} parent=1 // pred_fallthru
      _
    // Predicated region
    $region486: #{tpu_custom_call.1} parent=1 // pred_check
      %p819 = pneg %p815
    $region487: #{tpu_custom_call.1} parent=1 // pred_check_branch
      %821 = sbr.rel (%p819) target = $region489
    $region488: #{tpu_custom_call.1} parent=1 // pred_region
      %s822 = sshllo.u32 0, 1
      loop: start=0, step=1, limit=1
      $region490: #{tpu_custom_call.1} parent=488 // loop_pre_header
        _
      $region491: #{tpu_custom_call.1} parent=488 // loop_header
        %s824 = sphi 0, %s828
        %p825 = scmp.ge.s32.totalorder %s824, 1
        %s829 = sphi %s811, %s811
        %s830 = sphi %s812, %s812
      $region492: #{tpu_custom_call.1} parent=488 // loop_header_branch
        %827 = sbr.rel (%p825) target = $region496
      $region493: #{tpu_custom_call.1} parent=488 // loop_body
        %v831 = vld [vmem:[%s829] sm:%s822]
        %832 = vst [vmem:[%s830] sm:%s822] %v831
      $region494: #{tpu_custom_call.1} parent=488 // loop_footer
        %s828 = sadd.s32 1, %s824
      $region495: #{tpu_custom_call.1} parent=488 // loop_footer_branch
        %823 = sbr.rel target = $region491
      $region496: #{tpu_custom_call.1} parent=488 // loop_exit
        _
    $region489: #{tpu_custom_call.1} parent=1 // pred_fallthru
      _
    // Predicated region
    $region508: #{tpu_custom_call.1} parent=1 // pred_check
      _
    $region509: #{tpu_custom_call.1} parent=1 // pred_check_branch
      %856 = sbr.rel (0) target = $region511
    $region510: #{tpu_custom_call.1} parent=1 // pred_region
      %857 = vsyncadd %s813, 16
    $region511: #{tpu_custom_call.1} parent=1 // pred_fallthru
      _
    %s858 = scalar_lea.vmem %s5, %s45
    %s859 = scalar_lea.vmem %s12, 2
    %s860 = scalar_lea.sflag [#allocation2], 17
    %p862 = scmp.lt.u32.totalorder 1, 8
    %p863 = pneg %p862
    // Predicated region
    $region512: #{tpu_custom_call.1} parent=1 // pred_check
      _
    $region513: #{tpu_custom_call.1} parent=1 // pred_check_branch
      %865 = sbr.rel (%p862) target = $region515
    $region514: #{tpu_custom_call.1} parent=1 // pred_region
      %s880 = sand.u32 1, 7
      %p881 = scmp.eq.s32.totalorder %s880, 0
      %p882 = pneg %p881
      // Predicated region
      $region527: #{tpu_custom_call.1} parent=514 // pred_check
        _
      $region528: #{tpu_custom_call.1} parent=514 // pred_check_branch
        %884 = sbr.rel (%p881) target = $region530
      $region529: #{tpu_custom_call.1} parent=514 // pred_region
        %s885 = sand.u32 1, 7
        %s886 = ssub.s32 1, %s885
        %s887 = scalar_lea.vmem %s858, %s886
        %s888 = ssub.s32 1, %s885
        %s889 = scalar_lea.vmem %s859, %s888
        %s890 = sshllo.u32 0, %s885
        loop: start=0, step=1, limit=1
        $region531: #{tpu_custom_call.1} parent=529 // loop_pre_header
          _
        $region532: #{tpu_custom_call.1} parent=529 // loop_header
          %s892 = sphi 0, %s896
          %p893 = scmp.ge.s32.totalorder %s892, 1
          %s897 = sphi %s887, %s887
          %s898 = sphi %s889, %s889
        $region533: #{tpu_custom_call.1} parent=529 // loop_header_branch
          %895 = sbr.rel (%p893) target = $region537
        $region534: #{tpu_custom_call.1} parent=529 // loop_body
          %v899 = vld [vmem:[%s897] sm:%s890]
          %900 = vst [vmem:[%s898] sm:%s890] %v899
        $region535: #{tpu_custom_call.1} parent=529 // loop_footer
          %s896 = sadd.s32 1, %s892
        $region536: #{tpu_custom_call.1} parent=529 // loop_footer_branch
          %891 = sbr.rel target = $region532
        $region537: #{tpu_custom_call.1} parent=529 // loop_exit
          _
      $region530: #{tpu_custom_call.1} parent=514 // pred_fallthru
        _
    $region515: #{tpu_custom_call.1} parent=1 // pred_fallthru
      _
    // Predicated region
    $region516: #{tpu_custom_call.1} parent=1 // pred_check
      %p866 = pneg %p862
    $region517: #{tpu_custom_call.1} parent=1 // pred_check_branch
      %868 = sbr.rel (%p866) target = $region519
    $region518: #{tpu_custom_call.1} parent=1 // pred_region
      %s869 = sshllo.u32 0, 1
      loop: start=0, step=1, limit=1
      $region520: #{tpu_custom_call.1} parent=518 // loop_pre_header
        _
      $region521: #{tpu_custom_call.1} parent=518 // loop_header
        %s871 = sphi 0, %s875
        %p872 = scmp.ge.s32.totalorder %s871, 1
        %s876 = sphi %s858, %s858
        %s877 = sphi %s859, %s859
      $region522: #{tpu_custom_call.1} parent=518 // loop_header_branch
        %874 = sbr.rel (%p872) target = $region526
      $region523: #{tpu_custom_call.1} parent=518 // loop_body
        %v878 = vld [vmem:[%s876] sm:%s869]
        %879 = vst [vmem:[%s877] sm:%s869] %v878
      $region524: #{tpu_custom_call.1} parent=518 // loop_footer
        %s875 = sadd.s32 1, %s871
      $region525: #{tpu_custom_call.1} parent=518 // loop_footer_branch
        %870 = sbr.rel target = $region521
      $region526: #{tpu_custom_call.1} parent=518 // loop_exit
        _
    $region519: #{tpu_custom_call.1} parent=1 // pred_fallthru
      _
    // Predicated region
    $region538: #{tpu_custom_call.1} parent=1 // pred_check
      _
    $region539: #{tpu_custom_call.1} parent=1 // pred_check_branch
      %903 = sbr.rel (0) target = $region541
    $region540: #{tpu_custom_call.1} parent=1 // pred_region
      %904 = vsyncadd %s860, 16
    $region541: #{tpu_custom_call.1} parent=1 // pred_fallthru
      _
    %s905 = scalar_lea.vmem %s3, %s47
    %s906 = scalar_lea.vmem [#allocation7], 3
    %s907 = scalar_lea.sflag [#allocation2], 18
    %p909 = scmp.lt.u32.totalorder 1, 8
    %p910 = pneg %p909
    // Predicated region
    $region542: #{tpu_custom_call.1} parent=1 // pred_check
      _
    $region543: #{tpu_custom_call.1} parent=1 // pred_check_branch
      %912 = sbr.rel (%p909) target = $region545
    $region544: #{tpu_custom_call.1} parent=1 // pred_region
      %s927 = sand.u32 1, 7
      %p928 = scmp.eq.s32.totalorder %s927, 0
      %p929 = pneg %p928
      // Predicated region
      $region557: #{tpu_custom_call.1} parent=544 // pred_check
        _
      $region558: #{tpu_custom_call.1} parent=544 // pred_check_branch
        %931 = sbr.rel (%p928) target = $region560
      $region559: #{tpu_custom_call.1} parent=544 // pred_region
        %s932 = sand.u32 1, 7
        %s933 = ssub.s32 1, %s932
        %s934 = scalar_lea.vmem %s905, %s933
        %s935 = ssub.s32 1, %s932
        %s936 = scalar_lea.vmem %s906, %s935 [#allocation7]
        %s937 = sshllo.u32 0, %s932
        loop: start=0, step=1, limit=1
        $region561: #{tpu_custom_call.1} parent=559 // loop_pre_header
          _
        $region562: #{tpu_custom_call.1} parent=559 // loop_header
          %s939 = sphi 0, %s943
          %p940 = scmp.ge.s32.totalorder %s939, 1
          %s944 = sphi %s934, %s934
          %s945 = sphi %s936, %s936
        $region563: #{tpu_custom_call.1} parent=559 // loop_header_branch
          %942 = sbr.rel (%p940) target = $region567
        $region564: #{tpu_custom_call.1} parent=559 // loop_body
          %v946 = vld [vmem:[%s944] sm:%s937]
          %947 = vst [vmem:[%s945] sm:%s937] %v946
        $region565: #{tpu_custom_call.1} parent=559 // loop_footer
          %s943 = sadd.s32 1, %s939
        $region566: #{tpu_custom_call.1} parent=559 // loop_footer_branch
          %938 = sbr.rel target = $region562
        $region567: #{tpu_custom_call.1} parent=559 // loop_exit
          _
      $region560: #{tpu_custom_call.1} parent=544 // pred_fallthru
        _
    $region545: #{tpu_custom_call.1} parent=1 // pred_fallthru
      _
    // Predicated region
    $region546: #{tpu_custom_call.1} parent=1 // pred_check
      %p913 = pneg %p909
    $region547: #{tpu_custom_call.1} parent=1 // pred_check_branch
      %915 = sbr.rel (%p913) target = $region549
    $region548: #{tpu_custom_call.1} parent=1 // pred_region
      %s916 = sshllo.u32 0, 1
      loop: start=0, step=1, limit=1
      $region550: #{tpu_custom_call.1} parent=548 // loop_pre_header
        _
      $region551: #{tpu_custom_call.1} parent=548 // loop_header
        %s918 = sphi 0, %s922
        %p919 = scmp.ge.s32.totalorder %s918, 1
        %s923 = sphi %s905, %s905
        %s924 = sphi %s906, %s906
      $region552: #{tpu_custom_call.1} parent=548 // loop_header_branch
        %921 = sbr.rel (%p919) target = $region556
      $region553: #{tpu_custom_call.1} parent=548 // loop_body
        %v925 = vld [vmem:[%s923] sm:%s916]
        %926 = vst [vmem:[%s924] sm:%s916] %v925
      $region554: #{tpu_custom_call.1} parent=548 // loop_footer
        %s922 = sadd.s32 1, %s918
      $region555: #{tpu_custom_call.1} parent=548 // loop_footer_branch
        %917 = sbr.rel target = $region551
      $region556: #{tpu_custom_call.1} parent=548 // loop_exit
        _
    $region549: #{tpu_custom_call.1} parent=1 // pred_fallthru
      _
    // Predicated region
    $region568: #{tpu_custom_call.1} parent=1 // pred_check
      _
    $region569: #{tpu_custom_call.1} parent=1 // pred_check_branch
      %950 = sbr.rel (0) target = $region571
    $region570: #{tpu_custom_call.1} parent=1 // pred_region
      %951 = vsyncadd %s907, 16
    $region571: #{tpu_custom_call.1} parent=1 // pred_fallthru
      _
    %s952 = scalar_lea.vmem %s4, %s48
    %s953 = scalar_lea.vmem [#allocation9], 3
    %s954 = scalar_lea.sflag [#allocation2], 19
    %p956 = scmp.lt.u32.totalorder 1, 8
    %p957 = pneg %p956
    // Predicated region
    $region572: #{tpu_custom_call.1} parent=1 // pred_check
      _
    $region573: #{tpu_custom_call.1} parent=1 // pred_check_branch
      %959 = sbr.rel (%p956) target = $region575
    $region574: #{tpu_custom_call.1} parent=1 // pred_region
      %s974 = sand.u32 1, 7
      %p975 = scmp.eq.s32.totalorder %s974, 0
      %p976 = pneg %p975
      // Predicated region
      $region587: #{tpu_custom_call.1} parent=574 // pred_check
        _
      $region588: #{tpu_custom_call.1} parent=574 // pred_check_branch
        %978 = sbr.rel (%p975) target = $region590
      $region589: #{tpu_custom_call.1} parent=574 // pred_region
        %s979 = sand.u32 1, 7
        %s980 = ssub.s32 1, %s979
        %s981 = scalar_lea.vmem %s952, %s980
        %s982 = ssub.s32 1, %s979
        %s983 = scalar_lea.vmem %s953, %s982 [#allocation9]
        %s984 = sshllo.u32 0, %s979
        loop: start=0, step=1, limit=1
        $region591: #{tpu_custom_call.1} parent=589 // loop_pre_header
          _
        $region592: #{tpu_custom_call.1} parent=589 // loop_header
          %s986 = sphi 0, %s990
          %p987 = scmp.ge.s32.totalorder %s986, 1
          %s991 = sphi %s981, %s981
          %s992 = sphi %s983, %s983
        $region593: #{tpu_custom_call.1} parent=589 // loop_header_branch
          %989 = sbr.rel (%p987) target = $region597
        $region594: #{tpu_custom_call.1} parent=589 // loop_body
          %v993 = vld [vmem:[%s991] sm:%s984]
          %994 = vst [vmem:[%s992] sm:%s984] %v993
        $region595: #{tpu_custom_call.1} parent=589 // loop_footer
          %s990 = sadd.s32 1, %s986
        $region596: #{tpu_custom_call.1} parent=589 // loop_footer_branch
          %985 = sbr.rel target = $region592
        $region597: #{tpu_custom_call.1} parent=589 // loop_exit
          _
      $region590: #{tpu_custom_call.1} parent=574 // pred_fallthru
        _
    $region575: #{tpu_custom_call.1} parent=1 // pred_fallthru
      _
    // Predicated region
    $region576: #{tpu_custom_call.1} parent=1 // pred_check
      %p960 = pneg %p956
    $region577: #{tpu_custom_call.1} parent=1 // pred_check_branch
      %962 = sbr.rel (%p960) target = $region579
    $region578: #{tpu_custom_call.1} parent=1 // pred_region
      %s963 = sshllo.u32 0, 1
      loop: start=0, step=1, limit=1
      $region580: #{tpu_custom_call.1} parent=578 // loop_pre_header
        _
      $region581: #{tpu_custom_call.1} parent=578 // loop_header
        %s965 = sphi 0, %s969
        %p966 = scmp.ge.s32.totalorder %s965, 1
        %s970 = sphi %s952, %s952
        %s971 = sphi %s953, %s953
      $region582: #{tpu_custom_call.1} parent=578 // loop_header_branch
        %968 = sbr.rel (%p966) target = $region586
      $region583: #{tpu_custom_call.1} parent=578 // loop_body
        %v972 = vld [vmem:[%s970] sm:%s963]
        %973 = vst [vmem:[%s971] sm:%s963] %v972
      $region584: #{tpu_custom_call.1} parent=578 // loop_footer
        %s969 = sadd.s32 1, %s965
      $region585: #{tpu_custom_call.1} parent=578 // loop_footer_branch
        %964 = sbr.rel target = $region581
      $region586: #{tpu_custom_call.1} parent=578 // loop_exit
        _
    $region579: #{tpu_custom_call.1} parent=1 // pred_fallthru
      _
    // Predicated region
    $region598: #{tpu_custom_call.1} parent=1 // pred_check
      _
    $region599: #{tpu_custom_call.1} parent=1 // pred_check_branch
      %997 = sbr.rel (0) target = $region601
    $region600: #{tpu_custom_call.1} parent=1 // pred_region
      %998 = vsyncadd %s954, 16
    $region601: #{tpu_custom_call.1} parent=1 // pred_fallthru
      _
    %s999 = scalar_lea.vmem %s3, %s49
    %s1000 = scalar_lea.vmem [#allocation11], 3
    %s1001 = scalar_lea.sflag [#allocation2], 20
    %p1003 = scmp.lt.u32.totalorder 1, 8
    %p1004 = pneg %p1003
    // Predicated region
    $region602: #{tpu_custom_call.1} parent=1 // pred_check
      _
    $region603: #{tpu_custom_call.1} parent=1 // pred_check_branch
      %1006 = sbr.rel (%p1003) target = $region605
    $region604: #{tpu_custom_call.1} parent=1 // pred_region
      %s1021 = sand.u32 1, 7
      %p1022 = scmp.eq.s32.totalorder %s1021, 0
      %p1023 = pneg %p1022
      // Predicated region
      $region617: #{tpu_custom_call.1} parent=604 // pred_check
        _
      $region618: #{tpu_custom_call.1} parent=604 // pred_check_branch
        %1025 = sbr.rel (%p1022) target = $region620
      $region619: #{tpu_custom_call.1} parent=604 // pred_region
        %s1026 = sand.u32 1, 7
        %s1027 = ssub.s32 1, %s1026
        %s1028 = scalar_lea.vmem %s999, %s1027
        %s1029 = ssub.s32 1, %s1026
        %s1030 = scalar_lea.vmem %s1000, %s1029 [#allocation11]
        %s1031 = sshllo.u32 0, %s1026
        loop: start=0, step=1, limit=1
        $region621: #{tpu_custom_call.1} parent=619 // loop_pre_header
          _
        $region622: #{tpu_custom_call.1} parent=619 // loop_header
          %s1033 = sphi 0, %s1037
          %p1034 = scmp.ge.s32.totalorder %s1033, 1
          %s1038 = sphi %s1028, %s1028
          %s1039 = sphi %s1030, %s1030
        $region623: #{tpu_custom_call.1} parent=619 // loop_header_branch
          %1036 = sbr.rel (%p1034) target = $region627
        $region624: #{tpu_custom_call.1} parent=619 // loop_body
          %v1040 = vld [vmem:[%s1038] sm:%s1031]
          %1041 = vst [vmem:[%s1039] sm:%s1031] %v1040
        $region625: #{tpu_custom_call.1} parent=619 // loop_footer
          %s1037 = sadd.s32 1, %s1033
        $region626: #{tpu_custom_call.1} parent=619 // loop_footer_branch
          %1032 = sbr.rel target = $region622
        $region627: #{tpu_custom_call.1} parent=619 // loop_exit
          _
      $region620: #{tpu_custom_call.1} parent=604 // pred_fallthru
        _
    $region605: #{tpu_custom_call.1} parent=1 // pred_fallthru
      _
    // Predicated region
    $region606: #{tpu_custom_call.1} parent=1 // pred_check
      %p1007 = pneg %p1003
    $region607: #{tpu_custom_call.1} parent=1 // pred_check_branch
      %1009 = sbr.rel (%p1007) target = $region609
    $region608: #{tpu_custom_call.1} parent=1 // pred_region
      %s1010 = sshllo.u32 0, 1
      loop: start=0, step=1, limit=1
      $region610: #{tpu_custom_call.1} parent=608 // loop_pre_header
        _
      $region611: #{tpu_custom_call.1} parent=608 // loop_header
        %s1012 = sphi 0, %s1016
        %p1013 = scmp.ge.s32.totalorder %s1012, 1
        %s1017 = sphi %s999, %s999
        %s1018 = sphi %s1000, %s1000
      $region612: #{tpu_custom_call.1} parent=608 // loop_header_branch
        %1015 = sbr.rel (%p1013) target = $region616
      $region613: #{tpu_custom_call.1} parent=608 // loop_body
        %v1019 = vld [vmem:[%s1017] sm:%s1010]
        %1020 = vst [vmem:[%s1018] sm:%s1010] %v1019
      $region614: #{tpu_custom_call.1} parent=608 // loop_footer
        %s1016 = sadd.s32 1, %s1012
      $region615: #{tpu_custom_call.1} parent=608 // loop_footer_branch
        %1011 = sbr.rel target = $region611
      $region616: #{tpu_custom_call.1} parent=608 // loop_exit
        _
    $region609: #{tpu_custom_call.1} parent=1 // pred_fallthru
      _
    // Predicated region
    $region628: #{tpu_custom_call.1} parent=1 // pred_check
      _
    $region629: #{tpu_custom_call.1} parent=1 // pred_check_branch
      %1044 = sbr.rel (0) target = $region631
    $region630: #{tpu_custom_call.1} parent=1 // pred_region
      %1045 = vsyncadd %s1001, 16
    $region631: #{tpu_custom_call.1} parent=1 // pred_fallthru
      _
    %s1046 = scalar_lea.vmem %s5, %s47
    %s1047 = scalar_lea.vmem %s10, 3
    %s1048 = scalar_lea.sflag [#allocation2], 21
    %p1050 = scmp.lt.u32.totalorder 1, 8
    %p1051 = pneg %p1050
    // Predicated region
    $region632: #{tpu_custom_call.1} parent=1 // pred_check
      _
    $region633: #{tpu_custom_call.1} parent=1 // pred_check_branch
      %1053 = sbr.rel (%p1050) target = $region635
    $region634: #{tpu_custom_call.1} parent=1 // pred_region
      %s1068 = sand.u32 1, 7
      %p1069 = scmp.eq.s32.totalorder %s1068, 0
      %p1070 = pneg %p1069
      // Predicated region
      $region647: #{tpu_custom_call.1} parent=634 // pred_check
        _
      $region648: #{tpu_custom_call.1} parent=634 // pred_check_branch
        %1072 = sbr.rel (%p1069) target = $region650
      $region649: #{tpu_custom_call.1} parent=634 // pred_region
        %s1073 = sand.u32 1, 7
        %s1074 = ssub.s32 1, %s1073
        %s1075 = scalar_lea.vmem %s1046, %s1074
        %s1076 = ssub.s32 1, %s1073
        %s1077 = scalar_lea.vmem %s1047, %s1076
        %s1078 = sshllo.u32 0, %s1073
        loop: start=0, step=1, limit=1
        $region651: #{tpu_custom_call.1} parent=649 // loop_pre_header
          _
        $region652: #{tpu_custom_call.1} parent=649 // loop_header
          %s1080 = sphi 0, %s1084
          %p1081 = scmp.ge.s32.totalorder %s1080, 1
          %s1085 = sphi %s1075, %s1075
          %s1086 = sphi %s1077, %s1077
        $region653: #{tpu_custom_call.1} parent=649 // loop_header_branch
          %1083 = sbr.rel (%p1081) target = $region657
        $region654: #{tpu_custom_call.1} parent=649 // loop_body
          %v1087 = vld [vmem:[%s1085] sm:%s1078]
          %1088 = vst [vmem:[%s1086] sm:%s1078] %v1087
        $region655: #{tpu_custom_call.1} parent=649 // loop_footer
          %s1084 = sadd.s32 1, %s1080
        $region656: #{tpu_custom_call.1} parent=649 // loop_footer_branch
          %1079 = sbr.rel target = $region652
        $region657: #{tpu_custom_call.1} parent=649 // loop_exit
          _
      $region650: #{tpu_custom_call.1} parent=634 // pred_fallthru
        _
    $region635: #{tpu_custom_call.1} parent=1 // pred_fallthru
      _
    // Predicated region
    $region636: #{tpu_custom_call.1} parent=1 // pred_check
      %p1054 = pneg %p1050
    $region637: #{tpu_custom_call.1} parent=1 // pred_check_branch
      %1056 = sbr.rel (%p1054) target = $region639
    $region638: #{tpu_custom_call.1} parent=1 // pred_region
      %s1057 = sshllo.u32 0, 1
      loop: start=0, step=1, limit=1
      $region640: #{tpu_custom_call.1} parent=638 // loop_pre_header
        _
      $region641: #{tpu_custom_call.1} parent=638 // loop_header
        %s1059 = sphi 0, %s1063
        %p1060 = scmp.ge.s32.totalorder %s1059, 1
        %s1064 = sphi %s1046, %s1046
        %s1065 = sphi %s1047, %s1047
      $region642: #{tpu_custom_call.1} parent=638 // loop_header_branch
        %1062 = sbr.rel (%p1060) target = $region646
      $region643: #{tpu_custom_call.1} parent=638 // loop_body
        %v1066 = vld [vmem:[%s1064] sm:%s1057]
        %1067 = vst [vmem:[%s1065] sm:%s1057] %v1066
      $region644: #{tpu_custom_call.1} parent=638 // loop_footer
        %s1063 = sadd.s32 1, %s1059
      $region645: #{tpu_custom_call.1} parent=638 // loop_footer_branch
        %1058 = sbr.rel target = $region641
      $region646: #{tpu_custom_call.1} parent=638 // loop_exit
        _
    $region639: #{tpu_custom_call.1} parent=1 // pred_fallthru
      _
    // Predicated region
    $region658: #{tpu_custom_call.1} parent=1 // pred_check
      _
    $region659: #{tpu_custom_call.1} parent=1 // pred_check_branch
      %1091 = sbr.rel (0) target = $region661
    $region660: #{tpu_custom_call.1} parent=1 // pred_region
      %1092 = vsyncadd %s1048, 16
    $region661: #{tpu_custom_call.1} parent=1 // pred_fallthru
      _
    %s1093 = scalar_lea.vmem %s6, %s48
    %s1094 = scalar_lea.vmem %s11, 3
    %s1095 = scalar_lea.sflag [#allocation2], 22
    %p1097 = scmp.lt.u32.totalorder 1, 8
    %p1098 = pneg %p1097
    // Predicated region
    $region662: #{tpu_custom_call.1} parent=1 // pred_check
      _
    $region663: #{tpu_custom_call.1} parent=1 // pred_check_branch
      %1100 = sbr.rel (%p1097) target = $region665
    $region664: #{tpu_custom_call.1} parent=1 // pred_region
      %s1115 = sand.u32 1, 7
      %p1116 = scmp.eq.s32.totalorder %s1115, 0
      %p1117 = pneg %p1116
      // Predicated region
      $region677: #{tpu_custom_call.1} parent=664 // pred_check
        _
      $region678: #{tpu_custom_call.1} parent=664 // pred_check_branch
        %1119 = sbr.rel (%p1116) target = $region680
      $region679: #{tpu_custom_call.1} parent=664 // pred_region
        %s1120 = sand.u32 1, 7
        %s1121 = ssub.s32 1, %s1120
        %s1122 = scalar_lea.vmem %s1093, %s1121
        %s1123 = ssub.s32 1, %s1120
        %s1124 = scalar_lea.vmem %s1094, %s1123
        %s1125 = sshllo.u32 0, %s1120
        loop: start=0, step=1, limit=1
        $region681: #{tpu_custom_call.1} parent=679 // loop_pre_header
          _
        $region682: #{tpu_custom_call.1} parent=679 // loop_header
          %s1127 = sphi 0, %s1131
          %p1128 = scmp.ge.s32.totalorder %s1127, 1
          %s1132 = sphi %s1122, %s1122
          %s1133 = sphi %s1124, %s1124
        $region683: #{tpu_custom_call.1} parent=679 // loop_header_branch
          %1130 = sbr.rel (%p1128) target = $region687
        $region684: #{tpu_custom_call.1} parent=679 // loop_body
          %v1134 = vld [vmem:[%s1132] sm:%s1125]
          %1135 = vst [vmem:[%s1133] sm:%s1125] %v1134
        $region685: #{tpu_custom_call.1} parent=679 // loop_footer
          %s1131 = sadd.s32 1, %s1127
        $region686: #{tpu_custom_call.1} parent=679 // loop_footer_branch
          %1126 = sbr.rel target = $region682
        $region687: #{tpu_custom_call.1} parent=679 // loop_exit
          _
      $region680: #{tpu_custom_call.1} parent=664 // pred_fallthru
        _
    $region665: #{tpu_custom_call.1} parent=1 // pred_fallthru
      _
    // Predicated region
    $region666: #{tpu_custom_call.1} parent=1 // pred_check
      %p1101 = pneg %p1097
    $region667: #{tpu_custom_call.1} parent=1 // pred_check_branch
      %1103 = sbr.rel (%p1101) target = $region669
    $region668: #{tpu_custom_call.1} parent=1 // pred_region
      %s1104 = sshllo.u32 0, 1
      loop: start=0, step=1, limit=1
      $region670: #{tpu_custom_call.1} parent=668 // loop_pre_header
        _
      $region671: #{tpu_custom_call.1} parent=668 // loop_header
        %s1106 = sphi 0, %s1110
        %p1107 = scmp.ge.s32.totalorder %s1106, 1
        %s1111 = sphi %s1093, %s1093
        %s1112 = sphi %s1094, %s1094
      $region672: #{tpu_custom_call.1} parent=668 // loop_header_branch
        %1109 = sbr.rel (%p1107) target = $region676
      $region673: #{tpu_custom_call.1} parent=668 // loop_body
        %v1113 = vld [vmem:[%s1111] sm:%s1104]
        %1114 = vst [vmem:[%s1112] sm:%s1104] %v1113
      $region674: #{tpu_custom_call.1} parent=668 // loop_footer
        %s1110 = sadd.s32 1, %s1106
      $region675: #{tpu_custom_call.1} parent=668 // loop_footer_branch
        %1105 = sbr.rel target = $region671
      $region676: #{tpu_custom_call.1} parent=668 // loop_exit
        _
    $region669: #{tpu_custom_call.1} parent=1 // pred_fallthru
      _
    // Predicated region
    $region688: #{tpu_custom_call.1} parent=1 // pred_check
      _
    $region689: #{tpu_custom_call.1} parent=1 // pred_check_branch
      %1138 = sbr.rel (0) target = $region691
    $region690: #{tpu_custom_call.1} parent=1 // pred_region
      %1139 = vsyncadd %s1095, 16
    $region691: #{tpu_custom_call.1} parent=1 // pred_fallthru
      _
    %s1140 = scalar_lea.vmem %s5, %s49
    %s1141 = scalar_lea.vmem %s12, 3
    %s1142 = scalar_lea.sflag [#allocation2], 23
    %p1144 = scmp.lt.u32.totalorder 1, 8
    %p1145 = pneg %p1144
    // Predicated region
    $region692: #{tpu_custom_call.1} parent=1 // pred_check
      _
    $region693: #{tpu_custom_call.1} parent=1 // pred_check_branch
      %1147 = sbr.rel (%p1144) target = $region695
    $region694: #{tpu_custom_call.1} parent=1 // pred_region
      %s1162 = sand.u32 1, 7
      %p1163 = scmp.eq.s32.totalorder %s1162, 0
      %p1164 = pneg %p1163
      // Predicated region
      $region707: #{tpu_custom_call.1} parent=694 // pred_check
        _
      $region708: #{tpu_custom_call.1} parent=694 // pred_check_branch
        %1166 = sbr.rel (%p1163) target = $region710
      $region709: #{tpu_custom_call.1} parent=694 // pred_region
        %s1167 = sand.u32 1, 7
        %s1168 = ssub.s32 1, %s1167
        %s1169 = scalar_lea.vmem %s1140, %s1168
        %s1170 = ssub.s32 1, %s1167
        %s1171 = scalar_lea.vmem %s1141, %s1170
        %s1172 = sshllo.u32 0, %s1167
        loop: start=0, step=1, limit=1
        $region711: #{tpu_custom_call.1} parent=709 // loop_pre_header
          _
        $region712: #{tpu_custom_call.1} parent=709 // loop_header
          %s1174 = sphi 0, %s1178
          %p1175 = scmp.ge.s32.totalorder %s1174, 1
          %s1179 = sphi %s1169, %s1169
          %s1180 = sphi %s1171, %s1171
        $region713: #{tpu_custom_call.1} parent=709 // loop_header_branch
          %1177 = sbr.rel (%p1175) target = $region717
        $region714: #{tpu_custom_call.1} parent=709 // loop_body
          %v1181 = vld [vmem:[%s1179] sm:%s1172]
          %1182 = vst [vmem:[%s1180] sm:%s1172] %v1181
        $region715: #{tpu_custom_call.1} parent=709 // loop_footer
          %s1178 = sadd.s32 1, %s1174
        $region716: #{tpu_custom_call.1} parent=709 // loop_footer_branch
          %1173 = sbr.rel target = $region712
        $region717: #{tpu_custom_call.1} parent=709 // loop_exit
          _
      $region710: #{tpu_custom_call.1} parent=694 // pred_fallthru
        _
    $region695: #{tpu_custom_call.1} parent=1 // pred_fallthru
      _
    // Predicated region
    $region696: #{tpu_custom_call.1} parent=1 // pred_check
      %p1148 = pneg %p1144
    $region697: #{tpu_custom_call.1} parent=1 // pred_check_branch
      %1150 = sbr.rel (%p1148) target = $region699
    $region698: #{tpu_custom_call.1} parent=1 // pred_region
      %s1151 = sshllo.u32 0, 1
      loop: start=0, step=1, limit=1
      $region700: #{tpu_custom_call.1} parent=698 // loop_pre_header
        _
      $region701: #{tpu_custom_call.1} parent=698 // loop_header
        %s1153 = sphi 0, %s1157
        %p1154 = scmp.ge.s32.totalorder %s1153, 1
        %s1158 = sphi %s1140, %s1140
        %s1159 = sphi %s1141, %s1141
      $region702: #{tpu_custom_call.1} parent=698 // loop_header_branch
        %1156 = sbr.rel (%p1154) target = $region706
      $region703: #{tpu_custom_call.1} parent=698 // loop_body
        %v1160 = vld [vmem:[%s1158] sm:%s1151]
        %1161 = vst [vmem:[%s1159] sm:%s1151] %v1160
      $region704: #{tpu_custom_call.1} parent=698 // loop_footer
        %s1157 = sadd.s32 1, %s1153
      $region705: #{tpu_custom_call.1} parent=698 // loop_footer_branch
        %1152 = sbr.rel target = $region701
      $region706: #{tpu_custom_call.1} parent=698 // loop_exit
        _
    $region699: #{tpu_custom_call.1} parent=1 // pred_fallthru
      _
    // Predicated region
    $region718: #{tpu_custom_call.1} parent=1 // pred_check
      _
    $region719: #{tpu_custom_call.1} parent=1 // pred_check_branch
      %1185 = sbr.rel (0) target = $region721
    $region720: #{tpu_custom_call.1} parent=1 // pred_region
      %1186 = vsyncadd %s1142, 16
    $region721: #{tpu_custom_call.1} parent=1 // pred_fallthru
      _
    %s1187 = scalar_lea.vmem %s3, %s51
    %s1188 = scalar_lea.vmem [#allocation7], 4
    %s1189 = scalar_lea.sflag [#allocation2], 24
    %p1191 = scmp.lt.u32.totalorder 1, 8
    %p1192 = pneg %p1191
    // Predicated region
    $region722: #{tpu_custom_call.1} parent=1 // pred_check
      _
    $region723: #{tpu_custom_call.1} parent=1 // pred_check_branch
      %1194 = sbr.rel (%p1191) target = $region725
    $region724: #{tpu_custom_call.1} parent=1 // pred_region
      %s1209 = sand.u32 1, 7
      %p1210 = scmp.eq.s32.totalorder %s1209, 0
      %p1211 = pneg %p1210
      // Predicated region
      $region737: #{tpu_custom_call.1} parent=724 // pred_check
        _
      $region738: #{tpu_custom_call.1} parent=724 // pred_check_branch
        %1213 = sbr.rel (%p1210) target = $region740
      $region739: #{tpu_custom_call.1} parent=724 // pred_region
        %s1214 = sand.u32 1, 7
        %s1215 = ssub.s32 1, %s1214
        %s1216 = scalar_lea.vmem %s1187, %s1215
        %s1217 = ssub.s32 1, %s1214
        %s1218 = scalar_lea.vmem %s1188, %s1217 [#allocation7]
        %s1219 = sshllo.u32 0, %s1214
        loop: start=0, step=1, limit=1
        $region741: #{tpu_custom_call.1} parent=739 // loop_pre_header
          _
        $region742: #{tpu_custom_call.1} parent=739 // loop_header
          %s1221 = sphi 0, %s1225
          %p1222 = scmp.ge.s32.totalorder %s1221, 1
          %s1226 = sphi %s1216, %s1216
          %s1227 = sphi %s1218, %s1218
        $region743: #{tpu_custom_call.1} parent=739 // loop_header_branch
          %1224 = sbr.rel (%p1222) target = $region747
        $region744: #{tpu_custom_call.1} parent=739 // loop_body
          %v1228 = vld [vmem:[%s1226] sm:%s1219]
          %1229 = vst [vmem:[%s1227] sm:%s1219] %v1228
        $region745: #{tpu_custom_call.1} parent=739 // loop_footer
          %s1225 = sadd.s32 1, %s1221
        $region746: #{tpu_custom_call.1} parent=739 // loop_footer_branch
          %1220 = sbr.rel target = $region742
        $region747: #{tpu_custom_call.1} parent=739 // loop_exit
          _
      $region740: #{tpu_custom_call.1} parent=724 // pred_fallthru
        _
    $region725: #{tpu_custom_call.1} parent=1 // pred_fallthru
      _
    // Predicated region
    $region726: #{tpu_custom_call.1} parent=1 // pred_check
      %p1195 = pneg %p1191
    $region727: #{tpu_custom_call.1} parent=1 // pred_check_branch
      %1197 = sbr.rel (%p1195) target = $region729
    $region728: #{tpu_custom_call.1} parent=1 // pred_region
      %s1198 = sshllo.u32 0, 1
      loop: start=0, step=1, limit=1
      $region730: #{tpu_custom_call.1} parent=728 // loop_pre_header
        _
      $region731: #{tpu_custom_call.1} parent=728 // loop_header
        %s1200 = sphi 0, %s1204
        %p1201 = scmp.ge.s32.totalorder %s1200, 1
        %s1205 = sphi %s1187, %s1187
        %s1206 = sphi %s1188, %s1188
      $region732: #{tpu_custom_call.1} parent=728 // loop_header_branch
        %1203 = sbr.rel (%p1201) target = $region736
      $region733: #{tpu_custom_call.1} parent=728 // loop_body
        %v1207 = vld [vmem:[%s1205] sm:%s1198]
        %1208 = vst [vmem:[%s1206] sm:%s1198] %v1207
      $region734: #{tpu_custom_call.1} parent=728 // loop_footer
        %s1204 = sadd.s32 1, %s1200
      $region735: #{tpu_custom_call.1} parent=728 // loop_footer_branch
        %1199 = sbr.rel target = $region731
      $region736: #{tpu_custom_call.1} parent=728 // loop_exit
        _
    $region729: #{tpu_custom_call.1} parent=1 // pred_fallthru
      _
    // Predicated region
    $region748: #{tpu_custom_call.1} parent=1 // pred_check
      _
    $region749: #{tpu_custom_call.1} parent=1 // pred_check_branch
      %1232 = sbr.rel (0) target = $region751
    $region750: #{tpu_custom_call.1} parent=1 // pred_region
      %1233 = vsyncadd %s1189, 16
    $region751: #{tpu_custom_call.1} parent=1 // pred_fallthru
      _
    %s1234 = scalar_lea.vmem %s4, %s52
    %s1235 = scalar_lea.vmem [#allocation9], 4
    %s1236 = scalar_lea.sflag [#allocation2], 25
    %p1238 = scmp.lt.u32.totalorder 1, 8
    %p1239 = pneg %p1238
    // Predicated region
    $region752: #{tpu_custom_call.1} parent=1 // pred_check
      _
    $region753: #{tpu_custom_call.1} parent=1 // pred_check_branch
      %1241 = sbr.rel (%p1238) target = $region755
    $region754: #{tpu_custom_call.1} parent=1 // pred_region
      %s1256 = sand.u32 1, 7
      %p1257 = scmp.eq.s32.totalorder %s1256, 0
      %p1258 = pneg %p1257
      // Predicated region
      $region767: #{tpu_custom_call.1} parent=754 // pred_check
        _
      $region768: #{tpu_custom_call.1} parent=754 // pred_check_branch
        %1260 = sbr.rel (%p1257) target = $region770
      $region769: #{tpu_custom_call.1} parent=754 // pred_region
        %s1261 = sand.u32 1, 7
        %s1262 = ssub.s32 1, %s1261
        %s1263 = scalar_lea.vmem %s1234, %s1262
        %s1264 = ssub.s32 1, %s1261
        %s1265 = scalar_lea.vmem %s1235, %s1264 [#allocation9]
        %s1266 = sshllo.u32 0, %s1261
        loop: start=0, step=1, limit=1
        $region771: #{tpu_custom_call.1} parent=769 // loop_pre_header
          _
        $region772: #{tpu_custom_call.1} parent=769 // loop_header
          %s1268 = sphi 0, %s1272
          %p1269 = scmp.ge.s32.totalorder %s1268, 1
          %s1273 = sphi %s1263, %s1263
          %s1274 = sphi %s1265, %s1265
        $region773: #{tpu_custom_call.1} parent=769 // loop_header_branch
          %1271 = sbr.rel (%p1269) target = $region777
        $region774: #{tpu_custom_call.1} parent=769 // loop_body
          %v1275 = vld [vmem:[%s1273] sm:%s1266]
          %1276 = vst [vmem:[%s1274] sm:%s1266] %v1275
        $region775: #{tpu_custom_call.1} parent=769 // loop_footer
          %s1272 = sadd.s32 1, %s1268
        $region776: #{tpu_custom_call.1} parent=769 // loop_footer_branch
          %1267 = sbr.rel target = $region772
        $region777: #{tpu_custom_call.1} parent=769 // loop_exit
          _
      $region770: #{tpu_custom_call.1} parent=754 // pred_fallthru
        _
    $region755: #{tpu_custom_call.1} parent=1 // pred_fallthru
      _
    // Predicated region
    $region756: #{tpu_custom_call.1} parent=1 // pred_check
      %p1242 = pneg %p1238
    $region757: #{tpu_custom_call.1} parent=1 // pred_check_branch
      %1244 = sbr.rel (%p1242) target = $region759
    $region758: #{tpu_custom_call.1} parent=1 // pred_region
      %s1245 = sshllo.u32 0, 1
      loop: start=0, step=1, limit=1
      $region760: #{tpu_custom_call.1} parent=758 // loop_pre_header
        _
      $region761: #{tpu_custom_call.1} parent=758 // loop_header
        %s1247 = sphi 0, %s1251
        %p1248 = scmp.ge.s32.totalorder %s1247, 1
        %s1252 = sphi %s1234, %s1234
        %s1253 = sphi %s1235, %s1235
      $region762: #{tpu_custom_call.1} parent=758 // loop_header_branch
        %1250 = sbr.rel (%p1248) target = $region766
      $region763: #{tpu_custom_call.1} parent=758 // loop_body
        %v1254 = vld [vmem:[%s1252] sm:%s1245]
        %1255 = vst [vmem:[%s1253] sm:%s1245] %v1254
      $region764: #{tpu_custom_call.1} parent=758 // loop_footer
        %s1251 = sadd.s32 1, %s1247
      $region765: #{tpu_custom_call.1} parent=758 // loop_footer_branch
        %1246 = sbr.rel target = $region761
      $region766: #{tpu_custom_call.1} parent=758 // loop_exit
        _
    $region759: #{tpu_custom_call.1} parent=1 // pred_fallthru
      _
    // Predicated region
    $region778: #{tpu_custom_call.1} parent=1 // pred_check
      _
    $region779: #{tpu_custom_call.1} parent=1 // pred_check_branch
      %1279 = sbr.rel (0) target = $region781
    $region780: #{tpu_custom_call.1} parent=1 // pred_region
      %1280 = vsyncadd %s1236, 16
    $region781: #{tpu_custom_call.1} parent=1 // pred_fallthru
      _
    %s1281 = scalar_lea.vmem %s3, %s53
    %s1282 = scalar_lea.vmem [#allocation11], 4
    %s1283 = scalar_lea.sflag [#allocation2], 26
    %p1285 = scmp.lt.u32.totalorder 1, 8
    %p1286 = pneg %p1285
    // Predicated region
    $region782: #{tpu_custom_call.1} parent=1 // pred_check
      _
    $region783: #{tpu_custom_call.1} parent=1 // pred_check_branch
      %1288 = sbr.rel (%p1285) target = $region785
    $region784: #{tpu_custom_call.1} parent=1 // pred_region
      %s1303 = sand.u32 1, 7
      %p1304 = scmp.eq.s32.totalorder %s1303, 0
      %p1305 = pneg %p1304
      // Predicated region
      $region797: #{tpu_custom_call.1} parent=784 // pred_check
        _
      $region798: #{tpu_custom_call.1} parent=784 // pred_check_branch
        %1307 = sbr.rel (%p1304) target = $region800
      $region799: #{tpu_custom_call.1} parent=784 // pred_region
        %s1308 = sand.u32 1, 7
        %s1309 = ssub.s32 1, %s1308
        %s1310 = scalar_lea.vmem %s1281, %s1309
        %s1311 = ssub.s32 1, %s1308
        %s1312 = scalar_lea.vmem %s1282, %s1311 [#allocation11]
        %s1313 = sshllo.u32 0, %s1308
        loop: start=0, step=1, limit=1
        $region801: #{tpu_custom_call.1} parent=799 // loop_pre_header
          _
        $region802: #{tpu_custom_call.1} parent=799 // loop_header
          %s1315 = sphi 0, %s1319
          %p1316 = scmp.ge.s32.totalorder %s1315, 1
          %s1320 = sphi %s1310, %s1310
          %s1321 = sphi %s1312, %s1312
        $region803: #{tpu_custom_call.1} parent=799 // loop_header_branch
          %1318 = sbr.rel (%p1316) target = $region807
        $region804: #{tpu_custom_call.1} parent=799 // loop_body
          %v1322 = vld [vmem:[%s1320] sm:%s1313]
          %1323 = vst [vmem:[%s1321] sm:%s1313] %v1322
        $region805: #{tpu_custom_call.1} parent=799 // loop_footer
          %s1319 = sadd.s32 1, %s1315
        $region806: #{tpu_custom_call.1} parent=799 // loop_footer_branch
          %1314 = sbr.rel target = $region802
        $region807: #{tpu_custom_call.1} parent=799 // loop_exit
          _
      $region800: #{tpu_custom_call.1} parent=784 // pred_fallthru
        _
    $region785: #{tpu_custom_call.1} parent=1 // pred_fallthru
      _
    // Predicated region
    $region786: #{tpu_custom_call.1} parent=1 // pred_check
      %p1289 = pneg %p1285
    $region787: #{tpu_custom_call.1} parent=1 // pred_check_branch
      %1291 = sbr.rel (%p1289) target = $region789
    $region788: #{tpu_custom_call.1} parent=1 // pred_region
      %s1292 = sshllo.u32 0, 1
      loop: start=0, step=1, limit=1
      $region790: #{tpu_custom_call.1} parent=788 // loop_pre_header
        _
      $region791: #{tpu_custom_call.1} parent=788 // loop_header
        %s1294 = sphi 0, %s1298
        %p1295 = scmp.ge.s32.totalorder %s1294, 1
        %s1299 = sphi %s1281, %s1281
        %s1300 = sphi %s1282, %s1282
      $region792: #{tpu_custom_call.1} parent=788 // loop_header_branch
        %1297 = sbr.rel (%p1295) target = $region796
      $region793: #{tpu_custom_call.1} parent=788 // loop_body
        %v1301 = vld [vmem:[%s1299] sm:%s1292]
        %1302 = vst [vmem:[%s1300] sm:%s1292] %v1301
      $region794: #{tpu_custom_call.1} parent=788 // loop_footer
        %s1298 = sadd.s32 1, %s1294
      $region795: #{tpu_custom_call.1} parent=788 // loop_footer_branch
        %1293 = sbr.rel target = $region791
      $region796: #{tpu_custom_call.1} parent=788 // loop_exit
        _
    $region789: #{tpu_custom_call.1} parent=1 // pred_fallthru
      _
    // Predicated region
    $region808: #{tpu_custom_call.1} parent=1 // pred_check
      _
    $region809: #{tpu_custom_call.1} parent=1 // pred_check_branch
      %1326 = sbr.rel (0) target = $region811
    $region810: #{tpu_custom_call.1} parent=1 // pred_region
      %1327 = vsyncadd %s1283, 16
    $region811: #{tpu_custom_call.1} parent=1 // pred_fallthru
      _
    %s1328 = scalar_lea.vmem %s5, %s51
    %s1329 = scalar_lea.vmem %s10, 4
    %s1330 = scalar_lea.sflag [#allocation2], 27
    %p1332 = scmp.lt.u32.totalorder 1, 8
    %p1333 = pneg %p1332
    // Predicated region
    $region812: #{tpu_custom_call.1} parent=1 // pred_check
      _
    $region813: #{tpu_custom_call.1} parent=1 // pred_check_branch
      %1335 = sbr.rel (%p1332) target = $region815
    $region814: #{tpu_custom_call.1} parent=1 // pred_region
      %s1350 = sand.u32 1, 7
      %p1351 = scmp.eq.s32.totalorder %s1350, 0
      %p1352 = pneg %p1351
      // Predicated region
      $region827: #{tpu_custom_call.1} parent=814 // pred_check
        _
      $region828: #{tpu_custom_call.1} parent=814 // pred_check_branch
        %1354 = sbr.rel (%p1351) target = $region830
      $region829: #{tpu_custom_call.1} parent=814 // pred_region
        %s1355 = sand.u32 1, 7
        %s1356 = ssub.s32 1, %s1355
        %s1357 = scalar_lea.vmem %s1328, %s1356
        %s1358 = ssub.s32 1, %s1355
        %s1359 = scalar_lea.vmem %s1329, %s1358
        %s1360 = sshllo.u32 0, %s1355
        loop: start=0, step=1, limit=1
        $region831: #{tpu_custom_call.1} parent=829 // loop_pre_header
          _
        $region832: #{tpu_custom_call.1} parent=829 // loop_header
          %s1362 = sphi 0, %s1366
          %p1363 = scmp.ge.s32.totalorder %s1362, 1
          %s1367 = sphi %s1357, %s1357
          %s1368 = sphi %s1359, %s1359
        $region833: #{tpu_custom_call.1} parent=829 // loop_header_branch
          %1365 = sbr.rel (%p1363) target = $region837
        $region834: #{tpu_custom_call.1} parent=829 // loop_body
          %v1369 = vld [vmem:[%s1367] sm:%s1360]
          %1370 = vst [vmem:[%s1368] sm:%s1360] %v1369
        $region835: #{tpu_custom_call.1} parent=829 // loop_footer
          %s1366 = sadd.s32 1, %s1362
        $region836: #{tpu_custom_call.1} parent=829 // loop_footer_branch
          %1361 = sbr.rel target = $region832
        $region837: #{tpu_custom_call.1} parent=829 // loop_exit
          _
      $region830: #{tpu_custom_call.1} parent=814 // pred_fallthru
        _
    $region815: #{tpu_custom_call.1} parent=1 // pred_fallthru
      _
    // Predicated region
    $region816: #{tpu_custom_call.1} parent=1 // pred_check
      %p1336 = pneg %p1332
    $region817: #{tpu_custom_call.1} parent=1 // pred_check_branch
      %1338 = sbr.rel (%p1336) target = $region819
    $region818: #{tpu_custom_call.1} parent=1 // pred_region
      %s1339 = sshllo.u32 0, 1
      loop: start=0, step=1, limit=1
      $region820: #{tpu_custom_call.1} parent=818 // loop_pre_header
        _
      $region821: #{tpu_custom_call.1} parent=818 // loop_header
        %s1341 = sphi 0, %s1345
        %p1342 = scmp.ge.s32.totalorder %s1341, 1
        %s1346 = sphi %s1328, %s1328
        %s1347 = sphi %s1329, %s1329
      $region822: #{tpu_custom_call.1} parent=818 // loop_header_branch
        %1344 = sbr.rel (%p1342) target = $region826
      $region823: #{tpu_custom_call.1} parent=818 // loop_body
        %v1348 = vld [vmem:[%s1346] sm:%s1339]
        %1349 = vst [vmem:[%s1347] sm:%s1339] %v1348
      $region824: #{tpu_custom_call.1} parent=818 // loop_footer
        %s1345 = sadd.s32 1, %s1341
      $region825: #{tpu_custom_call.1} parent=818 // loop_footer_branch
        %1340 = sbr.rel target = $region821
      $region826: #{tpu_custom_call.1} parent=818 // loop_exit
        _
    $region819: #{tpu_custom_call.1} parent=1 // pred_fallthru
      _
    // Predicated region
    $region838: #{tpu_custom_call.1} parent=1 // pred_check
      _
    $region839: #{tpu_custom_call.1} parent=1 // pred_check_branch
      %1373 = sbr.rel (0) target = $region841
    $region840: #{tpu_custom_call.1} parent=1 // pred_region
      %1374 = vsyncadd %s1330, 16
    $region841: #{tpu_custom_call.1} parent=1 // pred_fallthru
      _
    %s1375 = scalar_lea.vmem %s6, %s52
    %s1376 = scalar_lea.vmem %s11, 4
    %s1377 = scalar_lea.sflag [#allocation2], 28
    %p1379 = scmp.lt.u32.totalorder 1, 8
    %p1380 = pneg %p1379
    // Predicated region
    $region842: #{tpu_custom_call.1} parent=1 // pred_check
      _
    $region843: #{tpu_custom_call.1} parent=1 // pred_check_branch
      %1382 = sbr.rel (%p1379) target = $region845
    $region844: #{tpu_custom_call.1} parent=1 // pred_region
      %s1397 = sand.u32 1, 7
      %p1398 = scmp.eq.s32.totalorder %s1397, 0
      %p1399 = pneg %p1398
      // Predicated region
      $region857: #{tpu_custom_call.1} parent=844 // pred_check
        _
      $region858: #{tpu_custom_call.1} parent=844 // pred_check_branch
        %1401 = sbr.rel (%p1398) target = $region860
      $region859: #{tpu_custom_call.1} parent=844 // pred_region
        %s1402 = sand.u32 1, 7
        %s1403 = ssub.s32 1, %s1402
        %s1404 = scalar_lea.vmem %s1375, %s1403
        %s1405 = ssub.s32 1, %s1402
        %s1406 = scalar_lea.vmem %s1376, %s1405
        %s1407 = sshllo.u32 0, %s1402
        loop: start=0, step=1, limit=1
        $region861: #{tpu_custom_call.1} parent=859 // loop_pre_header
          _
        $region862: #{tpu_custom_call.1} parent=859 // loop_header
          %s1409 = sphi 0, %s1413
          %p1410 = scmp.ge.s32.totalorder %s1409, 1
          %s1414 = sphi %s1404, %s1404
          %s1415 = sphi %s1406, %s1406
        $region863: #{tpu_custom_call.1} parent=859 // loop_header_branch
          %1412 = sbr.rel (%p1410) target = $region867
        $region864: #{tpu_custom_call.1} parent=859 // loop_body
          %v1416 = vld [vmem:[%s1414] sm:%s1407]
          %1417 = vst [vmem:[%s1415] sm:%s1407] %v1416
        $region865: #{tpu_custom_call.1} parent=859 // loop_footer
          %s1413 = sadd.s32 1, %s1409
        $region866: #{tpu_custom_call.1} parent=859 // loop_footer_branch
          %1408 = sbr.rel target = $region862
        $region867: #{tpu_custom_call.1} parent=859 // loop_exit
          _
      $region860: #{tpu_custom_call.1} parent=844 // pred_fallthru
        _
    $region845: #{tpu_custom_call.1} parent=1 // pred_fallthru
      _
    // Predicated region
    $region846: #{tpu_custom_call.1} parent=1 // pred_check
      %p1383 = pneg %p1379
    $region847: #{tpu_custom_call.1} parent=1 // pred_check_branch
      %1385 = sbr.rel (%p1383) target = $region849
    $region848: #{tpu_custom_call.1} parent=1 // pred_region
      %s1386 = sshllo.u32 0, 1
      loop: start=0, step=1, limit=1
      $region850: #{tpu_custom_call.1} parent=848 // loop_pre_header
        _
      $region851: #{tpu_custom_call.1} parent=848 // loop_header
        %s1388 = sphi 0, %s1392
        %p1389 = scmp.ge.s32.totalorder %s1388, 1
        %s1393 = sphi %s1375, %s1375
        %s1394 = sphi %s1376, %s1376
      $region852: #{tpu_custom_call.1} parent=848 // loop_header_branch
        %1391 = sbr.rel (%p1389) target = $region856
      $region853: #{tpu_custom_call.1} parent=848 // loop_body
        %v1395 = vld [vmem:[%s1393] sm:%s1386]
        %1396 = vst [vmem:[%s1394] sm:%s1386] %v1395
      $region854: #{tpu_custom_call.1} parent=848 // loop_footer
        %s1392 = sadd.s32 1, %s1388
      $region855: #{tpu_custom_call.1} parent=848 // loop_footer_branch
        %1387 = sbr.rel target = $region851
      $region856: #{tpu_custom_call.1} parent=848 // loop_exit
        _
    $region849: #{tpu_custom_call.1} parent=1 // pred_fallthru
      _
    // Predicated region
    $region868: #{tpu_custom_call.1} parent=1 // pred_check
      _
    $region869: #{tpu_custom_call.1} parent=1 // pred_check_branch
      %1420 = sbr.rel (0) target = $region871
    $region870: #{tpu_custom_call.1} parent=1 // pred_region
      %1421 = vsyncadd %s1377, 16
    $region871: #{tpu_custom_call.1} parent=1 // pred_fallthru
      _
    %s1422 = scalar_lea.vmem %s5, %s53
    %s1423 = scalar_lea.vmem %s12, 4
    %s1424 = scalar_lea.sflag [#allocation2], 29
    %p1426 = scmp.lt.u32.totalorder 1, 8
    %p1427 = pneg %p1426
    // Predicated region
    $region872: #{tpu_custom_call.1} parent=1 // pred_check
      _
    $region873: #{tpu_custom_call.1} parent=1 // pred_check_branch
      %1429 = sbr.rel (%p1426) target = $region875
    $region874: #{tpu_custom_call.1} parent=1 // pred_region
      %s1444 = sand.u32 1, 7
      %p1445 = scmp.eq.s32.totalorder %s1444, 0
      %p1446 = pneg %p1445
      // Predicated region
      $region887: #{tpu_custom_call.1} parent=874 // pred_check
        _
      $region888: #{tpu_custom_call.1} parent=874 // pred_check_branch
        %1448 = sbr.rel (%p1445) target = $region890
      $region889: #{tpu_custom_call.1} parent=874 // pred_region
        %s1449 = sand.u32 1, 7
        %s1450 = ssub.s32 1, %s1449
        %s1451 = scalar_lea.vmem %s1422, %s1450
        %s1452 = ssub.s32 1, %s1449
        %s1453 = scalar_lea.vmem %s1423, %s1452
        %s1454 = sshllo.u32 0, %s1449
        loop: start=0, step=1, limit=1
        $region891: #{tpu_custom_call.1} parent=889 // loop_pre_header
          _
        $region892: #{tpu_custom_call.1} parent=889 // loop_header
          %s1456 = sphi 0, %s1460
          %p1457 = scmp.ge.s32.totalorder %s1456, 1
          %s1461 = sphi %s1451, %s1451
          %s1462 = sphi %s1453, %s1453
        $region893: #{tpu_custom_call.1} parent=889 // loop_header_branch
          %1459 = sbr.rel (%p1457) target = $region897
        $region894: #{tpu_custom_call.1} parent=889 // loop_body
          %v1463 = vld [vmem:[%s1461] sm:%s1454]
          %1464 = vst [vmem:[%s1462] sm:%s1454] %v1463
        $region895: #{tpu_custom_call.1} parent=889 // loop_footer
          %s1460 = sadd.s32 1, %s1456
        $region896: #{tpu_custom_call.1} parent=889 // loop_footer_branch
          %1455 = sbr.rel target = $region892
        $region897: #{tpu_custom_call.1} parent=889 // loop_exit
          _
      $region890: #{tpu_custom_call.1} parent=874 // pred_fallthru
        _
    $region875: #{tpu_custom_call.1} parent=1 // pred_fallthru
      _
    // Predicated region
    $region876: #{tpu_custom_call.1} parent=1 // pred_check
      %p1430 = pneg %p1426
    $region877: #{tpu_custom_call.1} parent=1 // pred_check_branch
      %1432 = sbr.rel (%p1430) target = $region879
    $region878: #{tpu_custom_call.1} parent=1 // pred_region
      %s1433 = sshllo.u32 0, 1
      loop: start=0, step=1, limit=1
      $region880: #{tpu_custom_call.1} parent=878 // loop_pre_header
        _
      $region881: #{tpu_custom_call.1} parent=878 // loop_header
        %s1435 = sphi 0, %s1439
        %p1436 = scmp.ge.s32.totalorder %s1435, 1
        %s1440 = sphi %s1422, %s1422
        %s1441 = sphi %s1423, %s1423
      $region882: #{tpu_custom_call.1} parent=878 // loop_header_branch
        %1438 = sbr.rel (%p1436) target = $region886
      $region883: #{tpu_custom_call.1} parent=878 // loop_body
        %v1442 = vld [vmem:[%s1440] sm:%s1433]
        %1443 = vst [vmem:[%s1441] sm:%s1433] %v1442
      $region884: #{tpu_custom_call.1} parent=878 // loop_footer
        %s1439 = sadd.s32 1, %s1435
      $region885: #{tpu_custom_call.1} parent=878 // loop_footer_branch
        %1434 = sbr.rel target = $region881
      $region886: #{tpu_custom_call.1} parent=878 // loop_exit
        _
    $region879: #{tpu_custom_call.1} parent=1 // pred_fallthru
      _
    // Predicated region
    $region898: #{tpu_custom_call.1} parent=1 // pred_check
      _
    $region899: #{tpu_custom_call.1} parent=1 // pred_check_branch
      %1467 = sbr.rel (0) target = $region901
    $region900: #{tpu_custom_call.1} parent=1 // pred_region
      %1468 = vsyncadd %s1424, 16
    $region901: #{tpu_custom_call.1} parent=1 // pred_fallthru
      _
    %s1469 = scalar_lea.vmem %s3, %s55
    %s1470 = scalar_lea.vmem [#allocation7], 5
    %s1471 = scalar_lea.sflag [#allocation2], 30
    %p1473 = scmp.lt.u32.totalorder 1, 8
    %p1474 = pneg %p1473
    // Predicated region
    $region902: #{tpu_custom_call.1} parent=1 // pred_check
      _
    $region903: #{tpu_custom_call.1} parent=1 // pred_check_branch
      %1476 = sbr.rel (%p1473) target = $region905
    $region904: #{tpu_custom_call.1} parent=1 // pred_region
      %s1491 = sand.u32 1, 7
      %p1492 = scmp.eq.s32.totalorder %s1491, 0
      %p1493 = pneg %p1492
      // Predicated region
      $region917: #{tpu_custom_call.1} parent=904 // pred_check
        _
      $region918: #{tpu_custom_call.1} parent=904 // pred_check_branch
        %1495 = sbr.rel (%p1492) target = $region920
      $region919: #{tpu_custom_call.1} parent=904 // pred_region
        %s1496 = sand.u32 1, 7
        %s1497 = ssub.s32 1, %s1496
        %s1498 = scalar_lea.vmem %s1469, %s1497
        %s1499 = ssub.s32 1, %s1496
        %s1500 = scalar_lea.vmem %s1470, %s1499 [#allocation7]
        %s1501 = sshllo.u32 0, %s1496
        loop: start=0, step=1, limit=1
        $region921: #{tpu_custom_call.1} parent=919 // loop_pre_header
          _
        $region922: #{tpu_custom_call.1} parent=919 // loop_header
          %s1503 = sphi 0, %s1507
          %p1504 = scmp.ge.s32.totalorder %s1503, 1
          %s1508 = sphi %s1498, %s1498
          %s1509 = sphi %s1500, %s1500
        $region923: #{tpu_custom_call.1} parent=919 // loop_header_branch
          %1506 = sbr.rel (%p1504) target = $region927
        $region924: #{tpu_custom_call.1} parent=919 // loop_body
          %v1510 = vld [vmem:[%s1508] sm:%s1501]
          %1511 = vst [vmem:[%s1509] sm:%s1501] %v1510
        $region925: #{tpu_custom_call.1} parent=919 // loop_footer
          %s1507 = sadd.s32 1, %s1503
        $region926: #{tpu_custom_call.1} parent=919 // loop_footer_branch
          %1502 = sbr.rel target = $region922
        $region927: #{tpu_custom_call.1} parent=919 // loop_exit
          _
      $region920: #{tpu_custom_call.1} parent=904 // pred_fallthru
        _
    $region905: #{tpu_custom_call.1} parent=1 // pred_fallthru
      _
    // Predicated region
    $region906: #{tpu_custom_call.1} parent=1 // pred_check
      %p1477 = pneg %p1473
    $region907: #{tpu_custom_call.1} parent=1 // pred_check_branch
      %1479 = sbr.rel (%p1477) target = $region909
    $region908: #{tpu_custom_call.1} parent=1 // pred_region
      %s1480 = sshllo.u32 0, 1
      loop: start=0, step=1, limit=1
      $region910: #{tpu_custom_call.1} parent=908 // loop_pre_header
        _
      $region911: #{tpu_custom_call.1} parent=908 // loop_header
        %s1482 = sphi 0, %s1486
        %p1483 = scmp.ge.s32.totalorder %s1482, 1
        %s1487 = sphi %s1469, %s1469
        %s1488 = sphi %s1470, %s1470
      $region912: #{tpu_custom_call.1} parent=908 // loop_header_branch
        %1485 = sbr.rel (%p1483) target = $region916
      $region913: #{tpu_custom_call.1} parent=908 // loop_body
        %v1489 = vld [vmem:[%s1487] sm:%s1480]
        %1490 = vst [vmem:[%s1488] sm:%s1480] %v1489
      $region914: #{tpu_custom_call.1} parent=908 // loop_footer
        %s1486 = sadd.s32 1, %s1482
      $region915: #{tpu_custom_call.1} parent=908 // loop_footer_branch
        %1481 = sbr.rel target = $region911
      $region916: #{tpu_custom_call.1} parent=908 // loop_exit
        _
    $region909: #{tpu_custom_call.1} parent=1 // pred_fallthru
      _
    // Predicated region
    $region928: #{tpu_custom_call.1} parent=1 // pred_check
      _
    $region929: #{tpu_custom_call.1} parent=1 // pred_check_branch
      %1514 = sbr.rel (0) target = $region931
    $region930: #{tpu_custom_call.1} parent=1 // pred_region
      %1515 = vsyncadd %s1471, 16
    $region931: #{tpu_custom_call.1} parent=1 // pred_fallthru
      _
    %s1516 = scalar_lea.vmem %s4, %s56
    %s1517 = scalar_lea.vmem [#allocation9], 5
    %s1518 = scalar_lea.sflag [#allocation2], 31
    %p1520 = scmp.lt.u32.totalorder 1, 8
    %p1521 = pneg %p1520
    // Predicated region
    $region932: #{tpu_custom_call.1} parent=1 // pred_check
      _
    $region933: #{tpu_custom_call.1} parent=1 // pred_check_branch
      %1523 = sbr.rel (%p1520) target = $region935
    $region934: #{tpu_custom_call.1} parent=1 // pred_region
      %s1538 = sand.u32 1, 7
      %p1539 = scmp.eq.s32.totalorder %s1538, 0
      %p1540 = pneg %p1539
      // Predicated region
      $region947: #{tpu_custom_call.1} parent=934 // pred_check
        _
      $region948: #{tpu_custom_call.1} parent=934 // pred_check_branch
        %1542 = sbr.rel (%p1539) target = $region950
      $region949: #{tpu_custom_call.1} parent=934 // pred_region
        %s1543 = sand.u32 1, 7
        %s1544 = ssub.s32 1, %s1543
        %s1545 = scalar_lea.vmem %s1516, %s1544
        %s1546 = ssub.s32 1, %s1543
        %s1547 = scalar_lea.vmem %s1517, %s1546 [#allocation9]
        %s1548 = sshllo.u32 0, %s1543
        loop: start=0, step=1, limit=1
        $region951: #{tpu_custom_call.1} parent=949 // loop_pre_header
          _
        $region952: #{tpu_custom_call.1} parent=949 // loop_header
          %s1550 = sphi 0, %s1554
          %p1551 = scmp.ge.s32.totalorder %s1550, 1
          %s1555 = sphi %s1545, %s1545
          %s1556 = sphi %s1547, %s1547
        $region953: #{tpu_custom_call.1} parent=949 // loop_header_branch
          %1553 = sbr.rel (%p1551) target = $region957
        $region954: #{tpu_custom_call.1} parent=949 // loop_body
          %v1557 = vld [vmem:[%s1555] sm:%s1548]
          %1558 = vst [vmem:[%s1556] sm:%s1548] %v1557
        $region955: #{tpu_custom_call.1} parent=949 // loop_footer
          %s1554 = sadd.s32 1, %s1550
        $region956: #{tpu_custom_call.1} parent=949 // loop_footer_branch
          %1549 = sbr.rel target = $region952
        $region957: #{tpu_custom_call.1} parent=949 // loop_exit
          _
      $region950: #{tpu_custom_call.1} parent=934 // pred_fallthru
        _
    $region935: #{tpu_custom_call.1} parent=1 // pred_fallthru
      _
    // Predicated region
    $region936: #{tpu_custom_call.1} parent=1 // pred_check
      %p1524 = pneg %p1520
    $region937: #{tpu_custom_call.1} parent=1 // pred_check_branch
      %1526 = sbr.rel (%p1524) target = $region939
    $region938: #{tpu_custom_call.1} parent=1 // pred_region
      %s1527 = sshllo.u32 0, 1
      loop: start=0, step=1, limit=1
      $region940: #{tpu_custom_call.1} parent=938 // loop_pre_header
        _
      $region941: #{tpu_custom_call.1} parent=938 // loop_header
        %s1529 = sphi 0, %s1533
        %p1530 = scmp.ge.s32.totalorder %s1529, 1
        %s1534 = sphi %s1516, %s1516
        %s1535 = sphi %s1517, %s1517
      $region942: #{tpu_custom_call.1} parent=938 // loop_header_branch
        %1532 = sbr.rel (%p1530) target = $region946
      $region943: #{tpu_custom_call.1} parent=938 // loop_body
        %v1536 = vld [vmem:[%s1534] sm:%s1527]
        %1537 = vst [vmem:[%s1535] sm:%s1527] %v1536
      $region944: #{tpu_custom_call.1} parent=938 // loop_footer
        %s1533 = sadd.s32 1, %s1529
      $region945: #{tpu_custom_call.1} parent=938 // loop_footer_branch
        %1528 = sbr.rel target = $region941
      $region946: #{tpu_custom_call.1} parent=938 // loop_exit
        _
    $region939: #{tpu_custom_call.1} parent=1 // pred_fallthru
      _
    // Predicated region
    $region958: #{tpu_custom_call.1} parent=1 // pred_check
      _
    $region959: #{tpu_custom_call.1} parent=1 // pred_check_branch
      %1561 = sbr.rel (0) target = $region961
    $region960: #{tpu_custom_call.1} parent=1 // pred_region
      %1562 = vsyncadd %s1518, 16
    $region961: #{tpu_custom_call.1} parent=1 // pred_fallthru
      _
    %s1563 = scalar_lea.vmem %s3, %s57
    %s1564 = scalar_lea.vmem [#allocation11], 5
    %s1565 = scalar_lea.sflag [#allocation2], 32
    %p1567 = scmp.lt.u32.totalorder 1, 8
    %p1568 = pneg %p1567
    // Predicated region
    $region962: #{tpu_custom_call.1} parent=1 // pred_check
      _
    $region963: #{tpu_custom_call.1} parent=1 // pred_check_branch
      %1570 = sbr.rel (%p1567) target = $region965
    $region964: #{tpu_custom_call.1} parent=1 // pred_region
      %s1585 = sand.u32 1, 7
      %p1586 = scmp.eq.s32.totalorder %s1585, 0
      %p1587 = pneg %p1586
      // Predicated region
      $region977: #{tpu_custom_call.1} parent=964 // pred_check
        _
      $region978: #{tpu_custom_call.1} parent=964 // pred_check_branch
        %1589 = sbr.rel (%p1586) target = $region980
      $region979: #{tpu_custom_call.1} parent=964 // pred_region
        %s1590 = sand.u32 1, 7
        %s1591 = ssub.s32 1, %s1590
        %s1592 = scalar_lea.vmem %s1563, %s1591
        %s1593 = ssub.s32 1, %s1590
        %s1594 = scalar_lea.vmem %s1564, %s1593 [#allocation11]
        %s1595 = sshllo.u32 0, %s1590
        loop: start=0, step=1, limit=1
        $region981: #{tpu_custom_call.1} parent=979 // loop_pre_header
          _
        $region982: #{tpu_custom_call.1} parent=979 // loop_header
          %s1597 = sphi 0, %s1601
          %p1598 = scmp.ge.s32.totalorder %s1597, 1
          %s1602 = sphi %s1592, %s1592
          %s1603 = sphi %s1594, %s1594
        $region983: #{tpu_custom_call.1} parent=979 // loop_header_branch
          %1600 = sbr.rel (%p1598) target = $region987
        $region984: #{tpu_custom_call.1} parent=979 // loop_body
          %v1604 = vld [vmem:[%s1602] sm:%s1595]
          %1605 = vst [vmem:[%s1603] sm:%s1595] %v1604
        $region985: #{tpu_custom_call.1} parent=979 // loop_footer
          %s1601 = sadd.s32 1, %s1597
        $region986: #{tpu_custom_call.1} parent=979 // loop_footer_branch
          %1596 = sbr.rel target = $region982
        $region987: #{tpu_custom_call.1} parent=979 // loop_exit
          _
      $region980: #{tpu_custom_call.1} parent=964 // pred_fallthru
        _
    $region965: #{tpu_custom_call.1} parent=1 // pred_fallthru
      _
    // Predicated region
    $region966: #{tpu_custom_call.1} parent=1 // pred_check
      %p1571 = pneg %p1567
    $region967: #{tpu_custom_call.1} parent=1 // pred_check_branch
      %1573 = sbr.rel (%p1571) target = $region969
    $region968: #{tpu_custom_call.1} parent=1 // pred_region
      %s1574 = sshllo.u32 0, 1
      loop: start=0, step=1, limit=1
      $region970: #{tpu_custom_call.1} parent=968 // loop_pre_header
        _
      $region971: #{tpu_custom_call.1} parent=968 // loop_header
        %s1576 = sphi 0, %s1580
        %p1577 = scmp.ge.s32.totalorder %s1576, 1
        %s1581 = sphi %s1563, %s1563
        %s1582 = sphi %s1564, %s1564
      $region972: #{tpu_custom_call.1} parent=968 // loop_header_branch
        %1579 = sbr.rel (%p1577) target = $region976
      $region973: #{tpu_custom_call.1} parent=968 // loop_body
        %v1583 = vld [vmem:[%s1581] sm:%s1574]
        %1584 = vst [vmem:[%s1582] sm:%s1574] %v1583
      $region974: #{tpu_custom_call.1} parent=968 // loop_footer
        %s1580 = sadd.s32 1, %s1576
      $region975: #{tpu_custom_call.1} parent=968 // loop_footer_branch
        %1575 = sbr.rel target = $region971
      $region976: #{tpu_custom_call.1} parent=968 // loop_exit
        _
    $region969: #{tpu_custom_call.1} parent=1 // pred_fallthru
      _
    // Predicated region
    $region988: #{tpu_custom_call.1} parent=1 // pred_check
      _
    $region989: #{tpu_custom_call.1} parent=1 // pred_check_branch
      %1608 = sbr.rel (0) target = $region991
    $region990: #{tpu_custom_call.1} parent=1 // pred_region
      %1609 = vsyncadd %s1565, 16
    $region991: #{tpu_custom_call.1} parent=1 // pred_fallthru
      _
    %s1610 = scalar_lea.vmem %s5, %s55
    %s1611 = scalar_lea.vmem %s10, 5
    %s1612 = scalar_lea.sflag [#allocation2], 33
    %p1614 = scmp.lt.u32.totalorder 1, 8
    %p1615 = pneg %p1614
    // Predicated region
    $region992: #{tpu_custom_call.1} parent=1 // pred_check
      _
    $region993: #{tpu_custom_call.1} parent=1 // pred_check_branch
      %1617 = sbr.rel (%p1614) target = $region995
    $region994: #{tpu_custom_call.1} parent=1 // pred_region
      %s1632 = sand.u32 1, 7
      %p1633 = scmp.eq.s32.totalorder %s1632, 0
      %p1634 = pneg %p1633
      // Predicated region
      $region1007: #{tpu_custom_call.1} parent=994 // pred_check
        _
      $region1008: #{tpu_custom_call.1} parent=994 // pred_check_branch
        %1636 = sbr.rel (%p1633) target = $region1010
      $region1009: #{tpu_custom_call.1} parent=994 // pred_region
        %s1637 = sand.u32 1, 7
        %s1638 = ssub.s32 1, %s1637
        %s1639 = scalar_lea.vmem %s1610, %s1638
        %s1640 = ssub.s32 1, %s1637
        %s1641 = scalar_lea.vmem %s1611, %s1640
        %s1642 = sshllo.u32 0, %s1637
        loop: start=0, step=1, limit=1
        $region1011: #{tpu_custom_call.1} parent=1009 // loop_pre_header
          _
        $region1012: #{tpu_custom_call.1} parent=1009 // loop_header
          %s1644 = sphi 0, %s1648
          %p1645 = scmp.ge.s32.totalorder %s1644, 1
          %s1649 = sphi %s1639, %s1639
          %s1650 = sphi %s1641, %s1641
        $region1013: #{tpu_custom_call.1} parent=1009 // loop_header_branch
          %1647 = sbr.rel (%p1645) target = $region1017
        $region1014: #{tpu_custom_call.1} parent=1009 // loop_body
          %v1651 = vld [vmem:[%s1649] sm:%s1642]
          %1652 = vst [vmem:[%s1650] sm:%s1642] %v1651
        $region1015: #{tpu_custom_call.1} parent=1009 // loop_footer
          %s1648 = sadd.s32 1, %s1644
        $region1016: #{tpu_custom_call.1} parent=1009 // loop_footer_branch
          %1643 = sbr.rel target = $region1012
        $region1017: #{tpu_custom_call.1} parent=1009 // loop_exit
          _
      $region1010: #{tpu_custom_call.1} parent=994 // pred_fallthru
        _
    $region995: #{tpu_custom_call.1} parent=1 // pred_fallthru
      _
    // Predicated region
    $region996: #{tpu_custom_call.1} parent=1 // pred_check
      %p1618 = pneg %p1614
    $region997: #{tpu_custom_call.1} parent=1 // pred_check_branch
      %1620 = sbr.rel (%p1618) target = $region999
    $region998: #{tpu_custom_call.1} parent=1 // pred_region
      %s1621 = sshllo.u32 0, 1
      loop: start=0, step=1, limit=1
      $region1000: #{tpu_custom_call.1} parent=998 // loop_pre_header
        _
      $region1001: #{tpu_custom_call.1} parent=998 // loop_header
        %s1623 = sphi 0, %s1627
        %p1624 = scmp.ge.s32.totalorder %s1623, 1
        %s1628 = sphi %s1610, %s1610
        %s1629 = sphi %s1611, %s1611
      $region1002: #{tpu_custom_call.1} parent=998 // loop_header_branch
        %1626 = sbr.rel (%p1624) target = $region1006
      $region1003: #{tpu_custom_call.1} parent=998 // loop_body
        %v1630 = vld [vmem:[%s1628] sm:%s1621]
        %1631 = vst [vmem:[%s1629] sm:%s1621] %v1630
      $region1004: #{tpu_custom_call.1} parent=998 // loop_footer
        %s1627 = sadd.s32 1, %s1623
      $region1005: #{tpu_custom_call.1} parent=998 // loop_footer_branch
        %1622 = sbr.rel target = $region1001
      $region1006: #{tpu_custom_call.1} parent=998 // loop_exit
        _
    $region999: #{tpu_custom_call.1} parent=1 // pred_fallthru
      _
    // Predicated region
    $region1018: #{tpu_custom_call.1} parent=1 // pred_check
      _
    $region1019: #{tpu_custom_call.1} parent=1 // pred_check_branch
      %1655 = sbr.rel (0) target = $region1021
    $region1020: #{tpu_custom_call.1} parent=1 // pred_region
      %1656 = vsyncadd %s1612, 16
    $region1021: #{tpu_custom_call.1} parent=1 // pred_fallthru
      _
    %s1657 = scalar_lea.vmem %s6, %s56
    %s1658 = scalar_lea.vmem %s11, 5
    %s1659 = scalar_lea.sflag [#allocation2], 34
    %p1661 = scmp.lt.u32.totalorder 1, 8
    %p1662 = pneg %p1661
    // Predicated region
    $region1022: #{tpu_custom_call.1} parent=1 // pred_check
      _
    $region1023: #{tpu_custom_call.1} parent=1 // pred_check_branch
      %1664 = sbr.rel (%p1661) target = $region1025
    $region1024: #{tpu_custom_call.1} parent=1 // pred_region
      %s1679 = sand.u32 1, 7
      %p1680 = scmp.eq.s32.totalorder %s1679, 0
      %p1681 = pneg %p1680
      // Predicated region
      $region1037: #{tpu_custom_call.1} parent=1024 // pred_check
        _
      $region1038: #{tpu_custom_call.1} parent=1024 // pred_check_branch
        %1683 = sbr.rel (%p1680) target = $region1040
      $region1039: #{tpu_custom_call.1} parent=1024 // pred_region
        %s1684 = sand.u32 1, 7
        %s1685 = ssub.s32 1, %s1684
        %s1686 = scalar_lea.vmem %s1657, %s1685
        %s1687 = ssub.s32 1, %s1684
        %s1688 = scalar_lea.vmem %s1658, %s1687
        %s1689 = sshllo.u32 0, %s1684
        loop: start=0, step=1, limit=1
        $region1041: #{tpu_custom_call.1} parent=1039 // loop_pre_header
          _
        $region1042: #{tpu_custom_call.1} parent=1039 // loop_header
          %s1691 = sphi 0, %s1695
          %p1692 = scmp.ge.s32.totalorder %s1691, 1
          %s1696 = sphi %s1686, %s1686
          %s1697 = sphi %s1688, %s1688
        $region1043: #{tpu_custom_call.1} parent=1039 // loop_header_branch
          %1694 = sbr.rel (%p1692) target = $region1047
        $region1044: #{tpu_custom_call.1} parent=1039 // loop_body
          %v1698 = vld [vmem:[%s1696] sm:%s1689]
          %1699 = vst [vmem:[%s1697] sm:%s1689] %v1698
        $region1045: #{tpu_custom_call.1} parent=1039 // loop_footer
          %s1695 = sadd.s32 1, %s1691
        $region1046: #{tpu_custom_call.1} parent=1039 // loop_footer_branch
          %1690 = sbr.rel target = $region1042
        $region1047: #{tpu_custom_call.1} parent=1039 // loop_exit
          _
      $region1040: #{tpu_custom_call.1} parent=1024 // pred_fallthru
        _
    $region1025: #{tpu_custom_call.1} parent=1 // pred_fallthru
      _
    // Predicated region
    $region1026: #{tpu_custom_call.1} parent=1 // pred_check
      %p1665 = pneg %p1661
    $region1027: #{tpu_custom_call.1} parent=1 // pred_check_branch
      %1667 = sbr.rel (%p1665) target = $region1029
    $region1028: #{tpu_custom_call.1} parent=1 // pred_region
      %s1668 = sshllo.u32 0, 1
      loop: start=0, step=1, limit=1
      $region1030: #{tpu_custom_call.1} parent=1028 // loop_pre_header
        _
      $region1031: #{tpu_custom_call.1} parent=1028 // loop_header
        %s1670 = sphi 0, %s1674
        %p1671 = scmp.ge.s32.totalorder %s1670, 1
        %s1675 = sphi %s1657, %s1657
        %s1676 = sphi %s1658, %s1658
      $region1032: #{tpu_custom_call.1} parent=1028 // loop_header_branch
        %1673 = sbr.rel (%p1671) target = $region1036
      $region1033: #{tpu_custom_call.1} parent=1028 // loop_body
        %v1677 = vld [vmem:[%s1675] sm:%s1668]
        %1678 = vst [vmem:[%s1676] sm:%s1668] %v1677
      $region1034: #{tpu_custom_call.1} parent=1028 // loop_footer
        %s1674 = sadd.s32 1, %s1670
      $region1035: #{tpu_custom_call.1} parent=1028 // loop_footer_branch
        %1669 = sbr.rel target = $region1031
      $region1036: #{tpu_custom_call.1} parent=1028 // loop_exit
        _
    $region1029: #{tpu_custom_call.1} parent=1 // pred_fallthru
      _
    // Predicated region
    $region1048: #{tpu_custom_call.1} parent=1 // pred_check
      _
    $region1049: #{tpu_custom_call.1} parent=1 // pred_check_branch
      %1702 = sbr.rel (0) target = $region1051
    $region1050: #{tpu_custom_call.1} parent=1 // pred_region
      %1703 = vsyncadd %s1659, 16
    $region1051: #{tpu_custom_call.1} parent=1 // pred_fallthru
      _
    %s1704 = scalar_lea.vmem %s5, %s57
    %s1705 = scalar_lea.vmem %s12, 5
    %s1706 = scalar_lea.sflag [#allocation2], 35
    %p1708 = scmp.lt.u32.totalorder 1, 8
    %p1709 = pneg %p1708
    // Predicated region
    $region1052: #{tpu_custom_call.1} parent=1 // pred_check
      _
    $region1053: #{tpu_custom_call.1} parent=1 // pred_check_branch
      %1711 = sbr.rel (%p1708) target = $region1055
    $region1054: #{tpu_custom_call.1} parent=1 // pred_region
      %s1726 = sand.u32 1, 7
      %p1727 = scmp.eq.s32.totalorder %s1726, 0
      %p1728 = pneg %p1727
      // Predicated region
      $region1067: #{tpu_custom_call.1} parent=1054 // pred_check
        _
      $region1068: #{tpu_custom_call.1} parent=1054 // pred_check_branch
        %1730 = sbr.rel (%p1727) target = $region1070
      $region1069: #{tpu_custom_call.1} parent=1054 // pred_region
        %s1731 = sand.u32 1, 7
        %s1732 = ssub.s32 1, %s1731
        %s1733 = scalar_lea.vmem %s1704, %s1732
        %s1734 = ssub.s32 1, %s1731
        %s1735 = scalar_lea.vmem %s1705, %s1734
        %s1736 = sshllo.u32 0, %s1731
        loop: start=0, step=1, limit=1
        $region1071: #{tpu_custom_call.1} parent=1069 // loop_pre_header
          _
        $region1072: #{tpu_custom_call.1} parent=1069 // loop_header
          %s1738 = sphi 0, %s1742
          %p1739 = scmp.ge.s32.totalorder %s1738, 1
          %s1743 = sphi %s1733, %s1733
          %s1744 = sphi %s1735, %s1735
        $region1073: #{tpu_custom_call.1} parent=1069 // loop_header_branch
          %1741 = sbr.rel (%p1739) target = $region1077
        $region1074: #{tpu_custom_call.1} parent=1069 // loop_body
          %v1745 = vld [vmem:[%s1743] sm:%s1736]
          %1746 = vst [vmem:[%s1744] sm:%s1736] %v1745
        $region1075: #{tpu_custom_call.1} parent=1069 // loop_footer
          %s1742 = sadd.s32 1, %s1738
        $region1076: #{tpu_custom_call.1} parent=1069 // loop_footer_branch
          %1737 = sbr.rel target = $region1072
        $region1077: #{tpu_custom_call.1} parent=1069 // loop_exit
          _
      $region1070: #{tpu_custom_call.1} parent=1054 // pred_fallthru
        _
    $region1055: #{tpu_custom_call.1} parent=1 // pred_fallthru
      _
    // Predicated region
    $region1056: #{tpu_custom_call.1} parent=1 // pred_check
      %p1712 = pneg %p1708
    $region1057: #{tpu_custom_call.1} parent=1 // pred_check_branch
      %1714 = sbr.rel (%p1712) target = $region1059
    $region1058: #{tpu_custom_call.1} parent=1 // pred_region
      %s1715 = sshllo.u32 0, 1
      loop: start=0, step=1, limit=1
      $region1060: #{tpu_custom_call.1} parent=1058 // loop_pre_header
        _
      $region1061: #{tpu_custom_call.1} parent=1058 // loop_header
        %s1717 = sphi 0, %s1721
        %p1718 = scmp.ge.s32.totalorder %s1717, 1
        %s1722 = sphi %s1704, %s1704
        %s1723 = sphi %s1705, %s1705
      $region1062: #{tpu_custom_call.1} parent=1058 // loop_header_branch
        %1720 = sbr.rel (%p1718) target = $region1066
      $region1063: #{tpu_custom_call.1} parent=1058 // loop_body
        %v1724 = vld [vmem:[%s1722] sm:%s1715]
        %1725 = vst [vmem:[%s1723] sm:%s1715] %v1724
      $region1064: #{tpu_custom_call.1} parent=1058 // loop_footer
        %s1721 = sadd.s32 1, %s1717
      $region1065: #{tpu_custom_call.1} parent=1058 // loop_footer_branch
        %1716 = sbr.rel target = $region1061
      $region1066: #{tpu_custom_call.1} parent=1058 // loop_exit
        _
    $region1059: #{tpu_custom_call.1} parent=1 // pred_fallthru
      _
    // Predicated region
    $region1078: #{tpu_custom_call.1} parent=1 // pred_check
      _
    $region1079: #{tpu_custom_call.1} parent=1 // pred_check_branch
      %1749 = sbr.rel (0) target = $region1081
    $region1080: #{tpu_custom_call.1} parent=1 // pred_region
      %1750 = vsyncadd %s1706, 16
    $region1081: #{tpu_custom_call.1} parent=1 // pred_fallthru
      _
    %s1751 = scalar_lea.vmem %s3, %s59
    %s1752 = scalar_lea.vmem [#allocation7], 6
    %s1753 = scalar_lea.sflag [#allocation2], 36
    %p1755 = scmp.lt.u32.totalorder 1, 8
    %p1756 = pneg %p1755
    // Predicated region
    $region1082: #{tpu_custom_call.1} parent=1 // pred_check
      _
    $region1083: #{tpu_custom_call.1} parent=1 // pred_check_branch
      %1758 = sbr.rel (%p1755) target = $region1085
    $region1084: #{tpu_custom_call.1} parent=1 // pred_region
      %s1773 = sand.u32 1, 7
      %p1774 = scmp.eq.s32.totalorder %s1773, 0
      %p1775 = pneg %p1774
      // Predicated region
      $region1097: #{tpu_custom_call.1} parent=1084 // pred_check
        _
      $region1098: #{tpu_custom_call.1} parent=1084 // pred_check_branch
        %1777 = sbr.rel (%p1774) target = $region1100
      $region1099: #{tpu_custom_call.1} parent=1084 // pred_region
        %s1778 = sand.u32 1, 7
        %s1779 = ssub.s32 1, %s1778
        %s1780 = scalar_lea.vmem %s1751, %s1779
        %s1781 = ssub.s32 1, %s1778
        %s1782 = scalar_lea.vmem %s1752, %s1781 [#allocation7]
        %s1783 = sshllo.u32 0, %s1778
        loop: start=0, step=1, limit=1
        $region1101: #{tpu_custom_call.1} parent=1099 // loop_pre_header
          _
        $region1102: #{tpu_custom_call.1} parent=1099 // loop_header
          %s1785 = sphi 0, %s1789
          %p1786 = scmp.ge.s32.totalorder %s1785, 1
          %s1790 = sphi %s1780, %s1780
          %s1791 = sphi %s1782, %s1782
        $region1103: #{tpu_custom_call.1} parent=1099 // loop_header_branch
          %1788 = sbr.rel (%p1786) target = $region1107
        $region1104: #{tpu_custom_call.1} parent=1099 // loop_body
          %v1792 = vld [vmem:[%s1790] sm:%s1783]
          %1793 = vst [vmem:[%s1791] sm:%s1783] %v1792
        $region1105: #{tpu_custom_call.1} parent=1099 // loop_footer
          %s1789 = sadd.s32 1, %s1785
        $region1106: #{tpu_custom_call.1} parent=1099 // loop_footer_branch
          %1784 = sbr.rel target = $region1102
        $region1107: #{tpu_custom_call.1} parent=1099 // loop_exit
          _
      $region1100: #{tpu_custom_call.1} parent=1084 // pred_fallthru
        _
    $region1085: #{tpu_custom_call.1} parent=1 // pred_fallthru
      _
    // Predicated region
    $region1086: #{tpu_custom_call.1} parent=1 // pred_check
      %p1759 = pneg %p1755
    $region1087: #{tpu_custom_call.1} parent=1 // pred_check_branch
      %1761 = sbr.rel (%p1759) target = $region1089
    $region1088: #{tpu_custom_call.1} parent=1 // pred_region
      %s1762 = sshllo.u32 0, 1
      loop: start=0, step=1, limit=1
      $region1090: #{tpu_custom_call.1} parent=1088 // loop_pre_header
        _
      $region1091: #{tpu_custom_call.1} parent=1088 // loop_header
        %s1764 = sphi 0, %s1768
        %p1765 = scmp.ge.s32.totalorder %s1764, 1
        %s1769 = sphi %s1751, %s1751
        %s1770 = sphi %s1752, %s1752
      $region1092: #{tpu_custom_call.1} parent=1088 // loop_header_branch
        %1767 = sbr.rel (%p1765) target = $region1096
      $region1093: #{tpu_custom_call.1} parent=1088 // loop_body
        %v1771 = vld [vmem:[%s1769] sm:%s1762]
        %1772 = vst [vmem:[%s1770] sm:%s1762] %v1771
      $region1094: #{tpu_custom_call.1} parent=1088 // loop_footer
        %s1768 = sadd.s32 1, %s1764
      $region1095: #{tpu_custom_call.1} parent=1088 // loop_footer_branch
        %1763 = sbr.rel target = $region1091
      $region1096: #{tpu_custom_call.1} parent=1088 // loop_exit
        _
    $region1089: #{tpu_custom_call.1} parent=1 // pred_fallthru
      _
    // Predicated region
    $region1108: #{tpu_custom_call.1} parent=1 // pred_check
      _
    $region1109: #{tpu_custom_call.1} parent=1 // pred_check_branch
      %1796 = sbr.rel (0) target = $region1111
    $region1110: #{tpu_custom_call.1} parent=1 // pred_region
      %1797 = vsyncadd %s1753, 16
    $region1111: #{tpu_custom_call.1} parent=1 // pred_fallthru
      _
    %s1798 = scalar_lea.vmem %s4, %s60
    %s1799 = scalar_lea.vmem [#allocation9], 6
    %s1800 = scalar_lea.sflag [#allocation2], 37
    %p1802 = scmp.lt.u32.totalorder 1, 8
    %p1803 = pneg %p1802
    // Predicated region
    $region1112: #{tpu_custom_call.1} parent=1 // pred_check
      _
    $region1113: #{tpu_custom_call.1} parent=1 // pred_check_branch
      %1805 = sbr.rel (%p1802) target = $region1115
    $region1114: #{tpu_custom_call.1} parent=1 // pred_region
      %s1820 = sand.u32 1, 7
      %p1821 = scmp.eq.s32.totalorder %s1820, 0
      %p1822 = pneg %p1821
      // Predicated region
      $region1127: #{tpu_custom_call.1} parent=1114 // pred_check
        _
      $region1128: #{tpu_custom_call.1} parent=1114 // pred_check_branch
        %1824 = sbr.rel (%p1821) target = $region1130
      $region1129: #{tpu_custom_call.1} parent=1114 // pred_region
        %s1825 = sand.u32 1, 7
        %s1826 = ssub.s32 1, %s1825
        %s1827 = scalar_lea.vmem %s1798, %s1826
        %s1828 = ssub.s32 1, %s1825
        %s1829 = scalar_lea.vmem %s1799, %s1828 [#allocation9]
        %s1830 = sshllo.u32 0, %s1825
        loop: start=0, step=1, limit=1
        $region1131: #{tpu_custom_call.1} parent=1129 // loop_pre_header
          _
        $region1132: #{tpu_custom_call.1} parent=1129 // loop_header
          %s1832 = sphi 0, %s1836
          %p1833 = scmp.ge.s32.totalorder %s1832, 1
          %s1837 = sphi %s1827, %s1827
          %s1838 = sphi %s1829, %s1829
        $region1133: #{tpu_custom_call.1} parent=1129 // loop_header_branch
          %1835 = sbr.rel (%p1833) target = $region1137
        $region1134: #{tpu_custom_call.1} parent=1129 // loop_body
          %v1839 = vld [vmem:[%s1837] sm:%s1830]
          %1840 = vst [vmem:[%s1838] sm:%s1830] %v1839
        $region1135: #{tpu_custom_call.1} parent=1129 // loop_footer
          %s1836 = sadd.s32 1, %s1832
        $region1136: #{tpu_custom_call.1} parent=1129 // loop_footer_branch
          %1831 = sbr.rel target = $region1132
        $region1137: #{tpu_custom_call.1} parent=1129 // loop_exit
          _
      $region1130: #{tpu_custom_call.1} parent=1114 // pred_fallthru
        _
    $region1115: #{tpu_custom_call.1} parent=1 // pred_fallthru
      _
    // Predicated region
    $region1116: #{tpu_custom_call.1} parent=1 // pred_check
      %p1806 = pneg %p1802
    $region1117: #{tpu_custom_call.1} parent=1 // pred_check_branch
      %1808 = sbr.rel (%p1806) target = $region1119
    $region1118: #{tpu_custom_call.1} parent=1 // pred_region
      %s1809 = sshllo.u32 0, 1
      loop: start=0, step=1, limit=1
      $region1120: #{tpu_custom_call.1} parent=1118 // loop_pre_header
        _
      $region1121: #{tpu_custom_call.1} parent=1118 // loop_header
        %s1811 = sphi 0, %s1815
        %p1812 = scmp.ge.s32.totalorder %s1811, 1
        %s1816 = sphi %s1798, %s1798
        %s1817 = sphi %s1799, %s1799
      $region1122: #{tpu_custom_call.1} parent=1118 // loop_header_branch
        %1814 = sbr.rel (%p1812) target = $region1126
      $region1123: #{tpu_custom_call.1} parent=1118 // loop_body
        %v1818 = vld [vmem:[%s1816] sm:%s1809]
        %1819 = vst [vmem:[%s1817] sm:%s1809] %v1818
      $region1124: #{tpu_custom_call.1} parent=1118 // loop_footer
        %s1815 = sadd.s32 1, %s1811
      $region1125: #{tpu_custom_call.1} parent=1118 // loop_footer_branch
        %1810 = sbr.rel target = $region1121
      $region1126: #{tpu_custom_call.1} parent=1118 // loop_exit
        _
    $region1119: #{tpu_custom_call.1} parent=1 // pred_fallthru
      _
    // Predicated region
    $region1138: #{tpu_custom_call.1} parent=1 // pred_check
      _
    $region1139: #{tpu_custom_call.1} parent=1 // pred_check_branch
      %1843 = sbr.rel (0) target = $region1141
    $region1140: #{tpu_custom_call.1} parent=1 // pred_region
      %1844 = vsyncadd %s1800, 16
    $region1141: #{tpu_custom_call.1} parent=1 // pred_fallthru
      _
    %s1845 = scalar_lea.vmem %s3, %s61
    %s1846 = scalar_lea.vmem [#allocation11], 6
    %s1847 = scalar_lea.sflag [#allocation2], 38
    %p1849 = scmp.lt.u32.totalorder 1, 8
    %p1850 = pneg %p1849
    // Predicated region
    $region1142: #{tpu_custom_call.1} parent=1 // pred_check
      _
    $region1143: #{tpu_custom_call.1} parent=1 // pred_check_branch
      %1852 = sbr.rel (%p1849) target = $region1145
    $region1144: #{tpu_custom_call.1} parent=1 // pred_region
      %s1867 = sand.u32 1, 7
      %p1868 = scmp.eq.s32.totalorder %s1867, 0
      %p1869 = pneg %p1868
      // Predicated region
      $region1157: #{tpu_custom_call.1} parent=1144 // pred_check
        _
      $region1158: #{tpu_custom_call.1} parent=1144 // pred_check_branch
        %1871 = sbr.rel (%p1868) target = $region1160
      $region1159: #{tpu_custom_call.1} parent=1144 // pred_region
        %s1872 = sand.u32 1, 7
        %s1873 = ssub.s32 1, %s1872
        %s1874 = scalar_lea.vmem %s1845, %s1873
        %s1875 = ssub.s32 1, %s1872
        %s1876 = scalar_lea.vmem %s1846, %s1875 [#allocation11]
        %s1877 = sshllo.u32 0, %s1872
        loop: start=0, step=1, limit=1
        $region1161: #{tpu_custom_call.1} parent=1159 // loop_pre_header
          _
        $region1162: #{tpu_custom_call.1} parent=1159 // loop_header
          %s1879 = sphi 0, %s1883
          %p1880 = scmp.ge.s32.totalorder %s1879, 1
          %s1884 = sphi %s1874, %s1874
          %s1885 = sphi %s1876, %s1876
        $region1163: #{tpu_custom_call.1} parent=1159 // loop_header_branch
          %1882 = sbr.rel (%p1880) target = $region1167
        $region1164: #{tpu_custom_call.1} parent=1159 // loop_body
          %v1886 = vld [vmem:[%s1884] sm:%s1877]
          %1887 = vst [vmem:[%s1885] sm:%s1877] %v1886
        $region1165: #{tpu_custom_call.1} parent=1159 // loop_footer
          %s1883 = sadd.s32 1, %s1879
        $region1166: #{tpu_custom_call.1} parent=1159 // loop_footer_branch
          %1878 = sbr.rel target = $region1162
        $region1167: #{tpu_custom_call.1} parent=1159 // loop_exit
          _
      $region1160: #{tpu_custom_call.1} parent=1144 // pred_fallthru
        _
    $region1145: #{tpu_custom_call.1} parent=1 // pred_fallthru
      _
    // Predicated region
    $region1146: #{tpu_custom_call.1} parent=1 // pred_check
      %p1853 = pneg %p1849
    $region1147: #{tpu_custom_call.1} parent=1 // pred_check_branch
      %1855 = sbr.rel (%p1853) target = $region1149
    $region1148: #{tpu_custom_call.1} parent=1 // pred_region
      %s1856 = sshllo.u32 0, 1
      loop: start=0, step=1, limit=1
      $region1150: #{tpu_custom_call.1} parent=1148 // loop_pre_header
        _
      $region1151: #{tpu_custom_call.1} parent=1148 // loop_header
        %s1858 = sphi 0, %s1862
        %p1859 = scmp.ge.s32.totalorder %s1858, 1
        %s1863 = sphi %s1845, %s1845
        %s1864 = sphi %s1846, %s1846
      $region1152: #{tpu_custom_call.1} parent=1148 // loop_header_branch
        %1861 = sbr.rel (%p1859) target = $region1156
      $region1153: #{tpu_custom_call.1} parent=1148 // loop_body
        %v1865 = vld [vmem:[%s1863] sm:%s1856]
        %1866 = vst [vmem:[%s1864] sm:%s1856] %v1865
      $region1154: #{tpu_custom_call.1} parent=1148 // loop_footer
        %s1862 = sadd.s32 1, %s1858
      $region1155: #{tpu_custom_call.1} parent=1148 // loop_footer_branch
        %1857 = sbr.rel target = $region1151
      $region1156: #{tpu_custom_call.1} parent=1148 // loop_exit
        _
    $region1149: #{tpu_custom_call.1} parent=1 // pred_fallthru
      _
    // Predicated region
    $region1168: #{tpu_custom_call.1} parent=1 // pred_check
      _
    $region1169: #{tpu_custom_call.1} parent=1 // pred_check_branch
      %1890 = sbr.rel (0) target = $region1171
    $region1170: #{tpu_custom_call.1} parent=1 // pred_region
      %1891 = vsyncadd %s1847, 16
    $region1171: #{tpu_custom_call.1} parent=1 // pred_fallthru
      _
    %s1892 = scalar_lea.vmem %s5, %s59
    %s1893 = scalar_lea.vmem %s10, 6
    %s1894 = scalar_lea.sflag [#allocation2], 39
    %p1896 = scmp.lt.u32.totalorder 1, 8
    %p1897 = pneg %p1896
    // Predicated region
    $region1172: #{tpu_custom_call.1} parent=1 // pred_check
      _
    $region1173: #{tpu_custom_call.1} parent=1 // pred_check_branch
      %1899 = sbr.rel (%p1896) target = $region1175
    $region1174: #{tpu_custom_call.1} parent=1 // pred_region
      %s1914 = sand.u32 1, 7
      %p1915 = scmp.eq.s32.totalorder %s1914, 0
      %p1916 = pneg %p1915
      // Predicated region
      $region1187: #{tpu_custom_call.1} parent=1174 // pred_check
        _
      $region1188: #{tpu_custom_call.1} parent=1174 // pred_check_branch
        %1918 = sbr.rel (%p1915) target = $region1190
      $region1189: #{tpu_custom_call.1} parent=1174 // pred_region
        %s1919 = sand.u32 1, 7
        %s1920 = ssub.s32 1, %s1919
        %s1921 = scalar_lea.vmem %s1892, %s1920
        %s1922 = ssub.s32 1, %s1919
        %s1923 = scalar_lea.vmem %s1893, %s1922
        %s1924 = sshllo.u32 0, %s1919
        loop: start=0, step=1, limit=1
        $region1191: #{tpu_custom_call.1} parent=1189 // loop_pre_header
          _
        $region1192: #{tpu_custom_call.1} parent=1189 // loop_header
          %s1926 = sphi 0, %s1930
          %p1927 = scmp.ge.s32.totalorder %s1926, 1
          %s1931 = sphi %s1921, %s1921
          %s1932 = sphi %s1923, %s1923
        $region1193: #{tpu_custom_call.1} parent=1189 // loop_header_branch
          %1929 = sbr.rel (%p1927) target = $region1197
        $region1194: #{tpu_custom_call.1} parent=1189 // loop_body
          %v1933 = vld [vmem:[%s1931] sm:%s1924]
          %1934 = vst [vmem:[%s1932] sm:%s1924] %v1933
        $region1195: #{tpu_custom_call.1} parent=1189 // loop_footer
          %s1930 = sadd.s32 1, %s1926
        $region1196: #{tpu_custom_call.1} parent=1189 // loop_footer_branch
          %1925 = sbr.rel target = $region1192
        $region1197: #{tpu_custom_call.1} parent=1189 // loop_exit
          _
      $region1190: #{tpu_custom_call.1} parent=1174 // pred_fallthru
        _
    $region1175: #{tpu_custom_call.1} parent=1 // pred_fallthru
      _
    // Predicated region
    $region1176: #{tpu_custom_call.1} parent=1 // pred_check
      %p1900 = pneg %p1896
    $region1177: #{tpu_custom_call.1} parent=1 // pred_check_branch
      %1902 = sbr.rel (%p1900) target = $region1179
    $region1178: #{tpu_custom_call.1} parent=1 // pred_region
      %s1903 = sshllo.u32 0, 1
      loop: start=0, step=1, limit=1
      $region1180: #{tpu_custom_call.1} parent=1178 // loop_pre_header
        _
      $region1181: #{tpu_custom_call.1} parent=1178 // loop_header
        %s1905 = sphi 0, %s1909
        %p1906 = scmp.ge.s32.totalorder %s1905, 1
        %s1910 = sphi %s1892, %s1892
        %s1911 = sphi %s1893, %s1893
      $region1182: #{tpu_custom_call.1} parent=1178 // loop_header_branch
        %1908 = sbr.rel (%p1906) target = $region1186
      $region1183: #{tpu_custom_call.1} parent=1178 // loop_body
        %v1912 = vld [vmem:[%s1910] sm:%s1903]
        %1913 = vst [vmem:[%s1911] sm:%s1903] %v1912
      $region1184: #{tpu_custom_call.1} parent=1178 // loop_footer
        %s1909 = sadd.s32 1, %s1905
      $region1185: #{tpu_custom_call.1} parent=1178 // loop_footer_branch
        %1904 = sbr.rel target = $region1181
      $region1186: #{tpu_custom_call.1} parent=1178 // loop_exit
        _
    $region1179: #{tpu_custom_call.1} parent=1 // pred_fallthru
      _
    // Predicated region
    $region1198: #{tpu_custom_call.1} parent=1 // pred_check
      _
    $region1199: #{tpu_custom_call.1} parent=1 // pred_check_branch
      %1937 = sbr.rel (0) target = $region1201
    $region1200: #{tpu_custom_call.1} parent=1 // pred_region
      %1938 = vsyncadd %s1894, 16
    $region1201: #{tpu_custom_call.1} parent=1 // pred_fallthru
      _
    %s1939 = scalar_lea.vmem %s6, %s60
    %s1940 = scalar_lea.vmem %s11, 6
    %s1941 = scalar_lea.sflag [#allocation2], 40
    %p1943 = scmp.lt.u32.totalorder 1, 8
    %p1944 = pneg %p1943
    // Predicated region
    $region1202: #{tpu_custom_call.1} parent=1 // pred_check
      _
    $region1203: #{tpu_custom_call.1} parent=1 // pred_check_branch
      %1946 = sbr.rel (%p1943) target = $region1205
    $region1204: #{tpu_custom_call.1} parent=1 // pred_region
      %s1961 = sand.u32 1, 7
      %p1962 = scmp.eq.s32.totalorder %s1961, 0
      %p1963 = pneg %p1962
      // Predicated region
      $region1217: #{tpu_custom_call.1} parent=1204 // pred_check
        _
      $region1218: #{tpu_custom_call.1} parent=1204 // pred_check_branch
        %1965 = sbr.rel (%p1962) target = $region1220
      $region1219: #{tpu_custom_call.1} parent=1204 // pred_region
        %s1966 = sand.u32 1, 7
        %s1967 = ssub.s32 1, %s1966
        %s1968 = scalar_lea.vmem %s1939, %s1967
        %s1969 = ssub.s32 1, %s1966
        %s1970 = scalar_lea.vmem %s1940, %s1969
        %s1971 = sshllo.u32 0, %s1966
        loop: start=0, step=1, limit=1
        $region1221: #{tpu_custom_call.1} parent=1219 // loop_pre_header
          _
        $region1222: #{tpu_custom_call.1} parent=1219 // loop_header
          %s1973 = sphi 0, %s1977
          %p1974 = scmp.ge.s32.totalorder %s1973, 1
          %s1978 = sphi %s1968, %s1968
          %s1979 = sphi %s1970, %s1970
        $region1223: #{tpu_custom_call.1} parent=1219 // loop_header_branch
          %1976 = sbr.rel (%p1974) target = $region1227
        $region1224: #{tpu_custom_call.1} parent=1219 // loop_body
          %v1980 = vld [vmem:[%s1978] sm:%s1971]
          %1981 = vst [vmem:[%s1979] sm:%s1971] %v1980
        $region1225: #{tpu_custom_call.1} parent=1219 // loop_footer
          %s1977 = sadd.s32 1, %s1973
        $region1226: #{tpu_custom_call.1} parent=1219 // loop_footer_branch
          %1972 = sbr.rel target = $region1222
        $region1227: #{tpu_custom_call.1} parent=1219 // loop_exit
          _
      $region1220: #{tpu_custom_call.1} parent=1204 // pred_fallthru
        _
    $region1205: #{tpu_custom_call.1} parent=1 // pred_fallthru
      _
    // Predicated region
    $region1206: #{tpu_custom_call.1} parent=1 // pred_check
      %p1947 = pneg %p1943
    $region1207: #{tpu_custom_call.1} parent=1 // pred_check_branch
      %1949 = sbr.rel (%p1947) target = $region1209
    $region1208: #{tpu_custom_call.1} parent=1 // pred_region
      %s1950 = sshllo.u32 0, 1
      loop: start=0, step=1, limit=1
      $region1210: #{tpu_custom_call.1} parent=1208 // loop_pre_header
        _
      $region1211: #{tpu_custom_call.1} parent=1208 // loop_header
        %s1952 = sphi 0, %s1956
        %p1953 = scmp.ge.s32.totalorder %s1952, 1
        %s1957 = sphi %s1939, %s1939
        %s1958 = sphi %s1940, %s1940
      $region1212: #{tpu_custom_call.1} parent=1208 // loop_header_branch
        %1955 = sbr.rel (%p1953) target = $region1216
      $region1213: #{tpu_custom_call.1} parent=1208 // loop_body
        %v1959 = vld [vmem:[%s1957] sm:%s1950]
        %1960 = vst [vmem:[%s1958] sm:%s1950] %v1959
      $region1214: #{tpu_custom_call.1} parent=1208 // loop_footer
        %s1956 = sadd.s32 1, %s1952
      $region1215: #{tpu_custom_call.1} parent=1208 // loop_footer_branch
        %1951 = sbr.rel target = $region1211
      $region1216: #{tpu_custom_call.1} parent=1208 // loop_exit
        _
    $region1209: #{tpu_custom_call.1} parent=1 // pred_fallthru
      _
    // Predicated region
    $region1228: #{tpu_custom_call.1} parent=1 // pred_check
      _
    $region1229: #{tpu_custom_call.1} parent=1 // pred_check_branch
      %1984 = sbr.rel (0) target = $region1231
    $region1230: #{tpu_custom_call.1} parent=1 // pred_region
      %1985 = vsyncadd %s1941, 16
    $region1231: #{tpu_custom_call.1} parent=1 // pred_fallthru
      _
    %s1986 = scalar_lea.vmem %s5, %s61
    %s1987 = scalar_lea.vmem %s12, 6
    %s1988 = scalar_lea.sflag [#allocation2], 41
    %p1990 = scmp.lt.u32.totalorder 1, 8
    %p1991 = pneg %p1990
    // Predicated region
    $region1232: #{tpu_custom_call.1} parent=1 // pred_check
      _
    $region1233: #{tpu_custom_call.1} parent=1 // pred_check_branch
      %1993 = sbr.rel (%p1990) target = $region1235
    $region1234: #{tpu_custom_call.1} parent=1 // pred_region
      %s2008 = sand.u32 1, 7
      %p2009 = scmp.eq.s32.totalorder %s2008, 0
      %p2010 = pneg %p2009
      // Predicated region
      $region1247: #{tpu_custom_call.1} parent=1234 // pred_check
        _
      $region1248: #{tpu_custom_call.1} parent=1234 // pred_check_branch
        %2012 = sbr.rel (%p2009) target = $region1250
      $region1249: #{tpu_custom_call.1} parent=1234 // pred_region
        %s2013 = sand.u32 1, 7
        %s2014 = ssub.s32 1, %s2013
        %s2015 = scalar_lea.vmem %s1986, %s2014
        %s2016 = ssub.s32 1, %s2013
        %s2017 = scalar_lea.vmem %s1987, %s2016
        %s2018 = sshllo.u32 0, %s2013
        loop: start=0, step=1, limit=1
        $region1251: #{tpu_custom_call.1} parent=1249 // loop_pre_header
          _
        $region1252: #{tpu_custom_call.1} parent=1249 // loop_header
          %s2020 = sphi 0, %s2024
          %p2021 = scmp.ge.s32.totalorder %s2020, 1
          %s2025 = sphi %s2015, %s2015
          %s2026 = sphi %s2017, %s2017
        $region1253: #{tpu_custom_call.1} parent=1249 // loop_header_branch
          %2023 = sbr.rel (%p2021) target = $region1257
        $region1254: #{tpu_custom_call.1} parent=1249 // loop_body
          %v2027 = vld [vmem:[%s2025] sm:%s2018]
          %2028 = vst [vmem:[%s2026] sm:%s2018] %v2027
        $region1255: #{tpu_custom_call.1} parent=1249 // loop_footer
          %s2024 = sadd.s32 1, %s2020
        $region1256: #{tpu_custom_call.1} parent=1249 // loop_footer_branch
          %2019 = sbr.rel target = $region1252
        $region1257: #{tpu_custom_call.1} parent=1249 // loop_exit
          _
      $region1250: #{tpu_custom_call.1} parent=1234 // pred_fallthru
        _
    $region1235: #{tpu_custom_call.1} parent=1 // pred_fallthru
      _
    // Predicated region
    $region1236: #{tpu_custom_call.1} parent=1 // pred_check
      %p1994 = pneg %p1990
    $region1237: #{tpu_custom_call.1} parent=1 // pred_check_branch
      %1996 = sbr.rel (%p1994) target = $region1239
    $region1238: #{tpu_custom_call.1} parent=1 // pred_region
      %s1997 = sshllo.u32 0, 1
      loop: start=0, step=1, limit=1
      $region1240: #{tpu_custom_call.1} parent=1238 // loop_pre_header
        _
      $region1241: #{tpu_custom_call.1} parent=1238 // loop_header
        %s1999 = sphi 0, %s2003
        %p2000 = scmp.ge.s32.totalorder %s1999, 1
        %s2004 = sphi %s1986, %s1986
        %s2005 = sphi %s1987, %s1987
      $region1242: #{tpu_custom_call.1} parent=1238 // loop_header_branch
        %2002 = sbr.rel (%p2000) target = $region1246
      $region1243: #{tpu_custom_call.1} parent=1238 // loop_body
        %v2006 = vld [vmem:[%s2004] sm:%s1997]
        %2007 = vst [vmem:[%s2005] sm:%s1997] %v2006
      $region1244: #{tpu_custom_call.1} parent=1238 // loop_footer
        %s2003 = sadd.s32 1, %s1999
      $region1245: #{tpu_custom_call.1} parent=1238 // loop_footer_branch
        %1998 = sbr.rel target = $region1241
      $region1246: #{tpu_custom_call.1} parent=1238 // loop_exit
        _
    $region1239: #{tpu_custom_call.1} parent=1 // pred_fallthru
      _
    // Predicated region
    $region1258: #{tpu_custom_call.1} parent=1 // pred_check
      _
    $region1259: #{tpu_custom_call.1} parent=1 // pred_check_branch
      %2031 = sbr.rel (0) target = $region1261
    $region1260: #{tpu_custom_call.1} parent=1 // pred_region
      %2032 = vsyncadd %s1988, 16
    $region1261: #{tpu_custom_call.1} parent=1 // pred_fallthru
      _
    %s2033 = scalar_lea.vmem %s3, %s63
    %s2034 = scalar_lea.vmem [#allocation7], 7
    %s2035 = scalar_lea.sflag [#allocation2], 42
    %p2037 = scmp.lt.u32.totalorder 1, 8
    %p2038 = pneg %p2037
    // Predicated region
    $region1262: #{tpu_custom_call.1} parent=1 // pred_check
      _
    $region1263: #{tpu_custom_call.1} parent=1 // pred_check_branch
      %2040 = sbr.rel (%p2037) target = $region1265
    $region1264: #{tpu_custom_call.1} parent=1 // pred_region
      %s2055 = sand.u32 1, 7
      %p2056 = scmp.eq.s32.totalorder %s2055, 0
      %p2057 = pneg %p2056
      // Predicated region
      $region1277: #{tpu_custom_call.1} parent=1264 // pred_check
        _
      $region1278: #{tpu_custom_call.1} parent=1264 // pred_check_branch
        %2059 = sbr.rel (%p2056) target = $region1280
      $region1279: #{tpu_custom_call.1} parent=1264 // pred_region
        %s2060 = sand.u32 1, 7
        %s2061 = ssub.s32 1, %s2060
        %s2062 = scalar_lea.vmem %s2033, %s2061
        %s2063 = ssub.s32 1, %s2060
        %s2064 = scalar_lea.vmem %s2034, %s2063 [#allocation7]
        %s2065 = sshllo.u32 0, %s2060
        loop: start=0, step=1, limit=1
        $region1281: #{tpu_custom_call.1} parent=1279 // loop_pre_header
          _
        $region1282: #{tpu_custom_call.1} parent=1279 // loop_header
          %s2067 = sphi 0, %s2071
          %p2068 = scmp.ge.s32.totalorder %s2067, 1
          %s2072 = sphi %s2062, %s2062
          %s2073 = sphi %s2064, %s2064
        $region1283: #{tpu_custom_call.1} parent=1279 // loop_header_branch
          %2070 = sbr.rel (%p2068) target = $region1287
        $region1284: #{tpu_custom_call.1} parent=1279 // loop_body
          %v2074 = vld [vmem:[%s2072] sm:%s2065]
          %2075 = vst [vmem:[%s2073] sm:%s2065] %v2074
        $region1285: #{tpu_custom_call.1} parent=1279 // loop_footer
          %s2071 = sadd.s32 1, %s2067
        $region1286: #{tpu_custom_call.1} parent=1279 // loop_footer_branch
          %2066 = sbr.rel target = $region1282
        $region1287: #{tpu_custom_call.1} parent=1279 // loop_exit
          _
      $region1280: #{tpu_custom_call.1} parent=1264 // pred_fallthru
        _
    $region1265: #{tpu_custom_call.1} parent=1 // pred_fallthru
      _
    // Predicated region
    $region1266: #{tpu_custom_call.1} parent=1 // pred_check
      %p2041 = pneg %p2037
    $region1267: #{tpu_custom_call.1} parent=1 // pred_check_branch
      %2043 = sbr.rel (%p2041) target = $region1269
    $region1268: #{tpu_custom_call.1} parent=1 // pred_region
      %s2044 = sshllo.u32 0, 1
      loop: start=0, step=1, limit=1
      $region1270: #{tpu_custom_call.1} parent=1268 // loop_pre_header
        _
      $region1271: #{tpu_custom_call.1} parent=1268 // loop_header
        %s2046 = sphi 0, %s2050
        %p2047 = scmp.ge.s32.totalorder %s2046, 1
        %s2051 = sphi %s2033, %s2033
        %s2052 = sphi %s2034, %s2034
      $region1272: #{tpu_custom_call.1} parent=1268 // loop_header_branch
        %2049 = sbr.rel (%p2047) target = $region1276
      $region1273: #{tpu_custom_call.1} parent=1268 // loop_body
        %v2053 = vld [vmem:[%s2051] sm:%s2044]
        %2054 = vst [vmem:[%s2052] sm:%s2044] %v2053
      $region1274: #{tpu_custom_call.1} parent=1268 // loop_footer
        %s2050 = sadd.s32 1, %s2046
      $region1275: #{tpu_custom_call.1} parent=1268 // loop_footer_branch
        %2045 = sbr.rel target = $region1271
      $region1276: #{tpu_custom_call.1} parent=1268 // loop_exit
        _
    $region1269: #{tpu_custom_call.1} parent=1 // pred_fallthru
      _
    // Predicated region
    $region1288: #{tpu_custom_call.1} parent=1 // pred_check
      _
    $region1289: #{tpu_custom_call.1} parent=1 // pred_check_branch
      %2078 = sbr.rel (0) target = $region1291
    $region1290: #{tpu_custom_call.1} parent=1 // pred_region
      %2079 = vsyncadd %s2035, 16
    $region1291: #{tpu_custom_call.1} parent=1 // pred_fallthru
      _
    %s2080 = scalar_lea.vmem %s4, %s64
    %s2081 = scalar_lea.vmem [#allocation9], 7
    %s2082 = scalar_lea.sflag [#allocation2], 43
    %p2084 = scmp.lt.u32.totalorder 1, 8
    %p2085 = pneg %p2084
    // Predicated region
    $region1292: #{tpu_custom_call.1} parent=1 // pred_check
      _
    $region1293: #{tpu_custom_call.1} parent=1 // pred_check_branch
      %2087 = sbr.rel (%p2084) target = $region1295
    $region1294: #{tpu_custom_call.1} parent=1 // pred_region
      %s2102 = sand.u32 1, 7
      %p2103 = scmp.eq.s32.totalorder %s2102, 0
      %p2104 = pneg %p2103
      // Predicated region
      $region1307: #{tpu_custom_call.1} parent=1294 // pred_check
        _
      $region1308: #{tpu_custom_call.1} parent=1294 // pred_check_branch
        %2106 = sbr.rel (%p2103) target = $region1310
      $region1309: #{tpu_custom_call.1} parent=1294 // pred_region
        %s2107 = sand.u32 1, 7
        %s2108 = ssub.s32 1, %s2107
        %s2109 = scalar_lea.vmem %s2080, %s2108
        %s2110 = ssub.s32 1, %s2107
        %s2111 = scalar_lea.vmem %s2081, %s2110 [#allocation9]
        %s2112 = sshllo.u32 0, %s2107
        loop: start=0, step=1, limit=1
        $region1311: #{tpu_custom_call.1} parent=1309 // loop_pre_header
          _
        $region1312: #{tpu_custom_call.1} parent=1309 // loop_header
          %s2114 = sphi 0, %s2118
          %p2115 = scmp.ge.s32.totalorder %s2114, 1
          %s2119 = sphi %s2109, %s2109
          %s2120 = sphi %s2111, %s2111
        $region1313: #{tpu_custom_call.1} parent=1309 // loop_header_branch
          %2117 = sbr.rel (%p2115) target = $region1317
        $region1314: #{tpu_custom_call.1} parent=1309 // loop_body
          %v2121 = vld [vmem:[%s2119] sm:%s2112]
          %2122 = vst [vmem:[%s2120] sm:%s2112] %v2121
        $region1315: #{tpu_custom_call.1} parent=1309 // loop_footer
          %s2118 = sadd.s32 1, %s2114
        $region1316: #{tpu_custom_call.1} parent=1309 // loop_footer_branch
          %2113 = sbr.rel target = $region1312
        $region1317: #{tpu_custom_call.1} parent=1309 // loop_exit
          _
      $region1310: #{tpu_custom_call.1} parent=1294 // pred_fallthru
        _
    $region1295: #{tpu_custom_call.1} parent=1 // pred_fallthru
      _
    // Predicated region
    $region1296: #{tpu_custom_call.1} parent=1 // pred_check
      %p2088 = pneg %p2084
    $region1297: #{tpu_custom_call.1} parent=1 // pred_check_branch
      %2090 = sbr.rel (%p2088) target = $region1299
    $region1298: #{tpu_custom_call.1} parent=1 // pred_region
      %s2091 = sshllo.u32 0, 1
      loop: start=0, step=1, limit=1
      $region1300: #{tpu_custom_call.1} parent=1298 // loop_pre_header
        _
      $region1301: #{tpu_custom_call.1} parent=1298 // loop_header
        %s2093 = sphi 0, %s2097
        %p2094 = scmp.ge.s32.totalorder %s2093, 1
        %s2098 = sphi %s2080, %s2080
        %s2099 = sphi %s2081, %s2081
      $region1302: #{tpu_custom_call.1} parent=1298 // loop_header_branch
        %2096 = sbr.rel (%p2094) target = $region1306
      $region1303: #{tpu_custom_call.1} parent=1298 // loop_body
        %v2100 = vld [vmem:[%s2098] sm:%s2091]
        %2101 = vst [vmem:[%s2099] sm:%s2091] %v2100
      $region1304: #{tpu_custom_call.1} parent=1298 // loop_footer
        %s2097 = sadd.s32 1, %s2093
      $region1305: #{tpu_custom_call.1} parent=1298 // loop_footer_branch
        %2092 = sbr.rel target = $region1301
      $region1306: #{tpu_custom_call.1} parent=1298 // loop_exit
        _
    $region1299: #{tpu_custom_call.1} parent=1 // pred_fallthru
      _
    // Predicated region
    $region1318: #{tpu_custom_call.1} parent=1 // pred_check
      _
    $region1319: #{tpu_custom_call.1} parent=1 // pred_check_branch
      %2125 = sbr.rel (0) target = $region1321
    $region1320: #{tpu_custom_call.1} parent=1 // pred_region
      %2126 = vsyncadd %s2082, 16
    $region1321: #{tpu_custom_call.1} parent=1 // pred_fallthru
      _
    %s2127 = scalar_lea.vmem %s3, %s65
    %s2128 = scalar_lea.vmem [#allocation11], 7
    %s2129 = scalar_lea.sflag [#allocation2], 44
    %p2131 = scmp.lt.u32.totalorder 1, 8
    %p2132 = pneg %p2131
    // Predicated region
    $region1322: #{tpu_custom_call.1} parent=1 // pred_check
      _
    $region1323: #{tpu_custom_call.1} parent=1 // pred_check_branch
      %2134 = sbr.rel (%p2131) target = $region1325
    $region1324: #{tpu_custom_call.1} parent=1 // pred_region
      %s2149 = sand.u32 1, 7
      %p2150 = scmp.eq.s32.totalorder %s2149, 0
      %p2151 = pneg %p2150
      // Predicated region
      $region1337: #{tpu_custom_call.1} parent=1324 // pred_check
        _
      $region1338: #{tpu_custom_call.1} parent=1324 // pred_check_branch
        %2153 = sbr.rel (%p2150) target = $region1340
      $region1339: #{tpu_custom_call.1} parent=1324 // pred_region
        %s2154 = sand.u32 1, 7
        %s2155 = ssub.s32 1, %s2154
        %s2156 = scalar_lea.vmem %s2127, %s2155
        %s2157 = ssub.s32 1, %s2154
        %s2158 = scalar_lea.vmem %s2128, %s2157 [#allocation11]
        %s2159 = sshllo.u32 0, %s2154
        loop: start=0, step=1, limit=1
        $region1341: #{tpu_custom_call.1} parent=1339 // loop_pre_header
          _
        $region1342: #{tpu_custom_call.1} parent=1339 // loop_header
          %s2161 = sphi 0, %s2165
          %p2162 = scmp.ge.s32.totalorder %s2161, 1
          %s2166 = sphi %s2156, %s2156
          %s2167 = sphi %s2158, %s2158
        $region1343: #{tpu_custom_call.1} parent=1339 // loop_header_branch
          %2164 = sbr.rel (%p2162) target = $region1347
        $region1344: #{tpu_custom_call.1} parent=1339 // loop_body
          %v2168 = vld [vmem:[%s2166] sm:%s2159]
          %2169 = vst [vmem:[%s2167] sm:%s2159] %v2168
        $region1345: #{tpu_custom_call.1} parent=1339 // loop_footer
          %s2165 = sadd.s32 1, %s2161
        $region1346: #{tpu_custom_call.1} parent=1339 // loop_footer_branch
          %2160 = sbr.rel target = $region1342
        $region1347: #{tpu_custom_call.1} parent=1339 // loop_exit
          _
      $region1340: #{tpu_custom_call.1} parent=1324 // pred_fallthru
        _
    $region1325: #{tpu_custom_call.1} parent=1 // pred_fallthru
      _
    // Predicated region
    $region1326: #{tpu_custom_call.1} parent=1 // pred_check
      %p2135 = pneg %p2131
    $region1327: #{tpu_custom_call.1} parent=1 // pred_check_branch
      %2137 = sbr.rel (%p2135) target = $region1329
    $region1328: #{tpu_custom_call.1} parent=1 // pred_region
      %s2138 = sshllo.u32 0, 1
      loop: start=0, step=1, limit=1
      $region1330: #{tpu_custom_call.1} parent=1328 // loop_pre_header
        _
      $region1331: #{tpu_custom_call.1} parent=1328 // loop_header
        %s2140 = sphi 0, %s2144
        %p2141 = scmp.ge.s32.totalorder %s2140, 1
        %s2145 = sphi %s2127, %s2127
        %s2146 = sphi %s2128, %s2128
      $region1332: #{tpu_custom_call.1} parent=1328 // loop_header_branch
        %2143 = sbr.rel (%p2141) target = $region1336
      $region1333: #{tpu_custom_call.1} parent=1328 // loop_body
        %v2147 = vld [vmem:[%s2145] sm:%s2138]
        %2148 = vst [vmem:[%s2146] sm:%s2138] %v2147
      $region1334: #{tpu_custom_call.1} parent=1328 // loop_footer
        %s2144 = sadd.s32 1, %s2140
      $region1335: #{tpu_custom_call.1} parent=1328 // loop_footer_branch
        %2139 = sbr.rel target = $region1331
      $region1336: #{tpu_custom_call.1} parent=1328 // loop_exit
        _
    $region1329: #{tpu_custom_call.1} parent=1 // pred_fallthru
      _
    // Predicated region
    $region1348: #{tpu_custom_call.1} parent=1 // pred_check
      _
    $region1349: #{tpu_custom_call.1} parent=1 // pred_check_branch
      %2172 = sbr.rel (0) target = $region1351
    $region1350: #{tpu_custom_call.1} parent=1 // pred_region
      %2173 = vsyncadd %s2129, 16
    $region1351: #{tpu_custom_call.1} parent=1 // pred_fallthru
      _
    %s2174 = scalar_lea.vmem %s5, %s63
    %s2175 = scalar_lea.vmem %s10, 7
    %s2176 = scalar_lea.sflag [#allocation2], 45
    %p2178 = scmp.lt.u32.totalorder 1, 8
    %p2179 = pneg %p2178
    // Predicated region
    $region1352: #{tpu_custom_call.1} parent=1 // pred_check
      _
    $region1353: #{tpu_custom_call.1} parent=1 // pred_check_branch
      %2181 = sbr.rel (%p2178) target = $region1355
    $region1354: #{tpu_custom_call.1} parent=1 // pred_region
      %s2196 = sand.u32 1, 7
      %p2197 = scmp.eq.s32.totalorder %s2196, 0
      %p2198 = pneg %p2197
      // Predicated region
      $region1367: #{tpu_custom_call.1} parent=1354 // pred_check
        _
      $region1368: #{tpu_custom_call.1} parent=1354 // pred_check_branch
        %2200 = sbr.rel (%p2197) target = $region1370
      $region1369: #{tpu_custom_call.1} parent=1354 // pred_region
        %s2201 = sand.u32 1, 7
        %s2202 = ssub.s32 1, %s2201
        %s2203 = scalar_lea.vmem %s2174, %s2202
        %s2204 = ssub.s32 1, %s2201
        %s2205 = scalar_lea.vmem %s2175, %s2204
        %s2206 = sshllo.u32 0, %s2201
        loop: start=0, step=1, limit=1
        $region1371: #{tpu_custom_call.1} parent=1369 // loop_pre_header
          _
        $region1372: #{tpu_custom_call.1} parent=1369 // loop_header
          %s2208 = sphi 0, %s2212
          %p2209 = scmp.ge.s32.totalorder %s2208, 1
          %s2213 = sphi %s2203, %s2203
          %s2214 = sphi %s2205, %s2205
        $region1373: #{tpu_custom_call.1} parent=1369 // loop_header_branch
          %2211 = sbr.rel (%p2209) target = $region1377
        $region1374: #{tpu_custom_call.1} parent=1369 // loop_body
          %v2215 = vld [vmem:[%s2213] sm:%s2206]
          %2216 = vst [vmem:[%s2214] sm:%s2206] %v2215
        $region1375: #{tpu_custom_call.1} parent=1369 // loop_footer
          %s2212 = sadd.s32 1, %s2208
        $region1376: #{tpu_custom_call.1} parent=1369 // loop_footer_branch
          %2207 = sbr.rel target = $region1372
        $region1377: #{tpu_custom_call.1} parent=1369 // loop_exit
          _
      $region1370: #{tpu_custom_call.1} parent=1354 // pred_fallthru
        _
    $region1355: #{tpu_custom_call.1} parent=1 // pred_fallthru
      _
    // Predicated region
    $region1356: #{tpu_custom_call.1} parent=1 // pred_check
      %p2182 = pneg %p2178
    $region1357: #{tpu_custom_call.1} parent=1 // pred_check_branch
      %2184 = sbr.rel (%p2182) target = $region1359
    $region1358: #{tpu_custom_call.1} parent=1 // pred_region
      %s2185 = sshllo.u32 0, 1
      loop: start=0, step=1, limit=1
      $region1360: #{tpu_custom_call.1} parent=1358 // loop_pre_header
        _
      $region1361: #{tpu_custom_call.1} parent=1358 // loop_header
        %s2187 = sphi 0, %s2191
        %p2188 = scmp.ge.s32.totalorder %s2187, 1
        %s2192 = sphi %s2174, %s2174
        %s2193 = sphi %s2175, %s2175
      $region1362: #{tpu_custom_call.1} parent=1358 // loop_header_branch
        %2190 = sbr.rel (%p2188) target = $region1366
      $region1363: #{tpu_custom_call.1} parent=1358 // loop_body
        %v2194 = vld [vmem:[%s2192] sm:%s2185]
        %2195 = vst [vmem:[%s2193] sm:%s2185] %v2194
      $region1364: #{tpu_custom_call.1} parent=1358 // loop_footer
        %s2191 = sadd.s32 1, %s2187
      $region1365: #{tpu_custom_call.1} parent=1358 // loop_footer_branch
        %2186 = sbr.rel target = $region1361
      $region1366: #{tpu_custom_call.1} parent=1358 // loop_exit
        _
    $region1359: #{tpu_custom_call.1} parent=1 // pred_fallthru
      _
    // Predicated region
    $region1378: #{tpu_custom_call.1} parent=1 // pred_check
      _
    $region1379: #{tpu_custom_call.1} parent=1 // pred_check_branch
      %2219 = sbr.rel (0) target = $region1381
    $region1380: #{tpu_custom_call.1} parent=1 // pred_region
      %2220 = vsyncadd %s2176, 16
    $region1381: #{tpu_custom_call.1} parent=1 // pred_fallthru
      _
    %s2221 = scalar_lea.vmem %s6, %s64
    %s2222 = scalar_lea.vmem %s11, 7
    %s2223 = scalar_lea.sflag [#allocation2], 46
    %p2225 = scmp.lt.u32.totalorder 1, 8
    %p2226 = pneg %p2225
    // Predicated region
    $region1382: #{tpu_custom_call.1} parent=1 // pred_check
      _
    $region1383: #{tpu_custom_call.1} parent=1 // pred_check_branch
      %2228 = sbr.rel (%p2225) target = $region1385
    $region1384: #{tpu_custom_call.1} parent=1 // pred_region
      %s2243 = sand.u32 1, 7
      %p2244 = scmp.eq.s32.totalorder %s2243, 0
      %p2245 = pneg %p2244
      // Predicated region
      $region1397: #{tpu_custom_call.1} parent=1384 // pred_check
        _
      $region1398: #{tpu_custom_call.1} parent=1384 // pred_check_branch
        %2247 = sbr.rel (%p2244) target = $region1400
      $region1399: #{tpu_custom_call.1} parent=1384 // pred_region
        %s2248 = sand.u32 1, 7
        %s2249 = ssub.s32 1, %s2248
        %s2250 = scalar_lea.vmem %s2221, %s2249
        %s2251 = ssub.s32 1, %s2248
        %s2252 = scalar_lea.vmem %s2222, %s2251
        %s2253 = sshllo.u32 0, %s2248
        loop: start=0, step=1, limit=1
        $region1401: #{tpu_custom_call.1} parent=1399 // loop_pre_header
          _
        $region1402: #{tpu_custom_call.1} parent=1399 // loop_header
          %s2255 = sphi 0, %s2259
          %p2256 = scmp.ge.s32.totalorder %s2255, 1
          %s2260 = sphi %s2250, %s2250
          %s2261 = sphi %s2252, %s2252
        $region1403: #{tpu_custom_call.1} parent=1399 // loop_header_branch
          %2258 = sbr.rel (%p2256) target = $region1407
        $region1404: #{tpu_custom_call.1} parent=1399 // loop_body
          %v2262 = vld [vmem:[%s2260] sm:%s2253]
          %2263 = vst [vmem:[%s2261] sm:%s2253] %v2262
        $region1405: #{tpu_custom_call.1} parent=1399 // loop_footer
          %s2259 = sadd.s32 1, %s2255
        $region1406: #{tpu_custom_call.1} parent=1399 // loop_footer_branch
          %2254 = sbr.rel target = $region1402
        $region1407: #{tpu_custom_call.1} parent=1399 // loop_exit
          _
      $region1400: #{tpu_custom_call.1} parent=1384 // pred_fallthru
        _
    $region1385: #{tpu_custom_call.1} parent=1 // pred_fallthru
      _
    // Predicated region
    $region1386: #{tpu_custom_call.1} parent=1 // pred_check
      %p2229 = pneg %p2225
    $region1387: #{tpu_custom_call.1} parent=1 // pred_check_branch
      %2231 = sbr.rel (%p2229) target = $region1389
    $region1388: #{tpu_custom_call.1} parent=1 // pred_region
      %s2232 = sshllo.u32 0, 1
      loop: start=0, step=1, limit=1
      $region1390: #{tpu_custom_call.1} parent=1388 // loop_pre_header
        _
      $region1391: #{tpu_custom_call.1} parent=1388 // loop_header
        %s2234 = sphi 0, %s2238
        %p2235 = scmp.ge.s32.totalorder %s2234, 1
        %s2239 = sphi %s2221, %s2221
        %s2240 = sphi %s2222, %s2222
      $region1392: #{tpu_custom_call.1} parent=1388 // loop_header_branch
        %2237 = sbr.rel (%p2235) target = $region1396
      $region1393: #{tpu_custom_call.1} parent=1388 // loop_body
        %v2241 = vld [vmem:[%s2239] sm:%s2232]
        %2242 = vst [vmem:[%s2240] sm:%s2232] %v2241
      $region1394: #{tpu_custom_call.1} parent=1388 // loop_footer
        %s2238 = sadd.s32 1, %s2234
      $region1395: #{tpu_custom_call.1} parent=1388 // loop_footer_branch
        %2233 = sbr.rel target = $region1391
      $region1396: #{tpu_custom_call.1} parent=1388 // loop_exit
        _
    $region1389: #{tpu_custom_call.1} parent=1 // pred_fallthru
      _
    // Predicated region
    $region1408: #{tpu_custom_call.1} parent=1 // pred_check
      _
    $region1409: #{tpu_custom_call.1} parent=1 // pred_check_branch
      %2266 = sbr.rel (0) target = $region1411
    $region1410: #{tpu_custom_call.1} parent=1 // pred_region
      %2267 = vsyncadd %s2223, 16
    $region1411: #{tpu_custom_call.1} parent=1 // pred_fallthru
      _
    %s2268 = scalar_lea.vmem %s5, %s65
    %s2269 = scalar_lea.vmem %s12, 7
    %s2270 = scalar_lea.sflag [#allocation2], 47
    %p2272 = scmp.lt.u32.totalorder 1, 8
    %p2273 = pneg %p2272
    // Predicated region
    $region1412: #{tpu_custom_call.1} parent=1 // pred_check
      _
    $region1413: #{tpu_custom_call.1} parent=1 // pred_check_branch
      %2275 = sbr.rel (%p2272) target = $region1415
    $region1414: #{tpu_custom_call.1} parent=1 // pred_region
      %s2290 = sand.u32 1, 7
      %p2291 = scmp.eq.s32.totalorder %s2290, 0
      %p2292 = pneg %p2291
      // Predicated region
      $region1427: #{tpu_custom_call.1} parent=1414 // pred_check
        _
      $region1428: #{tpu_custom_call.1} parent=1414 // pred_check_branch
        %2294 = sbr.rel (%p2291) target = $region1430
      $region1429: #{tpu_custom_call.1} parent=1414 // pred_region
        %s2295 = sand.u32 1, 7
        %s2296 = ssub.s32 1, %s2295
        %s2297 = scalar_lea.vmem %s2268, %s2296
        %s2298 = ssub.s32 1, %s2295
        %s2299 = scalar_lea.vmem %s2269, %s2298
        %s2300 = sshllo.u32 0, %s2295
        loop: start=0, step=1, limit=1
        $region1431: #{tpu_custom_call.1} parent=1429 // loop_pre_header
          _
        $region1432: #{tpu_custom_call.1} parent=1429 // loop_header
          %s2302 = sphi 0, %s2306
          %p2303 = scmp.ge.s32.totalorder %s2302, 1
          %s2307 = sphi %s2297, %s2297
          %s2308 = sphi %s2299, %s2299
        $region1433: #{tpu_custom_call.1} parent=1429 // loop_header_branch
          %2305 = sbr.rel (%p2303) target = $region1437
        $region1434: #{tpu_custom_call.1} parent=1429 // loop_body
          %v2309 = vld [vmem:[%s2307] sm:%s2300]
          %2310 = vst [vmem:[%s2308] sm:%s2300] %v2309
        $region1435: #{tpu_custom_call.1} parent=1429 // loop_footer
          %s2306 = sadd.s32 1, %s2302
        $region1436: #{tpu_custom_call.1} parent=1429 // loop_footer_branch
          %2301 = sbr.rel target = $region1432
        $region1437: #{tpu_custom_call.1} parent=1429 // loop_exit
          _
      $region1430: #{tpu_custom_call.1} parent=1414 // pred_fallthru
        _
    $region1415: #{tpu_custom_call.1} parent=1 // pred_fallthru
      _
    // Predicated region
    $region1416: #{tpu_custom_call.1} parent=1 // pred_check
      %p2276 = pneg %p2272
    $region1417: #{tpu_custom_call.1} parent=1 // pred_check_branch
      %2278 = sbr.rel (%p2276) target = $region1419
    $region1418: #{tpu_custom_call.1} parent=1 // pred_region
      %s2279 = sshllo.u32 0, 1
      loop: start=0, step=1, limit=1
      $region1420: #{tpu_custom_call.1} parent=1418 // loop_pre_header
        _
      $region1421: #{tpu_custom_call.1} parent=1418 // loop_header
        %s2281 = sphi 0, %s2285
        %p2282 = scmp.ge.s32.totalorder %s2281, 1
        %s2286 = sphi %s2268, %s2268
        %s2287 = sphi %s2269, %s2269
      $region1422: #{tpu_custom_call.1} parent=1418 // loop_header_branch
        %2284 = sbr.rel (%p2282) target = $region1426
      $region1423: #{tpu_custom_call.1} parent=1418 // loop_body
        %v2288 = vld [vmem:[%s2286] sm:%s2279]
        %2289 = vst [vmem:[%s2287] sm:%s2279] %v2288
      $region1424: #{tpu_custom_call.1} parent=1418 // loop_footer
        %s2285 = sadd.s32 1, %s2281
      $region1425: #{tpu_custom_call.1} parent=1418 // loop_footer_branch
        %2280 = sbr.rel target = $region1421
      $region1426: #{tpu_custom_call.1} parent=1418 // loop_exit
        _
    $region1419: #{tpu_custom_call.1} parent=1 // pred_fallthru
      _
    // Predicated region
    $region1438: #{tpu_custom_call.1} parent=1 // pred_check
      _
    $region1439: #{tpu_custom_call.1} parent=1 // pred_check_branch
      %2313 = sbr.rel (0) target = $region1441
    $region1440: #{tpu_custom_call.1} parent=1 // pred_region
      %2314 = vsyncadd %s2270, 16
    $region1441: #{tpu_custom_call.1} parent=1 // pred_fallthru
      _
    %s2315 = smul.u32 1, 1
    %s2316 = sshll.u32 %s2315, 4
    %2317 = dma.done [#allocation2], %s2316
    %s2318 = sshll.u32 %s2315, 4
    %2319 = dma.done %s112, %s2318
    %s2320 = sshll.u32 %s2315, 4
    %2321 = dma.done %s158, %s2320
    %s2322 = sshll.u32 %s2315, 4
    %2323 = dma.done %s204, %s2322
    %s2324 = sshll.u32 %s2315, 4
    %2325 = dma.done %s250, %s2324
    %s2326 = sshll.u32 %s2315, 4
    %2327 = dma.done %s296, %s2326
    %s2328 = sshll.u32 %s2315, 4
    %2329 = dma.done %s343, %s2328
    %s2330 = sshll.u32 %s2315, 4
    %2331 = dma.done %s390, %s2330
    %s2332 = sshll.u32 %s2315, 4
    %2333 = dma.done %s437, %s2332
    %s2334 = sshll.u32 %s2315, 4
    %2335 = dma.done %s484, %s2334
    %s2336 = sshll.u32 %s2315, 4
    %2337 = dma.done %s531, %s2336
    %s2338 = sshll.u32 %s2315, 4
    %2339 = dma.done %s578, %s2338
    %s2340 = sshll.u32 %s2315, 4
    %2341 = dma.done %s625, %s2340
    %s2342 = sshll.u32 %s2315, 4
    %2343 = dma.done %s672, %s2342
    %s2344 = sshll.u32 %s2315, 4
    %2345 = dma.done %s719, %s2344
    %s2346 = sshll.u32 %s2315, 4
    %2347 = dma.done %s766, %s2346
    %s2348 = sshll.u32 %s2315, 4
    %2349 = dma.done %s813, %s2348
    %s2350 = sshll.u32 %s2315, 4
    %2351 = dma.done %s860, %s2350
    %s2352 = sshll.u32 %s2315, 4
    %2353 = dma.done %s907, %s2352
    %s2354 = sshll.u32 %s2315, 4
    %2355 = dma.done %s954, %s2354
    %s2356 = sshll.u32 %s2315, 4
    %2357 = dma.done %s1001, %s2356
    %s2358 = sshll.u32 %s2315, 4
    %2359 = dma.done %s1048, %s2358
    %s2360 = sshll.u32 %s2315, 4
    %2361 = dma.done %s1095, %s2360
    %s2362 = sshll.u32 %s2315, 4
    %2363 = dma.done %s1142, %s2362
    %s2364 = sshll.u32 %s2315, 4
    %2365 = dma.done %s1189, %s2364
    %s2366 = sshll.u32 %s2315, 4
    %2367 = dma.done %s1236, %s2366
    %s2368 = sshll.u32 %s2315, 4
    %2369 = dma.done %s1283, %s2368
    %s2370 = sshll.u32 %s2315, 4
    %2371 = dma.done %s1330, %s2370
    %s2372 = sshll.u32 %s2315, 4
    %2373 = dma.done %s1377, %s2372
    %s2374 = sshll.u32 %s2315, 4
    %2375 = dma.done %s1424, %s2374
    %s2376 = sshll.u32 %s2315, 4
    %2377 = dma.done %s1471, %s2376
    %s2378 = sshll.u32 %s2315, 4
    %2379 = dma.done %s1518, %s2378
    %s2380 = sshll.u32 %s2315, 4
    %2381 = dma.done %s1565, %s2380
    %s2382 = sshll.u32 %s2315, 4
    %2383 = dma.done %s1612, %s2382
    %s2384 = sshll.u32 %s2315, 4
    %2385 = dma.done %s1659, %s2384
    %s2386 = sshll.u32 %s2315, 4
    %2387 = dma.done %s1706, %s2386
    %s2388 = sshll.u32 %s2315, 4
    %2389 = dma.done %s1753, %s2388
    %s2390 = sshll.u32 %s2315, 4
    %2391 = dma.done %s1800, %s2390
    %s2392 = sshll.u32 %s2315, 4
    %2393 = dma.done %s1847, %s2392
    %s2394 = sshll.u32 %s2315, 4
    %2395 = dma.done %s1894, %s2394
    %s2396 = sshll.u32 %s2315, 4
    %2397 = dma.done %s1941, %s2396
    %s2398 = sshll.u32 %s2315, 4
    %2399 = dma.done %s1988, %s2398
    %s2400 = sshll.u32 %s2315, 4
    %2401 = dma.done %s2035, %s2400
    %s2402 = sshll.u32 %s2315, 4
    %2403 = dma.done %s2082, %s2402
    %s2404 = sshll.u32 %s2315, 4
    %2405 = dma.done %s2129, %s2404
    %s2406 = sshll.u32 %s2315, 4
    %2407 = dma.done %s2176, %s2406
    %s2408 = sshll.u32 %s2315, 4
    %2409 = dma.done %s2223, %s2408
    %s2410 = sshll.u32 %s2315, 4
    %2411 = dma.done %s2270, %s2410
    // Predicated region
    $region1442: #{tpu_custom_call.1} parent=1 // pred_check
      _
    $region1443: #{tpu_custom_call.1} parent=1 // pred_check_branch
      %2413 = sbr.rel (0) target = $region1445
    $region1444: #{tpu_custom_call.1} parent=1 // pred_region
      %s2415 = ssub.s32 128, 128
      %2416 = vsyncadd [#allocation8], %s2415
      %s2418 = sshll.u32 [#allocation7], 4
      %s2419 = int_to_ptr.vmem [resolvable:$true] %s2418
      %2421 = dma.vmem_to_hbm [thread:$0]  %s2419, 128, %s7, [#allocation8]
    $region1445: #{tpu_custom_call.1} parent=1 // pred_fallthru
      _
    // Predicated region
    $region1446: #{tpu_custom_call.1} parent=1 // pred_check
      _
    $region1447: #{tpu_custom_call.1} parent=1 // pred_check_branch
      %2423 = sbr.rel (0) target = $region1449
    $region1448: #{tpu_custom_call.1} parent=1 // pred_region
      %s2425 = ssub.s32 128, 128
      %2426 = vsyncadd [#allocation10], %s2425
      %s2428 = sshll.u32 [#allocation9], 4
      %s2429 = int_to_ptr.vmem [resolvable:$true] %s2428
      %2431 = dma.vmem_to_hbm [thread:$0]  %s2429, 128, %s8, [#allocation10]
    $region1449: #{tpu_custom_call.1} parent=1 // pred_fallthru
      _
    // Predicated region
    $region1450: #{tpu_custom_call.1} parent=1 // pred_check
      _
    $region1451: #{tpu_custom_call.1} parent=1 // pred_check_branch
      %2433 = sbr.rel (0) target = $region1453
    $region1452: #{tpu_custom_call.1} parent=1 // pred_region
      %s2435 = ssub.s32 128, 128
      %2436 = vsyncadd [#allocation10], %s2435
      %s2438 = sshll.u32 [#allocation11], 4
      %s2439 = int_to_ptr.vmem [resolvable:$true] %s2438
      %2441 = dma.vmem_to_hbm [thread:$0]  %s2439, 128, %s9, [#allocation10]
    $region1453: #{tpu_custom_call.1} parent=1 // pred_fallthru
      _
    // Predicated region
    $region1454: #{tpu_custom_call.1} parent=1 // pred_check
      _
    $region1455: #{tpu_custom_call.1} parent=1 // pred_check_branch
      %2443 = sbr.rel (0) target = $region1457
    $region1456: #{tpu_custom_call.1} parent=1 // pred_region
      _
    $region1457: #{tpu_custom_call.1} parent=1 // pred_fallthru
      _
    // Predicated region
    $region1458: #{tpu_custom_call.1} parent=1 // pred_check
      _
    $region1459: #{tpu_custom_call.1} parent=1 // pred_check_branch
      %2445 = sbr.rel (0) target = $region1461
    $region1460: #{tpu_custom_call.1} parent=1 // pred_region
      _
    $region1461: #{tpu_custom_call.1} parent=1 // pred_fallthru
      _
    // Predicated region
    $region1462: #{tpu_custom_call.1} parent=1 // pred_check
      _
    $region1463: #{tpu_custom_call.1} parent=1 // pred_check_branch
      %2447 = sbr.rel (0) target = $region1465
    $region1464: #{tpu_custom_call.1} parent=1 // pred_region
      _
    $region1465: #{tpu_custom_call.1} parent=1 // pred_fallthru
      _
    // Predicated region
    $region1466: #{tpu_custom_call.1} parent=1 // pred_check
      _
    $region1467: #{tpu_custom_call.1} parent=1 // pred_check_branch
      %2449 = sbr.rel (0) target = $region1469
    $region1468: #{tpu_custom_call.1} parent=1 // pred_region
      %2450 = dma.done [#allocation8], 128
    $region1469: #{tpu_custom_call.1} parent=1 // pred_fallthru
      _
    // Predicated region
    $region1470: #{tpu_custom_call.1} parent=1 // pred_check
      _
    $region1471: #{tpu_custom_call.1} parent=1 // pred_check_branch
      %2452 = sbr.rel (0) target = $region1473
    $region1472: #{tpu_custom_call.1} parent=1 // pred_region
      %2453 = dma.done [#allocation10], 128
    $region1473: #{tpu_custom_call.1} parent=1 // pred_fallthru
      _
    // Predicated region
    $region1474: #{tpu_custom_call.1} parent=1 // pred_check
      _
    $region1475: #{tpu_custom_call.1} parent=1 // pred_check_branch
      %2455 = sbr.rel (0) target = $region1477
    $region1476: #{tpu_custom_call.1} parent=1 // pred_region
      %2456 = dma.done [#allocation10], 128
    $region1477: #{tpu_custom_call.1} parent=1 // pred_fallthru
      _
    // Predicated region
    $region1478: #{tpu_custom_call.1} parent=1 // pred_check
      _
    $region1479: #{tpu_custom_call.1} parent=1 // pred_check_branch
      %2458 = sbr.rel (0) target = $region1481
    $region1480: #{tpu_custom_call.1} parent=1 // pred_region
      _
    $region1481: #{tpu_custom_call.1} parent=1 // pred_fallthru
      _
    // Predicated region
    $region1482: #{tpu_custom_call.1} parent=1 // pred_check
      _
    $region1483: #{tpu_custom_call.1} parent=1 // pred_check_branch
      %2460 = sbr.rel (0) target = $region1485
    $region1484: #{tpu_custom_call.1} parent=1 // pred_region
      _
    $region1485: #{tpu_custom_call.1} parent=1 // pred_fallthru
      _
    // Predicated region
    $region1486: #{tpu_custom_call.1} parent=1 // pred_check
      _
    $region1487: #{tpu_custom_call.1} parent=1 // pred_check_branch
      %2462 = sbr.rel (0) target = $region1489
    $region1488: #{tpu_custom_call.1} parent=1 // pred_region
      _
    $region1489: #{tpu_custom_call.1} parent=1 // pred_fallthru
      _
    %2463 = vsyncpa [#allocation8], 1
    %2464 = vsyncpa [#allocation10], 1
  %2465 = vsyncmov [#allocation2]
  %s2466 = vpop.sfrf %2465
  %p2467 = scmp.eq.s32.totalorder %s2466, 0
  %p2468 = pneg %p2467
  %2470 = shalt.err (%p2468)
  %s2471 = scalar_lea.sflag [#allocation2], 1
  %2472 = vsyncmov %s2471
  %s2473 = vpop.sfrf %2472
  %p2474 = scmp.eq.s32.totalorder %s2473, 0
  %p2475 = pneg %p2474
  %2477 = shalt.err (%p2475)
  %s2478 = scalar_lea.sflag [#allocation2], 2
  %2479 = vsyncmov %s2478
  %s2480 = vpop.sfrf %2479
  %p2481 = scmp.eq.s32.totalorder %s2480, 0
  %p2482 = pneg %p2481
  %2484 = shalt.err (%p2482)
  %s2485 = scalar_lea.sflag [#allocation2], 3
  %2486 = vsyncmov %s2485
  %s2487 = vpop.sfrf %2486
  %p2488 = scmp.eq.s32.totalorder %s2487, 0
  %p2489 = pneg %p2488
  %2491 = shalt.err (%p2489)
  %s2492 = scalar_lea.sflag [#allocation2], 4
  %2493 = vsyncmov %s2492
  %s2494 = vpop.sfrf %2493
  %p2495 = scmp.eq.s32.totalorder %s2494, 0
  %p2496 = pneg %p2495
  %2498 = shalt.err (%p2496)
  %s2499 = scalar_lea.sflag [#allocation2], 5
  %2500 = vsyncmov %s2499
  %s2501 = vpop.sfrf %2500
  %p2502 = scmp.eq.s32.totalorder %s2501, 0
  %p2503 = pneg %p2502
  %2505 = shalt.err (%p2503)
  %s2506 = scalar_lea.sflag [#allocation2], 6
  %2507 = vsyncmov %s2506
  %s2508 = vpop.sfrf %2507
  %p2509 = scmp.eq.s32.totalorder %s2508, 0
  %p2510 = pneg %p2509
  %2512 = shalt.err (%p2510)
  %s2513 = scalar_lea.sflag [#allocation2], 7
  %2514 = vsyncmov %s2513
  %s2515 = vpop.sfrf %2514
  %p2516 = scmp.eq.s32.totalorder %s2515, 0
  %p2517 = pneg %p2516
  %2519 = shalt.err (%p2517)
  %s2520 = scalar_lea.sflag [#allocation2], 8
  %2521 = vsyncmov %s2520
  %s2522 = vpop.sfrf %2521
  %p2523 = scmp.eq.s32.totalorder %s2522, 0
  %p2524 = pneg %p2523
  %2526 = shalt.err (%p2524)
  %s2527 = scalar_lea.sflag [#allocation2], 9
  %2528 = vsyncmov %s2527
  %s2529 = vpop.sfrf %2528
  %p2530 = scmp.eq.s32.totalorder %s2529, 0
  %p2531 = pneg %p2530
  %2533 = shalt.err (%p2531)
  %s2534 = scalar_lea.sflag [#allocation2], 10
  %2535 = vsyncmov %s2534
  %s2536 = vpop.sfrf %2535
  %p2537 = scmp.eq.s32.totalorder %s2536, 0
  %p2538 = pneg %p2537
  %2540 = shalt.err (%p2538)
  %s2541 = scalar_lea.sflag [#allocation2], 11
  %2542 = vsyncmov %s2541
  %s2543 = vpop.sfrf %2542
  %p2544 = scmp.eq.s32.totalorder %s2543, 0
  %p2545 = pneg %p2544
  %2547 = shalt.err (%p2545)
  %s2548 = scalar_lea.sflag [#allocation2], 12
  %2549 = vsyncmov %s2548
  %s2550 = vpop.sfrf %2549
  %p2551 = scmp.eq.s32.totalorder %s2550, 0
  %p2552 = pneg %p2551
  %2554 = shalt.err (%p2552)
  %s2555 = scalar_lea.sflag [#allocation2], 13
  %2556 = vsyncmov %s2555
  %s2557 = vpop.sfrf %2556
  %p2558 = scmp.eq.s32.totalorder %s2557, 0
  %p2559 = pneg %p2558
  %2561 = shalt.err (%p2559)
  %s2562 = scalar_lea.sflag [#allocation2], 14
  %2563 = vsyncmov %s2562
  %s2564 = vpop.sfrf %2563
  %p2565 = scmp.eq.s32.totalorder %s2564, 0
  %p2566 = pneg %p2565
  %2568 = shalt.err (%p2566)
  %s2569 = scalar_lea.sflag [#allocation2], 15
  %2570 = vsyncmov %s2569
  %s2571 = vpop.sfrf %2570
  %p2572 = scmp.eq.s32.totalorder %s2571, 0
  %p2573 = pneg %p2572
  %2575 = shalt.err (%p2573)
  %s2576 = scalar_lea.sflag [#allocation2], 16
  %2577 = vsyncmov %s2576
  %s2578 = vpop.sfrf %2577
  %p2579 = scmp.eq.s32.totalorder %s2578, 0
  %p2580 = pneg %p2579
  %2582 = shalt.err (%p2580)
  %s2583 = scalar_lea.sflag [#allocation2], 17
  %2584 = vsyncmov %s2583
  %s2585 = vpop.sfrf %2584
  %p2586 = scmp.eq.s32.totalorder %s2585, 0
  %p2587 = pneg %p2586
  %2589 = shalt.err (%p2587)
  %s2590 = scalar_lea.sflag [#allocation2], 18
  %2591 = vsyncmov %s2590
  %s2592 = vpop.sfrf %2591
  %p2593 = scmp.eq.s32.totalorder %s2592, 0
  %p2594 = pneg %p2593
  %2596 = shalt.err (%p2594)
  %s2597 = scalar_lea.sflag [#allocation2], 19
  %2598 = vsyncmov %s2597
  %s2599 = vpop.sfrf %2598
  %p2600 = scmp.eq.s32.totalorder %s2599, 0
  %p2601 = pneg %p2600
  %2603 = shalt.err (%p2601)
  %s2604 = scalar_lea.sflag [#allocation2], 20
  %2605 = vsyncmov %s2604
  %s2606 = vpop.sfrf %2605
  %p2607 = scmp.eq.s32.totalorder %s2606, 0
  %p2608 = pneg %p2607
  %2610 = shalt.err (%p2608)
  %s2611 = scalar_lea.sflag [#allocation2], 21
  %2612 = vsyncmov %s2611
  %s2613 = vpop.sfrf %2612
  %p2614 = scmp.eq.s32.totalorder %s2613, 0
  %p2615 = pneg %p2614
  %2617 = shalt.err (%p2615)
  %s2618 = scalar_lea.sflag [#allocation2], 22
  %2619 = vsyncmov %s2618
  %s2620 = vpop.sfrf %2619
  %p2621 = scmp.eq.s32.totalorder %s2620, 0
  %p2622 = pneg %p2621
  %2624 = shalt.err (%p2622)
  %s2625 = scalar_lea.sflag [#allocation2], 23
  %2626 = vsyncmov %s2625
  %s2627 = vpop.sfrf %2626
  %p2628 = scmp.eq.s32.totalorder %s2627, 0
  %p2629 = pneg %p2628
  %2631 = shalt.err (%p2629)
  %s2632 = scalar_lea.sflag [#allocation2], 24
  %2633 = vsyncmov %s2632
  %s2634 = vpop.sfrf %2633
  %p2635 = scmp.eq.s32.totalorder %s2634, 0
  %p2636 = pneg %p2635
  %2638 = shalt.err (%p2636)
  %s2639 = scalar_lea.sflag [#allocation2], 25
  %2640 = vsyncmov %s2639
  %s2641 = vpop.sfrf %2640
  %p2642 = scmp.eq.s32.totalorder %s2641, 0
  %p2643 = pneg %p2642
  %2645 = shalt.err (%p2643)
  %s2646 = scalar_lea.sflag [#allocation2], 26
  %2647 = vsyncmov %s2646
  %s2648 = vpop.sfrf %2647
  %p2649 = scmp.eq.s32.totalorder %s2648, 0
  %p2650 = pneg %p2649
  %2652 = shalt.err (%p2650)
  %s2653 = scalar_lea.sflag [#allocation2], 27
  %2654 = vsyncmov %s2653
  %s2655 = vpop.sfrf %2654
  %p2656 = scmp.eq.s32.totalorder %s2655, 0
  %p2657 = pneg %p2656
  %2659 = shalt.err (%p2657)
  %s2660 = scalar_lea.sflag [#allocation2], 28
  %2661 = vsyncmov %s2660
  %s2662 = vpop.sfrf %2661
  %p2663 = scmp.eq.s32.totalorder %s2662, 0
  %p2664 = pneg %p2663
  %2666 = shalt.err (%p2664)
  %s2667 = scalar_lea.sflag [#allocation2], 29
  %2668 = vsyncmov %s2667
  %s2669 = vpop.sfrf %2668
  %p2670 = scmp.eq.s32.totalorder %s2669, 0
  %p2671 = pneg %p2670
  %2673 = shalt.err (%p2671)
  %s2674 = scalar_lea.sflag [#allocation2], 30
  %2675 = vsyncmov %s2674
  %s2676 = vpop.sfrf %2675
  %p2677 = scmp.eq.s32.totalorder %s2676, 0
  %p2678 = pneg %p2677
  %2680 = shalt.err (%p2678)
  %s2681 = scalar_lea.sflag [#allocation2], 31
  %2682 = vsyncmov %s2681
  %s2683 = vpop.sfrf %2682
  %p2684 = scmp.eq.s32.totalorder %s2683, 0
  %p2685 = pneg %p2684
  %2687 = shalt.err (%p2685)
  %s2688 = scalar_lea.sflag [#allocation2], 32
  %2689 = vsyncmov %s2688
  %s2690 = vpop.sfrf %2689
  %p2691 = scmp.eq.s32.totalorder %s2690, 0
  %p2692 = pneg %p2691
  %2694 = shalt.err (%p2692)
  %s2695 = scalar_lea.sflag [#allocation2], 33
  %2696 = vsyncmov %s2695
  %s2697 = vpop.sfrf %2696
  %p2698 = scmp.eq.s32.totalorder %s2697, 0
  %p2699 = pneg %p2698
  %2701 = shalt.err (%p2699)
  %s2702 = scalar_lea.sflag [#allocation2], 34
  %2703 = vsyncmov %s2702
  %s2704 = vpop.sfrf %2703
  %p2705 = scmp.eq.s32.totalorder %s2704, 0
  %p2706 = pneg %p2705
  %2708 = shalt.err (%p2706)
  %s2709 = scalar_lea.sflag [#allocation2], 35
  %2710 = vsyncmov %s2709
  %s2711 = vpop.sfrf %2710
  %p2712 = scmp.eq.s32.totalorder %s2711, 0
  %p2713 = pneg %p2712
  %2715 = shalt.err (%p2713)
  %s2716 = scalar_lea.sflag [#allocation2], 36
  %2717 = vsyncmov %s2716
  %s2718 = vpop.sfrf %2717
  %p2719 = scmp.eq.s32.totalorder %s2718, 0
  %p2720 = pneg %p2719
  %2722 = shalt.err (%p2720)
  %s2723 = scalar_lea.sflag [#allocation2], 37
  %2724 = vsyncmov %s2723
  %s2725 = vpop.sfrf %2724
  %p2726 = scmp.eq.s32.totalorder %s2725, 0
  %p2727 = pneg %p2726
  %2729 = shalt.err (%p2727)
  %s2730 = scalar_lea.sflag [#allocation2], 38
  %2731 = vsyncmov %s2730
  %s2732 = vpop.sfrf %2731
  %p2733 = scmp.eq.s32.totalorder %s2732, 0
  %p2734 = pneg %p2733
  %2736 = shalt.err (%p2734)
  %s2737 = scalar_lea.sflag [#allocation2], 39
  %2738 = vsyncmov %s2737
  %s2739 = vpop.sfrf %2738
  %p2740 = scmp.eq.s32.totalorder %s2739, 0
  %p2741 = pneg %p2740
  %2743 = shalt.err (%p2741)
  %s2744 = scalar_lea.sflag [#allocation2], 40
  %2745 = vsyncmov %s2744
  %s2746 = vpop.sfrf %2745
  %p2747 = scmp.eq.s32.totalorder %s2746, 0
  %p2748 = pneg %p2747
  %2750 = shalt.err (%p2748)
  %s2751 = scalar_lea.sflag [#allocation2], 41
  %2752 = vsyncmov %s2751
  %s2753 = vpop.sfrf %2752
  %p2754 = scmp.eq.s32.totalorder %s2753, 0
  %p2755 = pneg %p2754
  %2757 = shalt.err (%p2755)
  %s2758 = scalar_lea.sflag [#allocation2], 42
  %2759 = vsyncmov %s2758
  %s2760 = vpop.sfrf %2759
  %p2761 = scmp.eq.s32.totalorder %s2760, 0
  %p2762 = pneg %p2761
  %2764 = shalt.err (%p2762)
  %s2765 = scalar_lea.sflag [#allocation2], 43
  %2766 = vsyncmov %s2765
  %s2767 = vpop.sfrf %2766
  %p2768 = scmp.eq.s32.totalorder %s2767, 0
  %p2769 = pneg %p2768
  %2771 = shalt.err (%p2769)
  %s2772 = scalar_lea.sflag [#allocation2], 44
  %2773 = vsyncmov %s2772
  %s2774 = vpop.sfrf %2773
  %p2775 = scmp.eq.s32.totalorder %s2774, 0
  %p2776 = pneg %p2775
  %2778 = shalt.err (%p2776)
  %s2779 = scalar_lea.sflag [#allocation2], 45
  %2780 = vsyncmov %s2779
  %s2781 = vpop.sfrf %2780
  %p2782 = scmp.eq.s32.totalorder %s2781, 0
  %p2783 = pneg %p2782
  %2785 = shalt.err (%p2783)
  %s2786 = scalar_lea.sflag [#allocation2], 46
  %2787 = vsyncmov %s2786
  %s2788 = vpop.sfrf %2787
  %p2789 = scmp.eq.s32.totalorder %s2788, 0
  %p2790 = pneg %p2789
  %2792 = shalt.err (%p2790)
  %s2793 = scalar_lea.sflag [#allocation2], 47
  %2794 = vsyncmov %s2793
  %s2795 = vpop.sfrf %2794
  %p2796 = scmp.eq.s32.totalorder %s2795, 0
  %p2797 = pneg %p2796
  %2799 = shalt.err (%p2797)

</llo_original>
